<compile_context>
chip_gen: v7x
topology: tpu7x:2x2x1
jax: 0.10.0
libtpu: 0.0.40
codegen_flags: <defaults>
</compile_context>

<pallas_src>
import jax
import jax.numpy as jnp
from jax.experimental import pallas as pl
from jax.experimental.pallas import tpu as pltpu

NUM_CONV_STEPS = 4      # MPNNet_v2 num_conv_steps (constructor arg)
EDGE_DIM = 4            # TransformerConv edge_dim
MIN_VAL = 1e-6
ATOMIC_NUMBERS = [6, 7, 8, 9, 15, 16, 17, 35, 53]   # len = 9


def _act(v):
    # SiLU (version >= 5); sigmoid goes to the EUP slot.
    return v * jax.nn.sigmoid(v)


def _softplus(z):
    # matches torch.nn.functional.softplus (beta=1, threshold=20), log1p for precision
    return jnp.where(z > 20.0, z, jnp.log1p(jnp.exp(jnp.minimum(z, 20.0))))


def evidential_mpnn_kernel(
    x_ref, mask_ref, edge_ref, pool_ref,
    w0_ref, b0_ref,
    wqkvs_ref, bqkvs_ref,
    we_ref,
    w3a_ref, b3a_ref, w3b_ref, b3b_ref, w3c_ref, b3c_ref,
    out_ref,
    qkvs_ref, qe_ref,
):
    # ---------- hoisted loads (reused every conv step) ----------
    mask = mask_ref[...]          # (N, N)  1.0 where edge j->i exists
    we = we_ref[...]              # (4, D)  lin_edge weight
    wqkvs = wqkvs_ref[...]        # (D, 4D) fused [Wq | Wk | Wv | Wskip]
    bqkvs = bqkvs_ref[...]        # (1, 4D)
    # NOTE: the (4, N, N) edge tensor is deliberately kept ref-resident
    # (per-plane vlds) instead of one giant hoisted value, to bound vreg
    # pressure at N=128.

    dim = we.shape[1]
    inv_sqrt_d = 1.0 / (float(dim) ** 0.5)
    neg_big = -1e30

    # lin0 + act
    out = _act(jnp.dot(x_ref[...], w0_ref[...],
                       preferred_element_type=jnp.float32) + b0_ref[...])

    # num_conv_steps applications of the same TransformerConv (dense masked attention)
    for _ in range(NUM_CONV_STEPS):
        # ONE lane-full (N,D)x(D,4D) matmul for q|k|v|skip, staged through VMEM
        # scratch; slices come back as offset loads (no vreg value-slicing).
        qkvs_ref[...] = jnp.dot(out, wqkvs,
                                preferred_element_type=jnp.float32) + bqkvs
        q = qkvs_ref[:, pl.ds(0, dim)]            # (N, D)
        k = qkvs_ref[:, pl.ds(dim, dim)]
        v = qkvs_ref[:, pl.ds(2 * dim, dim)]

        # qe[i, c] = q_i . We[c]   (contract on We's output dim; no host transpose)
        qe_ref[...] = jax.lax.dot_general(q, we, (((1,), (1,)), ((), ())),
                                          preferred_element_type=jnp.float32)  # (N, 4)

        # scores s_ij = q_i . (k_j + We e_ij) / sqrt(D)
        s = jax.lax.dot_general(q, k, (((1,), (1,)), ((), ())),
                                preferred_element_type=jnp.float32)             # (N, N)
        for c in range(EDGE_DIM):
            # qe column read from scratch ref (plain vld + broadcast, no XLU extract)
            s = s + edge_ref[c] * qe_ref[:, pl.ds(c, 1)]
        s = s * inv_sqrt_d
        # keep ordering: edge term added BEFORE masking so non-edges never leak
        s = jnp.where(mask > 0.0, s, neg_big)

        # masked softmax over incoming edges (lane axis). Rows with no incoming
        # edges rely on the denom clamp -> alpha == 0 -> zero message (matches ref).
        m = jnp.max(s, axis=1, keepdims=True)
        p = jnp.exp(s - m) * mask
        denom = jnp.sum(p, axis=1, keepdims=True)
        alpha = p * pl.reciprocal(jnp.maximum(denom, 1e-30), approx=True)        # (N, N)

        # message: sum_j alpha_ij * (v_j + We e_ij)
        msg = jnp.dot(alpha, v, preferred_element_type=jnp.float32)              # (N, D)
        ae = jnp.concatenate(
            [jnp.sum(alpha * edge_ref[c], axis=1, keepdims=True)
             for c in range(EDGE_DIM)], axis=1)                                  # (N, 4)
        msg = msg + jnp.dot(ae, we, preferred_element_type=jnp.float32)

        skip = qkvs_ref[:, pl.ds(3 * dim, dim)]
        out = _act(msg + skip)

    # global mean pool
    g = jnp.dot(pool_ref[...], out, preferred_element_type=jnp.float32)          # (B, D)

    # lin3 MLP head
    g = _act(jnp.dot(g, w3a_ref[...], preferred_element_type=jnp.float32) + b3a_ref[...])
    g = _act(jnp.dot(g, w3b_ref[...], preferred_element_type=jnp.float32) + b3b_ref[...])
    mol = jnp.dot(g, w3c_ref[...], preferred_element_type=jnp.float32) + b3c_ref[...]  # (B, 4K)

    # single contiguous store: [means | softplus+eps | softplus+eps+1 | softplus+eps]
    kout = out_ref.shape[1] // 4
    col = jax.lax.broadcasted_iota(jnp.int32, mol.shape, 1)
    sp = _softplus(mol) + MIN_VAL
    res = jnp.where(col < kout, mol, sp)
    res = jnp.where(jnp.logical_and(col >= 2 * kout, col < 3 * kout), res + 1.0, res)
    out_ref[...] = res


def evidential_forward(x, mask, edge_dense, pool_mat, params):
    N = x.shape[0]
    dim = params["wq"].shape[0]
    B = pool_mat.shape[0]
    four_k = params["w3c"].shape[1]
    kout = four_k // 4

    # fuse the four per-step projections into one lane-full weight/bias
    wqkvs = jnp.concatenate(
        [params["wq"], params["wk"], params["wv"], params["wskip"]], axis=1)    # (D, 4D)
    bqkvs = jnp.concatenate(
        [params["bq"], params["bk"], params["bv"], params["bskip"]], axis=1)    # (1, 4D)

    inputs = (
        x, mask, edge_dense, pool_mat,
        params["w0"], params["b0"],
        wqkvs, bqkvs,
        params["we"],
        params["w3a"], params["b3a"], params["w3b"], params["b3b"],
        params["w3c"], params["b3c"],
    )
    vmem = lambda: pl.BlockSpec(memory_space=pltpu.MemorySpace.VMEM)

    # TODO(synk): when N scales to real molecule batches, add a target-row-tiled
    # grid (parallel over graphs for v7x megacore), bf16 MXU inputs for the
    # attention matmuls, and pltpu.CompilerParams(vmem_limit_bytes=...).
    mol = pl.pallas_call(
        evidential_mpnn_kernel,
        out_shape=jax.ShapeDtypeStruct((B, four_k), jnp.float32),
        in_specs=[vmem() for _ in inputs],
        out_specs=vmem(),
        scratch_shapes=[
            pltpu.VMEM((N, 4 * dim), jnp.float32),   # fused q|k|v|skip staging
            pltpu.VMEM((N, EDGE_DIM), jnp.float32),  # qe columns
        ],
    )(*inputs)

    return (mol[:, :kout], mol[:, kout:2 * kout],
            mol[:, 2 * kout:3 * kout], mol[:, 3 * kout:])


def reference_forward(x, mask, edge_dense, pool_mat, params):
    """Pure-JAX reference using the 3-D (PyG-style) formulation."""
    def sp(z):
        return jnp.where(z > 20.0, z, jnp.log1p(jnp.exp(jnp.minimum(z, 20.0))))
    act = lambda v: v * jax.nn.sigmoid(v)
    we = params["we"]
    dim = we.shape[1]
    e_attr = jnp.transpose(edge_dense, (1, 2, 0))               # (N, N, 4)
    e_proj = jnp.einsum("ijc,cd->ijd", e_attr, we)              # (N, N, D)
    out = act(x @ params["w0"] + params["b0"])
    for _ in range(NUM_CONV_STEPS):
        q = out @ params["wq"] + params["bq"]
        k = out @ params["wk"] + params["bk"]
        v = out @ params["wv"] + params["bv"]
        kk = k[None, :, :] + e_proj
        vv = v[None, :, :] + e_proj
        s = jnp.einsum("id,ijd->ij", q, kk) / jnp.sqrt(float(dim))
        s = jnp.where(mask > 0, s, -1e30)
        m = jnp.max(s, axis=1, keepdims=True)
        p = jnp.exp(s - m) * mask
        alpha = p / jnp.maximum(p.sum(axis=1, keepdims=True), 1e-30)
        msg = jnp.einsum("ij,ijd->id", alpha, vv)
        out = act(msg + out @ params["wskip"] + params["bskip"])
    g = pool_mat @ out
    g = act(g @ params["w3a"] + params["b3a"])
    g = act(g @ params["w3b"] + params["b3b"])
    mol = g @ params["w3c"] + params["b3c"]
    kout = mol.shape[1] // 4
    return (mol[:, :kout],
            sp(mol[:, kout:2 * kout]) + MIN_VAL,
            sp(mol[:, 2 * kout:3 * kout]) + MIN_VAL + 1.0,
            sp(mol[:, 3 * kout:]) + MIN_VAL)


def _linear_params(key, fan_in, fan_out, bias=True):
    # PyTorch nn.Linear default init: U(-1/sqrt(fan_in), 1/sqrt(fan_in))
    kw, kb = jax.random.split(key)
    bound = 1.0 / (fan_in ** 0.5)
    w = jax.random.uniform(kw, (fan_in, fan_out), jnp.float32, -bound, bound)
    b = (jax.random.uniform(kb, (1, fan_out), jnp.float32, -bound, bound)
         if bias else jnp.zeros((1, fan_out), jnp.float32))
    return w, b


if __name__ == "__main__":
    key = jax.random.PRNGKey(0)
    N_PER_GRAPH = 16
    B = 8                                                # batch more graphs -> lane-full NxN
    N = N_PER_GRAPH * B                                  # 128 nodes
    NVEC = 0
    NUM_FEAT = 14 + 1 + len(ATOMIC_NUMBERS) + 0 + NVEC   # 24 (do_stem_mask=True, do_nblocks=False)
    DIM = 32                                             # nhid
    NUM_OUT_PER_MOL = 2                                  # EvidentialRegressor arg -> proxy emits 4*2

    keys = jax.random.split(key, 16)

    # node features
    x = jax.random.normal(keys[0], (N, NUM_FEAT), jnp.float32)

    # B disjoint directed rings (each node has 2 incoming edges), block-diagonal mask
    idx = jnp.arange(N_PER_GRAPH)
    diff = (idx[:, None] - idx[None, :]) % N_PER_GRAPH
    block = jnp.logical_or(diff == 1, diff == N_PER_GRAPH - 1).astype(jnp.float32)
    mask = jnp.kron(jnp.eye(B, dtype=jnp.float32), block)           # (N, N)

    # dense edge attributes, zero where no edge
    edge_dense = jax.random.normal(keys[1], (EDGE_DIM, N, N), jnp.float32) * mask[None, :, :]

    # global_mean_pool matrix
    batch = jnp.repeat(jnp.arange(B), N_PER_GRAPH)
    onehot = (batch[None, :] == jnp.arange(B)[:, None]).astype(jnp.float32)
    pool_mat = onehot / jnp.sum(onehot, axis=1, keepdims=True)       # (B, N)

    # deterministic parameters
    p = {}
    p["w0"], p["b0"] = _linear_params(keys[2], NUM_FEAT, DIM)
    p["wq"], p["bq"] = _linear_params(keys[3], DIM, DIM)
    p["wk"], p["bk"] = _linear_params(keys[4], DIM, DIM)
    p["wv"], p["bv"] = _linear_params(keys[5], DIM, DIM)
    p["we"], _ = _linear_params(keys[6], EDGE_DIM, DIM, bias=False)  # lin_edge (no bias)
    p["wskip"], p["bskip"] = _linear_params(keys[7], DIM, DIM)
    p["w3a"], p["b3a"] = _linear_params(keys[8], DIM, DIM)
    p["w3b"], p["b3b"] = _linear_params(keys[9], DIM, DIM)
    p["w3c"], p["b3c"] = _linear_params(keys[10], DIM, 4 * NUM_OUT_PER_MOL)

    means, lambdas, alphas, betas = jax.block_until_ready(
        evidential_forward(x, mask, edge_dense, pool_mat, p))

    ref = reference_forward(x, mask, edge_dense, pool_mat, p)
    for got, want in zip((means, lambdas, alphas, betas), ref):
        assert got.shape == (B, NUM_OUT_PER_MOL)
        assert jnp.allclose(got, want, rtol=5e-3, atol=5e-3)

    print("KERNEL_OK")
</pallas_src>

<mosaic_0001>
module attributes {stable_mosaic.version = 11 : i64} {
  func.func @evidential_mpnn_kernel(%arg0: memref<128x24xf32, #tpu.memory_space<vmem>>, %arg1: memref<128x128xf32, #tpu.memory_space<vmem>>, %arg2: memref<4x128x128xf32, #tpu.memory_space<vmem>>, %arg3: memref<8x128xf32, #tpu.memory_space<vmem>>, %arg4: memref<24x32xf32, #tpu.memory_space<vmem>>, %arg5: memref<1x32xf32, #tpu.memory_space<vmem>>, %arg6: memref<32x128xf32, #tpu.memory_space<vmem>>, %arg7: memref<1x128xf32, #tpu.memory_space<vmem>>, %arg8: memref<4x32xf32, #tpu.memory_space<vmem>>, %arg9: memref<32x32xf32, #tpu.memory_space<vmem>>, %arg10: memref<1x32xf32, #tpu.memory_space<vmem>>, %arg11: memref<32x32xf32, #tpu.memory_space<vmem>>, %arg12: memref<1x32xf32, #tpu.memory_space<vmem>>, %arg13: memref<32x8xf32, #tpu.memory_space<vmem>>, %arg14: memref<1x8xf32, #tpu.memory_space<vmem>>, %arg15: memref<8x8xf32, #tpu.memory_space<vmem>>, %arg16: memref<128x128xf32, #tpu.memory_space<vmem>>, %arg17: memref<128x4xf32, #tpu.memory_space<vmem>>) attributes {dimension_semantics = [], scalar_prefetch = 0 : i64, scratch_operands = 2 : i64, tpu.core_type = #tpu.core_type<tc>} {
    %c0 = arith.constant 0 : index
    %c0_0 = arith.constant 0 : index
    %0 = vector.load %arg1[%c0, %c0_0] : memref<128x128xf32, #tpu.memory_space<vmem>>, vector<128x128xf32>
    %c0_1 = arith.constant 0 : index
    %c0_2 = arith.constant 0 : index
    %1 = vector.load %arg8[%c0_1, %c0_2] : memref<4x32xf32, #tpu.memory_space<vmem>>, vector<4x32xf32>
    %c0_3 = arith.constant 0 : index
    %c0_4 = arith.constant 0 : index
    %2 = vector.load %arg6[%c0_3, %c0_4] : memref<32x128xf32, #tpu.memory_space<vmem>>, vector<32x128xf32>
    %c0_5 = arith.constant 0 : index
    %c0_6 = arith.constant 0 : index
    %3 = vector.load %arg7[%c0_5, %c0_6] : memref<1x128xf32, #tpu.memory_space<vmem>>, vector<1x128xf32>
    %c0_7 = arith.constant 0 : index
    %c0_8 = arith.constant 0 : index
    %4 = vector.load %arg0[%c0_7, %c0_8] : memref<128x24xf32, #tpu.memory_space<vmem>>, vector<128x24xf32>
    %c0_9 = arith.constant 0 : index
    %c0_10 = arith.constant 0 : index
    %5 = vector.load %arg4[%c0_9, %c0_10] : memref<24x32xf32, #tpu.memory_space<vmem>>, vector<24x32xf32>
    %cst = arith.constant dense<0.000000e+00> : vector<128x32xf32>
    %6 = tpu.matmul %4, %5, %cst {dimension_numbers = #tpu.dot_dimension_numbers<[1], [0], [0], [1], [0, 0, 1, 1], [], []>} : vector<128x24xf32>, vector<24x32xf32>, vector<128x32xf32> -> vector<128x32xf32>
    %c0_11 = arith.constant 0 : index
    %c0_12 = arith.constant 0 : index
    %7 = vector.load %arg5[%c0_11, %c0_12] : memref<1x32xf32, #tpu.memory_space<vmem>>, vector<1x32xf32>
    %8 = vector.broadcast %7 : vector<1x32xf32> to vector<128x32xf32>
    %9 = arith.addf %6, %8 : vector<128x32xf32>
    %10 = arith.negf %9 : vector<128x32xf32>
    %11 = math.exp %10 : vector<128x32xf32>
    %cst_13 = arith.constant 1.000000e+00 : f32
    %12 = vector.broadcast %cst_13 : f32 to vector<128x32xf32>
    %13 = arith.addf %12, %11 : vector<128x32xf32>
    %14 = arith.divf %12, %13 : vector<128x32xf32>
    %15 = arith.mulf %9, %14 : vector<128x32xf32>
    %cst_14 = arith.constant dense<0.000000e+00> : vector<128x128xf32>
    %16 = tpu.matmul %15, %2, %cst_14 {dimension_numbers = #tpu.dot_dimension_numbers<[1], [0], [0], [1], [0, 0, 1, 1], [], []>} : vector<128x32xf32>, vector<32x128xf32>, vector<128x128xf32> -> vector<128x128xf32>
    %17 = vector.broadcast %3 : vector<1x128xf32> to vector<128x128xf32>
    %18 = arith.addf %16, %17 : vector<128x128xf32>
    %c0_15 = arith.constant 0 : index
    %c0_16 = arith.constant 0 : index
    %19 = vector.load %arg16[%c0_15, %c0_16] : memref<128x128xf32, #tpu.memory_space<vmem>>, vector<128x128xf32>
    tpu.vector_store %arg16[%c0_15, %c0_16], %18 {strides = array<i32>} : memref<128x128xf32, #tpu.memory_space<vmem>>, vector<128x128xf32>,
    %c0_17 = arith.constant 0 : index
    %c0_18 = arith.constant 0 : index
    %20 = vector.load %arg16[%c0_17, %c0_18] : memref<128x128xf32, #tpu.memory_space<vmem>>, vector<128x32xf32>
    %c0_19 = arith.constant 0 : index
    %c32 = arith.constant 32 : index
    %21 = vector.load %arg16[%c0_19, %c32] : memref<128x128xf32, #tpu.memory_space<vmem>>, vector<128x32xf32>
    %c0_20 = arith.constant 0 : index
    %c64 = arith.constant 64 : index
    %22 = vector.load %arg16[%c0_20, %c64] : memref<128x128xf32, #tpu.memory_space<vmem>>, vector<128x32xf32>
    %cst_21 = arith.constant dense<0.000000e+00> : vector<128x4xf32>
    %23 = tpu.matmul %20, %1, %cst_21 {dimension_numbers = #tpu.dot_dimension_numbers<[1], [1], [0], [0], [0, 0, 1, 0], [], []>} : vector<128x32xf32>, vector<4x32xf32>, vector<128x4xf32> -> vector<128x4xf32>
    %c0_22 = arith.constant 0 : index
    %c0_23 = arith.constant 0 : index
    %24 = vector.load %arg17[%c0_22, %c0_23] : memref<128x4xf32, #tpu.memory_space<vmem>>, vector<128x4xf32>
    tpu.vector_store %arg17[%c0_22, %c0_23], %23 {strides = array<i32>} : memref<128x4xf32, #tpu.memory_space<vmem>>, vector<128x4xf32>,
    %cst_24 = arith.constant dense<0.000000e+00> : vector<128x128xf32>
    %25 = tpu.matmul %20, %21, %cst_24 {dimension_numbers = #tpu.dot_dimension_numbers<[1], [1], [0], [0], [0, 0, 1, 0], [], []>} : vector<128x32xf32>, vector<128x32xf32>, vector<128x128xf32> -> vector<128x128xf32>
    %c0_25 = arith.constant 0 : index
    %c0_26 = arith.constant 0 : index
    %c0_27 = arith.constant 0 : index
    %26 = vector.load %arg2[%c0_25, %c0_26, %c0_27] : memref<4x128x128xf32, #tpu.memory_space<vmem>>, vector<1x128x128xf32>
    %27 = vector.shape_cast %26 : vector<1x128x128xf32> to vector<128x128xf32>
    %c0_28 = arith.constant 0 : index
    %c0_29 = arith.constant 0 : index
    %28 = vector.load %arg17[%c0_28, %c0_29] : memref<128x4xf32, #tpu.memory_space<vmem>>, vector<128x1xf32>
    %29 = vector.broadcast %28 : vector<128x1xf32> to vector<128x128xf32>
    %30 = arith.mulf %27, %29 : vector<128x128xf32>
    %31 = arith.addf %25, %30 : vector<128x128xf32>
    %c1 = arith.constant 1 : index
    %c0_30 = arith.constant 0 : index
    %c0_31 = arith.constant 0 : index
    %32 = vector.load %arg2[%c1, %c0_30, %c0_31] : memref<4x128x128xf32, #tpu.memory_space<vmem>>, vector<1x128x128xf32>
    %33 = vector.shape_cast %32 : vector<1x128x128xf32> to vector<128x128xf32>
    %c0_32 = arith.constant 0 : index
    %c1_33 = arith.constant 1 : index
    %34 = vector.load %arg17[%c0_32, %c1_33] : memref<128x4xf32, #tpu.memory_space<vmem>>, vector<128x1xf32>
    %35 = vector.broadcast %34 : vector<128x1xf32> to vector<128x128xf32>
    %36 = arith.mulf %33, %35 : vector<128x128xf32>
    %37 = arith.addf %31, %36 : vector<128x128xf32>
    %c2 = arith.constant 2 : index
    %c0_34 = arith.constant 0 : index
    %c0_35 = arith.constant 0 : index
    %38 = vector.load %arg2[%c2, %c0_34, %c0_35] : memref<4x128x128xf32, #tpu.memory_space<vmem>>, vector<1x128x128xf32>
    %39 = vector.shape_cast %38 : vector<1x128x128xf32> to vector<128x128xf32>
    %c0_36 = arith.constant 0 : index
    %c2_37 = arith.constant 2 : index
    %40 = vector.load %arg17[%c0_36, %c2_37] : memref<128x4xf32, #tpu.memory_space<vmem>>, vector<128x1xf32>
    %41 = vector.broadcast %40 : vector<128x1xf32> to vector<128x128xf32>
    %42 = arith.mulf %39, %41 : vector<128x128xf32>
    %43 = arith.addf %37, %42 : vector<128x128xf32>
    %c3 = arith.constant 3 : index
    %c0_38 = arith.constant 0 : index
    %c0_39 = arith.constant 0 : index
    %44 = vector.load %arg2[%c3, %c0_38, %c0_39] : memref<4x128x128xf32, #tpu.memory_space<vmem>>, vector<1x128x128xf32>
    %45 = vector.shape_cast %44 : vector<1x128x128xf32> to vector<128x128xf32>
    %c0_40 = arith.constant 0 : index
    %c3_41 = arith.constant 3 : index
    %46 = vector.load %arg17[%c0_40, %c3_41] : memref<128x4xf32, #tpu.memory_space<vmem>>, vector<128x1xf32>
    %47 = vector.broadcast %46 : vector<128x1xf32> to vector<128x128xf32>
    %48 = arith.mulf %45, %47 : vector<128x128xf32>
    %49 = arith.addf %43, %48 : vector<128x128xf32>
    %cst_42 = arith.constant 0.176776692 : f32
    %50 = vector.broadcast %cst_42 : f32 to vector<128x128xf32>
    %51 = arith.mulf %49, %50 : vector<128x128xf32>
    %cst_43 = arith.constant 0.000000e+00 : f32
    %52 = vector.broadcast %cst_43 : f32 to vector<128x128xf32>
    %53 = arith.cmpf ogt, %0, %52 : vector<128x128xf32>
    %cst_44 = arith.constant -1.000000e+30 : f32
    %54 = vector.broadcast %cst_44 : f32 to vector<128x128xf32>
    %55 = arith.select %53, %51, %54 : vector<128x128xi1>, vector<128x128xf32>
    %cst_45 = arith.constant dense<0xFF800000> : vector<128xf32>
    %56 = vector.multi_reduction <maximumf>, %55, %cst_45 [1] : vector<128x128xf32> to vector<128xf32>
    %57 = vector.shape_cast %56 : vector<128xf32> to vector<128x1xf32>
    %58 = vector.broadcast %57 : vector<128x1xf32> to vector<128x128xf32>
    %59 = arith.subf %55, %58 : vector<128x128xf32>
    %60 = math.exp %59 : vector<128x128xf32>
    %61 = arith.mulf %60, %0 : vector<128x128xf32>
    %cst_46 = arith.constant dense<0.000000e+00> : vector<128xf32>
    %62 = vector.multi_reduction <add>, %61, %cst_46 [1] : vector<128x128xf32> to vector<128xf32>
    %63 = vector.shape_cast %62 : vector<128xf32> to vector<128x1xf32>
    %cst_47 = arith.constant 1.000000e-30 : f32
    %64 = vector.broadcast %cst_47 : f32 to vector<128x1xf32>
    %65 = arith.maximumf %63, %64 : vector<128x1xf32>
    %66 = tpu.reciprocal %65 {approx = true} : vector<128x1xf32> -> vector<128x1xf32>
    %67 = vector.broadcast %66 : vector<128x1xf32> to vector<128x128xf32>
    %68 = arith.mulf %61, %67 : vector<128x128xf32>
    %cst_48 = arith.constant dense<0.000000e+00> : vector<128x32xf32>
    %69 = tpu.matmul %68, %22, %cst_48 {dimension_numbers = #tpu.dot_dimension_numbers<[1], [0], [0], [1], [0, 0, 1, 1], [], []>} : vector<128x128xf32>, vector<128x32xf32>, vector<128x32xf32> -> vector<128x32xf32>
    %c0_49 = arith.constant 0 : index
    %c0_50 = arith.constant 0 : index
    %c0_51 = arith.constant 0 : index
    %70 = vector.load %arg2[%c0_49, %c0_50, %c0_51] : memref<4x128x128xf32, #tpu.memory_space<vmem>>, vector<1x128x128xf32>
    %71 = vector.shape_cast %70 : vector<1x128x128xf32> to vector<128x128xf32>
    %72 = arith.mulf %68, %71 : vector<128x128xf32>
    %cst_52 = arith.constant dense<0.000000e+00> : vector<128xf32>
    %73 = vector.multi_reduction <add>, %72, %cst_52 [1] : vector<128x128xf32> to vector<128xf32>
    %74 = vector.shape_cast %73 : vector<128xf32> to vector<128x1xf32>
    %c1_53 = arith.constant 1 : index
    %c0_54 = arith.constant 0 : index
    %c0_55 = arith.constant 0 : index
    %75 = vector.load %arg2[%c1_53, %c0_54, %c0_55] : memref<4x128x128xf32, #tpu.memory_space<vmem>>, vector<1x128x128xf32>
    %76 = vector.shape_cast %75 : vector<1x128x128xf32> to vector<128x128xf32>
    %77 = arith.mulf %68, %76 : vector<128x128xf32>
    %cst_56 = arith.constant dense<0.000000e+00> : vector<128xf32>
    %78 = vector.multi_reduction <add>, %77, %cst_56 [1] : vector<128x128xf32> to vector<128xf32>
    %79 = vector.shape_cast %78 : vector<128xf32> to vector<128x1xf32>
    %c2_57 = arith.constant 2 : index
    %c0_58 = arith.constant 0 : index
    %c0_59 = arith.constant 0 : index
    %80 = vector.load %arg2[%c2_57, %c0_58, %c0_59] : memref<4x128x128xf32, #tpu.memory_space<vmem>>, vector<1x128x128xf32>
    %81 = vector.shape_cast %80 : vector<1x128x128xf32> to vector<128x128xf32>
    %82 = arith.mulf %68, %81 : vector<128x128xf32>
    %cst_60 = arith.constant dense<0.000000e+00> : vector<128xf32>
    %83 = vector.multi_reduction <add>, %82, %cst_60 [1] : vector<128x128xf32> to vector<128xf32>
    %84 = vector.shape_cast %83 : vector<128xf32> to vector<128x1xf32>
    %c3_61 = arith.constant 3 : index
    %c0_62 = arith.constant 0 : index
    %c0_63 = arith.constant 0 : index
    %85 = vector.load %arg2[%c3_61, %c0_62, %c0_63] : memref<4x128x128xf32, #tpu.memory_space<vmem>>, vector<1x128x128xf32>
    %86 = vector.shape_cast %85 : vector<1x128x128xf32> to vector<128x128xf32>
    %87 = arith.mulf %68, %86 : vector<128x128xf32>
    %cst_64 = arith.constant dense<0.000000e+00> : vector<128xf32>
    %88 = vector.multi_reduction <add>, %87, %cst_64 [1] : vector<128x128xf32> to vector<128xf32>
    %89 = vector.shape_cast %88 : vector<128xf32> to vector<128x1xf32>
    %90 = tpu.concatenate %74, %79, %84, %89 in 1 : vector<128x1xf32>, vector<128x1xf32>, vector<128x1xf32>, vector<128x1xf32> -> vector<128x4xf32>
    %cst_65 = arith.constant dense<0.000000e+00> : vector<128x32xf32>
    %91 = tpu.matmul %90, %1, %cst_65 {dimension_numbers = #tpu.dot_dimension_numbers<[1], [0], [0], [1], [0, 0, 1, 1], [], []>} : vector<128x4xf32>, vector<4x32xf32>, vector<128x32xf32> -> vector<128x32xf32>
    %92 = arith.addf %69, %91 : vector<128x32xf32>
    %c0_66 = arith.constant 0 : index
    %c96 = arith.constant 96 : index
    %93 = vector.load %arg16[%c0_66, %c96] : memref<128x128xf32, #tpu.memory_space<vmem>>, vector<128x32xf32>
    %94 = arith.addf %92, %93 : vector<128x32xf32>
    %95 = arith.negf %94 : vector<128x32xf32>
    %96 = math.exp %95 : vector<128x32xf32>
    %cst_67 = arith.constant 1.000000e+00 : f32
    %97 = vector.broadcast %cst_67 : f32 to vector<128x32xf32>
    %98 = arith.addf %97, %96 : vector<128x32xf32>
    %99 = arith.divf %97, %98 : vector<128x32xf32>
    %100 = arith.mulf %94, %99 : vector<128x32xf32>
    %cst_68 = arith.constant dense<0.000000e+00> : vector<128x128xf32>
    %101 = tpu.matmul %100, %2, %cst_68 {dimension_numbers = #tpu.dot_dimension_numbers<[1], [0], [0], [1], [0, 0, 1, 1], [], []>} : vector<128x32xf32>, vector<32x128xf32>, vector<128x128xf32> -> vector<128x128xf32>
    %102 = vector.broadcast %3 : vector<1x128xf32> to vector<128x128xf32>
    %103 = arith.addf %101, %102 : vector<128x128xf32>
    %c0_69 = arith.constant 0 : index
    %c0_70 = arith.constant 0 : index
    %104 = vector.load %arg16[%c0_69, %c0_70] : memref<128x128xf32, #tpu.memory_space<vmem>>, vector<128x128xf32>
    tpu.vector_store %arg16[%c0_69, %c0_70], %103 {strides = array<i32>} : memref<128x128xf32, #tpu.memory_space<vmem>>, vector<128x128xf32>,
    %c0_71 = arith.constant 0 : index
    %c0_72 = arith.constant 0 : index
    %105 = vector.load %arg16[%c0_71, %c0_72] : memref<128x128xf32, #tpu.memory_space<vmem>>, vector<128x32xf32>
    %c0_73 = arith.constant 0 : index
    %c32_74 = arith.constant 32 : index
    %106 = vector.load %arg16[%c0_73, %c32_74] : memref<128x128xf32, #tpu.memory_space<vmem>>, vector<128x32xf32>
    %c0_75 = arith.constant 0 : index
    %c64_76 = arith.constant 64 : index
    %107 = vector.load %arg16[%c0_75, %c64_76] : memref<128x128xf32, #tpu.memory_space<vmem>>, vector<128x32xf32>
    %cst_77 = arith.constant dense<0.000000e+00> : vector<128x4xf32>
    %108 = tpu.matmul %105, %1, %cst_77 {dimension_numbers = #tpu.dot_dimension_numbers<[1], [1], [0], [0], [0, 0, 1, 0], [], []>} : vector<128x32xf32>, vector<4x32xf32>, vector<128x4xf32> -> vector<128x4xf32>
    %c0_78 = arith.constant 0 : index
    %c0_79 = arith.constant 0 : index
    %109 = vector.load %arg17[%c0_78, %c0_79] : memref<128x4xf32, #tpu.memory_space<vmem>>, vector<128x4xf32>
    tpu.vector_store %arg17[%c0_78, %c0_79], %108 {strides = array<i32>} : memref<128x4xf32, #tpu.memory_space<vmem>>, vector<128x4xf32>,
    %cst_80 = arith.constant dense<0.000000e+00> : vector<128x128xf32>
    %110 = tpu.matmul %105, %106, %cst_80 {dimension_numbers = #tpu.dot_dimension_numbers<[1], [1], [0], [0], [0, 0, 1, 0], [], []>} : vector<128x32xf32>, vector<128x32xf32>, vector<128x128xf32> -> vector<128x128xf32>
    %c0_81 = arith.constant 0 : index
    %c0_82 = arith.constant 0 : index
    %c0_83 = arith.constant 0 : index
    %111 = vector.load %arg2[%c0_81, %c0_82, %c0_83] : memref<4x128x128xf32, #tpu.memory_space<vmem>>, vector<1x128x128xf32>
    %112 = vector.shape_cast %111 : vector<1x128x128xf32> to vector<128x128xf32>
    %c0_84 = arith.constant 0 : index
    %c0_85 = arith.constant 0 : index
    %113 = vector.load %arg17[%c0_84, %c0_85] : memref<128x4xf32, #tpu.memory_space<vmem>>, vector<128x1xf32>
    %114 = vector.broadcast %113 : vector<128x1xf32> to vector<128x128xf32>
    %115 = arith.mulf %112, %114 : vector<128x128xf32>
    %116 = arith.addf %110, %115 : vector<128x128xf32>
    %c1_86 = arith.constant 1 : index
    %c0_87 = arith.constant 0 : index
    %c0_88 = arith.constant 0 : index
    %117 = vector.load %arg2[%c1_86, %c0_87, %c0_88] : memref<4x128x128xf32, #tpu.memory_space<vmem>>, vector<1x128x128xf32>
    %118 = vector.shape_cast %117 : vector<1x128x128xf32> to vector<128x128xf32>
    %c0_89 = arith.constant 0 : index
    %c1_90 = arith.constant 1 : index
    %119 = vector.load %arg17[%c0_89, %c1_90] : memref<128x4xf32, #tpu.memory_space<vmem>>, vector<128x1xf32>
    %120 = vector.broadcast %119 : vector<128x1xf32> to vector<128x128xf32>
    %121 = arith.mulf %118, %120 : vector<128x128xf32>
    %122 = arith.addf %116, %121 : vector<128x128xf32>
    %c2_91 = arith.constant 2 : index
    %c0_92 = arith.constant 0 : index
    %c0_93 = arith.constant 0 : index
    %123 = vector.load %arg2[%c2_91, %c0_92, %c0_93] : memref<4x128x128xf32, #tpu.memory_space<vmem>>, vector<1x128x128xf32>
    %124 = vector.shape_cast %123 : vector<1x128x128xf32> to vector<128x128xf32>
    %c0_94 = arith.constant 0 : index
    %c2_95 = arith.constant 2 : index
    %125 = vector.load %arg17[%c0_94, %c2_95] : memref<128x4xf32, #tpu.memory_space<vmem>>, vector<128x1xf32>
    %126 = vector.broadcast %125 : vector<128x1xf32> to vector<128x128xf32>
    %127 = arith.mulf %124, %126 : vector<128x128xf32>
    %128 = arith.addf %122, %127 : vector<128x128xf32>
    %c3_96 = arith.constant 3 : index
    %c0_97 = arith.constant 0 : index
    %c0_98 = arith.constant 0 : index
    %129 = vector.load %arg2[%c3_96, %c0_97, %c0_98] : memref<4x128x128xf32, #tpu.memory_space<vmem>>, vector<1x128x128xf32>
    %130 = vector.shape_cast %129 : vector<1x128x128xf32> to vector<128x128xf32>
    %c0_99 = arith.constant 0 : index
    %c3_100 = arith.constant 3 : index
    %131 = vector.load %arg17[%c0_99, %c3_100] : memref<128x4xf32, #tpu.memory_space<vmem>>, vector<128x1xf32>
    %132 = vector.broadcast %131 : vector<128x1xf32> to vector<128x128xf32>
    %133 = arith.mulf %130, %132 : vector<128x128xf32>
    %134 = arith.addf %128, %133 : vector<128x128xf32>
    %cst_101 = arith.constant 0.176776692 : f32
    %135 = vector.broadcast %cst_101 : f32 to vector<128x128xf32>
    %136 = arith.mulf %134, %135 : vector<128x128xf32>
    %cst_102 = arith.constant 0.000000e+00 : f32
    %137 = vector.broadcast %cst_102 : f32 to vector<128x128xf32>
    %138 = arith.cmpf ogt, %0, %137 : vector<128x128xf32>
    %cst_103 = arith.constant -1.000000e+30 : f32
    %139 = vector.broadcast %cst_103 : f32 to vector<128x128xf32>
    %140 = arith.select %138, %136, %139 : vector<128x128xi1>, vector<128x128xf32>
    %cst_104 = arith.constant dense<0xFF800000> : vector<128xf32>
    %141 = vector.multi_reduction <maximumf>, %140, %cst_104 [1] : vector<128x128xf32> to vector<128xf32>
    %142 = vector.shape_cast %141 : vector<128xf32> to vector<128x1xf32>
    %143 = vector.broadcast %142 : vector<128x1xf32> to vector<128x128xf32>
    %144 = arith.subf %140, %143 : vector<128x128xf32>
    %145 = math.exp %144 : vector<128x128xf32>
    %146 = arith.mulf %145, %0 : vector<128x128xf32>
    %cst_105 = arith.constant dense<0.000000e+00> : vector<128xf32>
    %147 = vector.multi_reduction <add>, %146, %cst_105 [1] : vector<128x128xf32> to vector<128xf32>
    %148 = vector.shape_cast %147 : vector<128xf32> to vector<128x1xf32>
    %cst_106 = arith.constant 1.000000e-30 : f32
    %149 = vector.broadcast %cst_106 : f32 to vector<128x1xf32>
    %150 = arith.maximumf %148, %149 : vector<128x1xf32>
    %151 = tpu.reciprocal %150 {approx = true} : vector<128x1xf32> -> vector<128x1xf32>
    %152 = vector.broadcast %151 : vector<128x1xf32> to vector<128x128xf32>
    %153 = arith.mulf %146, %152 : vector<128x128xf32>
    %cst_107 = arith.constant dense<0.000000e+00> : vector<128x32xf32>
    %154 = tpu.matmul %153, %107, %cst_107 {dimension_numbers = #tpu.dot_dimension_numbers<[1], [0], [0], [1], [0, 0, 1, 1], [], []>} : vector<128x128xf32>, vector<128x32xf32>, vector<128x32xf32> -> vector<128x32xf32>
    %c0_108 = arith.constant 0 : index
    %c0_109 = arith.constant 0 : index
    %c0_110 = arith.constant 0 : index
    %155 = vector.load %arg2[%c0_108, %c0_109, %c0_110] : memref<4x128x128xf32, #tpu.memory_space<vmem>>, vector<1x128x128xf32>
    %156 = vector.shape_cast %155 : vector<1x128x128xf32> to vector<128x128xf32>
    %157 = arith.mulf %153, %156 : vector<128x128xf32>
    %cst_111 = arith.constant dense<0.000000e+00> : vector<128xf32>
    %158 = vector.multi_reduction <add>, %157, %cst_111 [1] : vector<128x128xf32> to vector<128xf32>
    %159 = vector.shape_cast %158 : vector<128xf32> to vector<128x1xf32>
    %c1_112 = arith.constant 1 : index
    %c0_113 = arith.constant 0 : index
    %c0_114 = arith.constant 0 : index
    %160 = vector.load %arg2[%c1_112, %c0_113, %c0_114] : memref<4x128x128xf32, #tpu.memory_space<vmem>>, vector<1x128x128xf32>
    %161 = vector.shape_cast %160 : vector<1x128x128xf32> to vector<128x128xf32>
    %162 = arith.mulf %153, %161 : vector<128x128xf32>
    %cst_115 = arith.constant dense<0.000000e+00> : vector<128xf32>
    %163 = vector.multi_reduction <add>, %162, %cst_115 [1] : vector<128x128xf32> to vector<128xf32>
    %164 = vector.shape_cast %163 : vector<128xf32> to vector<128x1xf32>
    %c2_116 = arith.constant 2 : index
    %c0_117 = arith.constant 0 : index
    %c0_118 = arith.constant 0 : index
    %165 = vector.load %arg2[%c2_116, %c0_117, %c0_118] : memref<4x128x128xf32, #tpu.memory_space<vmem>>, vector<1x128x128xf32>
    %166 = vector.shape_cast %165 : vector<1x128x128xf32> to vector<128x128xf32>
    %167 = arith.mulf %153, %166 : vector<128x128xf32>
    %cst_119 = arith.constant dense<0.000000e+00> : vector<128xf32>
    %168 = vector.multi_reduction <add>, %167, %cst_119 [1] : vector<128x128xf32> to vector<128xf32>
    %169 = vector.shape_cast %168 : vector<128xf32> to vector<128x1xf32>
    %c3_120 = arith.constant 3 : index
    %c0_121 = arith.constant 0 : index
    %c0_122 = arith.constant 0 : index
    %170 = vector.load %arg2[%c3_120, %c0_121, %c0_122] : memref<4x128x128xf32, #tpu.memory_space<vmem>>, vector<1x128x128xf32>
    %171 = vector.shape_cast %170 : vector<1x128x128xf32> to vector<128x128xf32>
    %172 = arith.mulf %153, %171 : vector<128x128xf32>
    %cst_123 = arith.constant dense<0.000000e+00> : vector<128xf32>
    %173 = vector.multi_reduction <add>, %172, %cst_123 [1] : vector<128x128xf32> to vector<128xf32>
    %174 = vector.shape_cast %173 : vector<128xf32> to vector<128x1xf32>
    %175 = tpu.concatenate %159, %164, %169, %174 in 1 : vector<128x1xf32>, vector<128x1xf32>, vector<128x1xf32>, vector<128x1xf32> -> vector<128x4xf32>
    %cst_124 = arith.constant dense<0.000000e+00> : vector<128x32xf32>
    %176 = tpu.matmul %175, %1, %cst_124 {dimension_numbers = #tpu.dot_dimension_numbers<[1], [0], [0], [1], [0, 0, 1, 1], [], []>} : vector<128x4xf32>, vector<4x32xf32>, vector<128x32xf32> -> vector<128x32xf32>
    %177 = arith.addf %154, %176 : vector<128x32xf32>
    %c0_125 = arith.constant 0 : index
    %c96_126 = arith.constant 96 : index
    %178 = vector.load %arg16[%c0_125, %c96_126] : memref<128x128xf32, #tpu.memory_space<vmem>>, vector<128x32xf32>
    %179 = arith.addf %177, %178 : vector<128x32xf32>
    %180 = arith.negf %179 : vector<128x32xf32>
    %181 = math.exp %180 : vector<128x32xf32>
    %cst_127 = arith.constant 1.000000e+00 : f32
    %182 = vector.broadcast %cst_127 : f32 to vector<128x32xf32>
    %183 = arith.addf %182, %181 : vector<128x32xf32>
    %184 = arith.divf %182, %183 : vector<128x32xf32>
    %185 = arith.mulf %179, %184 : vector<128x32xf32>
    %cst_128 = arith.constant dense<0.000000e+00> : vector<128x128xf32>
    %186 = tpu.matmul %185, %2, %cst_128 {dimension_numbers = #tpu.dot_dimension_numbers<[1], [0], [0], [1], [0, 0, 1, 1], [], []>} : vector<128x32xf32>, vector<32x128xf32>, vector<128x128xf32> -> vector<128x128xf32>
    %187 = vector.broadcast %3 : vector<1x128xf32> to vector<128x128xf32>
    %188 = arith.addf %186, %187 : vector<128x128xf32>
    %c0_129 = arith.constant 0 : index
    %c0_130 = arith.constant 0 : index
    %189 = vector.load %arg16[%c0_129, %c0_130] : memref<128x128xf32, #tpu.memory_space<vmem>>, vector<128x128xf32>
    tpu.vector_store %arg16[%c0_129, %c0_130], %188 {strides = array<i32>} : memref<128x128xf32, #tpu.memory_space<vmem>>, vector<128x128xf32>,
    %c0_131 = arith.constant 0 : index
    %c0_132 = arith.constant 0 : index
    %190 = vector.load %arg16[%c0_131, %c0_132] : memref<128x128xf32, #tpu.memory_space<vmem>>, vector<128x32xf32>
    %c0_133 = arith.constant 0 : index
    %c32_134 = arith.constant 32 : index
    %191 = vector.load %arg16[%c0_133, %c32_134] : memref<128x128xf32, #tpu.memory_space<vmem>>, vector<128x32xf32>
    %c0_135 = arith.constant 0 : index
    %c64_136 = arith.constant 64 : index
    %192 = vector.load %arg16[%c0_135, %c64_136] : memref<128x128xf32, #tpu.memory_space<vmem>>, vector<128x32xf32>
    %cst_137 = arith.constant dense<0.000000e+00> : vector<128x4xf32>
    %193 = tpu.matmul %190, %1, %cst_137 {dimension_numbers = #tpu.dot_dimension_numbers<[1], [1], [0], [0], [0, 0, 1, 0], [], []>} : vector<128x32xf32>, vector<4x32xf32>, vector<128x4xf32> -> vector<128x4xf32>
    %c0_138 = arith.constant 0 : index
    %c0_139 = arith.constant 0 : index
    %194 = vector.load %arg17[%c0_138, %c0_139] : memref<128x4xf32, #tpu.memory_space<vmem>>, vector<128x4xf32>
    tpu.vector_store %arg17[%c0_138, %c0_139], %193 {strides = array<i32>} : memref<128x4xf32, #tpu.memory_space<vmem>>, vector<128x4xf32>,
    %cst_140 = arith.constant dense<0.000000e+00> : vector<128x128xf32>
    %195 = tpu.matmul %190, %191, %cst_140 {dimension_numbers = #tpu.dot_dimension_numbers<[1], [1], [0], [0], [0, 0, 1, 0], [], []>} : vector<128x32xf32>, vector<128x32xf32>, vector<128x128xf32> -> vector<128x128xf32>
    %c0_141 = arith.constant 0 : index
    %c0_142 = arith.constant 0 : index
    %c0_143 = arith.constant 0 : index
    %196 = vector.load %arg2[%c0_141, %c0_142, %c0_143] : memref<4x128x128xf32, #tpu.memory_space<vmem>>, vector<1x128x128xf32>
    %197 = vector.shape_cast %196 : vector<1x128x128xf32> to vector<128x128xf32>
    %c0_144 = arith.constant 0 : index
    %c0_145 = arith.constant 0 : index
    %198 = vector.load %arg17[%c0_144, %c0_145] : memref<128x4xf32, #tpu.memory_space<vmem>>, vector<128x1xf32>
    %199 = vector.broadcast %198 : vector<128x1xf32> to vector<128x128xf32>
    %200 = arith.mulf %197, %199 : vector<128x128xf32>
    %201 = arith.addf %195, %200 : vector<128x128xf32>
    %c1_146 = arith.constant 1 : index
    %c0_147 = arith.constant 0 : index
    %c0_148 = arith.constant 0 : index
    %202 = vector.load %arg2[%c1_146, %c0_147, %c0_148] : memref<4x128x128xf32, #tpu.memory_space<vmem>>, vector<1x128x128xf32>
    %203 = vector.shape_cast %202 : vector<1x128x128xf32> to vector<128x128xf32>
    %c0_149 = arith.constant 0 : index
    %c1_150 = arith.constant 1 : index
    %204 = vector.load %arg17[%c0_149, %c1_150] : memref<128x4xf32, #tpu.memory_space<vmem>>, vector<128x1xf32>
    %205 = vector.broadcast %204 : vector<128x1xf32> to vector<128x128xf32>
    %206 = arith.mulf %203, %205 : vector<128x128xf32>
    %207 = arith.addf %201, %206 : vector<128x128xf32>
    %c2_151 = arith.constant 2 : index
    %c0_152 = arith.constant 0 : index
    %c0_153 = arith.constant 0 : index
    %208 = vector.load %arg2[%c2_151, %c0_152, %c0_153] : memref<4x128x128xf32, #tpu.memory_space<vmem>>, vector<1x128x128xf32>
    %209 = vector.shape_cast %208 : vector<1x128x128xf32> to vector<128x128xf32>
    %c0_154 = arith.constant 0 : index
    %c2_155 = arith.constant 2 : index
    %210 = vector.load %arg17[%c0_154, %c2_155] : memref<128x4xf32, #tpu.memory_space<vmem>>, vector<128x1xf32>
    %211 = vector.broadcast %210 : vector<128x1xf32> to vector<128x128xf32>
    %212 = arith.mulf %209, %211 : vector<128x128xf32>
    %213 = arith.addf %207, %212 : vector<128x128xf32>
    %c3_156 = arith.constant 3 : index
    %c0_157 = arith.constant 0 : index
    %c0_158 = arith.constant 0 : index
    %214 = vector.load %arg2[%c3_156, %c0_157, %c0_158] : memref<4x128x128xf32, #tpu.memory_space<vmem>>, vector<1x128x128xf32>
    %215 = vector.shape_cast %214 : vector<1x128x128xf32> to vector<128x128xf32>
    %c0_159 = arith.constant 0 : index
    %c3_160 = arith.constant 3 : index
    %216 = vector.load %arg17[%c0_159, %c3_160] : memref<128x4xf32, #tpu.memory_space<vmem>>, vector<128x1xf32>
    %217 = vector.broadcast %216 : vector<128x1xf32> to vector<128x128xf32>
    %218 = arith.mulf %215, %217 : vector<128x128xf32>
    %219 = arith.addf %213, %218 : vector<128x128xf32>
    %cst_161 = arith.constant 0.176776692 : f32
    %220 = vector.broadcast %cst_161 : f32 to vector<128x128xf32>
    %221 = arith.mulf %219, %220 : vector<128x128xf32>
    %cst_162 = arith.constant 0.000000e+00 : f32
    %222 = vector.broadcast %cst_162 : f32 to vector<128x128xf32>
    %223 = arith.cmpf ogt, %0, %222 : vector<128x128xf32>
    %cst_163 = arith.constant -1.000000e+30 : f32
    %224 = vector.broadcast %cst_163 : f32 to vector<128x128xf32>
    %225 = arith.select %223, %221, %224 : vector<128x128xi1>, vector<128x128xf32>
    %cst_164 = arith.constant dense<0xFF800000> : vector<128xf32>
    %226 = vector.multi_reduction <maximumf>, %225, %cst_164 [1] : vector<128x128xf32> to vector<128xf32>
    %227 = vector.shape_cast %226 : vector<128xf32> to vector<128x1xf32>
    %228 = vector.broadcast %227 : vector<128x1xf32> to vector<128x128xf32>
    %229 = arith.subf %225, %228 : vector<128x128xf32>
    %230 = math.exp %229 : vector<128x128xf32>
    %231 = arith.mulf %230, %0 : vector<128x128xf32>
    %cst_165 = arith.constant dense<0.000000e+00> : vector<128xf32>
    %232 = vector.multi_reduction <add>, %231, %cst_165 [1] : vector<128x128xf32> to vector<128xf32>
    %233 = vector.shape_cast %232 : vector<128xf32> to vector<128x1xf32>
    %cst_166 = arith.constant 1.000000e-30 : f32
    %234 = vector.broadcast %cst_166 : f32 to vector<128x1xf32>
    %235 = arith.maximumf %233, %234 : vector<128x1xf32>
    %236 = tpu.reciprocal %235 {approx = true} : vector<128x1xf32> -> vector<128x1xf32>
    %237 = vector.broadcast %236 : vector<128x1xf32> to vector<128x128xf32>
    %238 = arith.mulf %231, %237 : vector<128x128xf32>
    %cst_167 = arith.constant dense<0.000000e+00> : vector<128x32xf32>
    %239 = tpu.matmul %238, %192, %cst_167 {dimension_numbers = #tpu.dot_dimension_numbers<[1], [0], [0], [1], [0, 0, 1, 1], [], []>} : vector<128x128xf32>, vector<128x32xf32>, vector<128x32xf32> -> vector<128x32xf32>
    %c0_168 = arith.constant 0 : index
    %c0_169 = arith.constant 0 : index
    %c0_170 = arith.constant 0 : index
    %240 = vector.load %arg2[%c0_168, %c0_169, %c0_170] : memref<4x128x128xf32, #tpu.memory_space<vmem>>, vector<1x128x128xf32>
    %241 = vector.shape_cast %240 : vector<1x128x128xf32> to vector<128x128xf32>
    %242 = arith.mulf %238, %241 : vector<128x128xf32>
    %cst_171 = arith.constant dense<0.000000e+00> : vector<128xf32>
    %243 = vector.multi_reduction <add>, %242, %cst_171 [1] : vector<128x128xf32> to vector<128xf32>
    %244 = vector.shape_cast %243 : vector<128xf32> to vector<128x1xf32>
    %c1_172 = arith.constant 1 : index
    %c0_173 = arith.constant 0 : index
    %c0_174 = arith.constant 0 : index
    %245 = vector.load %arg2[%c1_172, %c0_173, %c0_174] : memref<4x128x128xf32, #tpu.memory_space<vmem>>, vector<1x128x128xf32>
    %246 = vector.shape_cast %245 : vector<1x128x128xf32> to vector<128x128xf32>
    %247 = arith.mulf %238, %246 : vector<128x128xf32>
    %cst_175 = arith.constant dense<0.000000e+00> : vector<128xf32>
    %248 = vector.multi_reduction <add>, %247, %cst_175 [1] : vector<128x128xf32> to vector<128xf32>
    %249 = vector.shape_cast %248 : vector<128xf32> to vector<128x1xf32>
    %c2_176 = arith.constant 2 : index
    %c0_177 = arith.constant 0 : index
    %c0_178 = arith.constant 0 : index
    %250 = vector.load %arg2[%c2_176, %c0_177, %c0_178] : memref<4x128x128xf32, #tpu.memory_space<vmem>>, vector<1x128x128xf32>
    %251 = vector.shape_cast %250 : vector<1x128x128xf32> to vector<128x128xf32>
    %252 = arith.mulf %238, %251 : vector<128x128xf32>
    %cst_179 = arith.constant dense<0.000000e+00> : vector<128xf32>
    %253 = vector.multi_reduction <add>, %252, %cst_179 [1] : vector<128x128xf32> to vector<128xf32>
    %254 = vector.shape_cast %253 : vector<128xf32> to vector<128x1xf32>
    %c3_180 = arith.constant 3 : index
    %c0_181 = arith.constant 0 : index
    %c0_182 = arith.constant 0 : index
    %255 = vector.load %arg2[%c3_180, %c0_181, %c0_182] : memref<4x128x128xf32, #tpu.memory_space<vmem>>, vector<1x128x128xf32>
    %256 = vector.shape_cast %255 : vector<1x128x128xf32> to vector<128x128xf32>
    %257 = arith.mulf %238, %256 : vector<128x128xf32>
    %cst_183 = arith.constant dense<0.000000e+00> : vector<128xf32>
    %258 = vector.multi_reduction <add>, %257, %cst_183 [1] : vector<128x128xf32> to vector<128xf32>
    %259 = vector.shape_cast %258 : vector<128xf32> to vector<128x1xf32>
    %260 = tpu.concatenate %244, %249, %254, %259 in 1 : vector<128x1xf32>, vector<128x1xf32>, vector<128x1xf32>, vector<128x1xf32> -> vector<128x4xf32>
    %cst_184 = arith.constant dense<0.000000e+00> : vector<128x32xf32>
    %261 = tpu.matmul %260, %1, %cst_184 {dimension_numbers = #tpu.dot_dimension_numbers<[1], [0], [0], [1], [0, 0, 1, 1], [], []>} : vector<128x4xf32>, vector<4x32xf32>, vector<128x32xf32> -> vector<128x32xf32>
    %262 = arith.addf %239, %261 : vector<128x32xf32>
    %c0_185 = arith.constant 0 : index
    %c96_186 = arith.constant 96 : index
    %263 = vector.load %arg16[%c0_185, %c96_186] : memref<128x128xf32, #tpu.memory_space<vmem>>, vector<128x32xf32>
    %264 = arith.addf %262, %263 : vector<128x32xf32>
    %265 = arith.negf %264 : vector<128x32xf32>
    %266 = math.exp %265 : vector<128x32xf32>
    %cst_187 = arith.constant 1.000000e+00 : f32
    %267 = vector.broadcast %cst_187 : f32 to vector<128x32xf32>
    %268 = arith.addf %267, %266 : vector<128x32xf32>
    %269 = arith.divf %267, %268 : vector<128x32xf32>
    %270 = arith.mulf %264, %269 : vector<128x32xf32>
    %cst_188 = arith.constant dense<0.000000e+00> : vector<128x128xf32>
    %271 = tpu.matmul %270, %2, %cst_188 {dimension_numbers = #tpu.dot_dimension_numbers<[1], [0], [0], [1], [0, 0, 1, 1], [], []>} : vector<128x32xf32>, vector<32x128xf32>, vector<128x128xf32> -> vector<128x128xf32>
    %272 = vector.broadcast %3 : vector<1x128xf32> to vector<128x128xf32>
    %273 = arith.addf %271, %272 : vector<128x128xf32>
    %c0_189 = arith.constant 0 : index
    %c0_190 = arith.constant 0 : index
    %274 = vector.load %arg16[%c0_189, %c0_190] : memref<128x128xf32, #tpu.memory_space<vmem>>, vector<128x128xf32>
    tpu.vector_store %arg16[%c0_189, %c0_190], %273 {strides = array<i32>} : memref<128x128xf32, #tpu.memory_space<vmem>>, vector<128x128xf32>,
    %c0_191 = arith.constant 0 : index
    %c0_192 = arith.constant 0 : index
    %275 = vector.load %arg16[%c0_191, %c0_192] : memref<128x128xf32, #tpu.memory_space<vmem>>, vector<128x32xf32>
    %c0_193 = arith.constant 0 : index
    %c32_194 = arith.constant 32 : index
    %276 = vector.load %arg16[%c0_193, %c32_194] : memref<128x128xf32, #tpu.memory_space<vmem>>, vector<128x32xf32>
    %c0_195 = arith.constant 0 : index
    %c64_196 = arith.constant 64 : index
    %277 = vector.load %arg16[%c0_195, %c64_196] : memref<128x128xf32, #tpu.memory_space<vmem>>, vector<128x32xf32>
    %cst_197 = arith.constant dense<0.000000e+00> : vector<128x4xf32>
    %278 = tpu.matmul %275, %1, %cst_197 {dimension_numbers = #tpu.dot_dimension_numbers<[1], [1], [0], [0], [0, 0, 1, 0], [], []>} : vector<128x32xf32>, vector<4x32xf32>, vector<128x4xf32> -> vector<128x4xf32>
    %c0_198 = arith.constant 0 : index
    %c0_199 = arith.constant 0 : index
    %279 = vector.load %arg17[%c0_198, %c0_199] : memref<128x4xf32, #tpu.memory_space<vmem>>, vector<128x4xf32>
    tpu.vector_store %arg17[%c0_198, %c0_199], %278 {strides = array<i32>} : memref<128x4xf32, #tpu.memory_space<vmem>>, vector<128x4xf32>,
    %cst_200 = arith.constant dense<0.000000e+00> : vector<128x128xf32>
    %280 = tpu.matmul %275, %276, %cst_200 {dimension_numbers = #tpu.dot_dimension_numbers<[1], [1], [0], [0], [0, 0, 1, 0], [], []>} : vector<128x32xf32>, vector<128x32xf32>, vector<128x128xf32> -> vector<128x128xf32>
    %c0_201 = arith.constant 0 : index
    %c0_202 = arith.constant 0 : index
    %c0_203 = arith.constant 0 : index
    %281 = vector.load %arg2[%c0_201, %c0_202, %c0_203] : memref<4x128x128xf32, #tpu.memory_space<vmem>>, vector<1x128x128xf32>
    %282 = vector.shape_cast %281 : vector<1x128x128xf32> to vector<128x128xf32>
    %c0_204 = arith.constant 0 : index
    %c0_205 = arith.constant 0 : index
    %283 = vector.load %arg17[%c0_204, %c0_205] : memref<128x4xf32, #tpu.memory_space<vmem>>, vector<128x1xf32>
    %284 = vector.broadcast %283 : vector<128x1xf32> to vector<128x128xf32>
    %285 = arith.mulf %282, %284 : vector<128x128xf32>
    %286 = arith.addf %280, %285 : vector<128x128xf32>
    %c1_206 = arith.constant 1 : index
    %c0_207 = arith.constant 0 : index
    %c0_208 = arith.constant 0 : index
    %287 = vector.load %arg2[%c1_206, %c0_207, %c0_208] : memref<4x128x128xf32, #tpu.memory_space<vmem>>, vector<1x128x128xf32>
    %288 = vector.shape_cast %287 : vector<1x128x128xf32> to vector<128x128xf32>
    %c0_209 = arith.constant 0 : index
    %c1_210 = arith.constant 1 : index
    %289 = vector.load %arg17[%c0_209, %c1_210] : memref<128x4xf32, #tpu.memory_space<vmem>>, vector<128x1xf32>
    %290 = vector.broadcast %289 : vector<128x1xf32> to vector<128x128xf32>
    %291 = arith.mulf %288, %290 : vector<128x128xf32>
    %292 = arith.addf %286, %291 : vector<128x128xf32>
    %c2_211 = arith.constant 2 : index
    %c0_212 = arith.constant 0 : index
    %c0_213 = arith.constant 0 : index
    %293 = vector.load %arg2[%c2_211, %c0_212, %c0_213] : memref<4x128x128xf32, #tpu.memory_space<vmem>>, vector<1x128x128xf32>
    %294 = vector.shape_cast %293 : vector<1x128x128xf32> to vector<128x128xf32>
    %c0_214 = arith.constant 0 : index
    %c2_215 = arith.constant 2 : index
    %295 = vector.load %arg17[%c0_214, %c2_215] : memref<128x4xf32, #tpu.memory_space<vmem>>, vector<128x1xf32>
    %296 = vector.broadcast %295 : vector<128x1xf32> to vector<128x128xf32>
    %297 = arith.mulf %294, %296 : vector<128x128xf32>
    %298 = arith.addf %292, %297 : vector<128x128xf32>
    %c3_216 = arith.constant 3 : index
    %c0_217 = arith.constant 0 : index
    %c0_218 = arith.constant 0 : index
    %299 = vector.load %arg2[%c3_216, %c0_217, %c0_218] : memref<4x128x128xf32, #tpu.memory_space<vmem>>, vector<1x128x128xf32>
    %300 = vector.shape_cast %299 : vector<1x128x128xf32> to vector<128x128xf32>
    %c0_219 = arith.constant 0 : index
    %c3_220 = arith.constant 3 : index
    %301 = vector.load %arg17[%c0_219, %c3_220] : memref<128x4xf32, #tpu.memory_space<vmem>>, vector<128x1xf32>
    %302 = vector.broadcast %301 : vector<128x1xf32> to vector<128x128xf32>
    %303 = arith.mulf %300, %302 : vector<128x128xf32>
    %304 = arith.addf %298, %303 : vector<128x128xf32>
    %cst_221 = arith.constant 0.176776692 : f32
    %305 = vector.broadcast %cst_221 : f32 to vector<128x128xf32>
    %306 = arith.mulf %304, %305 : vector<128x128xf32>
    %cst_222 = arith.constant 0.000000e+00 : f32
    %307 = vector.broadcast %cst_222 : f32 to vector<128x128xf32>
    %308 = arith.cmpf ogt, %0, %307 : vector<128x128xf32>
    %cst_223 = arith.constant -1.000000e+30 : f32
    %309 = vector.broadcast %cst_223 : f32 to vector<128x128xf32>
    %310 = arith.select %308, %306, %309 : vector<128x128xi1>, vector<128x128xf32>
    %cst_224 = arith.constant dense<0xFF800000> : vector<128xf32>
    %311 = vector.multi_reduction <maximumf>, %310, %cst_224 [1] : vector<128x128xf32> to vector<128xf32>
    %312 = vector.shape_cast %311 : vector<128xf32> to vector<128x1xf32>
    %313 = vector.broadcast %312 : vector<128x1xf32> to vector<128x128xf32>
    %314 = arith.subf %310, %313 : vector<128x128xf32>
    %315 = math.exp %314 : vector<128x128xf32>
    %316 = arith.mulf %315, %0 : vector<128x128xf32>
    %cst_225 = arith.constant dense<0.000000e+00> : vector<128xf32>
    %317 = vector.multi_reduction <add>, %316, %cst_225 [1] : vector<128x128xf32> to vector<128xf32>
    %318 = vector.shape_cast %317 : vector<128xf32> to vector<128x1xf32>
    %cst_226 = arith.constant 1.000000e-30 : f32
    %319 = vector.broadcast %cst_226 : f32 to vector<128x1xf32>
    %320 = arith.maximumf %318, %319 : vector<128x1xf32>
    %321 = tpu.reciprocal %320 {approx = true} : vector<128x1xf32> -> vector<128x1xf32>
    %322 = vector.broadcast %321 : vector<128x1xf32> to vector<128x128xf32>
    %323 = arith.mulf %316, %322 : vector<128x128xf32>
    %cst_227 = arith.constant dense<0.000000e+00> : vector<128x32xf32>
    %324 = tpu.matmul %323, %277, %cst_227 {dimension_numbers = #tpu.dot_dimension_numbers<[1], [0], [0], [1], [0, 0, 1, 1], [], []>} : vector<128x128xf32>, vector<128x32xf32>, vector<128x32xf32> -> vector<128x32xf32>
    %c0_228 = arith.constant 0 : index
    %c0_229 = arith.constant 0 : index
    %c0_230 = arith.constant 0 : index
    %325 = vector.load %arg2[%c0_228, %c0_229, %c0_230] : memref<4x128x128xf32, #tpu.memory_space<vmem>>, vector<1x128x128xf32>
    %326 = vector.shape_cast %325 : vector<1x128x128xf32> to vector<128x128xf32>
    %327 = arith.mulf %323, %326 : vector<128x128xf32>
    %cst_231 = arith.constant dense<0.000000e+00> : vector<128xf32>
    %328 = vector.multi_reduction <add>, %327, %cst_231 [1] : vector<128x128xf32> to vector<128xf32>
    %329 = vector.shape_cast %328 : vector<128xf32> to vector<128x1xf32>
    %c1_232 = arith.constant 1 : index
    %c0_233 = arith.constant 0 : index
    %c0_234 = arith.constant 0 : index
    %330 = vector.load %arg2[%c1_232, %c0_233, %c0_234] : memref<4x128x128xf32, #tpu.memory_space<vmem>>, vector<1x128x128xf32>
    %331 = vector.shape_cast %330 : vector<1x128x128xf32> to vector<128x128xf32>
    %332 = arith.mulf %323, %331 : vector<128x128xf32>
    %cst_235 = arith.constant dense<0.000000e+00> : vector<128xf32>
    %333 = vector.multi_reduction <add>, %332, %cst_235 [1] : vector<128x128xf32> to vector<128xf32>
    %334 = vector.shape_cast %333 : vector<128xf32> to vector<128x1xf32>
    %c2_236 = arith.constant 2 : index
    %c0_237 = arith.constant 0 : index
    %c0_238 = arith.constant 0 : index
    %335 = vector.load %arg2[%c2_236, %c0_237, %c0_238] : memref<4x128x128xf32, #tpu.memory_space<vmem>>, vector<1x128x128xf32>
    %336 = vector.shape_cast %335 : vector<1x128x128xf32> to vector<128x128xf32>
    %337 = arith.mulf %323, %336 : vector<128x128xf32>
    %cst_239 = arith.constant dense<0.000000e+00> : vector<128xf32>
    %338 = vector.multi_reduction <add>, %337, %cst_239 [1] : vector<128x128xf32> to vector<128xf32>
    %339 = vector.shape_cast %338 : vector<128xf32> to vector<128x1xf32>
    %c3_240 = arith.constant 3 : index
    %c0_241 = arith.constant 0 : index
    %c0_242 = arith.constant 0 : index
    %340 = vector.load %arg2[%c3_240, %c0_241, %c0_242] : memref<4x128x128xf32, #tpu.memory_space<vmem>>, vector<1x128x128xf32>
    %341 = vector.shape_cast %340 : vector<1x128x128xf32> to vector<128x128xf32>
    %342 = arith.mulf %323, %341 : vector<128x128xf32>
    %cst_243 = arith.constant dense<0.000000e+00> : vector<128xf32>
    %343 = vector.multi_reduction <add>, %342, %cst_243 [1] : vector<128x128xf32> to vector<128xf32>
    %344 = vector.shape_cast %343 : vector<128xf32> to vector<128x1xf32>
    %345 = tpu.concatenate %329, %334, %339, %344 in 1 : vector<128x1xf32>, vector<128x1xf32>, vector<128x1xf32>, vector<128x1xf32> -> vector<128x4xf32>
    %cst_244 = arith.constant dense<0.000000e+00> : vector<128x32xf32>
    %346 = tpu.matmul %345, %1, %cst_244 {dimension_numbers = #tpu.dot_dimension_numbers<[1], [0], [0], [1], [0, 0, 1, 1], [], []>} : vector<128x4xf32>, vector<4x32xf32>, vector<128x32xf32> -> vector<128x32xf32>
    %347 = arith.addf %324, %346 : vector<128x32xf32>
    %c0_245 = arith.constant 0 : index
    %c96_246 = arith.constant 96 : index
    %348 = vector.load %arg16[%c0_245, %c96_246] : memref<128x128xf32, #tpu.memory_space<vmem>>, vector<128x32xf32>
    %349 = arith.addf %347, %348 : vector<128x32xf32>
    %350 = arith.negf %349 : vector<128x32xf32>
    %351 = math.exp %350 : vector<128x32xf32>
    %cst_247 = arith.constant 1.000000e+00 : f32
    %352 = vector.broadcast %cst_247 : f32 to vector<128x32xf32>
    %353 = arith.addf %352, %351 : vector<128x32xf32>
    %354 = arith.divf %352, %353 : vector<128x32xf32>
    %355 = arith.mulf %349, %354 : vector<128x32xf32>
    %c0_248 = arith.constant 0 : index
    %c0_249 = arith.constant 0 : index
    %356 = vector.load %arg3[%c0_248, %c0_249] : memref<8x128xf32, #tpu.memory_space<vmem>>, vector<8x128xf32>
    %cst_250 = arith.constant dense<0.000000e+00> : vector<8x32xf32>
    %357 = tpu.matmul %356, %355, %cst_250 {dimension_numbers = #tpu.dot_dimension_numbers<[1], [0], [0], [1], [0, 0, 1, 1], [], []>} : vector<8x128xf32>, vector<128x32xf32>, vector<8x32xf32> -> vector<8x32xf32>
    %c0_251 = arith.constant 0 : index
    %c0_252 = arith.constant 0 : index
    %358 = vector.load %arg9[%c0_251, %c0_252] : memref<32x32xf32, #tpu.memory_space<vmem>>, vector<32x32xf32>
    %cst_253 = arith.constant dense<0.000000e+00> : vector<8x32xf32>
    %359 = tpu.matmul %357, %358, %cst_253 {dimension_numbers = #tpu.dot_dimension_numbers<[1], [0], [0], [1], [0, 0, 1, 1], [], []>} : vector<8x32xf32>, vector<32x32xf32>, vector<8x32xf32> -> vector<8x32xf32>
    %c0_254 = arith.constant 0 : index
    %c0_255 = arith.constant 0 : index
    %360 = vector.load %arg10[%c0_254, %c0_255] : memref<1x32xf32, #tpu.memory_space<vmem>>, vector<1x32xf32>
    %361 = vector.broadcast %360 : vector<1x32xf32> to vector<8x32xf32>
    %362 = arith.addf %359, %361 : vector<8x32xf32>
    %363 = arith.negf %362 : vector<8x32xf32>
    %364 = math.exp %363 : vector<8x32xf32>
    %cst_256 = arith.constant 1.000000e+00 : f32
    %365 = vector.broadcast %cst_256 : f32 to vector<8x32xf32>
    %366 = arith.addf %365, %364 : vector<8x32xf32>
    %367 = arith.divf %365, %366 : vector<8x32xf32>
    %368 = arith.mulf %362, %367 : vector<8x32xf32>
    %c0_257 = arith.constant 0 : index
    %c0_258 = arith.constant 0 : index
    %369 = vector.load %arg11[%c0_257, %c0_258] : memref<32x32xf32, #tpu.memory_space<vmem>>, vector<32x32xf32>
    %cst_259 = arith.constant dense<0.000000e+00> : vector<8x32xf32>
    %370 = tpu.matmul %368, %369, %cst_259 {dimension_numbers = #tpu.dot_dimension_numbers<[1], [0], [0], [1], [0, 0, 1, 1], [], []>} : vector<8x32xf32>, vector<32x32xf32>, vector<8x32xf32> -> vector<8x32xf32>
    %c0_260 = arith.constant 0 : index
    %c0_261 = arith.constant 0 : index
    %371 = vector.load %arg12[%c0_260, %c0_261] : memref<1x32xf32, #tpu.memory_space<vmem>>, vector<1x32xf32>
    %372 = vector.broadcast %371 : vector<1x32xf32> to vector<8x32xf32>
    %373 = arith.addf %370, %372 : vector<8x32xf32>
    %374 = arith.negf %373 : vector<8x32xf32>
    %375 = math.exp %374 : vector<8x32xf32>
    %cst_262 = arith.constant 1.000000e+00 : f32
    %376 = vector.broadcast %cst_262 : f32 to vector<8x32xf32>
    %377 = arith.addf %376, %375 : vector<8x32xf32>
    %378 = arith.divf %376, %377 : vector<8x32xf32>
    %379 = arith.mulf %373, %378 : vector<8x32xf32>
    %c0_263 = arith.constant 0 : index
    %c0_264 = arith.constant 0 : index
    %380 = vector.load %arg13[%c0_263, %c0_264] : memref<32x8xf32, #tpu.memory_space<vmem>>, vector<32x8xf32>
    %cst_265 = arith.constant dense<0.000000e+00> : vector<8x8xf32>
    %381 = tpu.matmul %379, %380, %cst_265 {dimension_numbers = #tpu.dot_dimension_numbers<[1], [0], [0], [1], [0, 0, 1, 1], [], []>} : vector<8x32xf32>, vector<32x8xf32>, vector<8x8xf32> -> vector<8x8xf32>
    %c0_266 = arith.constant 0 : index
    %c0_267 = arith.constant 0 : index
    %382 = vector.load %arg14[%c0_266, %c0_267] : memref<1x8xf32, #tpu.memory_space<vmem>>, vector<1x8xf32>
    %383 = vector.broadcast %382 : vector<1x8xf32> to vector<8x8xf32>
    %384 = arith.addf %381, %383 : vector<8x8xf32>
    %385 = tpu.iota {dimensions = array<i32: 1>} : vector<8x8xi32>
    %cst_268 = arith.constant 2.000000e+01 : f32
    %386 = vector.broadcast %cst_268 : f32 to vector<8x8xf32>
    %387 = arith.cmpf ogt, %384, %386 : vector<8x8xf32>
    %cst_269 = arith.constant 2.000000e+01 : f32
    %388 = vector.broadcast %cst_269 : f32 to vector<8x8xf32>
    %389 = arith.minimumf %384, %388 : vector<8x8xf32>
    %390 = math.exp %389 : vector<8x8xf32>
    %391 = math.log1p %390 : vector<8x8xf32>
    %392 = arith.select %387, %384, %391 : vector<8x8xi1>, vector<8x8xf32>
    %cst_270 = arith.constant 9.99999997E-7 : f32
    %393 = vector.broadcast %cst_270 : f32 to vector<8x8xf32>
    %394 = arith.addf %392, %393 : vector<8x8xf32>
    %c2_i32 = arith.constant 2 : i32
    %395 = vector.broadcast %c2_i32 : i32 to vector<8x8xi32>
    %396 = arith.cmpi slt, %385, %395 : vector<8x8xi32>
    %397 = arith.select %396, %384, %394 : vector<8x8xi1>, vector<8x8xf32>
    %c4_i32 = arith.constant 4 : i32
    %398 = vector.broadcast %c4_i32 : i32 to vector<8x8xi32>
    %399 = arith.cmpi sge, %385, %398 : vector<8x8xi32>
    %c6_i32 = arith.constant 6 : i32
    %400 = vector.broadcast %c6_i32 : i32 to vector<8x8xi32>
    %401 = arith.cmpi slt, %385, %400 : vector<8x8xi32>
    %402 = arith.andi %399, %401 : vector<8x8xi1>
    %cst_271 = arith.constant 1.000000e+00 : f32
    %403 = vector.broadcast %cst_271 : f32 to vector<8x8xf32>
    %404 = arith.addf %397, %403 : vector<8x8xf32>
    %405 = arith.select %402, %404, %397 : vector<8x8xi1>, vector<8x8xf32>
    %c0_272 = arith.constant 0 : index
    %c0_273 = arith.constant 0 : index
    %406 = vector.load %arg15[%c0_272, %c0_273] : memref<8x8xf32, #tpu.memory_space<vmem>>, vector<8x8xf32>
    tpu.vector_store %arg15[%c0_272, %c0_273], %405 {strides = array<i32>} : memref<8x8xf32, #tpu.memory_space<vmem>>, vector<8x8xf32>,
    return
  }
}

</mosaic_0001>

<llo_original>
// kernel: tpu_custom_call.1
$region0: #{tpu_custom_call.1}
  #allocation0 [shape = 'u32[]', space=smem, size = 0x4, offset = 0x4, fixed_abs, tag = 'smem constant byte address 0x4 - core index']
  #allocation1 [shape = 'u32[144,128]{1,0:T(1,128)}', space=vmem, size = 0x12000, scoped, tag = 'internal scratch']
  #allocation2 [shape = 'f32[128,128]{1,0:T(8,128)}', space=vmem, size = 0x10000, scoped, tag = 'scratch operand']
  #allocation3 [shape = 'f32[128,4]{1,0:T(8,128)}', space=vmem, size = 0x10000, scoped, tag = 'scratch operand']
  %s0 = inlined_call_operand.vmem [shape: f32[128,24], index: 0, kind: input, shape index: {}]
  %s1 = inlined_call_operand.vmem [shape: f32[128,128], index: 1, kind: input, shape index: {}]
  %s2 = inlined_call_operand.hbm [shape: f32[4,128,128], index: 2, kind: input, shape index: {}]
  %s3 = inlined_call_operand.hbm [shape: f32[8,128], index: 3, kind: input, shape index: {}]
  %s4 = inlined_call_operand.hbm [shape: f32[24,32], index: 4, kind: input, shape index: {}]
  %s5 = inlined_call_operand.vmem [shape: f32[1,32], index: 5, kind: input, shape index: {}]
  %s6 = inlined_call_operand.vmem [shape: f32[32,128], index: 6, kind: input, shape index: {}]
  %s7 = inlined_call_operand.hbm [shape: f32[1,128], index: 7, kind: input, shape index: {}]
  %s8 = inlined_call_operand.hbm [shape: f32[4,32], index: 8, kind: input, shape index: {}]
  %s9 = inlined_call_operand.vmem [shape: f32[32,32], index: 9, kind: input, shape index: {}]
  %s10 = inlined_call_operand.hbm [shape: f32[1,32], index: 10, kind: input, shape index: {}]
  %s11 = inlined_call_operand.vmem [shape: f32[32,32], index: 11, kind: input, shape index: {}]
  %s12 = inlined_call_operand.vmem [shape: f32[1,32], index: 12, kind: input, shape index: {}]
  %s13 = inlined_call_operand.vmem [shape: f32[32,8], index: 13, kind: input, shape index: {}]
  %s14 = inlined_call_operand.vmem [shape: f32[1,8], index: 14, kind: input, shape index: {}]
  %s15 = inlined_call_operand.hbm [shape: f32[8,8], index: 15, kind: output, shape index: {}]
  %s16 = sld [smem:[#allocation0]]
  $region94: #{tpu_custom_call.1} parent=0
    _
  %s18 = ssub.s32 1, %s16
  %s19 = scalar_select 0, %s18, %s16
  $region1: #{tpu_custom_call.1} parent=0
    #allocation4 [shape = 'u8[262144]{0}', space=vmem, size = 0x40000, scoped, tag = 'input window, operand 2, single buffered']
    #allocation5 [shape = 's32[1]{0}', space=sflag, size = 0x4, scoped, tag = 'scoped memory for tpu_custom_call.1']
    #allocation6 [shape = 's32[1]{0}', space=sflag, size = 0x4, scoped, tag = 'scoped memory for tpu_custom_call.1']
    #allocation7 [shape = 'u8[4096]{0}', space=vmem, size = 0x1000, scoped, tag = 'input window, operand 3, single buffered']
    #allocation8 [shape = 's32[1]{0}', space=sflag, size = 0x4, scoped, tag = 'scoped memory for tpu_custom_call.1']
    #allocation9 [shape = 'u8[12288]{0}', space=vmem, size = 0x3000, scoped, tag = 'input window, operand 4, single buffered']
    #allocation10 [shape = 'u8[512]{0}', space=vmem, size = 0x400, scoped, tag = 'input window, operand 7, single buffered']
    #allocation11 [shape = 's32[1]{0}', space=sflag, size = 0x4, scoped, tag = 'scoped memory for tpu_custom_call.1']
    #allocation12 [shape = 'u8[2048]{0}', space=vmem, size = 0x800, scoped, tag = 'input window, operand 8, single buffered']
    #allocation13 [shape = 'u8[512]{0}', space=vmem, size = 0x400, scoped, tag = 'input window, operand 10, single buffered']
    #allocation14 [shape = 's32[1]{0}', space=sflag, size = 0x4, scoped, tag = 'scoped memory for tpu_custom_call.1']
    #allocation15 [shape = 'u8[4096]{0}', space=vmem, size = 0x1000, scoped, tag = 'output window, operand 0, single buffered']
    %20 = vsyncpa [#allocation5], 0
    %21 = vsyncpa [#allocation8], 0
    %22 = vsyncpa [#allocation11], 0
    %23 = vsyncpa [#allocation14], 0
    %24 = vsyncpa [#allocation6], 0
    // Predicated region
    $region2: #{tpu_custom_call.1} parent=1 // pred_check
      _
    $region3: #{tpu_custom_call.1} parent=1 // pred_check_branch
      %26 = sbr.rel (0) target = $region5
    $region4: #{tpu_custom_call.1} parent=1 // pred_region
      _
    $region5: #{tpu_custom_call.1} parent=1 // pred_fallthru
      _
    // Predicated region
    $region6: #{tpu_custom_call.1} parent=1 // pred_check
      _
    $region7: #{tpu_custom_call.1} parent=1 // pred_check_branch
      %28 = sbr.rel (0) target = $region9
    $region8: #{tpu_custom_call.1} parent=1 // pred_region
      _
    $region9: #{tpu_custom_call.1} parent=1 // pred_fallthru
      _
    // Predicated region
    $region10: #{tpu_custom_call.1} parent=1 // pred_check
      _
    $region11: #{tpu_custom_call.1} parent=1 // pred_check_branch
      %30 = sbr.rel (0) target = $region13
    $region12: #{tpu_custom_call.1} parent=1 // pred_region
      %s32 = ssub.s32 8192, 8192
      %33 = vsyncadd [#allocation5], %s32
      %s34 = sshll.u32 [#allocation4], 4
      %s35 = int_to_ptr.vmem [resolvable:$true] %s34
      %40 = dma.hbm_to_vmem [thread:$0]  %s2, 8192, %s35, [#allocation5], 128, 128, 8
    $region13: #{tpu_custom_call.1} parent=1 // pred_fallthru
      _
    // Predicated region
    $region14: #{tpu_custom_call.1} parent=1 // pred_check
      _
    $region15: #{tpu_custom_call.1} parent=1 // pred_check_branch
      %42 = sbr.rel (0) target = $region17
    $region16: #{tpu_custom_call.1} parent=1 // pred_region
      %s44 = ssub.s32 128, 128
      %45 = vsyncadd [#allocation8], %s44
      %s47 = sshll.u32 [#allocation7], 4
      %s48 = int_to_ptr.vmem [resolvable:$true] %s47
      %50 = dma.hbm_to_vmem [thread:$0]  %s3, 128, %s48, [#allocation8]
    $region17: #{tpu_custom_call.1} parent=1 // pred_fallthru
      _
    // Predicated region
    $region18: #{tpu_custom_call.1} parent=1 // pred_check
      _
    $region19: #{tpu_custom_call.1} parent=1 // pred_check_branch
      %52 = sbr.rel (0) target = $region21
    $region20: #{tpu_custom_call.1} parent=1 // pred_region
      %s54 = ssub.s32 384, 384
      %55 = vsyncadd [#allocation8], %s54
      %s56 = sshll.u32 [#allocation9], 4
      %s57 = int_to_ptr.vmem [resolvable:$true] %s56
      %62 = dma.hbm_to_vmem [thread:$0]  %s4, 384, %s57, [#allocation8], 128, 128, 8
    $region21: #{tpu_custom_call.1} parent=1 // pred_fallthru
      _
    // Predicated region
    $region22: #{tpu_custom_call.1} parent=1 // pred_check
      _
    $region23: #{tpu_custom_call.1} parent=1 // pred_check_branch
      %64 = sbr.rel (0) target = $region25
    $region24: #{tpu_custom_call.1} parent=1 // pred_region
      _
    $region25: #{tpu_custom_call.1} parent=1 // pred_fallthru
      _
    // Predicated region
    $region26: #{tpu_custom_call.1} parent=1 // pred_check
      _
    $region27: #{tpu_custom_call.1} parent=1 // pred_check_branch
      %66 = sbr.rel (0) target = $region29
    $region28: #{tpu_custom_call.1} parent=1 // pred_region
      _
    $region29: #{tpu_custom_call.1} parent=1 // pred_fallthru
      _
    // Predicated region
    $region30: #{tpu_custom_call.1} parent=1 // pred_check
      _
    $region31: #{tpu_custom_call.1} parent=1 // pred_check_branch
      %68 = sbr.rel (0) target = $region33
    $region32: #{tpu_custom_call.1} parent=1 // pred_region
      %s70 = ssub.s32 16, 16
      %71 = vsyncadd [#allocation11], %s70
      %s73 = sshll.u32 [#allocation10], 4
      %s74 = int_to_ptr.vmem [resolvable:$true] %s73
      %76 = dma.hbm_to_vmem [thread:$0]  %s7, 16, %s74, [#allocation11]
    $region33: #{tpu_custom_call.1} parent=1 // pred_fallthru
      _
    // Predicated region
    $region34: #{tpu_custom_call.1} parent=1 // pred_check
      _
    $region35: #{tpu_custom_call.1} parent=1 // pred_check_branch
      %78 = sbr.rel (0) target = $region37
    $region36: #{tpu_custom_call.1} parent=1 // pred_region
      %s80 = ssub.s32 64, 64
      %81 = vsyncadd [#allocation11], %s80
      %s83 = sshll.u32 [#allocation12], 4
      %s84 = int_to_ptr.vmem [resolvable:$true] %s83
      %86 = dma.hbm_to_vmem [thread:$0]  %s8, 64, %s84, [#allocation11]
    $region37: #{tpu_custom_call.1} parent=1 // pred_fallthru
      _
    // Predicated region
    $region38: #{tpu_custom_call.1} parent=1 // pred_check
      _
    $region39: #{tpu_custom_call.1} parent=1 // pred_check_branch
      %88 = sbr.rel (0) target = $region41
    $region40: #{tpu_custom_call.1} parent=1 // pred_region
      _
    $region41: #{tpu_custom_call.1} parent=1 // pred_fallthru
      _
    // Predicated region
    $region42: #{tpu_custom_call.1} parent=1 // pred_check
      _
    $region43: #{tpu_custom_call.1} parent=1 // pred_check_branch
      %90 = sbr.rel (0) target = $region45
    $region44: #{tpu_custom_call.1} parent=1 // pred_region
      %s92 = ssub.s32 16, 16
      %93 = vsyncadd [#allocation14], %s92
      %s95 = sshll.u32 [#allocation13], 4
      %s96 = int_to_ptr.vmem [resolvable:$true] %s95
      %98 = dma.hbm_to_vmem [thread:$0]  %s10, 16, %s96, [#allocation14]
    $region45: #{tpu_custom_call.1} parent=1 // pred_fallthru
      _
    // Predicated region
    $region46: #{tpu_custom_call.1} parent=1 // pred_check
      _
    $region47: #{tpu_custom_call.1} parent=1 // pred_check_branch
      %100 = sbr.rel (0) target = $region49
    $region48: #{tpu_custom_call.1} parent=1 // pred_region
      _
    $region49: #{tpu_custom_call.1} parent=1 // pred_fallthru
      _
    // Predicated region
    $region50: #{tpu_custom_call.1} parent=1 // pred_check
      _
    $region51: #{tpu_custom_call.1} parent=1 // pred_check_branch
      %102 = sbr.rel (0) target = $region53
    $region52: #{tpu_custom_call.1} parent=1 // pred_region
      _
    $region53: #{tpu_custom_call.1} parent=1 // pred_fallthru
      _
    // Predicated region
    $region54: #{tpu_custom_call.1} parent=1 // pred_check
      _
    $region55: #{tpu_custom_call.1} parent=1 // pred_check_branch
      %104 = sbr.rel (0) target = $region57
    $region56: #{tpu_custom_call.1} parent=1 // pred_region
      _
    $region57: #{tpu_custom_call.1} parent=1 // pred_fallthru
      _
    // Predicated region
    $region58: #{tpu_custom_call.1} parent=1 // pred_check
      _
    $region59: #{tpu_custom_call.1} parent=1 // pred_check_branch
      %106 = sbr.rel (0) target = $region61
    $region60: #{tpu_custom_call.1} parent=1 // pred_region
      _
    $region61: #{tpu_custom_call.1} parent=1 // pred_fallthru
      _
    // Predicated region
    $region62: #{tpu_custom_call.1} parent=1 // pred_check
      _
    $region63: #{tpu_custom_call.1} parent=1 // pred_check_branch
      %108 = sbr.rel (0) target = $region65
    $region64: #{tpu_custom_call.1} parent=1 // pred_region
      %109 = dma.done [#allocation5], 8192
    $region65: #{tpu_custom_call.1} parent=1 // pred_fallthru
      _
    // Predicated region
    $region66: #{tpu_custom_call.1} parent=1 // pred_check
      _
    $region67: #{tpu_custom_call.1} parent=1 // pred_check_branch
      %111 = sbr.rel (0) target = $region69
    $region68: #{tpu_custom_call.1} parent=1 // pred_region
      %112 = dma.done [#allocation8], 128
    $region69: #{tpu_custom_call.1} parent=1 // pred_fallthru
      _
    // Predicated region
    $region70: #{tpu_custom_call.1} parent=1 // pred_check
      _
    $region71: #{tpu_custom_call.1} parent=1 // pred_check_branch
      %114 = sbr.rel (0) target = $region73
    $region72: #{tpu_custom_call.1} parent=1 // pred_region
      %115 = dma.done [#allocation8], 384
    $region73: #{tpu_custom_call.1} parent=1 // pred_fallthru
      _
    // Predicated region
    $region74: #{tpu_custom_call.1} parent=1 // pred_check
      _
    $region75: #{tpu_custom_call.1} parent=1 // pred_check_branch
      %117 = sbr.rel (0) target = $region77
    $region76: #{tpu_custom_call.1} parent=1 // pred_region
      %118 = dma.done [#allocation11], 16
    $region77: #{tpu_custom_call.1} parent=1 // pred_fallthru
      _
    // Predicated region
    $region78: #{tpu_custom_call.1} parent=1 // pred_check
      _
    $region79: #{tpu_custom_call.1} parent=1 // pred_check_branch
      %120 = sbr.rel (0) target = $region81
    $region80: #{tpu_custom_call.1} parent=1 // pred_region
      %121 = dma.done [#allocation11], 64
    $region81: #{tpu_custom_call.1} parent=1 // pred_fallthru
      _
    // Predicated region
    $region82: #{tpu_custom_call.1} parent=1 // pred_check
      _
    $region83: #{tpu_custom_call.1} parent=1 // pred_check_branch
      %123 = sbr.rel (0) target = $region85
    $region84: #{tpu_custom_call.1} parent=1 // pred_region
      %124 = dma.done [#allocation14], 16
    $region85: #{tpu_custom_call.1} parent=1 // pred_fallthru
      _
    %v125 = vld [vmem:[%s1] sm:$0xff]
    %v126 = vld [vmem:[%s1 + $0x8] sm:$0xff]
    %v127 = vld [vmem:[%s1 + $0x10] sm:$0xff]
    %v128 = vld [vmem:[%s1 + $0x18] sm:$0xff]
    %v129 = vld [vmem:[%s1 + $0x20] sm:$0xff]
    %v130 = vld [vmem:[%s1 + $0x28] sm:$0xff]
    %v131 = vld [vmem:[%s1 + $0x30] sm:$0xff]
    %v132 = vld [vmem:[%s1 + $0x38] sm:$0xff]
    %v133 = vld [vmem:[%s1 + $0x40] sm:$0xff]
    %v134 = vld [vmem:[%s1 + $0x48] sm:$0xff]
    %v135 = vld [vmem:[%s1 + $0x50] sm:$0xff]
    %v136 = vld [vmem:[%s1 + $0x58] sm:$0xff]
    %v137 = vld [vmem:[%s1 + $0x60] sm:$0xff]
    %v138 = vld [vmem:[%s1 + $0x68] sm:$0xff]
    %v139 = vld [vmem:[%s1 + $0x70] sm:$0xff]
    %v140 = vld [vmem:[%s1 + $0x78] sm:$0xff]
    %v141 = vld [vmem:[#allocation12] sm:$0xf]
    %v142 = vld [vmem:[%s6] sm:$0xff]
    %v143 = vld [vmem:[%s6 + $0x8] sm:$0xff]
    %v144 = vld [vmem:[%s6 + $0x10] sm:$0xff]
    %v145 = vld [vmem:[%s6 + $0x18] sm:$0xff]
    %v146 = vld [vmem:[#allocation10] sm:$0x1]
    %v147 = vld [vmem:[%s0] sm:$0xff]
    %v148 = vld [vmem:[%s0 + $0x8] sm:$0xff]
    %v149 = vld [vmem:[%s0 + $0x10] sm:$0xff]
    %v150 = vld [vmem:[%s0 + $0x18] sm:$0xff]
    %v151 = vld [vmem:[%s0 + $0x20] sm:$0xff]
    %v152 = vld [vmem:[%s0 + $0x28] sm:$0xff]
    %v153 = vld [vmem:[%s0 + $0x30] sm:$0xff]
    %v154 = vld [vmem:[%s0 + $0x38] sm:$0xff]
    %v155 = vld [vmem:[%s0 + $0x40] sm:$0xff]
    %v156 = vld [vmem:[%s0 + $0x48] sm:$0xff]
    %v157 = vld [vmem:[%s0 + $0x50] sm:$0xff]
    %v158 = vld [vmem:[%s0 + $0x58] sm:$0xff]
    %v159 = vld [vmem:[%s0 + $0x60] sm:$0xff]
    %v160 = vld [vmem:[%s0 + $0x68] sm:$0xff]
    %v161 = vld [vmem:[%s0 + $0x70] sm:$0xff]
    %v162 = vld [vmem:[%s0 + $0x78] sm:$0xff]
    %v163 = vld [vmem:[#allocation9] sm:$0xff]
    %v164 = vld [vmem:[#allocation9 + $0x8] sm:$0xff]
    %v165 = vld [vmem:[#allocation9 + $0x10] sm:$0xff]
    %v166 = vld [vmem:[%s5] sm:$0x1]
    %v168 = vlaneseq
    %v169 = vshrl.u32 %v168, 7
    %v170 = vsub.s32 0, %v169
    %v171 = vrot.slane %v166, %v170
    %vm173 = vcmask 195584
    %v175 = vsel %vm173, %v147, 0
    %v178 = vsel %vm173, %v148, 0
    %v181 = vsel %vm173, %v149, 0
    %v184 = vsel %vm173, %v150, 0
    %v187 = vsel %vm173, %v151, 0
    %v190 = vsel %vm173, %v152, 0
    %v193 = vsel %vm173, %v153, 0
    %v196 = vsel %vm173, %v154, 0
    %v199 = vsel %vm173, %v155, 0
    %v202 = vsel %vm173, %v156, 0
    %v205 = vsel %vm173, %v157, 0
    %v208 = vsel %vm173, %v158, 0
    %v211 = vsel %vm173, %v159, 0
    %v214 = vsel %vm173, %v160, 0
    %v217 = vsel %vm173, %v161, 0
    %v220 = vsel %vm173, %v162, 0
    %222 = vmatprep.subr.mxu0 0.0
    %223 = vmatpush1.msra.mxu0 %v163
    %224 = vmatprep.subr.mxu0 0.0
    %225 = vmatpush1.msra.mxu0 %v164
    %226 = vmatprep.subr.mxu0 0.0
    %227 = vmatpush1.msra.mxu0 %v165
    %228 = vmatprep.subr.mxu0 0.0
    %229 = vmatpush1.msra.mxu0 0.0
    %230 = vmatprep.subr.mxu0 0.0
    %231 = vmatpush1.msra.mxu0 0.0
    %232 = vmatprep.subr.mxu0 0.0
    %233 = vmatpush1.msra.mxu0 0.0
    %234 = vmatprep.subr.mxu0 0.0
    %235 = vmatpush1.msra.mxu0 0.0
    %236 = vmatprep.subr.mxu0 0.0
    %237 = vmatpush1.msra.mxu0 0.0
    %238 = vmatprep.subr.mxu0 0.0
    %239 = vmatpush1.msra.mxu0 0.0
    %240 = vmatprep.subr.mxu0 0.0
    %241 = vmatpush1.msra.mxu0 0.0
    %242 = vmatprep.subr.mxu0 0.0
    %243 = vmatpush1.msra.mxu0 0.0
    %244 = vmatprep.subr.mxu0 0.0
    %245 = vmatpush1.msra.mxu0 0.0
    %246 = vmatprep.subr.mxu0 0.0
    %247 = vmatpush1.msra.mxu0 0.0
    %248 = vmatprep.subr.mxu0 0.0
    %249 = vmatpush1.msra.mxu0 0.0
    %250 = vmatprep.subr.mxu0 0.0
    %251 = vmatpush1.msra.mxu0 0.0
    %252 = vmatprep.subr.mxu0 0.0
    %253 = vmatpush1.msra.mxu0 0.0
    %254 = vmatprep.subr.mxu0 0.0
    %255 = vmatpush1.msra.mxu0 0.0
    %256 = vmatprep.subr.mxu0 0.0
    %257 = vmatpush1.msra.mxu0 0.0
    %258 = vmatprep.subr.mxu0 0.0
    %259 = vmatpush1.msra.mxu0 0.0
    %260 = vmatprep.subr.mxu0 0.0
    %261 = vmatpush1.msra.mxu0 0.0
    %262 = vmatprep.subr.mxu0 0.0
    %263 = vmatpush1.msra.mxu0 0.0
    %264 = vmatprep.subr.mxu0 0.0
    %265 = vmatpush1.msra.mxu0 0.0
    %266 = vmatprep.subr.mxu0 0.0
    %267 = vmatpush1.msra.mxu0 0.0
    %268 = vmatprep.subr.mxu0 0.0
    %269 = vmatpush1.msra.mxu0 0.0
    %270 = vmatprep.subr.mxu0 0.0
    %271 = vmatpush1.msra.mxu0 0.0
    %272 = vmatprep.subr.mxu0 0.0
    %273 = vmatpush1.msra.mxu0 0.0
    %274 = vmatprep.subr.mxu0 0.0
    %275 = vmatpush1.msra.mxu0 0.0
    %276 = vmatprep.subr.mxu0 0.0
    %277 = vmatpush1.msra.mxu0 0.0
    %278 = vmatprep.subr.mxu0 0.0
    %279 = vmatpush1.msra.mxu0 0.0
    %280 = vmatprep.subr.mxu0 0.0
    %281 = vmatpush1.msra.mxu0 0.0
    %282 = vmatprep.subr.mxu0 0.0
    %283 = vmatpush1.msra.mxu0 0.0
    %284 = vmatprep.subr.mxu0 0.0
    %285 = vmatpush1.msra.mxu0 0.0
    %286 = vmatprep.mubr.f32.mxu0 0.0
    %287 = vmatmul.mubr.f32.gmra.mrb[0].mxu0 %v175
    %v288 = vpop.f32.mrb[0].mxu0
    %v289 = vadd.f32 %v171, %v288
    %v290 = vpop.f32.mrb[0].mxu0
    %291 = vmatprep.mubr.f32.mxu0 0.0
    %292 = vmatmul.mubr.f32.gmra.mrb[0].mxu0 %v178
    %v293 = vpop.f32.mrb[0].mxu0
    %v294 = vadd.f32 %v171, %v293
    %v295 = vpop.f32.mrb[0].mxu0
    %296 = vmatprep.mubr.f32.mxu0 0.0
    %297 = vmatmul.mubr.f32.gmra.mrb[0].mxu0 %v181
    %v298 = vpop.f32.mrb[0].mxu0
    %v299 = vadd.f32 %v171, %v298
    %v300 = vpop.f32.mrb[0].mxu0
    %301 = vmatprep.mubr.f32.mxu0 0.0
    %302 = vmatmul.mubr.f32.gmra.mrb[0].mxu0 %v184
    %v303 = vpop.f32.mrb[0].mxu0
    %v304 = vadd.f32 %v171, %v303
    %v305 = vpop.f32.mrb[0].mxu0
    %306 = vmatprep.mubr.f32.mxu0 0.0
    %307 = vmatmul.mubr.f32.gmra.mrb[0].mxu0 %v187
    %v308 = vpop.f32.mrb[0].mxu0
    %v309 = vadd.f32 %v171, %v308
    %v310 = vpop.f32.mrb[0].mxu0
    %311 = vmatprep.mubr.f32.mxu0 0.0
    %312 = vmatmul.mubr.f32.gmra.mrb[0].mxu0 %v190
    %v313 = vpop.f32.mrb[0].mxu0
    %v314 = vadd.f32 %v171, %v313
    %v315 = vpop.f32.mrb[0].mxu0
    %316 = vmatprep.mubr.f32.mxu0 0.0
    %317 = vmatmul.mubr.f32.gmra.mrb[0].mxu0 %v193
    %v318 = vpop.f32.mrb[0].mxu0
    %v319 = vadd.f32 %v171, %v318
    %v320 = vpop.f32.mrb[0].mxu0
    %321 = vmatprep.mubr.f32.mxu0 0.0
    %322 = vmatmul.mubr.f32.gmra.mrb[0].mxu0 %v196
    %v323 = vpop.f32.mrb[0].mxu0
    %v324 = vadd.f32 %v171, %v323
    %v325 = vpop.f32.mrb[0].mxu0
    %326 = vmatprep.mubr.f32.mxu0 0.0
    %327 = vmatmul.mubr.f32.gmra.mrb[0].mxu0 %v199
    %v328 = vpop.f32.mrb[0].mxu0
    %v329 = vadd.f32 %v171, %v328
    %v330 = vpop.f32.mrb[0].mxu0
    %331 = vmatprep.mubr.f32.mxu0 0.0
    %332 = vmatmul.mubr.f32.gmra.mrb[0].mxu0 %v202
    %v333 = vpop.f32.mrb[0].mxu0
    %v334 = vadd.f32 %v171, %v333
    %v335 = vpop.f32.mrb[0].mxu0
    %336 = vmatprep.mubr.f32.mxu0 0.0
    %337 = vmatmul.mubr.f32.gmra.mrb[0].mxu0 %v205
    %v338 = vpop.f32.mrb[0].mxu0
    %v339 = vadd.f32 %v171, %v338
    %v340 = vpop.f32.mrb[0].mxu0
    %341 = vmatprep.mubr.f32.mxu0 0.0
    %342 = vmatmul.mubr.f32.gmra.mrb[0].mxu0 %v208
    %v343 = vpop.f32.mrb[0].mxu0
    %v344 = vadd.f32 %v171, %v343
    %v345 = vpop.f32.mrb[0].mxu0
    %346 = vmatprep.mubr.f32.mxu0 0.0
    %347 = vmatmul.mubr.f32.gmra.mrb[0].mxu0 %v211
    %v348 = vpop.f32.mrb[0].mxu0
    %v349 = vadd.f32 %v171, %v348
    %v350 = vpop.f32.mrb[0].mxu0
    %351 = vmatprep.mubr.f32.mxu0 0.0
    %352 = vmatmul.mubr.f32.gmra.mrb[0].mxu0 %v214
    %v353 = vpop.f32.mrb[0].mxu0
    %v354 = vadd.f32 %v171, %v353
    %v355 = vpop.f32.mrb[0].mxu0
    %356 = vmatprep.mubr.f32.mxu0 0.0
    %357 = vmatmul.mubr.f32.gmra.mrb[0].mxu0 %v217
    %v358 = vpop.f32.mrb[0].mxu0
    %v359 = vadd.f32 %v171, %v358
    %v360 = vpop.f32.mrb[0].mxu0
    %361 = vmatprep.mubr.f32.mxu0 0.0
    %362 = vmatmul.mubr.f32.gmra.mrb[0].mxu0 %v220
    %v363 = vpop.f32.mrb[0].mxu0
    %v364 = vadd.f32 %v171, %v363
    %v365 = vpop.f32.mrb[0].mxu0
    %366 = vdwg.mxu0
    %v367 = vxor.u32 %v289, 2147483648
    %v368 = vxor.u32 %v294, 2147483648
    %v369 = vxor.u32 %v299, 2147483648
    %v370 = vxor.u32 %v304, 2147483648
    %v371 = vxor.u32 %v309, 2147483648
    %v372 = vxor.u32 %v314, 2147483648
    %v373 = vxor.u32 %v319, 2147483648
    %v374 = vxor.u32 %v324, 2147483648
    %v375 = vxor.u32 %v329, 2147483648
    %v376 = vxor.u32 %v334, 2147483648
    %v377 = vxor.u32 %v339, 2147483648
    %v378 = vxor.u32 %v344, 2147483648
    %v379 = vxor.u32 %v349, 2147483648
    %v380 = vxor.u32 %v354, 2147483648
    %v381 = vxor.u32 %v359, 2147483648
    %v382 = vxor.u32 %v364, 2147483648
    %v383 = vmul.f32 %v367, 1.442695
    %v384 = vpow.pop %v383
    %v385 = vmul.f32 %v368, 1.442695
    %v386 = vpow.pop %v385
    %v387 = vmul.f32 %v369, 1.442695
    %v388 = vpow.pop %v387
    %v389 = vmul.f32 %v370, 1.442695
    %v390 = vpow.pop %v389
    %v391 = vmul.f32 %v371, 1.442695
    %v392 = vpow.pop %v391
    %v393 = vmul.f32 %v372, 1.442695
    %v394 = vpow.pop %v393
    %v395 = vmul.f32 %v373, 1.442695
    %v396 = vpow.pop %v395
    %v397 = vmul.f32 %v374, 1.442695
    %v398 = vpow.pop %v397
    %v399 = vmul.f32 %v375, 1.442695
    %v400 = vpow.pop %v399
    %v401 = vmul.f32 %v376, 1.442695
    %v402 = vpow.pop %v401
    %v403 = vmul.f32 %v377, 1.442695
    %v404 = vpow.pop %v403
    %v405 = vmul.f32 %v378, 1.442695
    %v406 = vpow.pop %v405
    %v407 = vmul.f32 %v379, 1.442695
    %v408 = vpow.pop %v407
    %v409 = vmul.f32 %v380, 1.442695
    %v410 = vpow.pop %v409
    %v411 = vmul.f32 %v381, 1.442695
    %v412 = vpow.pop %v411
    %v413 = vmul.f32 %v382, 1.442695
    %v414 = vpow.pop %v413
    %v415 = vadd.f32 %v384, 1.0
    %v416 = vadd.f32 %v386, 1.0
    %v417 = vadd.f32 %v388, 1.0
    %v418 = vadd.f32 %v390, 1.0
    %v419 = vadd.f32 %v392, 1.0
    %v420 = vadd.f32 %v394, 1.0
    %v421 = vadd.f32 %v396, 1.0
    %v422 = vadd.f32 %v398, 1.0
    %v423 = vadd.f32 %v400, 1.0
    %v424 = vadd.f32 %v402, 1.0
    %v425 = vadd.f32 %v404, 1.0
    %v426 = vadd.f32 %v406, 1.0
    %v427 = vadd.f32 %v408, 1.0
    %v428 = vadd.f32 %v410, 1.0
    %v429 = vadd.f32 %v412, 1.0
    %v430 = vadd.f32 %v414, 1.0
    %v431 = vrcp.pop %v415
    %v432 = vmul.f32 1.0, %v431
    %v433 = vrcp.pop %v416
    %v434 = vmul.f32 1.0, %v433
    %v435 = vrcp.pop %v417
    %v436 = vmul.f32 1.0, %v435
    %v437 = vrcp.pop %v418
    %v438 = vmul.f32 1.0, %v437
    %v439 = vrcp.pop %v419
    %v440 = vmul.f32 1.0, %v439
    %v441 = vrcp.pop %v420
    %v442 = vmul.f32 1.0, %v441
    %v443 = vrcp.pop %v421
    %v444 = vmul.f32 1.0, %v443
    %v445 = vrcp.pop %v422
    %v446 = vmul.f32 1.0, %v445
    %v447 = vrcp.pop %v423
    %v448 = vmul.f32 1.0, %v447
    %v449 = vrcp.pop %v424
    %v450 = vmul.f32 1.0, %v449
    %v451 = vrcp.pop %v425
    %v452 = vmul.f32 1.0, %v451
    %v453 = vrcp.pop %v426
    %v454 = vmul.f32 1.0, %v453
    %v455 = vrcp.pop %v427
    %v456 = vmul.f32 1.0, %v455
    %v457 = vrcp.pop %v428
    %v458 = vmul.f32 1.0, %v457
    %v459 = vrcp.pop %v429
    %v460 = vmul.f32 1.0, %v459
    %v461 = vrcp.pop %v430
    %v462 = vmul.f32 1.0, %v461
    %v463 = vmul.f32 %v289, %v432
    %v464 = vmul.f32 %v294, %v434
    %v465 = vmul.f32 %v299, %v436
    %v466 = vmul.f32 %v304, %v438
    %v467 = vmul.f32 %v309, %v440
    %v468 = vmul.f32 %v314, %v442
    %v469 = vmul.f32 %v319, %v444
    %v470 = vmul.f32 %v324, %v446
    %v471 = vmul.f32 %v329, %v448
    %v472 = vmul.f32 %v334, %v450
    %v473 = vmul.f32 %v339, %v452
    %v474 = vmul.f32 %v344, %v454
    %v475 = vmul.f32 %v349, %v456
    %v476 = vmul.f32 %v354, %v458
    %v477 = vmul.f32 %v359, %v460
    %v478 = vmul.f32 %v364, %v462
    %v480 = vlaneseq
    %v481 = vshrl.u32 %v480, 7
    %v482 = vsub.s32 0, %v481
    %v483 = vrot.slane %v146, %v482
    %vm485 = vcmask 261120
    %v487 = vsel %vm485, %v463, 0
    %v490 = vsel %vm485, %v464, 0
    %v493 = vsel %vm485, %v465, 0
    %v496 = vsel %vm485, %v466, 0
    %v499 = vsel %vm485, %v467, 0
    %v502 = vsel %vm485, %v468, 0
    %v505 = vsel %vm485, %v469, 0
    %v508 = vsel %vm485, %v470, 0
    %v511 = vsel %vm485, %v471, 0
    %v514 = vsel %vm485, %v472, 0
    %v517 = vsel %vm485, %v473, 0
    %v520 = vsel %vm485, %v474, 0
    %v523 = vsel %vm485, %v475, 0
    %v526 = vsel %vm485, %v476, 0
    %v529 = vsel %vm485, %v477, 0
    %v532 = vsel %vm485, %v478, 0
    %534 = vmatprep.subr.mxu0 0.0
    %535 = vmatpush1.msra.mxu0 %v142
    %536 = vmatprep.subr.mxu0 0.0
    %537 = vmatpush1.msra.mxu0 %v143
    %538 = vmatprep.subr.mxu0 0.0
    %539 = vmatpush1.msra.mxu0 %v144
    %540 = vmatprep.subr.mxu0 0.0
    %541 = vmatpush1.msra.mxu0 %v145
    %542 = vmatprep.subr.mxu0 0.0
    %543 = vmatpush1.msra.mxu0 0.0
    %544 = vmatprep.subr.mxu0 0.0
    %545 = vmatpush1.msra.mxu0 0.0
    %546 = vmatprep.subr.mxu0 0.0
    %547 = vmatpush1.msra.mxu0 0.0
    %548 = vmatprep.subr.mxu0 0.0
    %549 = vmatpush1.msra.mxu0 0.0
    %550 = vmatprep.subr.mxu0 0.0
    %551 = vmatpush1.msra.mxu0 0.0
    %552 = vmatprep.subr.mxu0 0.0
    %553 = vmatpush1.msra.mxu0 0.0
    %554 = vmatprep.subr.mxu0 0.0
    %555 = vmatpush1.msra.mxu0 0.0
    %556 = vmatprep.subr.mxu0 0.0
    %557 = vmatpush1.msra.mxu0 0.0
    %558 = vmatprep.subr.mxu0 0.0
    %559 = vmatpush1.msra.mxu0 0.0
    %560 = vmatprep.subr.mxu0 0.0
    %561 = vmatpush1.msra.mxu0 0.0
    %562 = vmatprep.subr.mxu0 0.0
    %563 = vmatpush1.msra.mxu0 0.0
    %564 = vmatprep.subr.mxu0 0.0
    %565 = vmatpush1.msra.mxu0 0.0
    %566 = vmatprep.subr.mxu0 0.0
    %567 = vmatpush1.msra.mxu0 0.0
    %568 = vmatprep.subr.mxu0 0.0
    %569 = vmatpush1.msra.mxu0 0.0
    %570 = vmatprep.subr.mxu0 0.0
    %571 = vmatpush1.msra.mxu0 0.0
    %572 = vmatprep.subr.mxu0 0.0
    %573 = vmatpush1.msra.mxu0 0.0
    %574 = vmatprep.subr.mxu0 0.0
    %575 = vmatpush1.msra.mxu0 0.0
    %576 = vmatprep.subr.mxu0 0.0
    %577 = vmatpush1.msra.mxu0 0.0
    %578 = vmatprep.subr.mxu0 0.0
    %579 = vmatpush1.msra.mxu0 0.0
    %580 = vmatprep.subr.mxu0 0.0
    %581 = vmatpush1.msra.mxu0 0.0
    %582 = vmatprep.subr.mxu0 0.0
    %583 = vmatpush1.msra.mxu0 0.0
    %584 = vmatprep.subr.mxu0 0.0
    %585 = vmatpush1.msra.mxu0 0.0
    %586 = vmatprep.subr.mxu0 0.0
    %587 = vmatpush1.msra.mxu0 0.0
    %588 = vmatprep.subr.mxu0 0.0
    %589 = vmatpush1.msra.mxu0 0.0
    %590 = vmatprep.subr.mxu0 0.0
    %591 = vmatpush1.msra.mxu0 0.0
    %592 = vmatprep.subr.mxu0 0.0
    %593 = vmatpush1.msra.mxu0 0.0
    %594 = vmatprep.subr.mxu0 0.0
    %595 = vmatpush1.msra.mxu0 0.0
    %596 = vmatprep.subr.mxu0 0.0
    %597 = vmatpush1.msra.mxu0 0.0
    %598 = vmatprep.mubr.f32.mxu0 0.0
    %599 = vmatmul.mubr.f32.gmra.mrb[0].mxu0 %v487
    %v600 = vpop.f32.mrb[0].mxu0
    %v601 = vadd.f32 %v483, %v600
    %v602 = vpop.f32.mrb[0].mxu0
    %603 = vmatprep.mubr.f32.mxu0 0.0
    %604 = vmatmul.mubr.f32.gmra.mrb[0].mxu0 %v490
    %v605 = vpop.f32.mrb[0].mxu0
    %v606 = vadd.f32 %v483, %v605
    %v607 = vpop.f32.mrb[0].mxu0
    %608 = vmatprep.mubr.f32.mxu0 0.0
    %609 = vmatmul.mubr.f32.gmra.mrb[0].mxu0 %v493
    %v610 = vpop.f32.mrb[0].mxu0
    %v611 = vadd.f32 %v483, %v610
    %v612 = vpop.f32.mrb[0].mxu0
    %613 = vmatprep.mubr.f32.mxu0 0.0
    %614 = vmatmul.mubr.f32.gmra.mrb[0].mxu0 %v496
    %v615 = vpop.f32.mrb[0].mxu0
    %v616 = vadd.f32 %v483, %v615
    %v617 = vpop.f32.mrb[0].mxu0
    %618 = vmatprep.mubr.f32.mxu0 0.0
    %619 = vmatmul.mubr.f32.gmra.mrb[0].mxu0 %v499
    %v620 = vpop.f32.mrb[0].mxu0
    %v621 = vadd.f32 %v483, %v620
    %v622 = vpop.f32.mrb[0].mxu0
    %623 = vmatprep.mubr.f32.mxu0 0.0
    %624 = vmatmul.mubr.f32.gmra.mrb[0].mxu0 %v502
    %v625 = vpop.f32.mrb[0].mxu0
    %v626 = vadd.f32 %v483, %v625
    %v627 = vpop.f32.mrb[0].mxu0
    %628 = vmatprep.mubr.f32.mxu0 0.0
    %629 = vmatmul.mubr.f32.gmra.mrb[0].mxu0 %v505
    %v630 = vpop.f32.mrb[0].mxu0
    %v631 = vadd.f32 %v483, %v630
    %v632 = vpop.f32.mrb[0].mxu0
    %633 = vmatprep.mubr.f32.mxu0 0.0
    %634 = vmatmul.mubr.f32.gmra.mrb[0].mxu0 %v508
    %v635 = vpop.f32.mrb[0].mxu0
    %v636 = vadd.f32 %v483, %v635
    %v637 = vpop.f32.mrb[0].mxu0
    %638 = vmatprep.mubr.f32.mxu0 0.0
    %639 = vmatmul.mubr.f32.gmra.mrb[0].mxu0 %v511
    %v640 = vpop.f32.mrb[0].mxu0
    %v641 = vadd.f32 %v483, %v640
    %v642 = vpop.f32.mrb[0].mxu0
    %643 = vmatprep.mubr.f32.mxu0 0.0
    %644 = vmatmul.mubr.f32.gmra.mrb[0].mxu0 %v514
    %v645 = vpop.f32.mrb[0].mxu0
    %v646 = vadd.f32 %v483, %v645
    %v647 = vpop.f32.mrb[0].mxu0
    %648 = vmatprep.mubr.f32.mxu0 0.0
    %649 = vmatmul.mubr.f32.gmra.mrb[0].mxu0 %v517
    %v650 = vpop.f32.mrb[0].mxu0
    %v651 = vadd.f32 %v483, %v650
    %v652 = vpop.f32.mrb[0].mxu0
    %653 = vmatprep.mubr.f32.mxu0 0.0
    %654 = vmatmul.mubr.f32.gmra.mrb[0].mxu0 %v520
    %v655 = vpop.f32.mrb[0].mxu0
    %v656 = vadd.f32 %v483, %v655
    %v657 = vpop.f32.mrb[0].mxu0
    %658 = vmatprep.mubr.f32.mxu0 0.0
    %659 = vmatmul.mubr.f32.gmra.mrb[0].mxu0 %v523
    %v660 = vpop.f32.mrb[0].mxu0
    %v661 = vadd.f32 %v483, %v660
    %v662 = vpop.f32.mrb[0].mxu0
    %663 = vmatprep.mubr.f32.mxu0 0.0
    %664 = vmatmul.mubr.f32.gmra.mrb[0].mxu0 %v526
    %v665 = vpop.f32.mrb[0].mxu0
    %v666 = vadd.f32 %v483, %v665
    %v667 = vpop.f32.mrb[0].mxu0
    %668 = vmatprep.mubr.f32.mxu0 0.0
    %669 = vmatmul.mubr.f32.gmra.mrb[0].mxu0 %v529
    %v670 = vpop.f32.mrb[0].mxu0
    %v671 = vadd.f32 %v483, %v670
    %v672 = vpop.f32.mrb[0].mxu0
    %673 = vmatprep.mubr.f32.mxu0 0.0
    %674 = vmatmul.mubr.f32.gmra.mrb[0].mxu0 %v532
    %v675 = vpop.f32.mrb[0].mxu0
    %v676 = vadd.f32 %v483, %v675
    %v677 = vpop.f32.mrb[0].mxu0
    %678 = vdwg.mxu0
    %679 = vst [vmem:[#allocation2] sm:$0xff] %v601
    %680 = vst [vmem:[#allocation2 + $0x8] sm:$0xff] %v606
    %681 = vst [vmem:[#allocation2 + $0x10] sm:$0xff] %v611
    %682 = vst [vmem:[#allocation2 + $0x18] sm:$0xff] %v616
    %683 = vst [vmem:[#allocation2 + $0x20] sm:$0xff] %v621
    %684 = vst [vmem:[#allocation2 + $0x28] sm:$0xff] %v626
    %685 = vst [vmem:[#allocation2 + $0x30] sm:$0xff] %v631
    %686 = vst [vmem:[#allocation2 + $0x38] sm:$0xff] %v636
    %687 = vst [vmem:[#allocation2 + $0x40] sm:$0xff] %v641
    %688 = vst [vmem:[#allocation2 + $0x48] sm:$0xff] %v646
    %689 = vst [vmem:[#allocation2 + $0x50] sm:$0xff] %v651
    %690 = vst [vmem:[#allocation2 + $0x58] sm:$0xff] %v656
    %691 = vst [vmem:[#allocation2 + $0x60] sm:$0xff] %v661
    %692 = vst [vmem:[#allocation2 + $0x68] sm:$0xff] %v666
    %693 = vst [vmem:[#allocation2 + $0x70] sm:$0xff] %v671
    %694 = vst [vmem:[#allocation2 + $0x78] sm:$0xff] %v676
    %v695 = vld [vmem:[#allocation2] sm:$0xff]
    %v696 = vld [vmem:[#allocation2 + $0x8] sm:$0xff]
    %v697 = vld [vmem:[#allocation2 + $0x10] sm:$0xff]
    %v698 = vld [vmem:[#allocation2 + $0x18] sm:$0xff]
    %v699 = vld [vmem:[#allocation2 + $0x20] sm:$0xff]
    %v700 = vld [vmem:[#allocation2 + $0x28] sm:$0xff]
    %v701 = vld [vmem:[#allocation2 + $0x30] sm:$0xff]
    %v702 = vld [vmem:[#allocation2 + $0x38] sm:$0xff]
    %v703 = vld [vmem:[#allocation2 + $0x40] sm:$0xff]
    %v704 = vld [vmem:[#allocation2 + $0x48] sm:$0xff]
    %v705 = vld [vmem:[#allocation2 + $0x50] sm:$0xff]
    %v706 = vld [vmem:[#allocation2 + $0x58] sm:$0xff]
    %v707 = vld [vmem:[#allocation2 + $0x60] sm:$0xff]
    %v708 = vld [vmem:[#allocation2 + $0x68] sm:$0xff]
    %v709 = vld [vmem:[#allocation2 + $0x70] sm:$0xff]
    %v710 = vld [vmem:[#allocation2 + $0x78] sm:$0xff]
    %v712 = vsel %vm485, %v695, 0
    %v715 = vsel %vm485, %v696, 0
    %v718 = vsel %vm485, %v697, 0
    %v721 = vsel %vm485, %v698, 0
    %v724 = vsel %vm485, %v699, 0
    %v727 = vsel %vm485, %v700, 0
    %v730 = vsel %vm485, %v701, 0
    %v733 = vsel %vm485, %v702, 0
    %v736 = vsel %vm485, %v703, 0
    %v739 = vsel %vm485, %v704, 0
    %v742 = vsel %vm485, %v705, 0
    %v745 = vsel %vm485, %v706, 0
    %v748 = vsel %vm485, %v707, 0
    %v751 = vsel %vm485, %v708, 0
    %v754 = vsel %vm485, %v709, 0
    %v757 = vsel %vm485, %v710, 0
    %v760 = vsel %vm485, %v141, 0
    %762 = vmatprep.subr.mxu0 0.0
    %763 = vmatpush1.xpose.msra.mxu0 %v760
    %764 = vmatprep.subr.mxu0 0.0
    %765 = vmatpush1.xpose.msra.mxu0 0.0
    %766 = vmatprep.subr.mxu0 0.0
    %767 = vmatpush1.xpose.msra.mxu0 0.0
    %768 = vmatprep.subr.mxu0 0.0
    %769 = vmatpush1.xpose.msra.mxu0 0.0
    %770 = vmatprep.subr.mxu0 0.0
    %771 = vmatpush1.xpose.msra.mxu0 0.0
    %772 = vmatprep.subr.mxu0 0.0
    %773 = vmatpush1.xpose.msra.mxu0 0.0
    %774 = vmatprep.subr.mxu0 0.0
    %775 = vmatpush1.xpose.msra.mxu0 0.0
    %776 = vmatprep.subr.mxu0 0.0
    %777 = vmatpush1.xpose.msra.mxu0 0.0
    %778 = vmatprep.subr.mxu0 0.0
    %779 = vmatpush1.xpose.msra.mxu0 0.0
    %780 = vmatprep.subr.mxu0 0.0
    %781 = vmatpush1.xpose.msra.mxu0 0.0
    %782 = vmatprep.subr.mxu0 0.0
    %783 = vmatpush1.xpose.msra.mxu0 0.0
    %784 = vmatprep.subr.mxu0 0.0
    %785 = vmatpush1.xpose.msra.mxu0 0.0
    %786 = vmatprep.subr.mxu0 0.0
    %787 = vmatpush1.xpose.msra.mxu0 0.0
    %788 = vmatprep.subr.mxu0 0.0
    %789 = vmatpush1.xpose.msra.mxu0 0.0
    %790 = vmatprep.subr.mxu0 0.0
    %791 = vmatpush1.xpose.msra.mxu0 0.0
    %792 = vmatprep.subr.mxu0 0.0
    %793 = vmatpush1.xpose.msra.mxu0 0.0
    %794 = vmatprep.subr.mxu0 0.0
    %795 = vmatpush1.xpose.msra.mxu0 0.0
    %796 = vmatprep.subr.mxu0 0.0
    %797 = vmatpush1.xpose.msra.mxu0 0.0
    %798 = vmatprep.subr.mxu0 0.0
    %799 = vmatpush1.xpose.msra.mxu0 0.0
    %800 = vmatprep.subr.mxu0 0.0
    %801 = vmatpush1.xpose.msra.mxu0 0.0
    %802 = vmatprep.subr.mxu0 0.0
    %803 = vmatpush1.xpose.msra.mxu0 0.0
    %804 = vmatprep.subr.mxu0 0.0
    %805 = vmatpush1.xpose.msra.mxu0 0.0
    %806 = vmatprep.subr.mxu0 0.0
    %807 = vmatpush1.xpose.msra.mxu0 0.0
    %808 = vmatprep.subr.mxu0 0.0
    %809 = vmatpush1.xpose.msra.mxu0 0.0
    %810 = vmatprep.subr.mxu0 0.0
    %811 = vmatpush1.xpose.msra.mxu0 0.0
    %812 = vmatprep.subr.mxu0 0.0
    %813 = vmatpush1.xpose.msra.mxu0 0.0
    %814 = vmatprep.subr.mxu0 0.0
    %815 = vmatpush1.xpose.msra.mxu0 0.0
    %816 = vmatprep.subr.mxu0 0.0
    %817 = vmatpush1.xpose.msra.mxu0 0.0
    %818 = vmatprep.subr.mxu0 0.0
    %819 = vmatpush1.xpose.msra.mxu0 0.0
    %820 = vmatprep.subr.mxu0 0.0
    %821 = vmatpush1.xpose.msra.mxu0 0.0
    %822 = vmatprep.subr.mxu0 0.0
    %823 = vmatpush1.xpose.msra.mxu0 0.0
    %824 = vmatprep.subr.mxu0 0.0
    %825 = vmatpush1.xpose.msra.mxu0 0.0
    %826 = vmatprep.mubr.f32.mxu0 0.0
    %827 = vmatmul.mubr.f32.gmra.mrb[0].mxu0 %v712
    %v828 = vpop.f32.mrb[0].mxu0
    %v829 = vadd.f32 0.0, %v828
    %v830 = vpop.f32.mrb[0].mxu0
    %831 = vmatprep.mubr.f32.mxu0 0.0
    %832 = vmatmul.mubr.f32.gmra.mrb[0].mxu0 %v715
    %v833 = vpop.f32.mrb[0].mxu0
    %v834 = vadd.f32 0.0, %v833
    %v835 = vpop.f32.mrb[0].mxu0
    %836 = vmatprep.mubr.f32.mxu0 0.0
    %837 = vmatmul.mubr.f32.gmra.mrb[0].mxu0 %v718
    %v838 = vpop.f32.mrb[0].mxu0
    %v839 = vadd.f32 0.0, %v838
    %v840 = vpop.f32.mrb[0].mxu0
    %841 = vmatprep.mubr.f32.mxu0 0.0
    %842 = vmatmul.mubr.f32.gmra.mrb[0].mxu0 %v721
    %v843 = vpop.f32.mrb[0].mxu0
    %v844 = vadd.f32 0.0, %v843
    %v845 = vpop.f32.mrb[0].mxu0
    %846 = vmatprep.mubr.f32.mxu0 0.0
    %847 = vmatmul.mubr.f32.gmra.mrb[0].mxu0 %v724
    %v848 = vpop.f32.mrb[0].mxu0
    %v849 = vadd.f32 0.0, %v848
    %v850 = vpop.f32.mrb[0].mxu0
    %851 = vmatprep.mubr.f32.mxu0 0.0
    %852 = vmatmul.mubr.f32.gmra.mrb[0].mxu0 %v727
    %v853 = vpop.f32.mrb[0].mxu0
    %v854 = vadd.f32 0.0, %v853
    %v855 = vpop.f32.mrb[0].mxu0
    %856 = vmatprep.mubr.f32.mxu0 0.0
    %857 = vmatmul.mubr.f32.gmra.mrb[0].mxu0 %v730
    %v858 = vpop.f32.mrb[0].mxu0
    %v859 = vadd.f32 0.0, %v858
    %v860 = vpop.f32.mrb[0].mxu0
    %861 = vmatprep.mubr.f32.mxu0 0.0
    %862 = vmatmul.mubr.f32.gmra.mrb[0].mxu0 %v733
    %v863 = vpop.f32.mrb[0].mxu0
    %v864 = vadd.f32 0.0, %v863
    %v865 = vpop.f32.mrb[0].mxu0
    %866 = vmatprep.mubr.f32.mxu0 0.0
    %867 = vmatmul.mubr.f32.gmra.mrb[0].mxu0 %v736
    %v868 = vpop.f32.mrb[0].mxu0
    %v869 = vadd.f32 0.0, %v868
    %v870 = vpop.f32.mrb[0].mxu0
    %871 = vmatprep.mubr.f32.mxu0 0.0
    %872 = vmatmul.mubr.f32.gmra.mrb[0].mxu0 %v739
    %v873 = vpop.f32.mrb[0].mxu0
    %v874 = vadd.f32 0.0, %v873
    %v875 = vpop.f32.mrb[0].mxu0
    %876 = vmatprep.mubr.f32.mxu0 0.0
    %877 = vmatmul.mubr.f32.gmra.mrb[0].mxu0 %v742
    %v878 = vpop.f32.mrb[0].mxu0
    %v879 = vadd.f32 0.0, %v878
    %v880 = vpop.f32.mrb[0].mxu0
    %881 = vmatprep.mubr.f32.mxu0 0.0
    %882 = vmatmul.mubr.f32.gmra.mrb[0].mxu0 %v745
    %v883 = vpop.f32.mrb[0].mxu0
    %v884 = vadd.f32 0.0, %v883
    %v885 = vpop.f32.mrb[0].mxu0
    %886 = vmatprep.mubr.f32.mxu0 0.0
    %887 = vmatmul.mubr.f32.gmra.mrb[0].mxu0 %v748
    %v888 = vpop.f32.mrb[0].mxu0
    %v889 = vadd.f32 0.0, %v888
    %v890 = vpop.f32.mrb[0].mxu0
    %891 = vmatprep.mubr.f32.mxu0 0.0
    %892 = vmatmul.mubr.f32.gmra.mrb[0].mxu0 %v751
    %v893 = vpop.f32.mrb[0].mxu0
    %v894 = vadd.f32 0.0, %v893
    %v895 = vpop.f32.mrb[0].mxu0
    %896 = vmatprep.mubr.f32.mxu0 0.0
    %897 = vmatmul.mubr.f32.gmra.mrb[0].mxu0 %v754
    %v898 = vpop.f32.mrb[0].mxu0
    %v899 = vadd.f32 0.0, %v898
    %v900 = vpop.f32.mrb[0].mxu0
    %901 = vmatprep.mubr.f32.mxu0 0.0
    %902 = vmatmul.mubr.f32.gmra.mrb[0].mxu0 %v757
    %v903 = vpop.f32.mrb[0].mxu0
    %v904 = vadd.f32 0.0, %v903
    %v905 = vpop.f32.mrb[0].mxu0
    %906 = vdwg.mxu0
    %vm907 = vcmask 31744
    %908 = vst.msk [vmem:[#allocation3] sm:$0xff] %vm907, %v829
    %909 = vst.msk [vmem:[#allocation3 + $0x8] sm:$0xff] %vm907, %v834
    %910 = vst.msk [vmem:[#allocation3 + $0x10] sm:$0xff] %vm907, %v839
    %911 = vst.msk [vmem:[#allocation3 + $0x18] sm:$0xff] %vm907, %v844
    %912 = vst.msk [vmem:[#allocation3 + $0x20] sm:$0xff] %vm907, %v849
    %913 = vst.msk [vmem:[#allocation3 + $0x28] sm:$0xff] %vm907, %v854
    %914 = vst.msk [vmem:[#allocation3 + $0x30] sm:$0xff] %vm907, %v859
    %915 = vst.msk [vmem:[#allocation3 + $0x38] sm:$0xff] %vm907, %v864
    %916 = vst.msk [vmem:[#allocation3 + $0x40] sm:$0xff] %vm907, %v869
    %917 = vst.msk [vmem:[#allocation3 + $0x48] sm:$0xff] %vm907, %v874
    %918 = vst.msk [vmem:[#allocation3 + $0x50] sm:$0xff] %vm907, %v879
    %919 = vst.msk [vmem:[#allocation3 + $0x58] sm:$0xff] %vm907, %v884
    %920 = vst.msk [vmem:[#allocation3 + $0x60] sm:$0xff] %vm907, %v889
    %921 = vst.msk [vmem:[#allocation3 + $0x68] sm:$0xff] %vm907, %v894
    %922 = vst.msk [vmem:[#allocation3 + $0x70] sm:$0xff] %vm907, %v899
    %923 = vst.msk [vmem:[#allocation3 + $0x78] sm:$0xff] %vm907, %v904
    %v924 = vld [vmem:[#allocation4] sm:$0xff]
    %v925 = vld [vmem:[#allocation4 + $0x8] sm:$0xff]
    %v926 = vld [vmem:[#allocation4 + $0x10] sm:$0xff]
    %v927 = vld [vmem:[#allocation4 + $0x18] sm:$0xff]
    %v928 = vld [vmem:[#allocation4 + $0x20] sm:$0xff]
    %v929 = vld [vmem:[#allocation4 + $0x28] sm:$0xff]
    %v930 = vld [vmem:[#allocation4 + $0x30] sm:$0xff]
    %v931 = vld [vmem:[#allocation4 + $0x38] sm:$0xff]
    %v932 = vld [vmem:[#allocation4 + $0x40] sm:$0xff]
    %v933 = vld [vmem:[#allocation4 + $0x48] sm:$0xff]
    %v934 = vld [vmem:[#allocation4 + $0x50] sm:$0xff]
    %v935 = vld [vmem:[#allocation4 + $0x58] sm:$0xff]
    %v936 = vld [vmem:[#allocation4 + $0x60] sm:$0xff]
    %v937 = vld [vmem:[#allocation4 + $0x68] sm:$0xff]
    %v938 = vld [vmem:[#allocation4 + $0x70] sm:$0xff]
    %v939 = vld [vmem:[#allocation4 + $0x78] sm:$0xff]
    %v940 = vld [vmem:[#allocation3] sm:$0xff]
    %v941 = vld [vmem:[#allocation3 + $0x8] sm:$0xff]
    %v942 = vld [vmem:[#allocation3 + $0x10] sm:$0xff]
    %v943 = vld [vmem:[#allocation3 + $0x18] sm:$0xff]
    %v944 = vld [vmem:[#allocation3 + $0x20] sm:$0xff]
    %v945 = vld [vmem:[#allocation3 + $0x28] sm:$0xff]
    %v946 = vld [vmem:[#allocation3 + $0x30] sm:$0xff]
    %v947 = vld [vmem:[#allocation3 + $0x38] sm:$0xff]
    %v948 = vld [vmem:[#allocation3 + $0x40] sm:$0xff]
    %v949 = vld [vmem:[#allocation3 + $0x48] sm:$0xff]
    %v950 = vld [vmem:[#allocation3 + $0x50] sm:$0xff]
    %v951 = vld [vmem:[#allocation3 + $0x58] sm:$0xff]
    %v952 = vld [vmem:[#allocation3 + $0x60] sm:$0xff]
    %v953 = vld [vmem:[#allocation3 + $0x68] sm:$0xff]
    %v954 = vld [vmem:[#allocation3 + $0x70] sm:$0xff]
    %v955 = vld [vmem:[#allocation3 + $0x78] sm:$0xff]
    %957 = vset.pattern.permute.xlu0 0
    %958 = vperm.xlu0 %957, %v940
    %v959 = vpop.permute.xlu0 %958
    %962 = vset.pattern.permute.xlu0 0
    %963 = vperm.xlu0 %962, %v941
    %v964 = vpop.permute.xlu0 %963
    %967 = vset.pattern.permute.xlu0 0
    %968 = vperm.xlu0 %967, %v942
    %v969 = vpop.permute.xlu0 %968
    %972 = vset.pattern.permute.xlu0 0
    %973 = vperm.xlu0 %972, %v943
    %v974 = vpop.permute.xlu0 %973
    %977 = vset.pattern.permute.xlu0 0
    %978 = vperm.xlu0 %977, %v944
    %v979 = vpop.permute.xlu0 %978
    %982 = vset.pattern.permute.xlu0 0
    %983 = vperm.xlu0 %982, %v945
    %v984 = vpop.permute.xlu0 %983
    %987 = vset.pattern.permute.xlu0 0
    %988 = vperm.xlu0 %987, %v946
    %v989 = vpop.permute.xlu0 %988
    %992 = vset.pattern.permute.xlu0 0
    %993 = vperm.xlu0 %992, %v947
    %v994 = vpop.permute.xlu0 %993
    %997 = vset.pattern.permute.xlu0 0
    %998 = vperm.xlu0 %997, %v948
    %v999 = vpop.permute.xlu0 %998
    %1002 = vset.pattern.permute.xlu0 0
    %1003 = vperm.xlu0 %1002, %v949
    %v1004 = vpop.permute.xlu0 %1003
    %1007 = vset.pattern.permute.xlu0 0
    %1008 = vperm.xlu0 %1007, %v950
    %v1009 = vpop.permute.xlu0 %1008
    %1012 = vset.pattern.permute.xlu0 0
    %1013 = vperm.xlu0 %1012, %v951
    %v1014 = vpop.permute.xlu0 %1013
    %1017 = vset.pattern.permute.xlu0 0
    %1018 = vperm.xlu0 %1017, %v952
    %v1019 = vpop.permute.xlu0 %1018
    %1022 = vset.pattern.permute.xlu0 0
    %1023 = vperm.xlu0 %1022, %v953
    %v1024 = vpop.permute.xlu0 %1023
    %1027 = vset.pattern.permute.xlu0 0
    %1028 = vperm.xlu0 %1027, %v954
    %v1029 = vpop.permute.xlu0 %1028
    %1032 = vset.pattern.permute.xlu0 0
    %1033 = vperm.xlu0 %1032, %v955
    %v1034 = vpop.permute.xlu0 %1033
    %v1036 = vmul.f32 %v924, %v959
    %v1037 = vmul.f32 %v925, %v964
    %v1038 = vmul.f32 %v926, %v969
    %v1039 = vmul.f32 %v927, %v974
    %v1040 = vmul.f32 %v928, %v979
    %v1041 = vmul.f32 %v929, %v984
    %v1042 = vmul.f32 %v930, %v989
    %v1043 = vmul.f32 %v931, %v994
    %v1044 = vmul.f32 %v932, %v999
    %v1045 = vmul.f32 %v933, %v1004
    %v1046 = vmul.f32 %v934, %v1009
    %v1047 = vmul.f32 %v935, %v1014
    %v1048 = vmul.f32 %v936, %v1019
    %v1049 = vmul.f32 %v937, %v1024
    %v1050 = vmul.f32 %v938, %v1029
    %v1051 = vmul.f32 %v939, %v1034
    %1052 = vrot.lane.b32.xlu0 %v695, 96
    %v1053 = vpop.permute.xlu0 %1052
    %1054 = vrot.lane.b32.xlu0 %v696, 96
    %v1055 = vpop.permute.xlu0 %1054
    %1056 = vrot.lane.b32.xlu0 %v697, 96
    %v1057 = vpop.permute.xlu0 %1056
    %1058 = vrot.lane.b32.xlu0 %v698, 96
    %v1059 = vpop.permute.xlu0 %1058
    %1060 = vrot.lane.b32.xlu0 %v699, 96
    %v1061 = vpop.permute.xlu0 %1060
    %1062 = vrot.lane.b32.xlu0 %v700, 96
    %v1063 = vpop.permute.xlu0 %1062
    %1064 = vrot.lane.b32.xlu0 %v701, 96
    %v1065 = vpop.permute.xlu0 %1064
    %1066 = vrot.lane.b32.xlu0 %v702, 96
    %v1067 = vpop.permute.xlu0 %1066
    %1068 = vrot.lane.b32.xlu0 %v703, 96
    %v1069 = vpop.permute.xlu0 %1068
    %1070 = vrot.lane.b32.xlu0 %v704, 96
    %v1071 = vpop.permute.xlu0 %1070
    %1072 = vrot.lane.b32.xlu0 %v705, 96
    %v1073 = vpop.permute.xlu0 %1072
    %1074 = vrot.lane.b32.xlu0 %v706, 96
    %v1075 = vpop.permute.xlu0 %1074
    %1076 = vrot.lane.b32.xlu0 %v707, 96
    %v1077 = vpop.permute.xlu0 %1076
    %1078 = vrot.lane.b32.xlu0 %v708, 96
    %v1079 = vpop.permute.xlu0 %1078
    %1080 = vrot.lane.b32.xlu0 %v709, 96
    %v1081 = vpop.permute.xlu0 %1080
    %1082 = vrot.lane.b32.xlu0 %v710, 96
    %v1083 = vpop.permute.xlu0 %1082
    %v1084 = vsel %vm485, %v1053, 0
    %v1086 = vsel %vm485, %v1055, 0
    %v1088 = vsel %vm485, %v1057, 0
    %v1090 = vsel %vm485, %v1059, 0
    %v1092 = vsel %vm485, %v1061, 0
    %v1094 = vsel %vm485, %v1063, 0
    %v1096 = vsel %vm485, %v1065, 0
    %v1098 = vsel %vm485, %v1067, 0
    %v1100 = vsel %vm485, %v1069, 0
    %v1102 = vsel %vm485, %v1071, 0
    %v1104 = vsel %vm485, %v1073, 0
    %v1106 = vsel %vm485, %v1075, 0
    %v1108 = vsel %vm485, %v1077, 0
    %v1110 = vsel %vm485, %v1079, 0
    %v1112 = vsel %vm485, %v1081, 0
    %v1114 = vsel %vm485, %v1083, 0
    %1116 = vmatprep.subr.mxu0 0.0
    %1117 = vmatpush1.xpose.msra.mxu0 %v1084
    %1118 = vmatprep.subr.mxu0 0.0
    %1119 = vmatpush1.xpose.msra.mxu0 %v1086
    %1120 = vmatprep.subr.mxu0 0.0
    %1121 = vmatpush1.xpose.msra.mxu0 %v1088
    %1122 = vmatprep.subr.mxu0 0.0
    %1123 = vmatpush1.xpose.msra.mxu0 %v1090
    %1124 = vmatprep.subr.mxu0 0.0
    %1125 = vmatpush1.xpose.msra.mxu0 %v1092
    %1126 = vmatprep.subr.mxu0 0.0
    %1127 = vmatpush1.xpose.msra.mxu0 %v1094
    %1128 = vmatprep.subr.mxu0 0.0
    %1129 = vmatpush1.xpose.msra.mxu0 %v1096
    %1130 = vmatprep.subr.mxu0 0.0
    %1131 = vmatpush1.xpose.msra.mxu0 %v1098
    %1132 = vmatprep.subr.mxu0 0.0
    %1133 = vmatpush1.xpose.msra.mxu0 %v1100
    %1134 = vmatprep.subr.mxu0 0.0
    %1135 = vmatpush1.xpose.msra.mxu0 %v1102
    %1136 = vmatprep.subr.mxu0 0.0
    %1137 = vmatpush1.xpose.msra.mxu0 %v1104
    %1138 = vmatprep.subr.mxu0 0.0
    %1139 = vmatpush1.xpose.msra.mxu0 %v1106
    %1140 = vmatprep.subr.mxu0 0.0
    %1141 = vmatpush1.xpose.msra.mxu0 %v1108
    %1142 = vmatprep.subr.mxu0 0.0
    %1143 = vmatpush1.xpose.msra.mxu0 %v1110
    %1144 = vmatprep.subr.mxu0 0.0
    %1145 = vmatpush1.xpose.msra.mxu0 %v1112
    %1146 = vmatprep.subr.mxu0 0.0
    %1147 = vmatpush1.xpose.msra.mxu0 %v1114
    %1148 = vmatprep.subr.mxu0 0.0
    %1149 = vmatpush1.xpose.msra.mxu0 0.0
    %1150 = vmatprep.subr.mxu0 0.0
    %1151 = vmatpush1.xpose.msra.mxu0 0.0
    %1152 = vmatprep.subr.mxu0 0.0
    %1153 = vmatpush1.xpose.msra.mxu0 0.0
    %1154 = vmatprep.subr.mxu0 0.0
    %1155 = vmatpush1.xpose.msra.mxu0 0.0
    %1156 = vmatprep.subr.mxu0 0.0
    %1157 = vmatpush1.xpose.msra.mxu0 0.0
    %1158 = vmatprep.subr.mxu0 0.0
    %1159 = vmatpush1.xpose.msra.mxu0 0.0
    %1160 = vmatprep.subr.mxu0 0.0
    %1161 = vmatpush1.xpose.msra.mxu0 0.0
    %1162 = vmatprep.subr.mxu0 0.0
    %1163 = vmatpush1.xpose.msra.mxu0 0.0
    %1164 = vmatprep.subr.mxu0 0.0
    %1165 = vmatpush1.xpose.msra.mxu0 0.0
    %1166 = vmatprep.subr.mxu0 0.0
    %1167 = vmatpush1.xpose.msra.mxu0 0.0
    %1168 = vmatprep.subr.mxu0 0.0
    %1169 = vmatpush1.xpose.msra.mxu0 0.0
    %1170 = vmatprep.subr.mxu0 0.0
    %1171 = vmatpush1.xpose.msra.mxu0 0.0
    %1172 = vmatprep.subr.mxu0 0.0
    %1173 = vmatpush1.xpose.msra.mxu0 0.0
    %1174 = vmatprep.subr.mxu0 0.0
    %1175 = vmatpush1.xpose.msra.mxu0 0.0
    %1176 = vmatprep.subr.mxu0 0.0
    %1177 = vmatpush1.xpose.msra.mxu0 0.0
    %1178 = vmatprep.subr.mxu0 0.0
    %1179 = vmatpush1.xpose.msra.mxu0 0.0
    %1180 = vmatprep.mubr.f32.mxu0 0.0
    %1181 = vmatmul.mubr.f32.gmra.mrb[0].mxu0 %v712
    %v1182 = vpop.f32.mrb[0].mxu0
    %v1183 = vadd.f32 %v1036, %v1182
    %v1184 = vpop.f32.mrb[0].mxu0
    %1185 = vmatprep.mubr.f32.mxu0 0.0
    %1186 = vmatmul.mubr.f32.gmra.mrb[0].mxu0 %v715
    %v1187 = vpop.f32.mrb[0].mxu0
    %v1188 = vadd.f32 %v1037, %v1187
    %v1189 = vpop.f32.mrb[0].mxu0
    %1190 = vmatprep.mubr.f32.mxu0 0.0
    %1191 = vmatmul.mubr.f32.gmra.mrb[0].mxu0 %v718
    %v1192 = vpop.f32.mrb[0].mxu0
    %v1193 = vadd.f32 %v1038, %v1192
    %v1194 = vpop.f32.mrb[0].mxu0
    %1195 = vmatprep.mubr.f32.mxu0 0.0
    %1196 = vmatmul.mubr.f32.gmra.mrb[0].mxu0 %v721
    %v1197 = vpop.f32.mrb[0].mxu0
    %v1198 = vadd.f32 %v1039, %v1197
    %v1199 = vpop.f32.mrb[0].mxu0
    %1200 = vmatprep.mubr.f32.mxu0 0.0
    %1201 = vmatmul.mubr.f32.gmra.mrb[0].mxu0 %v724
    %v1202 = vpop.f32.mrb[0].mxu0
    %v1203 = vadd.f32 %v1040, %v1202
    %v1204 = vpop.f32.mrb[0].mxu0
    %1205 = vmatprep.mubr.f32.mxu0 0.0
    %1206 = vmatmul.mubr.f32.gmra.mrb[0].mxu0 %v727
    %v1207 = vpop.f32.mrb[0].mxu0
    %v1208 = vadd.f32 %v1041, %v1207
    %v1209 = vpop.f32.mrb[0].mxu0
    %1210 = vmatprep.mubr.f32.mxu0 0.0
    %1211 = vmatmul.mubr.f32.gmra.mrb[0].mxu0 %v730
    %v1212 = vpop.f32.mrb[0].mxu0
    %v1213 = vadd.f32 %v1042, %v1212
    %v1214 = vpop.f32.mrb[0].mxu0
    %1215 = vmatprep.mubr.f32.mxu0 0.0
    %1216 = vmatmul.mubr.f32.gmra.mrb[0].mxu0 %v733
    %v1217 = vpop.f32.mrb[0].mxu0
    %v1218 = vadd.f32 %v1043, %v1217
    %v1219 = vpop.f32.mrb[0].mxu0
    %1220 = vmatprep.mubr.f32.mxu0 0.0
    %1221 = vmatmul.mubr.f32.gmra.mrb[0].mxu0 %v736
    %v1222 = vpop.f32.mrb[0].mxu0
    %v1223 = vadd.f32 %v1044, %v1222
    %v1224 = vpop.f32.mrb[0].mxu0
    %1225 = vmatprep.mubr.f32.mxu0 0.0
    %1226 = vmatmul.mubr.f32.gmra.mrb[0].mxu0 %v739
    %v1227 = vpop.f32.mrb[0].mxu0
    %v1228 = vadd.f32 %v1045, %v1227
    %v1229 = vpop.f32.mrb[0].mxu0
    %1230 = vmatprep.mubr.f32.mxu0 0.0
    %1231 = vmatmul.mubr.f32.gmra.mrb[0].mxu0 %v742
    %v1232 = vpop.f32.mrb[0].mxu0
    %v1233 = vadd.f32 %v1046, %v1232
    %v1234 = vpop.f32.mrb[0].mxu0
    %1235 = vmatprep.mubr.f32.mxu0 0.0
    %1236 = vmatmul.mubr.f32.gmra.mrb[0].mxu0 %v745
    %v1237 = vpop.f32.mrb[0].mxu0
    %v1238 = vadd.f32 %v1047, %v1237
    %v1239 = vpop.f32.mrb[0].mxu0
    %1240 = vmatprep.mubr.f32.mxu0 0.0
    %1241 = vmatmul.mubr.f32.gmra.mrb[0].mxu0 %v748
    %v1242 = vpop.f32.mrb[0].mxu0
    %v1243 = vadd.f32 %v1048, %v1242
    %v1244 = vpop.f32.mrb[0].mxu0
    %1245 = vmatprep.mubr.f32.mxu0 0.0
    %1246 = vmatmul.mubr.f32.gmra.mrb[0].mxu0 %v751
    %v1247 = vpop.f32.mrb[0].mxu0
    %v1248 = vadd.f32 %v1049, %v1247
    %v1249 = vpop.f32.mrb[0].mxu0
    %1250 = vmatprep.mubr.f32.mxu0 0.0
    %1251 = vmatmul.mubr.f32.gmra.mrb[0].mxu0 %v754
    %v1252 = vpop.f32.mrb[0].mxu0
    %v1253 = vadd.f32 %v1050, %v1252
    %v1254 = vpop.f32.mrb[0].mxu0
    %1255 = vmatprep.mubr.f32.mxu0 0.0
    %1256 = vmatmul.mubr.f32.gmra.mrb[0].mxu0 %v757
    %v1257 = vpop.f32.mrb[0].mxu0
    %v1258 = vadd.f32 %v1051, %v1257
    %v1259 = vpop.f32.mrb[0].mxu0
    %1260 = vdwg.mxu0
    %s1261 = scalar_lea.vmem [#allocation4], 128
    %v1262 = vld [vmem:[%s1261] sm:$0xff]
    %v1263 = vld [vmem:[%s1261 + $0x8] sm:$0xff]
    %v1264 = vld [vmem:[%s1261 + $0x10] sm:$0xff]
    %v1265 = vld [vmem:[%s1261 + $0x18] sm:$0xff]
    %v1266 = vld [vmem:[%s1261 + $0x20] sm:$0xff]
    %v1267 = vld [vmem:[%s1261 + $0x28] sm:$0xff]
    %v1268 = vld [vmem:[%s1261 + $0x30] sm:$0xff]
    %v1269 = vld [vmem:[%s1261 + $0x38] sm:$0xff]
    %v1270 = vld [vmem:[%s1261 + $0x40] sm:$0xff]
    %v1271 = vld [vmem:[%s1261 + $0x48] sm:$0xff]
    %v1272 = vld [vmem:[%s1261 + $0x50] sm:$0xff]
    %v1273 = vld [vmem:[%s1261 + $0x58] sm:$0xff]
    %v1274 = vld [vmem:[%s1261 + $0x60] sm:$0xff]
    %v1275 = vld [vmem:[%s1261 + $0x68] sm:$0xff]
    %v1276 = vld [vmem:[%s1261 + $0x70] sm:$0xff]
    %v1277 = vld [vmem:[%s1261 + $0x78] sm:$0xff]
    %1278 = vset.pattern.permute.xlu0 1
    %1279 = vperm.xlu0 %1278, %v940
    %v1280 = vpop.permute.xlu0 %1279
    %1282 = vset.pattern.permute.xlu0 1
    %1283 = vperm.xlu0 %1282, %v941
    %v1284 = vpop.permute.xlu0 %1283
    %1286 = vset.pattern.permute.xlu0 1
    %1287 = vperm.xlu0 %1286, %v942
    %v1288 = vpop.permute.xlu0 %1287
    %1290 = vset.pattern.permute.xlu0 1
    %1291 = vperm.xlu0 %1290, %v943
    %v1292 = vpop.permute.xlu0 %1291
    %1294 = vset.pattern.permute.xlu0 1
    %1295 = vperm.xlu0 %1294, %v944
    %v1296 = vpop.permute.xlu0 %1295
    %1298 = vset.pattern.permute.xlu0 1
    %1299 = vperm.xlu0 %1298, %v945
    %v1300 = vpop.permute.xlu0 %1299
    %1302 = vset.pattern.permute.xlu0 1
    %1303 = vperm.xlu0 %1302, %v946
    %v1304 = vpop.permute.xlu0 %1303
    %1306 = vset.pattern.permute.xlu0 1
    %1307 = vperm.xlu0 %1306, %v947
    %v1308 = vpop.permute.xlu0 %1307
    %1310 = vset.pattern.permute.xlu0 1
    %1311 = vperm.xlu0 %1310, %v948
    %v1312 = vpop.permute.xlu0 %1311
    %1314 = vset.pattern.permute.xlu0 1
    %1315 = vperm.xlu0 %1314, %v949
    %v1316 = vpop.permute.xlu0 %1315
    %1318 = vset.pattern.permute.xlu0 1
    %1319 = vperm.xlu0 %1318, %v950
    %v1320 = vpop.permute.xlu0 %1319
    %1322 = vset.pattern.permute.xlu0 1
    %1323 = vperm.xlu0 %1322, %v951
    %v1324 = vpop.permute.xlu0 %1323
    %1326 = vset.pattern.permute.xlu0 1
    %1327 = vperm.xlu0 %1326, %v952
    %v1328 = vpop.permute.xlu0 %1327
    %1330 = vset.pattern.permute.xlu0 1
    %1331 = vperm.xlu0 %1330, %v953
    %v1332 = vpop.permute.xlu0 %1331
    %1334 = vset.pattern.permute.xlu0 1
    %1335 = vperm.xlu0 %1334, %v954
    %v1336 = vpop.permute.xlu0 %1335
    %1338 = vset.pattern.permute.xlu0 1
    %1339 = vperm.xlu0 %1338, %v955
    %v1340 = vpop.permute.xlu0 %1339
    %v1342 = vmul.f32 %v1262, %v1280
    %v1343 = vmul.f32 %v1263, %v1284
    %v1344 = vmul.f32 %v1264, %v1288
    %v1345 = vmul.f32 %v1265, %v1292
    %v1346 = vmul.f32 %v1266, %v1296
    %v1347 = vmul.f32 %v1267, %v1300
    %v1348 = vmul.f32 %v1268, %v1304
    %v1349 = vmul.f32 %v1269, %v1308
    %v1350 = vmul.f32 %v1270, %v1312
    %v1351 = vmul.f32 %v1271, %v1316
    %v1352 = vmul.f32 %v1272, %v1320
    %v1353 = vmul.f32 %v1273, %v1324
    %v1354 = vmul.f32 %v1274, %v1328
    %v1355 = vmul.f32 %v1275, %v1332
    %v1356 = vmul.f32 %v1276, %v1336
    %v1357 = vmul.f32 %v1277, %v1340
    %v1358 = vadd.f32 %v1183, %v1342
    %v1359 = vadd.f32 %v1188, %v1343
    %v1360 = vadd.f32 %v1193, %v1344
    %v1361 = vadd.f32 %v1198, %v1345
    %v1362 = vadd.f32 %v1203, %v1346
    %v1363 = vadd.f32 %v1208, %v1347
    %v1364 = vadd.f32 %v1213, %v1348
    %v1365 = vadd.f32 %v1218, %v1349
    %v1366 = vadd.f32 %v1223, %v1350
    %v1367 = vadd.f32 %v1228, %v1351
    %v1368 = vadd.f32 %v1233, %v1352
    %v1369 = vadd.f32 %v1238, %v1353
    %v1370 = vadd.f32 %v1243, %v1354
    %v1371 = vadd.f32 %v1248, %v1355
    %v1372 = vadd.f32 %v1253, %v1356
    %v1373 = vadd.f32 %v1258, %v1357
    %s1374 = scalar_lea.vmem [#allocation4], 256
    %v1375 = vld [vmem:[%s1374] sm:$0xff]
    %v1376 = vld [vmem:[%s1374 + $0x8] sm:$0xff]
    %v1377 = vld [vmem:[%s1374 + $0x10] sm:$0xff]
    %v1378 = vld [vmem:[%s1374 + $0x18] sm:$0xff]
    %v1379 = vld [vmem:[%s1374 + $0x20] sm:$0xff]
    %v1380 = vld [vmem:[%s1374 + $0x28] sm:$0xff]
    %v1381 = vld [vmem:[%s1374 + $0x30] sm:$0xff]
    %v1382 = vld [vmem:[%s1374 + $0x38] sm:$0xff]
    %v1383 = vld [vmem:[%s1374 + $0x40] sm:$0xff]
    %v1384 = vld [vmem:[%s1374 + $0x48] sm:$0xff]
    %v1385 = vld [vmem:[%s1374 + $0x50] sm:$0xff]
    %v1386 = vld [vmem:[%s1374 + $0x58] sm:$0xff]
    %v1387 = vld [vmem:[%s1374 + $0x60] sm:$0xff]
    %v1388 = vld [vmem:[%s1374 + $0x68] sm:$0xff]
    %v1389 = vld [vmem:[%s1374 + $0x70] sm:$0xff]
    %v1390 = vld [vmem:[%s1374 + $0x78] sm:$0xff]
    %1391 = vset.pattern.permute.xlu0 2
    %1392 = vperm.xlu0 %1391, %v940
    %v1393 = vpop.permute.xlu0 %1392
    %1395 = vset.pattern.permute.xlu0 2
    %1396 = vperm.xlu0 %1395, %v941
    %v1397 = vpop.permute.xlu0 %1396
    %1399 = vset.pattern.permute.xlu0 2
    %1400 = vperm.xlu0 %1399, %v942
    %v1401 = vpop.permute.xlu0 %1400
    %1403 = vset.pattern.permute.xlu0 2
    %1404 = vperm.xlu0 %1403, %v943
    %v1405 = vpop.permute.xlu0 %1404
    %1407 = vset.pattern.permute.xlu0 2
    %1408 = vperm.xlu0 %1407, %v944
    %v1409 = vpop.permute.xlu0 %1408
    %1411 = vset.pattern.permute.xlu0 2
    %1412 = vperm.xlu0 %1411, %v945
    %v1413 = vpop.permute.xlu0 %1412
    %1415 = vset.pattern.permute.xlu0 2
    %1416 = vperm.xlu0 %1415, %v946
    %v1417 = vpop.permute.xlu0 %1416
    %1419 = vset.pattern.permute.xlu0 2
    %1420 = vperm.xlu0 %1419, %v947
    %v1421 = vpop.permute.xlu0 %1420
    %1423 = vset.pattern.permute.xlu0 2
    %1424 = vperm.xlu0 %1423, %v948
    %v1425 = vpop.permute.xlu0 %1424
    %1427 = vset.pattern.permute.xlu0 2
    %1428 = vperm.xlu0 %1427, %v949
    %v1429 = vpop.permute.xlu0 %1428
    %1431 = vset.pattern.permute.xlu0 2
    %1432 = vperm.xlu0 %1431, %v950
    %v1433 = vpop.permute.xlu0 %1432
    %1435 = vset.pattern.permute.xlu0 2
    %1436 = vperm.xlu0 %1435, %v951
    %v1437 = vpop.permute.xlu0 %1436
    %1439 = vset.pattern.permute.xlu0 2
    %1440 = vperm.xlu0 %1439, %v952
    %v1441 = vpop.permute.xlu0 %1440
    %1443 = vset.pattern.permute.xlu0 2
    %1444 = vperm.xlu0 %1443, %v953
    %v1445 = vpop.permute.xlu0 %1444
    %1447 = vset.pattern.permute.xlu0 2
    %1448 = vperm.xlu0 %1447, %v954
    %v1449 = vpop.permute.xlu0 %1448
    %1451 = vset.pattern.permute.xlu0 2
    %1452 = vperm.xlu0 %1451, %v955
    %v1453 = vpop.permute.xlu0 %1452
    %v1455 = vmul.f32 %v1375, %v1393
    %v1456 = vmul.f32 %v1376, %v1397
    %v1457 = vmul.f32 %v1377, %v1401
    %v1458 = vmul.f32 %v1378, %v1405
    %v1459 = vmul.f32 %v1379, %v1409
    %v1460 = vmul.f32 %v1380, %v1413
    %v1461 = vmul.f32 %v1381, %v1417
    %v1462 = vmul.f32 %v1382, %v1421
    %v1463 = vmul.f32 %v1383, %v1425
    %v1464 = vmul.f32 %v1384, %v1429
    %v1465 = vmul.f32 %v1385, %v1433
    %v1466 = vmul.f32 %v1386, %v1437
    %v1467 = vmul.f32 %v1387, %v1441
    %v1468 = vmul.f32 %v1388, %v1445
    %v1469 = vmul.f32 %v1389, %v1449
    %v1470 = vmul.f32 %v1390, %v1453
    %v1471 = vadd.f32 %v1358, %v1455
    %v1472 = vadd.f32 %v1359, %v1456
    %v1473 = vadd.f32 %v1360, %v1457
    %v1474 = vadd.f32 %v1361, %v1458
    %v1475 = vadd.f32 %v1362, %v1459
    %v1476 = vadd.f32 %v1363, %v1460
    %v1477 = vadd.f32 %v1364, %v1461
    %v1478 = vadd.f32 %v1365, %v1462
    %v1479 = vadd.f32 %v1366, %v1463
    %v1480 = vadd.f32 %v1367, %v1464
    %v1481 = vadd.f32 %v1368, %v1465
    %v1482 = vadd.f32 %v1369, %v1466
    %v1483 = vadd.f32 %v1370, %v1467
    %v1484 = vadd.f32 %v1371, %v1468
    %v1485 = vadd.f32 %v1372, %v1469
    %v1486 = vadd.f32 %v1373, %v1470
    %s1487 = scalar_lea.vmem [#allocation4], 384
    %v1488 = vld [vmem:[%s1487] sm:$0xff]
    %v1489 = vld [vmem:[%s1487 + $0x8] sm:$0xff]
    %v1490 = vld [vmem:[%s1487 + $0x10] sm:$0xff]
    %v1491 = vld [vmem:[%s1487 + $0x18] sm:$0xff]
    %v1492 = vld [vmem:[%s1487 + $0x20] sm:$0xff]
    %v1493 = vld [vmem:[%s1487 + $0x28] sm:$0xff]
    %v1494 = vld [vmem:[%s1487 + $0x30] sm:$0xff]
    %v1495 = vld [vmem:[%s1487 + $0x38] sm:$0xff]
    %v1496 = vld [vmem:[%s1487 + $0x40] sm:$0xff]
    %v1497 = vld [vmem:[%s1487 + $0x48] sm:$0xff]
    %v1498 = vld [vmem:[%s1487 + $0x50] sm:$0xff]
    %v1499 = vld [vmem:[%s1487 + $0x58] sm:$0xff]
    %v1500 = vld [vmem:[%s1487 + $0x60] sm:$0xff]
    %v1501 = vld [vmem:[%s1487 + $0x68] sm:$0xff]
    %v1502 = vld [vmem:[%s1487 + $0x70] sm:$0xff]
    %v1503 = vld [vmem:[%s1487 + $0x78] sm:$0xff]
    %1504 = vset.pattern.permute.xlu0 3
    %1505 = vperm.xlu0 %1504, %v940
    %v1506 = vpop.permute.xlu0 %1505
    %1508 = vset.pattern.permute.xlu0 3
    %1509 = vperm.xlu0 %1508, %v941
    %v1510 = vpop.permute.xlu0 %1509
    %1512 = vset.pattern.permute.xlu0 3
    %1513 = vperm.xlu0 %1512, %v942
    %v1514 = vpop.permute.xlu0 %1513
    %1516 = vset.pattern.permute.xlu0 3
    %1517 = vperm.xlu0 %1516, %v943
    %v1518 = vpop.permute.xlu0 %1517
    %1520 = vset.pattern.permute.xlu0 3
    %1521 = vperm.xlu0 %1520, %v944
    %v1522 = vpop.permute.xlu0 %1521
    %1524 = vset.pattern.permute.xlu0 3
    %1525 = vperm.xlu0 %1524, %v945
    %v1526 = vpop.permute.xlu0 %1525
    %1528 = vset.pattern.permute.xlu0 3
    %1529 = vperm.xlu0 %1528, %v946
    %v1530 = vpop.permute.xlu0 %1529
    %1532 = vset.pattern.permute.xlu0 3
    %1533 = vperm.xlu0 %1532, %v947
    %v1534 = vpop.permute.xlu0 %1533
    %1536 = vset.pattern.permute.xlu0 3
    %1537 = vperm.xlu0 %1536, %v948
    %v1538 = vpop.permute.xlu0 %1537
    %1540 = vset.pattern.permute.xlu0 3
    %1541 = vperm.xlu0 %1540, %v949
    %v1542 = vpop.permute.xlu0 %1541
    %1544 = vset.pattern.permute.xlu0 3
    %1545 = vperm.xlu0 %1544, %v950
    %v1546 = vpop.permute.xlu0 %1545
    %1548 = vset.pattern.permute.xlu0 3
    %1549 = vperm.xlu0 %1548, %v951
    %v1550 = vpop.permute.xlu0 %1549
    %1552 = vset.pattern.permute.xlu0 3
    %1553 = vperm.xlu0 %1552, %v952
    %v1554 = vpop.permute.xlu0 %1553
    %1556 = vset.pattern.permute.xlu0 3
    %1557 = vperm.xlu0 %1556, %v953
    %v1558 = vpop.permute.xlu0 %1557
    %1560 = vset.pattern.permute.xlu0 3
    %1561 = vperm.xlu0 %1560, %v954
    %v1562 = vpop.permute.xlu0 %1561
    %1564 = vset.pattern.permute.xlu0 3
    %1565 = vperm.xlu0 %1564, %v955
    %v1566 = vpop.permute.xlu0 %1565
    %v1568 = vmul.f32 %v1488, %v1506
    %v1569 = vmul.f32 %v1489, %v1510
    %v1570 = vmul.f32 %v1490, %v1514
    %v1571 = vmul.f32 %v1491, %v1518
    %v1572 = vmul.f32 %v1492, %v1522
    %v1573 = vmul.f32 %v1493, %v1526
    %v1574 = vmul.f32 %v1494, %v1530
    %v1575 = vmul.f32 %v1495, %v1534
    %v1576 = vmul.f32 %v1496, %v1538
    %v1577 = vmul.f32 %v1497, %v1542
    %v1578 = vmul.f32 %v1498, %v1546
    %v1579 = vmul.f32 %v1499, %v1550
    %v1580 = vmul.f32 %v1500, %v1554
    %v1581 = vmul.f32 %v1501, %v1558
    %v1582 = vmul.f32 %v1502, %v1562
    %v1583 = vmul.f32 %v1503, %v1566
    %v1584 = vadd.f32 %v1471, %v1568
    %v1585 = vadd.f32 %v1472, %v1569
    %v1586 = vadd.f32 %v1473, %v1570
    %v1587 = vadd.f32 %v1474, %v1571
    %v1588 = vadd.f32 %v1475, %v1572
    %v1589 = vadd.f32 %v1476, %v1573
    %v1590 = vadd.f32 %v1477, %v1574
    %v1591 = vadd.f32 %v1478, %v1575
    %v1592 = vadd.f32 %v1479, %v1576
    %v1593 = vadd.f32 %v1480, %v1577
    %v1594 = vadd.f32 %v1481, %v1578
    %v1595 = vadd.f32 %v1482, %v1579
    %v1596 = vadd.f32 %v1483, %v1580
    %v1597 = vadd.f32 %v1484, %v1581
    %v1598 = vadd.f32 %v1485, %v1582
    %v1599 = vadd.f32 %v1486, %v1583
    %v1600 = vmul.f32 %v1584, 0.17677669
    %v1601 = vmul.f32 %v1585, 0.17677669
    %v1602 = vmul.f32 %v1586, 0.17677669
    %v1603 = vmul.f32 %v1587, 0.17677669
    %v1604 = vmul.f32 %v1588, 0.17677669
    %v1605 = vmul.f32 %v1589, 0.17677669
    %v1606 = vmul.f32 %v1590, 0.17677669
    %v1607 = vmul.f32 %v1591, 0.17677669
    %v1608 = vmul.f32 %v1592, 0.17677669
    %v1609 = vmul.f32 %v1593, 0.17677669
    %v1610 = vmul.f32 %v1594, 0.17677669
    %v1611 = vmul.f32 %v1595, 0.17677669
    %v1612 = vmul.f32 %v1596, 0.17677669
    %v1613 = vmul.f32 %v1597, 0.17677669
    %v1614 = vmul.f32 %v1598, 0.17677669
    %v1615 = vmul.f32 %v1599, 0.17677669
    %vm1616 = vcmp.gt.f32.partialorder %v125, 0.0
    %vm1617 = vcmp.gt.f32.partialorder %v126, 0.0
    %vm1618 = vcmp.gt.f32.partialorder %v127, 0.0
    %vm1619 = vcmp.gt.f32.partialorder %v128, 0.0
    %vm1620 = vcmp.gt.f32.partialorder %v129, 0.0
    %vm1621 = vcmp.gt.f32.partialorder %v130, 0.0
    %vm1622 = vcmp.gt.f32.partialorder %v131, 0.0
    %vm1623 = vcmp.gt.f32.partialorder %v132, 0.0
    %vm1624 = vcmp.gt.f32.partialorder %v133, 0.0
    %vm1625 = vcmp.gt.f32.partialorder %v134, 0.0
    %vm1626 = vcmp.gt.f32.partialorder %v135, 0.0
    %vm1627 = vcmp.gt.f32.partialorder %v136, 0.0
    %vm1628 = vcmp.gt.f32.partialorder %v137, 0.0
    %vm1629 = vcmp.gt.f32.partialorder %v138, 0.0
    %vm1630 = vcmp.gt.f32.partialorder %v139, 0.0
    %vm1631 = vcmp.gt.f32.partialorder %v140, 0.0
    %v1632 = vsel %vm1616, %v1600, -1e+30
    %v1633 = vsel %vm1617, %v1601, -1e+30
    %v1634 = vsel %vm1618, %v1602, -1e+30
    %v1635 = vsel %vm1619, %v1603, -1e+30
    %v1636 = vsel %vm1620, %v1604, -1e+30
    %v1637 = vsel %vm1621, %v1605, -1e+30
    %v1638 = vsel %vm1622, %v1606, -1e+30
    %v1639 = vsel %vm1623, %v1607, -1e+30
    %v1640 = vsel %vm1624, %v1608, -1e+30
    %v1641 = vsel %vm1625, %v1609, -1e+30
    %v1642 = vsel %vm1626, %v1610, -1e+30
    %v1643 = vsel %vm1627, %v1611, -1e+30
    %v1644 = vsel %vm1628, %v1612, -1e+30
    %v1645 = vsel %vm1629, %v1613, -1e+30
    %v1646 = vsel %vm1630, %v1614, -1e+30
    %v1647 = vsel %vm1631, %v1615, -1e+30
    %1648 = vmax.xlane.f32.xlu0 %v1632
    %v1649 = vpop.xlane.xlu0 %1648
    %1650 = vmax.xlane.f32.xlu0 %v1633
    %v1651 = vpop.xlane.xlu0 %1650
    %1652 = vmax.xlane.f32.xlu0 %v1634
    %v1653 = vpop.xlane.xlu0 %1652
    %1654 = vmax.xlane.f32.xlu0 %v1635
    %v1655 = vpop.xlane.xlu0 %1654
    %1656 = vmax.xlane.f32.xlu0 %v1636
    %v1657 = vpop.xlane.xlu0 %1656
    %1658 = vmax.xlane.f32.xlu0 %v1637
    %v1659 = vpop.xlane.xlu0 %1658
    %1660 = vmax.xlane.f32.xlu0 %v1638
    %v1661 = vpop.xlane.xlu0 %1660
    %1662 = vmax.xlane.f32.xlu0 %v1639
    %v1663 = vpop.xlane.xlu0 %1662
    %1664 = vmax.xlane.f32.xlu0 %v1640
    %v1665 = vpop.xlane.xlu0 %1664
    %1666 = vmax.xlane.f32.xlu0 %v1641
    %v1667 = vpop.xlane.xlu0 %1666
    %1668 = vmax.xlane.f32.xlu0 %v1642
    %v1669 = vpop.xlane.xlu0 %1668
    %1670 = vmax.xlane.f32.xlu0 %v1643
    %v1671 = vpop.xlane.xlu0 %1670
    %1672 = vmax.xlane.f32.xlu0 %v1644
    %v1673 = vpop.xlane.xlu0 %1672
    %1674 = vmax.xlane.f32.xlu0 %v1645
    %v1675 = vpop.xlane.xlu0 %1674
    %1676 = vmax.xlane.f32.xlu0 %v1646
    %v1677 = vpop.xlane.xlu0 %1676
    %1678 = vmax.xlane.f32.xlu0 %v1647
    %v1679 = vpop.xlane.xlu0 %1678
    %v1680 = vsub.f32 %v1632, %v1649
    %v1681 = vsub.f32 %v1633, %v1651
    %v1682 = vsub.f32 %v1634, %v1653
    %v1683 = vsub.f32 %v1635, %v1655
    %v1684 = vsub.f32 %v1636, %v1657
    %v1685 = vsub.f32 %v1637, %v1659
    %v1686 = vsub.f32 %v1638, %v1661
    %v1687 = vsub.f32 %v1639, %v1663
    %v1688 = vsub.f32 %v1640, %v1665
    %v1689 = vsub.f32 %v1641, %v1667
    %v1690 = vsub.f32 %v1642, %v1669
    %v1691 = vsub.f32 %v1643, %v1671
    %v1692 = vsub.f32 %v1644, %v1673
    %v1693 = vsub.f32 %v1645, %v1675
    %v1694 = vsub.f32 %v1646, %v1677
    %v1695 = vsub.f32 %v1647, %v1679
    %v1696 = vmul.f32 %v1680, 1.442695
    %v1697 = vpow.pop %v1696
    %v1698 = vmul.f32 %v1681, 1.442695
    %v1699 = vpow.pop %v1698
    %v1700 = vmul.f32 %v1682, 1.442695
    %v1701 = vpow.pop %v1700
    %v1702 = vmul.f32 %v1683, 1.442695
    %v1703 = vpow.pop %v1702
    %v1704 = vmul.f32 %v1684, 1.442695
    %v1705 = vpow.pop %v1704
    %v1706 = vmul.f32 %v1685, 1.442695
    %v1707 = vpow.pop %v1706
    %v1708 = vmul.f32 %v1686, 1.442695
    %v1709 = vpow.pop %v1708
    %v1710 = vmul.f32 %v1687, 1.442695
    %v1711 = vpow.pop %v1710
    %v1712 = vmul.f32 %v1688, 1.442695
    %v1713 = vpow.pop %v1712
    %v1714 = vmul.f32 %v1689, 1.442695
    %v1715 = vpow.pop %v1714
    %v1716 = vmul.f32 %v1690, 1.442695
    %v1717 = vpow.pop %v1716
    %v1718 = vmul.f32 %v1691, 1.442695
    %v1719 = vpow.pop %v1718
    %v1720 = vmul.f32 %v1692, 1.442695
    %v1721 = vpow.pop %v1720
    %v1722 = vmul.f32 %v1693, 1.442695
    %v1723 = vpow.pop %v1722
    %v1724 = vmul.f32 %v1694, 1.442695
    %v1725 = vpow.pop %v1724
    %v1726 = vmul.f32 %v1695, 1.442695
    %v1727 = vpow.pop %v1726
    %v1728 = vmul.f32 %v1697, %v125
    %v1729 = vmul.f32 %v1699, %v126
    %v1730 = vmul.f32 %v1701, %v127
    %v1731 = vmul.f32 %v1703, %v128
    %v1732 = vmul.f32 %v1705, %v129
    %v1733 = vmul.f32 %v1707, %v130
    %v1734 = vmul.f32 %v1709, %v131
    %v1735 = vmul.f32 %v1711, %v132
    %v1736 = vmul.f32 %v1713, %v133
    %v1737 = vmul.f32 %v1715, %v134
    %v1738 = vmul.f32 %v1717, %v135
    %v1739 = vmul.f32 %v1719, %v136
    %v1740 = vmul.f32 %v1721, %v137
    %v1741 = vmul.f32 %v1723, %v138
    %v1742 = vmul.f32 %v1725, %v139
    %v1743 = vmul.f32 %v1727, %v140
    %1744 = vadd.xlane.f32.xlu0 %v1728
    %v1745 = vpop.xlane.xlu0 %1744
    %1746 = vadd.xlane.f32.xlu0 %v1729
    %v1747 = vpop.xlane.xlu0 %1746
    %1748 = vadd.xlane.f32.xlu0 %v1730
    %v1749 = vpop.xlane.xlu0 %1748
    %1750 = vadd.xlane.f32.xlu0 %v1731
    %v1751 = vpop.xlane.xlu0 %1750
    %1752 = vadd.xlane.f32.xlu0 %v1732
    %v1753 = vpop.xlane.xlu0 %1752
    %1754 = vadd.xlane.f32.xlu0 %v1733
    %v1755 = vpop.xlane.xlu0 %1754
    %1756 = vadd.xlane.f32.xlu0 %v1734
    %v1757 = vpop.xlane.xlu0 %1756
    %1758 = vadd.xlane.f32.xlu0 %v1735
    %v1759 = vpop.xlane.xlu0 %1758
    %1760 = vadd.xlane.f32.xlu0 %v1736
    %v1761 = vpop.xlane.xlu0 %1760
    %1762 = vadd.xlane.f32.xlu0 %v1737
    %v1763 = vpop.xlane.xlu0 %1762
    %1764 = vadd.xlane.f32.xlu0 %v1738
    %v1765 = vpop.xlane.xlu0 %1764
    %1766 = vadd.xlane.f32.xlu0 %v1739
    %v1767 = vpop.xlane.xlu0 %1766
    %1768 = vadd.xlane.f32.xlu0 %v1740
    %v1769 = vpop.xlane.xlu0 %1768
    %1770 = vadd.xlane.f32.xlu0 %v1741
    %v1771 = vpop.xlane.xlu0 %1770
    %1772 = vadd.xlane.f32.xlu0 %v1742
    %v1773 = vpop.xlane.xlu0 %1772
    %1774 = vadd.xlane.f32.xlu0 %v1743
    %v1775 = vpop.xlane.xlu0 %1774
    %v1776 = vmax.f32 %v1745, 1e-30
    %v1777 = vmax.f32 %v1747, 1e-30
    %v1778 = vmax.f32 %v1749, 1e-30
    %v1779 = vmax.f32 %v1751, 1e-30
    %v1780 = vmax.f32 %v1753, 1e-30
    %v1781 = vmax.f32 %v1755, 1e-30
    %v1782 = vmax.f32 %v1757, 1e-30
    %v1783 = vmax.f32 %v1759, 1e-30
    %v1784 = vmax.f32 %v1761, 1e-30
    %v1785 = vmax.f32 %v1763, 1e-30
    %v1786 = vmax.f32 %v1765, 1e-30
    %v1787 = vmax.f32 %v1767, 1e-30
    %v1788 = vmax.f32 %v1769, 1e-30
    %v1789 = vmax.f32 %v1771, 1e-30
    %v1790 = vmax.f32 %v1773, 1e-30
    %v1791 = vmax.f32 %v1775, 1e-30
    %v1792 = vrcp.pop %v1776
    %v1793 = vrcp.pop %v1777
    %v1794 = vrcp.pop %v1778
    %v1795 = vrcp.pop %v1779
    %v1796 = vrcp.pop %v1780
    %v1797 = vrcp.pop %v1781
    %v1798 = vrcp.pop %v1782
    %v1799 = vrcp.pop %v1783
    %v1800 = vrcp.pop %v1784
    %v1801 = vrcp.pop %v1785
    %v1802 = vrcp.pop %v1786
    %v1803 = vrcp.pop %v1787
    %v1804 = vrcp.pop %v1788
    %v1805 = vrcp.pop %v1789
    %v1806 = vrcp.pop %v1790
    %v1807 = vrcp.pop %v1791
    %v1808 = vmul.f32 %v1728, %v1792
    %v1809 = vmul.f32 %v1729, %v1793
    %v1810 = vmul.f32 %v1730, %v1794
    %v1811 = vmul.f32 %v1731, %v1795
    %v1812 = vmul.f32 %v1732, %v1796
    %v1813 = vmul.f32 %v1733, %v1797
    %v1814 = vmul.f32 %v1734, %v1798
    %v1815 = vmul.f32 %v1735, %v1799
    %v1816 = vmul.f32 %v1736, %v1800
    %v1817 = vmul.f32 %v1737, %v1801
    %v1818 = vmul.f32 %v1738, %v1802
    %v1819 = vmul.f32 %v1739, %v1803
    %v1820 = vmul.f32 %v1740, %v1804
    %v1821 = vmul.f32 %v1741, %v1805
    %v1822 = vmul.f32 %v1742, %v1806
    %v1823 = vmul.f32 %v1743, %v1807
    %v1824 = vmul.f32 %v1808, %v924
    %v1825 = vmul.f32 %v1809, %v925
    %v1826 = vmul.f32 %v1810, %v926
    %v1827 = vmul.f32 %v1811, %v927
    %v1828 = vmul.f32 %v1812, %v928
    %v1829 = vmul.f32 %v1813, %v929
    %v1830 = vmul.f32 %v1814, %v930
    %v1831 = vmul.f32 %v1815, %v931
    %v1832 = vmul.f32 %v1816, %v932
    %v1833 = vmul.f32 %v1817, %v933
    %v1834 = vmul.f32 %v1818, %v934
    %v1835 = vmul.f32 %v1819, %v935
    %v1836 = vmul.f32 %v1820, %v936
    %v1837 = vmul.f32 %v1821, %v937
    %v1838 = vmul.f32 %v1822, %v938
    %v1839 = vmul.f32 %v1823, %v939
    %1840 = vadd.xlane.f32.xlu0 %v1824
    %v1841 = vpop.xlane.xlu0 %1840
    %1842 = vadd.xlane.f32.xlu0 %v1825
    %v1843 = vpop.xlane.xlu0 %1842
    %1844 = vadd.xlane.f32.xlu0 %v1826
    %v1845 = vpop.xlane.xlu0 %1844
    %1846 = vadd.xlane.f32.xlu0 %v1827
    %v1847 = vpop.xlane.xlu0 %1846
    %1848 = vadd.xlane.f32.xlu0 %v1828
    %v1849 = vpop.xlane.xlu0 %1848
    %1850 = vadd.xlane.f32.xlu0 %v1829
    %v1851 = vpop.xlane.xlu0 %1850
    %1852 = vadd.xlane.f32.xlu0 %v1830
    %v1853 = vpop.xlane.xlu0 %1852
    %1854 = vadd.xlane.f32.xlu0 %v1831
    %v1855 = vpop.xlane.xlu0 %1854
    %1856 = vadd.xlane.f32.xlu0 %v1832
    %v1857 = vpop.xlane.xlu0 %1856
    %1858 = vadd.xlane.f32.xlu0 %v1833
    %v1859 = vpop.xlane.xlu0 %1858
    %1860 = vadd.xlane.f32.xlu0 %v1834
    %v1861 = vpop.xlane.xlu0 %1860
    %1862 = vadd.xlane.f32.xlu0 %v1835
    %v1863 = vpop.xlane.xlu0 %1862
    %1864 = vadd.xlane.f32.xlu0 %v1836
    %v1865 = vpop.xlane.xlu0 %1864
    %1866 = vadd.xlane.f32.xlu0 %v1837
    %v1867 = vpop.xlane.xlu0 %1866
    %1868 = vadd.xlane.f32.xlu0 %v1838
    %v1869 = vpop.xlane.xlu0 %1868
    %1870 = vadd.xlane.f32.xlu0 %v1839
    %v1871 = vpop.xlane.xlu0 %1870
    %v1872 = vmul.f32 %v1808, %v1262
    %v1873 = vmul.f32 %v1809, %v1263
    %v1874 = vmul.f32 %v1810, %v1264
    %v1875 = vmul.f32 %v1811, %v1265
    %v1876 = vmul.f32 %v1812, %v1266
    %v1877 = vmul.f32 %v1813, %v1267
    %v1878 = vmul.f32 %v1814, %v1268
    %v1879 = vmul.f32 %v1815, %v1269
    %v1880 = vmul.f32 %v1816, %v1270
    %v1881 = vmul.f32 %v1817, %v1271
    %v1882 = vmul.f32 %v1818, %v1272
    %v1883 = vmul.f32 %v1819, %v1273
    %v1884 = vmul.f32 %v1820, %v1274
    %v1885 = vmul.f32 %v1821, %v1275
    %v1886 = vmul.f32 %v1822, %v1276
    %v1887 = vmul.f32 %v1823, %v1277
    %1888 = vadd.xlane.f32.xlu0 %v1872
    %v1889 = vpop.xlane.xlu0 %1888
    %1890 = vadd.xlane.f32.xlu0 %v1873
    %v1891 = vpop.xlane.xlu0 %1890
    %1892 = vadd.xlane.f32.xlu0 %v1874
    %v1893 = vpop.xlane.xlu0 %1892
    %1894 = vadd.xlane.f32.xlu0 %v1875
    %v1895 = vpop.xlane.xlu0 %1894
    %1896 = vadd.xlane.f32.xlu0 %v1876
    %v1897 = vpop.xlane.xlu0 %1896
    %1898 = vadd.xlane.f32.xlu0 %v1877
    %v1899 = vpop.xlane.xlu0 %1898
    %1900 = vadd.xlane.f32.xlu0 %v1878
    %v1901 = vpop.xlane.xlu0 %1900
    %1902 = vadd.xlane.f32.xlu0 %v1879
    %v1903 = vpop.xlane.xlu0 %1902
    %1904 = vadd.xlane.f32.xlu0 %v1880
    %v1905 = vpop.xlane.xlu0 %1904
    %1906 = vadd.xlane.f32.xlu0 %v1881
    %v1907 = vpop.xlane.xlu0 %1906
    %1908 = vadd.xlane.f32.xlu0 %v1882
    %v1909 = vpop.xlane.xlu0 %1908
    %1910 = vadd.xlane.f32.xlu0 %v1883
    %v1911 = vpop.xlane.xlu0 %1910
    %1912 = vadd.xlane.f32.xlu0 %v1884
    %v1913 = vpop.xlane.xlu0 %1912
    %1914 = vadd.xlane.f32.xlu0 %v1885
    %v1915 = vpop.xlane.xlu0 %1914
    %1916 = vadd.xlane.f32.xlu0 %v1886
    %v1917 = vpop.xlane.xlu0 %1916
    %1918 = vadd.xlane.f32.xlu0 %v1887
    %v1919 = vpop.xlane.xlu0 %1918
    %v1920 = vmul.f32 %v1808, %v1375
    %v1921 = vmul.f32 %v1809, %v1376
    %v1922 = vmul.f32 %v1810, %v1377
    %v1923 = vmul.f32 %v1811, %v1378
    %v1924 = vmul.f32 %v1812, %v1379
    %v1925 = vmul.f32 %v1813, %v1380
    %v1926 = vmul.f32 %v1814, %v1381
    %v1927 = vmul.f32 %v1815, %v1382
    %v1928 = vmul.f32 %v1816, %v1383
    %v1929 = vmul.f32 %v1817, %v1384
    %v1930 = vmul.f32 %v1818, %v1385
    %v1931 = vmul.f32 %v1819, %v1386
    %v1932 = vmul.f32 %v1820, %v1387
    %v1933 = vmul.f32 %v1821, %v1388
    %v1934 = vmul.f32 %v1822, %v1389
    %v1935 = vmul.f32 %v1823, %v1390
    %1936 = vadd.xlane.f32.xlu0 %v1920
    %v1937 = vpop.xlane.xlu0 %1936
    %1938 = vadd.xlane.f32.xlu0 %v1921
    %v1939 = vpop.xlane.xlu0 %1938
    %1940 = vadd.xlane.f32.xlu0 %v1922
    %v1941 = vpop.xlane.xlu0 %1940
    %1942 = vadd.xlane.f32.xlu0 %v1923
    %v1943 = vpop.xlane.xlu0 %1942
    %1944 = vadd.xlane.f32.xlu0 %v1924
    %v1945 = vpop.xlane.xlu0 %1944
    %1946 = vadd.xlane.f32.xlu0 %v1925
    %v1947 = vpop.xlane.xlu0 %1946
    %1948 = vadd.xlane.f32.xlu0 %v1926
    %v1949 = vpop.xlane.xlu0 %1948
    %1950 = vadd.xlane.f32.xlu0 %v1927
    %v1951 = vpop.xlane.xlu0 %1950
    %1952 = vadd.xlane.f32.xlu0 %v1928
    %v1953 = vpop.xlane.xlu0 %1952
    %1954 = vadd.xlane.f32.xlu0 %v1929
    %v1955 = vpop.xlane.xlu0 %1954
    %1956 = vadd.xlane.f32.xlu0 %v1930
    %v1957 = vpop.xlane.xlu0 %1956
    %1958 = vadd.xlane.f32.xlu0 %v1931
    %v1959 = vpop.xlane.xlu0 %1958
    %1960 = vadd.xlane.f32.xlu0 %v1932
    %v1961 = vpop.xlane.xlu0 %1960
    %1962 = vadd.xlane.f32.xlu0 %v1933
    %v1963 = vpop.xlane.xlu0 %1962
    %1964 = vadd.xlane.f32.xlu0 %v1934
    %v1965 = vpop.xlane.xlu0 %1964
    %1966 = vadd.xlane.f32.xlu0 %v1935
    %v1967 = vpop.xlane.xlu0 %1966
    %v1968 = vmul.f32 %v1808, %v1488
    %v1969 = vmul.f32 %v1809, %v1489
    %v1970 = vmul.f32 %v1810, %v1490
    %v1971 = vmul.f32 %v1811, %v1491
    %v1972 = vmul.f32 %v1812, %v1492
    %v1973 = vmul.f32 %v1813, %v1493
    %v1974 = vmul.f32 %v1814, %v1494
    %v1975 = vmul.f32 %v1815, %v1495
    %v1976 = vmul.f32 %v1816, %v1496
    %v1977 = vmul.f32 %v1817, %v1497
    %v1978 = vmul.f32 %v1818, %v1498
    %v1979 = vmul.f32 %v1819, %v1499
    %v1980 = vmul.f32 %v1820, %v1500
    %v1981 = vmul.f32 %v1821, %v1501
    %v1982 = vmul.f32 %v1822, %v1502
    %v1983 = vmul.f32 %v1823, %v1503
    %1984 = vadd.xlane.f32.xlu0 %v1968
    %v1985 = vpop.xlane.xlu0 %1984
    %1986 = vadd.xlane.f32.xlu0 %v1969
    %v1987 = vpop.xlane.xlu0 %1986
    %1988 = vadd.xlane.f32.xlu0 %v1970
    %v1989 = vpop.xlane.xlu0 %1988
    %1990 = vadd.xlane.f32.xlu0 %v1971
    %v1991 = vpop.xlane.xlu0 %1990
    %1992 = vadd.xlane.f32.xlu0 %v1972
    %v1993 = vpop.xlane.xlu0 %1992
    %1994 = vadd.xlane.f32.xlu0 %v1973
    %v1995 = vpop.xlane.xlu0 %1994
    %1996 = vadd.xlane.f32.xlu0 %v1974
    %v1997 = vpop.xlane.xlu0 %1996
    %1998 = vadd.xlane.f32.xlu0 %v1975
    %v1999 = vpop.xlane.xlu0 %1998
    %2000 = vadd.xlane.f32.xlu0 %v1976
    %v2001 = vpop.xlane.xlu0 %2000
    %2002 = vadd.xlane.f32.xlu0 %v1977
    %v2003 = vpop.xlane.xlu0 %2002
    %2004 = vadd.xlane.f32.xlu0 %v1978
    %v2005 = vpop.xlane.xlu0 %2004
    %2006 = vadd.xlane.f32.xlu0 %v1979
    %v2007 = vpop.xlane.xlu0 %2006
    %2008 = vadd.xlane.f32.xlu0 %v1980
    %v2009 = vpop.xlane.xlu0 %2008
    %2010 = vadd.xlane.f32.xlu0 %v1981
    %v2011 = vpop.xlane.xlu0 %2010
    %2012 = vadd.xlane.f32.xlu0 %v1982
    %v2013 = vpop.xlane.xlu0 %2012
    %2014 = vadd.xlane.f32.xlu0 %v1983
    %v2015 = vpop.xlane.xlu0 %2014
    %vm2016 = vcmask 7168
    %v2017 = vsel %vm2016, %v1841, %v1889
    %v2018 = vsel %vm2016, %v1843, %v1891
    %v2019 = vsel %vm2016, %v1845, %v1893
    %v2020 = vsel %vm2016, %v1847, %v1895
    %v2021 = vsel %vm2016, %v1849, %v1897
    %v2022 = vsel %vm2016, %v1851, %v1899
    %v2023 = vsel %vm2016, %v1853, %v1901
    %v2024 = vsel %vm2016, %v1855, %v1903
    %v2025 = vsel %vm2016, %v1857, %v1905
    %v2026 = vsel %vm2016, %v1859, %v1907
    %v2027 = vsel %vm2016, %v1861, %v1909
    %v2028 = vsel %vm2016, %v1863, %v1911
    %v2029 = vsel %vm2016, %v1865, %v1913
    %v2030 = vsel %vm2016, %v1867, %v1915
    %v2031 = vsel %vm2016, %v1869, %v1917
    %v2032 = vsel %vm2016, %v1871, %v1919
    %vm2033 = vcmask 15360
    %v2034 = vsel %vm2033, %v2017, %v1937
    %v2035 = vsel %vm2033, %v2018, %v1939
    %v2036 = vsel %vm2033, %v2019, %v1941
    %v2037 = vsel %vm2033, %v2020, %v1943
    %v2038 = vsel %vm2033, %v2021, %v1945
    %v2039 = vsel %vm2033, %v2022, %v1947
    %v2040 = vsel %vm2033, %v2023, %v1949
    %v2041 = vsel %vm2033, %v2024, %v1951
    %v2042 = vsel %vm2033, %v2025, %v1953
    %v2043 = vsel %vm2033, %v2026, %v1955
    %v2044 = vsel %vm2033, %v2027, %v1957
    %v2045 = vsel %vm2033, %v2028, %v1959
    %v2046 = vsel %vm2033, %v2029, %v1961
    %v2047 = vsel %vm2033, %v2030, %v1963
    %v2048 = vsel %vm2033, %v2031, %v1965
    %v2049 = vsel %vm2033, %v2032, %v1967
    %vm2050 = vcmask 23552
    %v2051 = vsel %vm2050, %v2034, %v1985
    %v2052 = vsel %vm2050, %v2035, %v1987
    %v2053 = vsel %vm2050, %v2036, %v1989
    %v2054 = vsel %vm2050, %v2037, %v1991
    %v2055 = vsel %vm2050, %v2038, %v1993
    %v2056 = vsel %vm2050, %v2039, %v1995
    %v2057 = vsel %vm2050, %v2040, %v1997
    %v2058 = vsel %vm2050, %v2041, %v1999
    %v2059 = vsel %vm2050, %v2042, %v2001
    %v2060 = vsel %vm2050, %v2043, %v2003
    %v2061 = vsel %vm2050, %v2044, %v2005
    %v2062 = vsel %vm2050, %v2045, %v2007
    %v2063 = vsel %vm2050, %v2046, %v2009
    %v2064 = vsel %vm2050, %v2047, %v2011
    %v2065 = vsel %vm2050, %v2048, %v2013
    %v2066 = vsel %vm2050, %v2049, %v2015
    %v2068 = vsel %vm907, %v2051, 0
    %v2071 = vsel %vm907, %v2052, 0
    %v2074 = vsel %vm907, %v2053, 0
    %v2077 = vsel %vm907, %v2054, 0
    %v2080 = vsel %vm907, %v2055, 0
    %v2083 = vsel %vm907, %v2056, 0
    %v2086 = vsel %vm907, %v2057, 0
    %v2089 = vsel %vm907, %v2058, 0
    %v2092 = vsel %vm907, %v2059, 0
    %v2095 = vsel %vm907, %v2060, 0
    %v2098 = vsel %vm907, %v2061, 0
    %v2101 = vsel %vm907, %v2062, 0
    %v2104 = vsel %vm907, %v2063, 0
    %v2107 = vsel %vm907, %v2064, 0
    %v2110 = vsel %vm907, %v2065, 0
    %v2113 = vsel %vm907, %v2066, 0
    %vm2115 = vcmask 1043456
    %v2116 = vsel %vm2115, %v141, 0
    %2118 = vmatprep.subr.mxu0 0.0
    %2119 = vmatpush1.msra.mxu0 %v2116
    %2120 = vmatprep.subr.mxu0 0.0
    %2121 = vmatpush1.msra.mxu0 0.0
    %2122 = vmatprep.subr.mxu0 0.0
    %2123 = vmatpush1.msra.mxu0 0.0
    %2124 = vmatprep.subr.mxu0 0.0
    %2125 = vmatpush1.msra.mxu0 0.0
    %2126 = vmatprep.subr.mxu0 0.0
    %2127 = vmatpush1.msra.mxu0 0.0
    %2128 = vmatprep.subr.mxu0 0.0
    %2129 = vmatpush1.msra.mxu0 0.0
    %2130 = vmatprep.subr.mxu0 0.0
    %2131 = vmatpush1.msra.mxu0 0.0
    %2132 = vmatprep.subr.mxu0 0.0
    %2133 = vmatpush1.msra.mxu0 0.0
    %2134 = vmatprep.subr.mxu0 0.0
    %2135 = vmatpush1.msra.mxu0 0.0
    %2136 = vmatprep.subr.mxu0 0.0
    %2137 = vmatpush1.msra.mxu0 0.0
    %2138 = vmatprep.subr.mxu0 0.0
    %2139 = vmatpush1.msra.mxu0 0.0
    %2140 = vmatprep.subr.mxu0 0.0
    %2141 = vmatpush1.msra.mxu0 0.0
    %2142 = vmatprep.subr.mxu0 0.0
    %2143 = vmatpush1.msra.mxu0 0.0
    %2144 = vmatprep.subr.mxu0 0.0
    %2145 = vmatpush1.msra.mxu0 0.0
    %2146 = vmatprep.subr.mxu0 0.0
    %2147 = vmatpush1.msra.mxu0 0.0
    %2148 = vmatprep.subr.mxu0 0.0
    %2149 = vmatpush1.msra.mxu0 0.0
    %2150 = vmatprep.subr.mxu0 0.0
    %2151 = vmatpush1.msra.mxu0 0.0
    %2152 = vmatprep.subr.mxu0 0.0
    %2153 = vmatpush1.msra.mxu0 0.0
    %2154 = vmatprep.subr.mxu0 0.0
    %2155 = vmatpush1.msra.mxu0 0.0
    %2156 = vmatprep.subr.mxu0 0.0
    %2157 = vmatpush1.msra.mxu0 0.0
    %2158 = vmatprep.subr.mxu0 0.0
    %2159 = vmatpush1.msra.mxu0 0.0
    %2160 = vmatprep.subr.mxu0 0.0
    %2161 = vmatpush1.msra.mxu0 0.0
    %2162 = vmatprep.subr.mxu0 0.0
    %2163 = vmatpush1.msra.mxu0 0.0
    %2164 = vmatprep.subr.mxu0 0.0
    %2165 = vmatpush1.msra.mxu0 0.0
    %2166 = vmatprep.subr.mxu0 0.0
    %2167 = vmatpush1.msra.mxu0 0.0
    %2168 = vmatprep.subr.mxu0 0.0
    %2169 = vmatpush1.msra.mxu0 0.0
    %2170 = vmatprep.subr.mxu0 0.0
    %2171 = vmatpush1.msra.mxu0 0.0
    %2172 = vmatprep.subr.mxu0 0.0
    %2173 = vmatpush1.msra.mxu0 0.0
    %2174 = vmatprep.subr.mxu0 0.0
    %2175 = vmatpush1.msra.mxu0 0.0
    %2176 = vmatprep.subr.mxu0 0.0
    %2177 = vmatpush1.msra.mxu0 0.0
    %2178 = vmatprep.subr.mxu0 0.0
    %2179 = vmatpush1.msra.mxu0 0.0
    %2180 = vmatprep.subr.mxu0 0.0
    %2181 = vmatpush1.msra.mxu0 0.0
    %2182 = vmatprep.mubr.f32.mxu0 0.0
    %2183 = vmatmul.mubr.f32.gmra.mrb[0].mxu0 %v2068
    %v2184 = vpop.f32.mrb[0].mxu0
    %v2185 = vadd.f32 0.0, %v2184
    %v2186 = vpop.f32.mrb[0].mxu0
    %2187 = vmatprep.mubr.f32.mxu0 0.0
    %2188 = vmatmul.mubr.f32.gmra.mrb[0].mxu0 %v2071
    %v2189 = vpop.f32.mrb[0].mxu0
    %v2190 = vadd.f32 0.0, %v2189
    %v2191 = vpop.f32.mrb[0].mxu0
    %2192 = vmatprep.mubr.f32.mxu0 0.0
    %2193 = vmatmul.mubr.f32.gmra.mrb[0].mxu0 %v2074
    %v2194 = vpop.f32.mrb[0].mxu0
    %v2195 = vadd.f32 0.0, %v2194
    %v2196 = vpop.f32.mrb[0].mxu0
    %2197 = vmatprep.mubr.f32.mxu0 0.0
    %2198 = vmatmul.mubr.f32.gmra.mrb[0].mxu0 %v2077
    %v2199 = vpop.f32.mrb[0].mxu0
    %v2200 = vadd.f32 0.0, %v2199
    %v2201 = vpop.f32.mrb[0].mxu0
    %2202 = vmatprep.mubr.f32.mxu0 0.0
    %2203 = vmatmul.mubr.f32.gmra.mrb[0].mxu0 %v2080
    %v2204 = vpop.f32.mrb[0].mxu0
    %v2205 = vadd.f32 0.0, %v2204
    %v2206 = vpop.f32.mrb[0].mxu0
    %2207 = vmatprep.mubr.f32.mxu0 0.0
    %2208 = vmatmul.mubr.f32.gmra.mrb[0].mxu0 %v2083
    %v2209 = vpop.f32.mrb[0].mxu0
    %v2210 = vadd.f32 0.0, %v2209
    %v2211 = vpop.f32.mrb[0].mxu0
    %2212 = vmatprep.mubr.f32.mxu0 0.0
    %2213 = vmatmul.mubr.f32.gmra.mrb[0].mxu0 %v2086
    %v2214 = vpop.f32.mrb[0].mxu0
    %v2215 = vadd.f32 0.0, %v2214
    %v2216 = vpop.f32.mrb[0].mxu0
    %2217 = vmatprep.mubr.f32.mxu0 0.0
    %2218 = vmatmul.mubr.f32.gmra.mrb[0].mxu0 %v2089
    %v2219 = vpop.f32.mrb[0].mxu0
    %v2220 = vadd.f32 0.0, %v2219
    %v2221 = vpop.f32.mrb[0].mxu0
    %2222 = vmatprep.mubr.f32.mxu0 0.0
    %2223 = vmatmul.mubr.f32.gmra.mrb[0].mxu0 %v2092
    %v2224 = vpop.f32.mrb[0].mxu0
    %v2225 = vadd.f32 0.0, %v2224
    %v2226 = vpop.f32.mrb[0].mxu0
    %2227 = vmatprep.mubr.f32.mxu0 0.0
    %2228 = vmatmul.mubr.f32.gmra.mrb[0].mxu0 %v2095
    %v2229 = vpop.f32.mrb[0].mxu0
    %v2230 = vadd.f32 0.0, %v2229
    %v2231 = vpop.f32.mrb[0].mxu0
    %2232 = vmatprep.mubr.f32.mxu0 0.0
    %2233 = vmatmul.mubr.f32.gmra.mrb[0].mxu0 %v2098
    %v2234 = vpop.f32.mrb[0].mxu0
    %v2235 = vadd.f32 0.0, %v2234
    %v2236 = vpop.f32.mrb[0].mxu0
    %2237 = vmatprep.mubr.f32.mxu0 0.0
    %2238 = vmatmul.mubr.f32.gmra.mrb[0].mxu0 %v2101
    %v2239 = vpop.f32.mrb[0].mxu0
    %v2240 = vadd.f32 0.0, %v2239
    %v2241 = vpop.f32.mrb[0].mxu0
    %2242 = vmatprep.mubr.f32.mxu0 0.0
    %2243 = vmatmul.mubr.f32.gmra.mrb[0].mxu0 %v2104
    %v2244 = vpop.f32.mrb[0].mxu0
    %v2245 = vadd.f32 0.0, %v2244
    %v2246 = vpop.f32.mrb[0].mxu0
    %2247 = vmatprep.mubr.f32.mxu0 0.0
    %2248 = vmatmul.mubr.f32.gmra.mrb[0].mxu0 %v2107
    %v2249 = vpop.f32.mrb[0].mxu0
    %v2250 = vadd.f32 0.0, %v2249
    %v2251 = vpop.f32.mrb[0].mxu0
    %2252 = vmatprep.mubr.f32.mxu0 0.0
    %2253 = vmatmul.mubr.f32.gmra.mrb[0].mxu0 %v2110
    %v2254 = vpop.f32.mrb[0].mxu0
    %v2255 = vadd.f32 0.0, %v2254
    %v2256 = vpop.f32.mrb[0].mxu0
    %2257 = vmatprep.mubr.f32.mxu0 0.0
    %2258 = vmatmul.mubr.f32.gmra.mrb[0].mxu0 %v2113
    %v2259 = vpop.f32.mrb[0].mxu0
    %v2260 = vadd.f32 0.0, %v2259
    %v2261 = vpop.f32.mrb[0].mxu0
    %2262 = vdwg.mxu0
    %2263 = vrot.lane.b32.xlu0 %v695, 64
    %v2264 = vpop.permute.xlu0 %2263
    %2265 = vrot.lane.b32.xlu0 %v696, 64
    %v2266 = vpop.permute.xlu0 %2265
    %2267 = vrot.lane.b32.xlu0 %v697, 64
    %v2268 = vpop.permute.xlu0 %2267
    %2269 = vrot.lane.b32.xlu0 %v698, 64
    %v2270 = vpop.permute.xlu0 %2269
    %2271 = vrot.lane.b32.xlu0 %v699, 64
    %v2272 = vpop.permute.xlu0 %2271
    %2273 = vrot.lane.b32.xlu0 %v700, 64
    %v2274 = vpop.permute.xlu0 %2273
    %2275 = vrot.lane.b32.xlu0 %v701, 64
    %v2276 = vpop.permute.xlu0 %2275
    %2277 = vrot.lane.b32.xlu0 %v702, 64
    %v2278 = vpop.permute.xlu0 %2277
    %2279 = vrot.lane.b32.xlu0 %v703, 64
    %v2280 = vpop.permute.xlu0 %2279
    %2281 = vrot.lane.b32.xlu0 %v704, 64
    %v2282 = vpop.permute.xlu0 %2281
    %2283 = vrot.lane.b32.xlu0 %v705, 64
    %v2284 = vpop.permute.xlu0 %2283
    %2285 = vrot.lane.b32.xlu0 %v706, 64
    %v2286 = vpop.permute.xlu0 %2285
    %2287 = vrot.lane.b32.xlu0 %v707, 64
    %v2288 = vpop.permute.xlu0 %2287
    %2289 = vrot.lane.b32.xlu0 %v708, 64
    %v2290 = vpop.permute.xlu0 %2289
    %2291 = vrot.lane.b32.xlu0 %v709, 64
    %v2292 = vpop.permute.xlu0 %2291
    %2293 = vrot.lane.b32.xlu0 %v710, 64
    %v2294 = vpop.permute.xlu0 %2293
    %2311 = vmatprep.subr.mxu0 0.0
    %2312 = vmatpush1.msra.mxu0 %v2264
    %2313 = vmatprep.subr.mxu0 0.0
    %2314 = vmatpush1.msra.mxu0 %v2266
    %2315 = vmatprep.subr.mxu0 0.0
    %2316 = vmatpush1.msra.mxu0 %v2268
    %2317 = vmatprep.subr.mxu0 0.0
    %2318 = vmatpush1.msra.mxu0 %v2270
    %2319 = vmatprep.subr.mxu0 0.0
    %2320 = vmatpush1.msra.mxu0 %v2272
    %2321 = vmatprep.subr.mxu0 0.0
    %2322 = vmatpush1.msra.mxu0 %v2274
    %2323 = vmatprep.subr.mxu0 0.0
    %2324 = vmatpush1.msra.mxu0 %v2276
    %2325 = vmatprep.subr.mxu0 0.0
    %2326 = vmatpush1.msra.mxu0 %v2278
    %2327 = vmatprep.subr.mxu0 0.0
    %2328 = vmatpush1.msra.mxu0 %v2280
    %2329 = vmatprep.subr.mxu0 0.0
    %2330 = vmatpush1.msra.mxu0 %v2282
    %2331 = vmatprep.subr.mxu0 0.0
    %2332 = vmatpush1.msra.mxu0 %v2284
    %2333 = vmatprep.subr.mxu0 0.0
    %2334 = vmatpush1.msra.mxu0 %v2286
    %2335 = vmatprep.subr.mxu0 0.0
    %2336 = vmatpush1.msra.mxu0 %v2288
    %2337 = vmatprep.subr.mxu0 0.0
    %2338 = vmatpush1.msra.mxu0 %v2290
    %2339 = vmatprep.subr.mxu0 0.0
    %2340 = vmatpush1.msra.mxu0 %v2292
    %2341 = vmatprep.subr.mxu0 0.0
    %2342 = vmatpush1.msra.mxu0 %v2294
    %2343 = vmatprep.subr.mxu0 0.0
    %2344 = vmatpush1.msra.mxu0 0.0
    %2345 = vmatprep.subr.mxu0 0.0
    %2346 = vmatpush1.msra.mxu0 0.0
    %2347 = vmatprep.subr.mxu0 0.0
    %2348 = vmatpush1.msra.mxu0 0.0
    %2349 = vmatprep.subr.mxu0 0.0
    %2350 = vmatpush1.msra.mxu0 0.0
    %2351 = vmatprep.subr.mxu0 0.0
    %2352 = vmatpush1.msra.mxu0 0.0
    %2353 = vmatprep.subr.mxu0 0.0
    %2354 = vmatpush1.msra.mxu0 0.0
    %2355 = vmatprep.subr.mxu0 0.0
    %2356 = vmatpush1.msra.mxu0 0.0
    %2357 = vmatprep.subr.mxu0 0.0
    %2358 = vmatpush1.msra.mxu0 0.0
    %2359 = vmatprep.subr.mxu0 0.0
    %2360 = vmatpush1.msra.mxu0 0.0
    %2361 = vmatprep.subr.mxu0 0.0
    %2362 = vmatpush1.msra.mxu0 0.0
    %2363 = vmatprep.subr.mxu0 0.0
    %2364 = vmatpush1.msra.mxu0 0.0
    %2365 = vmatprep.subr.mxu0 0.0
    %2366 = vmatpush1.msra.mxu0 0.0
    %2367 = vmatprep.subr.mxu0 0.0
    %2368 = vmatpush1.msra.mxu0 0.0
    %2369 = vmatprep.subr.mxu0 0.0
    %2370 = vmatpush1.msra.mxu0 0.0
    %2371 = vmatprep.subr.mxu0 0.0
    %2372 = vmatpush1.msra.mxu0 0.0
    %2373 = vmatprep.subr.mxu0 0.0
    %2374 = vmatpush1.msra.mxu0 0.0
    %2375 = vmatprep.mubr.f32.mxu0 0.0
    %2376 = vmatmul.mubr.f32.gmra.mrb[0].mxu0 %v1808
    %v2377 = vpop.f32.mrb[0].mxu0
    %v2378 = vadd.f32 %v2185, %v2377
    %v2379 = vpop.f32.mrb[0].mxu0
    %2380 = vmatprep.mubr.f32.mxu0 0.0
    %2381 = vmatmul.mubr.f32.gmra.mrb[0].mxu0 %v1809
    %v2382 = vpop.f32.mrb[0].mxu0
    %v2383 = vadd.f32 %v2190, %v2382
    %v2384 = vpop.f32.mrb[0].mxu0
    %2385 = vmatprep.mubr.f32.mxu0 0.0
    %2386 = vmatmul.mubr.f32.gmra.mrb[0].mxu0 %v1810
    %v2387 = vpop.f32.mrb[0].mxu0
    %v2388 = vadd.f32 %v2195, %v2387
    %v2389 = vpop.f32.mrb[0].mxu0
    %2390 = vmatprep.mubr.f32.mxu0 0.0
    %2391 = vmatmul.mubr.f32.gmra.mrb[0].mxu0 %v1811
    %v2392 = vpop.f32.mrb[0].mxu0
    %v2393 = vadd.f32 %v2200, %v2392
    %v2394 = vpop.f32.mrb[0].mxu0
    %2395 = vmatprep.mubr.f32.mxu0 0.0
    %2396 = vmatmul.mubr.f32.gmra.mrb[0].mxu0 %v1812
    %v2397 = vpop.f32.mrb[0].mxu0
    %v2398 = vadd.f32 %v2205, %v2397
    %v2399 = vpop.f32.mrb[0].mxu0
    %2400 = vmatprep.mubr.f32.mxu0 0.0
    %2401 = vmatmul.mubr.f32.gmra.mrb[0].mxu0 %v1813
    %v2402 = vpop.f32.mrb[0].mxu0
    %v2403 = vadd.f32 %v2210, %v2402
    %v2404 = vpop.f32.mrb[0].mxu0
    %2405 = vmatprep.mubr.f32.mxu0 0.0
    %2406 = vmatmul.mubr.f32.gmra.mrb[0].mxu0 %v1814
    %v2407 = vpop.f32.mrb[0].mxu0
    %v2408 = vadd.f32 %v2215, %v2407
    %v2409 = vpop.f32.mrb[0].mxu0
    %2410 = vmatprep.mubr.f32.mxu0 0.0
    %2411 = vmatmul.mubr.f32.gmra.mrb[0].mxu0 %v1815
    %v2412 = vpop.f32.mrb[0].mxu0
    %v2413 = vadd.f32 %v2220, %v2412
    %v2414 = vpop.f32.mrb[0].mxu0
    %2415 = vmatprep.mubr.f32.mxu0 0.0
    %2416 = vmatmul.mubr.f32.gmra.mrb[0].mxu0 %v1816
    %v2417 = vpop.f32.mrb[0].mxu0
    %v2418 = vadd.f32 %v2225, %v2417
    %v2419 = vpop.f32.mrb[0].mxu0
    %2420 = vmatprep.mubr.f32.mxu0 0.0
    %2421 = vmatmul.mubr.f32.gmra.mrb[0].mxu0 %v1817
    %v2422 = vpop.f32.mrb[0].mxu0
    %v2423 = vadd.f32 %v2230, %v2422
    %v2424 = vpop.f32.mrb[0].mxu0
    %2425 = vmatprep.mubr.f32.mxu0 0.0
    %2426 = vmatmul.mubr.f32.gmra.mrb[0].mxu0 %v1818
    %v2427 = vpop.f32.mrb[0].mxu0
    %v2428 = vadd.f32 %v2235, %v2427
    %v2429 = vpop.f32.mrb[0].mxu0
    %2430 = vmatprep.mubr.f32.mxu0 0.0
    %2431 = vmatmul.mubr.f32.gmra.mrb[0].mxu0 %v1819
    %v2432 = vpop.f32.mrb[0].mxu0
    %v2433 = vadd.f32 %v2240, %v2432
    %v2434 = vpop.f32.mrb[0].mxu0
    %2435 = vmatprep.mubr.f32.mxu0 0.0
    %2436 = vmatmul.mubr.f32.gmra.mrb[0].mxu0 %v1820
    %v2437 = vpop.f32.mrb[0].mxu0
    %v2438 = vadd.f32 %v2245, %v2437
    %v2439 = vpop.f32.mrb[0].mxu0
    %2440 = vmatprep.mubr.f32.mxu0 0.0
    %2441 = vmatmul.mubr.f32.gmra.mrb[0].mxu0 %v1821
    %v2442 = vpop.f32.mrb[0].mxu0
    %v2443 = vadd.f32 %v2250, %v2442
    %v2444 = vpop.f32.mrb[0].mxu0
    %2445 = vmatprep.mubr.f32.mxu0 0.0
    %2446 = vmatmul.mubr.f32.gmra.mrb[0].mxu0 %v1822
    %v2447 = vpop.f32.mrb[0].mxu0
    %v2448 = vadd.f32 %v2255, %v2447
    %v2449 = vpop.f32.mrb[0].mxu0
    %2450 = vmatprep.mubr.f32.mxu0 0.0
    %2451 = vmatmul.mubr.f32.gmra.mrb[0].mxu0 %v1823
    %v2452 = vpop.f32.mrb[0].mxu0
    %v2453 = vadd.f32 %v2260, %v2452
    %v2454 = vpop.f32.mrb[0].mxu0
    %2455 = vdwg.mxu0
    %v2456 = vld [vmem:[#allocation2] sm:$0xff]
    %v2457 = vld [vmem:[#allocation2 + $0x8] sm:$0xff]
    %v2458 = vld [vmem:[#allocation2 + $0x10] sm:$0xff]
    %v2459 = vld [vmem:[#allocation2 + $0x18] sm:$0xff]
    %v2460 = vld [vmem:[#allocation2 + $0x20] sm:$0xff]
    %v2461 = vld [vmem:[#allocation2 + $0x28] sm:$0xff]
    %v2462 = vld [vmem:[#allocation2 + $0x30] sm:$0xff]
    %v2463 = vld [vmem:[#allocation2 + $0x38] sm:$0xff]
    %v2464 = vld [vmem:[#allocation2 + $0x40] sm:$0xff]
    %v2465 = vld [vmem:[#allocation2 + $0x48] sm:$0xff]
    %v2466 = vld [vmem:[#allocation2 + $0x50] sm:$0xff]
    %v2467 = vld [vmem:[#allocation2 + $0x58] sm:$0xff]
    %v2468 = vld [vmem:[#allocation2 + $0x60] sm:$0xff]
    %v2469 = vld [vmem:[#allocation2 + $0x68] sm:$0xff]
    %v2470 = vld [vmem:[#allocation2 + $0x70] sm:$0xff]
    %v2471 = vld [vmem:[#allocation2 + $0x78] sm:$0xff]
    %2488 = vrot.lane.b32.xlu0 %v2456, 32
    %v2489 = vpop.permute.xlu0 %2488
    %2490 = vrot.lane.b32.xlu0 %v2457, 32
    %v2491 = vpop.permute.xlu0 %2490
    %2492 = vrot.lane.b32.xlu0 %v2458, 32
    %v2493 = vpop.permute.xlu0 %2492
    %2494 = vrot.lane.b32.xlu0 %v2459, 32
    %v2495 = vpop.permute.xlu0 %2494
    %2496 = vrot.lane.b32.xlu0 %v2460, 32
    %v2497 = vpop.permute.xlu0 %2496
    %2498 = vrot.lane.b32.xlu0 %v2461, 32
    %v2499 = vpop.permute.xlu0 %2498
    %2500 = vrot.lane.b32.xlu0 %v2462, 32
    %v2501 = vpop.permute.xlu0 %2500
    %2502 = vrot.lane.b32.xlu0 %v2463, 32
    %v2503 = vpop.permute.xlu0 %2502
    %2504 = vrot.lane.b32.xlu0 %v2464, 32
    %v2505 = vpop.permute.xlu0 %2504
    %2506 = vrot.lane.b32.xlu0 %v2465, 32
    %v2507 = vpop.permute.xlu0 %2506
    %2508 = vrot.lane.b32.xlu0 %v2466, 32
    %v2509 = vpop.permute.xlu0 %2508
    %2510 = vrot.lane.b32.xlu0 %v2467, 32
    %v2511 = vpop.permute.xlu0 %2510
    %2512 = vrot.lane.b32.xlu0 %v2468, 32
    %v2513 = vpop.permute.xlu0 %2512
    %2514 = vrot.lane.b32.xlu0 %v2469, 32
    %v2515 = vpop.permute.xlu0 %2514
    %2516 = vrot.lane.b32.xlu0 %v2470, 32
    %v2517 = vpop.permute.xlu0 %2516
    %2518 = vrot.lane.b32.xlu0 %v2471, 32
    %v2519 = vpop.permute.xlu0 %2518
    %v2536 = vadd.f32 %v2378, %v2489
    %v2537 = vadd.f32 %v2383, %v2491
    %v2538 = vadd.f32 %v2388, %v2493
    %v2539 = vadd.f32 %v2393, %v2495
    %v2540 = vadd.f32 %v2398, %v2497
    %v2541 = vadd.f32 %v2403, %v2499
    %v2542 = vadd.f32 %v2408, %v2501
    %v2543 = vadd.f32 %v2413, %v2503
    %v2544 = vadd.f32 %v2418, %v2505
    %v2545 = vadd.f32 %v2423, %v2507
    %v2546 = vadd.f32 %v2428, %v2509
    %v2547 = vadd.f32 %v2433, %v2511
    %v2548 = vadd.f32 %v2438, %v2513
    %v2549 = vadd.f32 %v2443, %v2515
    %v2550 = vadd.f32 %v2448, %v2517
    %v2551 = vadd.f32 %v2453, %v2519
    %v2552 = vxor.u32 %v2536, 2147483648
    %v2553 = vxor.u32 %v2537, 2147483648
    %v2554 = vxor.u32 %v2538, 2147483648
    %v2555 = vxor.u32 %v2539, 2147483648
    %v2556 = vxor.u32 %v2540, 2147483648
    %v2557 = vxor.u32 %v2541, 2147483648
    %v2558 = vxor.u32 %v2542, 2147483648
    %v2559 = vxor.u32 %v2543, 2147483648
    %v2560 = vxor.u32 %v2544, 2147483648
    %v2561 = vxor.u32 %v2545, 2147483648
    %v2562 = vxor.u32 %v2546, 2147483648
    %v2563 = vxor.u32 %v2547, 2147483648
    %v2564 = vxor.u32 %v2548, 2147483648
    %v2565 = vxor.u32 %v2549, 2147483648
    %v2566 = vxor.u32 %v2550, 2147483648
    %v2567 = vxor.u32 %v2551, 2147483648
    %v2568 = vmul.f32 %v2552, 1.442695
    %v2569 = vpow.pop %v2568
    %v2570 = vmul.f32 %v2553, 1.442695
    %v2571 = vpow.pop %v2570
    %v2572 = vmul.f32 %v2554, 1.442695
    %v2573 = vpow.pop %v2572
    %v2574 = vmul.f32 %v2555, 1.442695
    %v2575 = vpow.pop %v2574
    %v2576 = vmul.f32 %v2556, 1.442695
    %v2577 = vpow.pop %v2576
    %v2578 = vmul.f32 %v2557, 1.442695
    %v2579 = vpow.pop %v2578
    %v2580 = vmul.f32 %v2558, 1.442695
    %v2581 = vpow.pop %v2580
    %v2582 = vmul.f32 %v2559, 1.442695
    %v2583 = vpow.pop %v2582
    %v2584 = vmul.f32 %v2560, 1.442695
    %v2585 = vpow.pop %v2584
    %v2586 = vmul.f32 %v2561, 1.442695
    %v2587 = vpow.pop %v2586
    %v2588 = vmul.f32 %v2562, 1.442695
    %v2589 = vpow.pop %v2588
    %v2590 = vmul.f32 %v2563, 1.442695
    %v2591 = vpow.pop %v2590
    %v2592 = vmul.f32 %v2564, 1.442695
    %v2593 = vpow.pop %v2592
    %v2594 = vmul.f32 %v2565, 1.442695
    %v2595 = vpow.pop %v2594
    %v2596 = vmul.f32 %v2566, 1.442695
    %v2597 = vpow.pop %v2596
    %v2598 = vmul.f32 %v2567, 1.442695
    %v2599 = vpow.pop %v2598
    %v2600 = vadd.f32 %v2569, 1.0
    %v2601 = vadd.f32 %v2571, 1.0
    %v2602 = vadd.f32 %v2573, 1.0
    %v2603 = vadd.f32 %v2575, 1.0
    %v2604 = vadd.f32 %v2577, 1.0
    %v2605 = vadd.f32 %v2579, 1.0
    %v2606 = vadd.f32 %v2581, 1.0
    %v2607 = vadd.f32 %v2583, 1.0
    %v2608 = vadd.f32 %v2585, 1.0
    %v2609 = vadd.f32 %v2587, 1.0
    %v2610 = vadd.f32 %v2589, 1.0
    %v2611 = vadd.f32 %v2591, 1.0
    %v2612 = vadd.f32 %v2593, 1.0
    %v2613 = vadd.f32 %v2595, 1.0
    %v2614 = vadd.f32 %v2597, 1.0
    %v2615 = vadd.f32 %v2599, 1.0
    %v2616 = vrcp.pop %v2600
    %v2617 = vmul.f32 1.0, %v2616
    %v2618 = vrcp.pop %v2601
    %v2619 = vmul.f32 1.0, %v2618
    %v2620 = vrcp.pop %v2602
    %v2621 = vmul.f32 1.0, %v2620
    %v2622 = vrcp.pop %v2603
    %v2623 = vmul.f32 1.0, %v2622
    %v2624 = vrcp.pop %v2604
    %v2625 = vmul.f32 1.0, %v2624
    %v2626 = vrcp.pop %v2605
    %v2627 = vmul.f32 1.0, %v2626
    %v2628 = vrcp.pop %v2606
    %v2629 = vmul.f32 1.0, %v2628
    %v2630 = vrcp.pop %v2607
    %v2631 = vmul.f32 1.0, %v2630
    %v2632 = vrcp.pop %v2608
    %v2633 = vmul.f32 1.0, %v2632
    %v2634 = vrcp.pop %v2609
    %v2635 = vmul.f32 1.0, %v2634
    %v2636 = vrcp.pop %v2610
    %v2637 = vmul.f32 1.0, %v2636
    %v2638 = vrcp.pop %v2611
    %v2639 = vmul.f32 1.0, %v2638
    %v2640 = vrcp.pop %v2612
    %v2641 = vmul.f32 1.0, %v2640
    %v2642 = vrcp.pop %v2613
    %v2643 = vmul.f32 1.0, %v2642
    %v2644 = vrcp.pop %v2614
    %v2645 = vmul.f32 1.0, %v2644
    %v2646 = vrcp.pop %v2615
    %v2647 = vmul.f32 1.0, %v2646
    %v2648 = vmul.f32 %v2536, %v2617
    %v2649 = vmul.f32 %v2537, %v2619
    %v2650 = vmul.f32 %v2538, %v2621
    %v2651 = vmul.f32 %v2539, %v2623
    %v2652 = vmul.f32 %v2540, %v2625
    %v2653 = vmul.f32 %v2541, %v2627
    %v2654 = vmul.f32 %v2542, %v2629
    %v2655 = vmul.f32 %v2543, %v2631
    %v2656 = vmul.f32 %v2544, %v2633
    %v2657 = vmul.f32 %v2545, %v2635
    %v2658 = vmul.f32 %v2546, %v2637
    %v2659 = vmul.f32 %v2547, %v2639
    %v2660 = vmul.f32 %v2548, %v2641
    %v2661 = vmul.f32 %v2549, %v2643
    %v2662 = vmul.f32 %v2550, %v2645
    %v2663 = vmul.f32 %v2551, %v2647
    %v2665 = vsel %vm485, %v2648, 0
    %v2668 = vsel %vm485, %v2649, 0
    %v2671 = vsel %vm485, %v2650, 0
    %v2674 = vsel %vm485, %v2651, 0
    %v2677 = vsel %vm485, %v2652, 0
    %v2680 = vsel %vm485, %v2653, 0
    %v2683 = vsel %vm485, %v2654, 0
    %v2686 = vsel %vm485, %v2655, 0
    %v2689 = vsel %vm485, %v2656, 0
    %v2692 = vsel %vm485, %v2657, 0
    %v2695 = vsel %vm485, %v2658, 0
    %v2698 = vsel %vm485, %v2659, 0
    %v2701 = vsel %vm485, %v2660, 0
    %v2704 = vsel %vm485, %v2661, 0
    %v2707 = vsel %vm485, %v2662, 0
    %v2710 = vsel %vm485, %v2663, 0
    %2712 = vmatprep.subr.mxu0 0.0
    %2713 = vmatpush1.msra.mxu0 %v142
    %2714 = vmatprep.subr.mxu0 0.0
    %2715 = vmatpush1.msra.mxu0 %v143
    %2716 = vmatprep.subr.mxu0 0.0
    %2717 = vmatpush1.msra.mxu0 %v144
    %2718 = vmatprep.subr.mxu0 0.0
    %2719 = vmatpush1.msra.mxu0 %v145
    %2720 = vmatprep.subr.mxu0 0.0
    %2721 = vmatpush1.msra.mxu0 0.0
    %2722 = vmatprep.subr.mxu0 0.0
    %2723 = vmatpush1.msra.mxu0 0.0
    %2724 = vmatprep.subr.mxu0 0.0
    %2725 = vmatpush1.msra.mxu0 0.0
    %2726 = vmatprep.subr.mxu0 0.0
    %2727 = vmatpush1.msra.mxu0 0.0
    %2728 = vmatprep.subr.mxu0 0.0
    %2729 = vmatpush1.msra.mxu0 0.0
    %2730 = vmatprep.subr.mxu0 0.0
    %2731 = vmatpush1.msra.mxu0 0.0
    %2732 = vmatprep.subr.mxu0 0.0
    %2733 = vmatpush1.msra.mxu0 0.0
    %2734 = vmatprep.subr.mxu0 0.0
    %2735 = vmatpush1.msra.mxu0 0.0
    %2736 = vmatprep.subr.mxu0 0.0
    %2737 = vmatpush1.msra.mxu0 0.0
    %2738 = vmatprep.subr.mxu0 0.0
    %2739 = vmatpush1.msra.mxu0 0.0
    %2740 = vmatprep.subr.mxu0 0.0
    %2741 = vmatpush1.msra.mxu0 0.0
    %2742 = vmatprep.subr.mxu0 0.0
    %2743 = vmatpush1.msra.mxu0 0.0
    %2744 = vmatprep.subr.mxu0 0.0
    %2745 = vmatpush1.msra.mxu0 0.0
    %2746 = vmatprep.subr.mxu0 0.0
    %2747 = vmatpush1.msra.mxu0 0.0
    %2748 = vmatprep.subr.mxu0 0.0
    %2749 = vmatpush1.msra.mxu0 0.0
    %2750 = vmatprep.subr.mxu0 0.0
    %2751 = vmatpush1.msra.mxu0 0.0
    %2752 = vmatprep.subr.mxu0 0.0
    %2753 = vmatpush1.msra.mxu0 0.0
    %2754 = vmatprep.subr.mxu0 0.0
    %2755 = vmatpush1.msra.mxu0 0.0
    %2756 = vmatprep.subr.mxu0 0.0
    %2757 = vmatpush1.msra.mxu0 0.0
    %2758 = vmatprep.subr.mxu0 0.0
    %2759 = vmatpush1.msra.mxu0 0.0
    %2760 = vmatprep.subr.mxu0 0.0
    %2761 = vmatpush1.msra.mxu0 0.0
    %2762 = vmatprep.subr.mxu0 0.0
    %2763 = vmatpush1.msra.mxu0 0.0
    %2764 = vmatprep.subr.mxu0 0.0
    %2765 = vmatpush1.msra.mxu0 0.0
    %2766 = vmatprep.subr.mxu0 0.0
    %2767 = vmatpush1.msra.mxu0 0.0
    %2768 = vmatprep.subr.mxu0 0.0
    %2769 = vmatpush1.msra.mxu0 0.0
    %2770 = vmatprep.subr.mxu0 0.0
    %2771 = vmatpush1.msra.mxu0 0.0
    %2772 = vmatprep.subr.mxu0 0.0
    %2773 = vmatpush1.msra.mxu0 0.0
    %2774 = vmatprep.subr.mxu0 0.0
    %2775 = vmatpush1.msra.mxu0 0.0
    %2776 = vmatprep.mubr.f32.mxu0 0.0
    %2777 = vmatmul.mubr.f32.gmra.mrb[0].mxu0 %v2665
    %v2778 = vpop.f32.mrb[0].mxu0
    %v2779 = vadd.f32 %v483, %v2778
    %v2780 = vpop.f32.mrb[0].mxu0
    %2781 = vmatprep.mubr.f32.mxu0 0.0
    %2782 = vmatmul.mubr.f32.gmra.mrb[0].mxu0 %v2668
    %v2783 = vpop.f32.mrb[0].mxu0
    %v2784 = vadd.f32 %v483, %v2783
    %v2785 = vpop.f32.mrb[0].mxu0
    %2786 = vmatprep.mubr.f32.mxu0 0.0
    %2787 = vmatmul.mubr.f32.gmra.mrb[0].mxu0 %v2671
    %v2788 = vpop.f32.mrb[0].mxu0
    %v2789 = vadd.f32 %v483, %v2788
    %v2790 = vpop.f32.mrb[0].mxu0
    %2791 = vmatprep.mubr.f32.mxu0 0.0
    %2792 = vmatmul.mubr.f32.gmra.mrb[0].mxu0 %v2674
    %v2793 = vpop.f32.mrb[0].mxu0
    %v2794 = vadd.f32 %v483, %v2793
    %v2795 = vpop.f32.mrb[0].mxu0
    %2796 = vmatprep.mubr.f32.mxu0 0.0
    %2797 = vmatmul.mubr.f32.gmra.mrb[0].mxu0 %v2677
    %v2798 = vpop.f32.mrb[0].mxu0
    %v2799 = vadd.f32 %v483, %v2798
    %v2800 = vpop.f32.mrb[0].mxu0
    %2801 = vmatprep.mubr.f32.mxu0 0.0
    %2802 = vmatmul.mubr.f32.gmra.mrb[0].mxu0 %v2680
    %v2803 = vpop.f32.mrb[0].mxu0
    %v2804 = vadd.f32 %v483, %v2803
    %v2805 = vpop.f32.mrb[0].mxu0
    %2806 = vmatprep.mubr.f32.mxu0 0.0
    %2807 = vmatmul.mubr.f32.gmra.mrb[0].mxu0 %v2683
    %v2808 = vpop.f32.mrb[0].mxu0
    %v2809 = vadd.f32 %v483, %v2808
    %v2810 = vpop.f32.mrb[0].mxu0
    %2811 = vmatprep.mubr.f32.mxu0 0.0
    %2812 = vmatmul.mubr.f32.gmra.mrb[0].mxu0 %v2686
    %v2813 = vpop.f32.mrb[0].mxu0
    %v2814 = vadd.f32 %v483, %v2813
    %v2815 = vpop.f32.mrb[0].mxu0
    %2816 = vmatprep.mubr.f32.mxu0 0.0
    %2817 = vmatmul.mubr.f32.gmra.mrb[0].mxu0 %v2689
    %v2818 = vpop.f32.mrb[0].mxu0
    %v2819 = vadd.f32 %v483, %v2818
    %v2820 = vpop.f32.mrb[0].mxu0
    %2821 = vmatprep.mubr.f32.mxu0 0.0
    %2822 = vmatmul.mubr.f32.gmra.mrb[0].mxu0 %v2692
    %v2823 = vpop.f32.mrb[0].mxu0
    %v2824 = vadd.f32 %v483, %v2823
    %v2825 = vpop.f32.mrb[0].mxu0
    %2826 = vmatprep.mubr.f32.mxu0 0.0
    %2827 = vmatmul.mubr.f32.gmra.mrb[0].mxu0 %v2695
    %v2828 = vpop.f32.mrb[0].mxu0
    %v2829 = vadd.f32 %v483, %v2828
    %v2830 = vpop.f32.mrb[0].mxu0
    %2831 = vmatprep.mubr.f32.mxu0 0.0
    %2832 = vmatmul.mubr.f32.gmra.mrb[0].mxu0 %v2698
    %v2833 = vpop.f32.mrb[0].mxu0
    %v2834 = vadd.f32 %v483, %v2833
    %v2835 = vpop.f32.mrb[0].mxu0
    %2836 = vmatprep.mubr.f32.mxu0 0.0
    %2837 = vmatmul.mubr.f32.gmra.mrb[0].mxu0 %v2701
    %v2838 = vpop.f32.mrb[0].mxu0
    %v2839 = vadd.f32 %v483, %v2838
    %v2840 = vpop.f32.mrb[0].mxu0
    %2841 = vmatprep.mubr.f32.mxu0 0.0
    %2842 = vmatmul.mubr.f32.gmra.mrb[0].mxu0 %v2704
    %v2843 = vpop.f32.mrb[0].mxu0
    %v2844 = vadd.f32 %v483, %v2843
    %v2845 = vpop.f32.mrb[0].mxu0
    %2846 = vmatprep.mubr.f32.mxu0 0.0
    %2847 = vmatmul.mubr.f32.gmra.mrb[0].mxu0 %v2707
    %v2848 = vpop.f32.mrb[0].mxu0
    %v2849 = vadd.f32 %v483, %v2848
    %v2850 = vpop.f32.mrb[0].mxu0
    %2851 = vmatprep.mubr.f32.mxu0 0.0
    %2852 = vmatmul.mubr.f32.gmra.mrb[0].mxu0 %v2710
    %v2853 = vpop.f32.mrb[0].mxu0
    %v2854 = vadd.f32 %v483, %v2853
    %v2855 = vpop.f32.mrb[0].mxu0
    %2856 = vdwg.mxu0
    %2857 = vst [vmem:[#allocation2] sm:$0xff] %v2779
    %2858 = vst [vmem:[#allocation2 + $0x8] sm:$0xff] %v2784
    %2859 = vst [vmem:[#allocation2 + $0x10] sm:$0xff] %v2789
    %2860 = vst [vmem:[#allocation2 + $0x18] sm:$0xff] %v2794
    %2861 = vst [vmem:[#allocation2 + $0x20] sm:$0xff] %v2799
    %2862 = vst [vmem:[#allocation2 + $0x28] sm:$0xff] %v2804
    %2863 = vst [vmem:[#allocation2 + $0x30] sm:$0xff] %v2809
    %2864 = vst [vmem:[#allocation2 + $0x38] sm:$0xff] %v2814
    %2865 = vst [vmem:[#allocation2 + $0x40] sm:$0xff] %v2819
    %2866 = vst [vmem:[#allocation2 + $0x48] sm:$0xff] %v2824
    %2867 = vst [vmem:[#allocation2 + $0x50] sm:$0xff] %v2829
    %2868 = vst [vmem:[#allocation2 + $0x58] sm:$0xff] %v2834
    %2869 = vst [vmem:[#allocation2 + $0x60] sm:$0xff] %v2839
    %2870 = vst [vmem:[#allocation2 + $0x68] sm:$0xff] %v2844
    %2871 = vst [vmem:[#allocation2 + $0x70] sm:$0xff] %v2849
    %2872 = vst [vmem:[#allocation2 + $0x78] sm:$0xff] %v2854
    %v2873 = vld [vmem:[#allocation2] sm:$0xff]
    %v2874 = vld [vmem:[#allocation2 + $0x8] sm:$0xff]
    %v2875 = vld [vmem:[#allocation2 + $0x10] sm:$0xff]
    %v2876 = vld [vmem:[#allocation2 + $0x18] sm:$0xff]
    %v2877 = vld [vmem:[#allocation2 + $0x20] sm:$0xff]
    %v2878 = vld [vmem:[#allocation2 + $0x28] sm:$0xff]
    %v2879 = vld [vmem:[#allocation2 + $0x30] sm:$0xff]
    %v2880 = vld [vmem:[#allocation2 + $0x38] sm:$0xff]
    %v2881 = vld [vmem:[#allocation2 + $0x40] sm:$0xff]
    %v2882 = vld [vmem:[#allocation2 + $0x48] sm:$0xff]
    %v2883 = vld [vmem:[#allocation2 + $0x50] sm:$0xff]
    %v2884 = vld [vmem:[#allocation2 + $0x58] sm:$0xff]
    %v2885 = vld [vmem:[#allocation2 + $0x60] sm:$0xff]
    %v2886 = vld [vmem:[#allocation2 + $0x68] sm:$0xff]
    %v2887 = vld [vmem:[#allocation2 + $0x70] sm:$0xff]
    %v2888 = vld [vmem:[#allocation2 + $0x78] sm:$0xff]
    %v2890 = vsel %vm485, %v2873, 0
    %v2893 = vsel %vm485, %v2874, 0
    %v2896 = vsel %vm485, %v2875, 0
    %v2899 = vsel %vm485, %v2876, 0
    %v2902 = vsel %vm485, %v2877, 0
    %v2905 = vsel %vm485, %v2878, 0
    %v2908 = vsel %vm485, %v2879, 0
    %v2911 = vsel %vm485, %v2880, 0
    %v2914 = vsel %vm485, %v2881, 0
    %v2917 = vsel %vm485, %v2882, 0
    %v2920 = vsel %vm485, %v2883, 0
    %v2923 = vsel %vm485, %v2884, 0
    %v2926 = vsel %vm485, %v2885, 0
    %v2929 = vsel %vm485, %v2886, 0
    %v2932 = vsel %vm485, %v2887, 0
    %v2935 = vsel %vm485, %v2888, 0
    %2937 = vmatprep.subr.mxu0 0.0
    %2938 = vmatpush1.xpose.msra.mxu0 %v760
    %2939 = vmatprep.subr.mxu0 0.0
    %2940 = vmatpush1.xpose.msra.mxu0 0.0
    %2941 = vmatprep.subr.mxu0 0.0
    %2942 = vmatpush1.xpose.msra.mxu0 0.0
    %2943 = vmatprep.subr.mxu0 0.0
    %2944 = vmatpush1.xpose.msra.mxu0 0.0
    %2945 = vmatprep.subr.mxu0 0.0
    %2946 = vmatpush1.xpose.msra.mxu0 0.0
    %2947 = vmatprep.subr.mxu0 0.0
    %2948 = vmatpush1.xpose.msra.mxu0 0.0
    %2949 = vmatprep.subr.mxu0 0.0
    %2950 = vmatpush1.xpose.msra.mxu0 0.0
    %2951 = vmatprep.subr.mxu0 0.0
    %2952 = vmatpush1.xpose.msra.mxu0 0.0
    %2953 = vmatprep.subr.mxu0 0.0
    %2954 = vmatpush1.xpose.msra.mxu0 0.0
    %2955 = vmatprep.subr.mxu0 0.0
    %2956 = vmatpush1.xpose.msra.mxu0 0.0
    %2957 = vmatprep.subr.mxu0 0.0
    %2958 = vmatpush1.xpose.msra.mxu0 0.0
    %2959 = vmatprep.subr.mxu0 0.0
    %2960 = vmatpush1.xpose.msra.mxu0 0.0
    %2961 = vmatprep.subr.mxu0 0.0
    %2962 = vmatpush1.xpose.msra.mxu0 0.0
    %2963 = vmatprep.subr.mxu0 0.0
    %2964 = vmatpush1.xpose.msra.mxu0 0.0
    %2965 = vmatprep.subr.mxu0 0.0
    %2966 = vmatpush1.xpose.msra.mxu0 0.0
    %2967 = vmatprep.subr.mxu0 0.0
    %2968 = vmatpush1.xpose.msra.mxu0 0.0
    %2969 = vmatprep.subr.mxu0 0.0
    %2970 = vmatpush1.xpose.msra.mxu0 0.0
    %2971 = vmatprep.subr.mxu0 0.0
    %2972 = vmatpush1.xpose.msra.mxu0 0.0
    %2973 = vmatprep.subr.mxu0 0.0
    %2974 = vmatpush1.xpose.msra.mxu0 0.0
    %2975 = vmatprep.subr.mxu0 0.0
    %2976 = vmatpush1.xpose.msra.mxu0 0.0
    %2977 = vmatprep.subr.mxu0 0.0
    %2978 = vmatpush1.xpose.msra.mxu0 0.0
    %2979 = vmatprep.subr.mxu0 0.0
    %2980 = vmatpush1.xpose.msra.mxu0 0.0
    %2981 = vmatprep.subr.mxu0 0.0
    %2982 = vmatpush1.xpose.msra.mxu0 0.0
    %2983 = vmatprep.subr.mxu0 0.0
    %2984 = vmatpush1.xpose.msra.mxu0 0.0
    %2985 = vmatprep.subr.mxu0 0.0
    %2986 = vmatpush1.xpose.msra.mxu0 0.0
    %2987 = vmatprep.subr.mxu0 0.0
    %2988 = vmatpush1.xpose.msra.mxu0 0.0
    %2989 = vmatprep.subr.mxu0 0.0
    %2990 = vmatpush1.xpose.msra.mxu0 0.0
    %2991 = vmatprep.subr.mxu0 0.0
    %2992 = vmatpush1.xpose.msra.mxu0 0.0
    %2993 = vmatprep.subr.mxu0 0.0
    %2994 = vmatpush1.xpose.msra.mxu0 0.0
    %2995 = vmatprep.subr.mxu0 0.0
    %2996 = vmatpush1.xpose.msra.mxu0 0.0
    %2997 = vmatprep.subr.mxu0 0.0
    %2998 = vmatpush1.xpose.msra.mxu0 0.0
    %2999 = vmatprep.subr.mxu0 0.0
    %3000 = vmatpush1.xpose.msra.mxu0 0.0
    %3001 = vmatprep.mubr.f32.mxu0 0.0
    %3002 = vmatmul.mubr.f32.gmra.mrb[0].mxu0 %v2890
    %v3003 = vpop.f32.mrb[0].mxu0
    %v3004 = vadd.f32 0.0, %v3003
    %v3005 = vpop.f32.mrb[0].mxu0
    %3006 = vmatprep.mubr.f32.mxu0 0.0
    %3007 = vmatmul.mubr.f32.gmra.mrb[0].mxu0 %v2893
    %v3008 = vpop.f32.mrb[0].mxu0
    %v3009 = vadd.f32 0.0, %v3008
    %v3010 = vpop.f32.mrb[0].mxu0
    %3011 = vmatprep.mubr.f32.mxu0 0.0
    %3012 = vmatmul.mubr.f32.gmra.mrb[0].mxu0 %v2896
    %v3013 = vpop.f32.mrb[0].mxu0
    %v3014 = vadd.f32 0.0, %v3013
    %v3015 = vpop.f32.mrb[0].mxu0
    %3016 = vmatprep.mubr.f32.mxu0 0.0
    %3017 = vmatmul.mubr.f32.gmra.mrb[0].mxu0 %v2899
    %v3018 = vpop.f32.mrb[0].mxu0
    %v3019 = vadd.f32 0.0, %v3018
    %v3020 = vpop.f32.mrb[0].mxu0
    %3021 = vmatprep.mubr.f32.mxu0 0.0
    %3022 = vmatmul.mubr.f32.gmra.mrb[0].mxu0 %v2902
    %v3023 = vpop.f32.mrb[0].mxu0
    %v3024 = vadd.f32 0.0, %v3023
    %v3025 = vpop.f32.mrb[0].mxu0
    %3026 = vmatprep.mubr.f32.mxu0 0.0
    %3027 = vmatmul.mubr.f32.gmra.mrb[0].mxu0 %v2905
    %v3028 = vpop.f32.mrb[0].mxu0
    %v3029 = vadd.f32 0.0, %v3028
    %v3030 = vpop.f32.mrb[0].mxu0
    %3031 = vmatprep.mubr.f32.mxu0 0.0
    %3032 = vmatmul.mubr.f32.gmra.mrb[0].mxu0 %v2908
    %v3033 = vpop.f32.mrb[0].mxu0
    %v3034 = vadd.f32 0.0, %v3033
    %v3035 = vpop.f32.mrb[0].mxu0
    %3036 = vmatprep.mubr.f32.mxu0 0.0
    %3037 = vmatmul.mubr.f32.gmra.mrb[0].mxu0 %v2911
    %v3038 = vpop.f32.mrb[0].mxu0
    %v3039 = vadd.f32 0.0, %v3038
    %v3040 = vpop.f32.mrb[0].mxu0
    %3041 = vmatprep.mubr.f32.mxu0 0.0
    %3042 = vmatmul.mubr.f32.gmra.mrb[0].mxu0 %v2914
    %v3043 = vpop.f32.mrb[0].mxu0
    %v3044 = vadd.f32 0.0, %v3043
    %v3045 = vpop.f32.mrb[0].mxu0
    %3046 = vmatprep.mubr.f32.mxu0 0.0
    %3047 = vmatmul.mubr.f32.gmra.mrb[0].mxu0 %v2917
    %v3048 = vpop.f32.mrb[0].mxu0
    %v3049 = vadd.f32 0.0, %v3048
    %v3050 = vpop.f32.mrb[0].mxu0
    %3051 = vmatprep.mubr.f32.mxu0 0.0
    %3052 = vmatmul.mubr.f32.gmra.mrb[0].mxu0 %v2920
    %v3053 = vpop.f32.mrb[0].mxu0
    %v3054 = vadd.f32 0.0, %v3053
    %v3055 = vpop.f32.mrb[0].mxu0
    %3056 = vmatprep.mubr.f32.mxu0 0.0
    %3057 = vmatmul.mubr.f32.gmra.mrb[0].mxu0 %v2923
    %v3058 = vpop.f32.mrb[0].mxu0
    %v3059 = vadd.f32 0.0, %v3058
    %v3060 = vpop.f32.mrb[0].mxu0
    %3061 = vmatprep.mubr.f32.mxu0 0.0
    %3062 = vmatmul.mubr.f32.gmra.mrb[0].mxu0 %v2926
    %v3063 = vpop.f32.mrb[0].mxu0
    %v3064 = vadd.f32 0.0, %v3063
    %v3065 = vpop.f32.mrb[0].mxu0
    %3066 = vmatprep.mubr.f32.mxu0 0.0
    %3067 = vmatmul.mubr.f32.gmra.mrb[0].mxu0 %v2929
    %v3068 = vpop.f32.mrb[0].mxu0
    %v3069 = vadd.f32 0.0, %v3068
    %v3070 = vpop.f32.mrb[0].mxu0
    %3071 = vmatprep.mubr.f32.mxu0 0.0
    %3072 = vmatmul.mubr.f32.gmra.mrb[0].mxu0 %v2932
    %v3073 = vpop.f32.mrb[0].mxu0
    %v3074 = vadd.f32 0.0, %v3073
    %v3075 = vpop.f32.mrb[0].mxu0
    %3076 = vmatprep.mubr.f32.mxu0 0.0
    %3077 = vmatmul.mubr.f32.gmra.mrb[0].mxu0 %v2935
    %v3078 = vpop.f32.mrb[0].mxu0
    %v3079 = vadd.f32 0.0, %v3078
    %v3080 = vpop.f32.mrb[0].mxu0
    %3081 = vdwg.mxu0
    %3082 = vst.msk [vmem:[#allocation3] sm:$0xff] %vm907, %v3004
    %3083 = vst.msk [vmem:[#allocation3 + $0x8] sm:$0xff] %vm907, %v3009
    %3084 = vst.msk [vmem:[#allocation3 + $0x10] sm:$0xff] %vm907, %v3014
    %3085 = vst.msk [vmem:[#allocation3 + $0x18] sm:$0xff] %vm907, %v3019
    %3086 = vst.msk [vmem:[#allocation3 + $0x20] sm:$0xff] %vm907, %v3024
    %3087 = vst.msk [vmem:[#allocation3 + $0x28] sm:$0xff] %vm907, %v3029
    %3088 = vst.msk [vmem:[#allocation3 + $0x30] sm:$0xff] %vm907, %v3034
    %3089 = vst.msk [vmem:[#allocation3 + $0x38] sm:$0xff] %vm907, %v3039
    %3090 = vst.msk [vmem:[#allocation3 + $0x40] sm:$0xff] %vm907, %v3044
    %3091 = vst.msk [vmem:[#allocation3 + $0x48] sm:$0xff] %vm907, %v3049
    %3092 = vst.msk [vmem:[#allocation3 + $0x50] sm:$0xff] %vm907, %v3054
    %3093 = vst.msk [vmem:[#allocation3 + $0x58] sm:$0xff] %vm907, %v3059
    %3094 = vst.msk [vmem:[#allocation3 + $0x60] sm:$0xff] %vm907, %v3064
    %3095 = vst.msk [vmem:[#allocation3 + $0x68] sm:$0xff] %vm907, %v3069
    %3096 = vst.msk [vmem:[#allocation3 + $0x70] sm:$0xff] %vm907, %v3074
    %3097 = vst.msk [vmem:[#allocation3 + $0x78] sm:$0xff] %vm907, %v3079
    %v3098 = vld [vmem:[#allocation4] sm:$0xff]
    %v3099 = vld [vmem:[#allocation4 + $0x8] sm:$0xff]
    %v3100 = vld [vmem:[#allocation4 + $0x10] sm:$0xff]
    %v3101 = vld [vmem:[#allocation4 + $0x18] sm:$0xff]
    %v3102 = vld [vmem:[#allocation4 + $0x20] sm:$0xff]
    %v3103 = vld [vmem:[#allocation4 + $0x28] sm:$0xff]
    %v3104 = vld [vmem:[#allocation4 + $0x30] sm:$0xff]
    %v3105 = vld [vmem:[#allocation4 + $0x38] sm:$0xff]
    %v3106 = vld [vmem:[#allocation4 + $0x40] sm:$0xff]
    %v3107 = vld [vmem:[#allocation4 + $0x48] sm:$0xff]
    %v3108 = vld [vmem:[#allocation4 + $0x50] sm:$0xff]
    %v3109 = vld [vmem:[#allocation4 + $0x58] sm:$0xff]
    %v3110 = vld [vmem:[#allocation4 + $0x60] sm:$0xff]
    %v3111 = vld [vmem:[#allocation4 + $0x68] sm:$0xff]
    %v3112 = vld [vmem:[#allocation4 + $0x70] sm:$0xff]
    %v3113 = vld [vmem:[#allocation4 + $0x78] sm:$0xff]
    %v3114 = vld [vmem:[#allocation3] sm:$0xff]
    %v3115 = vld [vmem:[#allocation3 + $0x8] sm:$0xff]
    %v3116 = vld [vmem:[#allocation3 + $0x10] sm:$0xff]
    %v3117 = vld [vmem:[#allocation3 + $0x18] sm:$0xff]
    %v3118 = vld [vmem:[#allocation3 + $0x20] sm:$0xff]
    %v3119 = vld [vmem:[#allocation3 + $0x28] sm:$0xff]
    %v3120 = vld [vmem:[#allocation3 + $0x30] sm:$0xff]
    %v3121 = vld [vmem:[#allocation3 + $0x38] sm:$0xff]
    %v3122 = vld [vmem:[#allocation3 + $0x40] sm:$0xff]
    %v3123 = vld [vmem:[#allocation3 + $0x48] sm:$0xff]
    %v3124 = vld [vmem:[#allocation3 + $0x50] sm:$0xff]
    %v3125 = vld [vmem:[#allocation3 + $0x58] sm:$0xff]
    %v3126 = vld [vmem:[#allocation3 + $0x60] sm:$0xff]
    %v3127 = vld [vmem:[#allocation3 + $0x68] sm:$0xff]
    %v3128 = vld [vmem:[#allocation3 + $0x70] sm:$0xff]
    %v3129 = vld [vmem:[#allocation3 + $0x78] sm:$0xff]
    %3131 = vset.pattern.permute.xlu0 0
    %3132 = vperm.xlu0 %3131, %v3114
    %v3133 = vpop.permute.xlu0 %3132
    %3136 = vset.pattern.permute.xlu0 0
    %3137 = vperm.xlu0 %3136, %v3115
    %v3138 = vpop.permute.xlu0 %3137
    %3141 = vset.pattern.permute.xlu0 0
    %3142 = vperm.xlu0 %3141, %v3116
    %v3143 = vpop.permute.xlu0 %3142
    %3146 = vset.pattern.permute.xlu0 0
    %3147 = vperm.xlu0 %3146, %v3117
    %v3148 = vpop.permute.xlu0 %3147
    %3151 = vset.pattern.permute.xlu0 0
    %3152 = vperm.xlu0 %3151, %v3118
    %v3153 = vpop.permute.xlu0 %3152
    %3156 = vset.pattern.permute.xlu0 0
    %3157 = vperm.xlu0 %3156, %v3119
    %v3158 = vpop.permute.xlu0 %3157
    %3161 = vset.pattern.permute.xlu0 0
    %3162 = vperm.xlu0 %3161, %v3120
    %v3163 = vpop.permute.xlu0 %3162
    %3166 = vset.pattern.permute.xlu0 0
    %3167 = vperm.xlu0 %3166, %v3121
    %v3168 = vpop.permute.xlu0 %3167
    %3171 = vset.pattern.permute.xlu0 0
    %3172 = vperm.xlu0 %3171, %v3122
    %v3173 = vpop.permute.xlu0 %3172
    %3176 = vset.pattern.permute.xlu0 0
    %3177 = vperm.xlu0 %3176, %v3123
    %v3178 = vpop.permute.xlu0 %3177
    %3181 = vset.pattern.permute.xlu0 0
    %3182 = vperm.xlu0 %3181, %v3124
    %v3183 = vpop.permute.xlu0 %3182
    %3186 = vset.pattern.permute.xlu0 0
    %3187 = vperm.xlu0 %3186, %v3125
    %v3188 = vpop.permute.xlu0 %3187
    %3191 = vset.pattern.permute.xlu0 0
    %3192 = vperm.xlu0 %3191, %v3126
    %v3193 = vpop.permute.xlu0 %3192
    %3196 = vset.pattern.permute.xlu0 0
    %3197 = vperm.xlu0 %3196, %v3127
    %v3198 = vpop.permute.xlu0 %3197
    %3201 = vset.pattern.permute.xlu0 0
    %3202 = vperm.xlu0 %3201, %v3128
    %v3203 = vpop.permute.xlu0 %3202
    %3206 = vset.pattern.permute.xlu0 0
    %3207 = vperm.xlu0 %3206, %v3129
    %v3208 = vpop.permute.xlu0 %3207
    %v3210 = vmul.f32 %v3098, %v3133
    %v3211 = vmul.f32 %v3099, %v3138
    %v3212 = vmul.f32 %v3100, %v3143
    %v3213 = vmul.f32 %v3101, %v3148
    %v3214 = vmul.f32 %v3102, %v3153
    %v3215 = vmul.f32 %v3103, %v3158
    %v3216 = vmul.f32 %v3104, %v3163
    %v3217 = vmul.f32 %v3105, %v3168
    %v3218 = vmul.f32 %v3106, %v3173
    %v3219 = vmul.f32 %v3107, %v3178
    %v3220 = vmul.f32 %v3108, %v3183
    %v3221 = vmul.f32 %v3109, %v3188
    %v3222 = vmul.f32 %v3110, %v3193
    %v3223 = vmul.f32 %v3111, %v3198
    %v3224 = vmul.f32 %v3112, %v3203
    %v3225 = vmul.f32 %v3113, %v3208
    %3226 = vrot.lane.b32.xlu0 %v2873, 96
    %v3227 = vpop.permute.xlu0 %3226
    %3228 = vrot.lane.b32.xlu0 %v2874, 96
    %v3229 = vpop.permute.xlu0 %3228
    %3230 = vrot.lane.b32.xlu0 %v2875, 96
    %v3231 = vpop.permute.xlu0 %3230
    %3232 = vrot.lane.b32.xlu0 %v2876, 96
    %v3233 = vpop.permute.xlu0 %3232
    %3234 = vrot.lane.b32.xlu0 %v2877, 96
    %v3235 = vpop.permute.xlu0 %3234
    %3236 = vrot.lane.b32.xlu0 %v2878, 96
    %v3237 = vpop.permute.xlu0 %3236
    %3238 = vrot.lane.b32.xlu0 %v2879, 96
    %v3239 = vpop.permute.xlu0 %3238
    %3240 = vrot.lane.b32.xlu0 %v2880, 96
    %v3241 = vpop.permute.xlu0 %3240
    %3242 = vrot.lane.b32.xlu0 %v2881, 96
    %v3243 = vpop.permute.xlu0 %3242
    %3244 = vrot.lane.b32.xlu0 %v2882, 96
    %v3245 = vpop.permute.xlu0 %3244
    %3246 = vrot.lane.b32.xlu0 %v2883, 96
    %v3247 = vpop.permute.xlu0 %3246
    %3248 = vrot.lane.b32.xlu0 %v2884, 96
    %v3249 = vpop.permute.xlu0 %3248
    %3250 = vrot.lane.b32.xlu0 %v2885, 96
    %v3251 = vpop.permute.xlu0 %3250
    %3252 = vrot.lane.b32.xlu0 %v2886, 96
    %v3253 = vpop.permute.xlu0 %3252
    %3254 = vrot.lane.b32.xlu0 %v2887, 96
    %v3255 = vpop.permute.xlu0 %3254
    %3256 = vrot.lane.b32.xlu0 %v2888, 96
    %v3257 = vpop.permute.xlu0 %3256
    %v3258 = vsel %vm485, %v3227, 0
    %v3260 = vsel %vm485, %v3229, 0
    %v3262 = vsel %vm485, %v3231, 0
    %v3264 = vsel %vm485, %v3233, 0
    %v3266 = vsel %vm485, %v3235, 0
    %v3268 = vsel %vm485, %v3237, 0
    %v3270 = vsel %vm485, %v3239, 0
    %v3272 = vsel %vm485, %v3241, 0
    %v3274 = vsel %vm485, %v3243, 0
    %v3276 = vsel %vm485, %v3245, 0
    %v3278 = vsel %vm485, %v3247, 0
    %v3280 = vsel %vm485, %v3249, 0
    %v3282 = vsel %vm485, %v3251, 0
    %v3284 = vsel %vm485, %v3253, 0
    %v3286 = vsel %vm485, %v3255, 0
    %v3288 = vsel %vm485, %v3257, 0
    %3290 = vmatprep.subr.mxu0 0.0
    %3291 = vmatpush1.xpose.msra.mxu0 %v3258
    %3292 = vmatprep.subr.mxu0 0.0
    %3293 = vmatpush1.xpose.msra.mxu0 %v3260
    %3294 = vmatprep.subr.mxu0 0.0
    %3295 = vmatpush1.xpose.msra.mxu0 %v3262
    %3296 = vmatprep.subr.mxu0 0.0
    %3297 = vmatpush1.xpose.msra.mxu0 %v3264
    %3298 = vmatprep.subr.mxu0 0.0
    %3299 = vmatpush1.xpose.msra.mxu0 %v3266
    %3300 = vmatprep.subr.mxu0 0.0
    %3301 = vmatpush1.xpose.msra.mxu0 %v3268
    %3302 = vmatprep.subr.mxu0 0.0
    %3303 = vmatpush1.xpose.msra.mxu0 %v3270
    %3304 = vmatprep.subr.mxu0 0.0
    %3305 = vmatpush1.xpose.msra.mxu0 %v3272
    %3306 = vmatprep.subr.mxu0 0.0
    %3307 = vmatpush1.xpose.msra.mxu0 %v3274
    %3308 = vmatprep.subr.mxu0 0.0
    %3309 = vmatpush1.xpose.msra.mxu0 %v3276
    %3310 = vmatprep.subr.mxu0 0.0
    %3311 = vmatpush1.xpose.msra.mxu0 %v3278
    %3312 = vmatprep.subr.mxu0 0.0
    %3313 = vmatpush1.xpose.msra.mxu0 %v3280
    %3314 = vmatprep.subr.mxu0 0.0
    %3315 = vmatpush1.xpose.msra.mxu0 %v3282
    %3316 = vmatprep.subr.mxu0 0.0
    %3317 = vmatpush1.xpose.msra.mxu0 %v3284
    %3318 = vmatprep.subr.mxu0 0.0
    %3319 = vmatpush1.xpose.msra.mxu0 %v3286
    %3320 = vmatprep.subr.mxu0 0.0
    %3321 = vmatpush1.xpose.msra.mxu0 %v3288
    %3322 = vmatprep.subr.mxu0 0.0
    %3323 = vmatpush1.xpose.msra.mxu0 0.0
    %3324 = vmatprep.subr.mxu0 0.0
    %3325 = vmatpush1.xpose.msra.mxu0 0.0
    %3326 = vmatprep.subr.mxu0 0.0
    %3327 = vmatpush1.xpose.msra.mxu0 0.0
    %3328 = vmatprep.subr.mxu0 0.0
    %3329 = vmatpush1.xpose.msra.mxu0 0.0
    %3330 = vmatprep.subr.mxu0 0.0
    %3331 = vmatpush1.xpose.msra.mxu0 0.0
    %3332 = vmatprep.subr.mxu0 0.0
    %3333 = vmatpush1.xpose.msra.mxu0 0.0
    %3334 = vmatprep.subr.mxu0 0.0
    %3335 = vmatpush1.xpose.msra.mxu0 0.0
    %3336 = vmatprep.subr.mxu0 0.0
    %3337 = vmatpush1.xpose.msra.mxu0 0.0
    %3338 = vmatprep.subr.mxu0 0.0
    %3339 = vmatpush1.xpose.msra.mxu0 0.0
    %3340 = vmatprep.subr.mxu0 0.0
    %3341 = vmatpush1.xpose.msra.mxu0 0.0
    %3342 = vmatprep.subr.mxu0 0.0
    %3343 = vmatpush1.xpose.msra.mxu0 0.0
    %3344 = vmatprep.subr.mxu0 0.0
    %3345 = vmatpush1.xpose.msra.mxu0 0.0
    %3346 = vmatprep.subr.mxu0 0.0
    %3347 = vmatpush1.xpose.msra.mxu0 0.0
    %3348 = vmatprep.subr.mxu0 0.0
    %3349 = vmatpush1.xpose.msra.mxu0 0.0
    %3350 = vmatprep.subr.mxu0 0.0
    %3351 = vmatpush1.xpose.msra.mxu0 0.0
    %3352 = vmatprep.subr.mxu0 0.0
    %3353 = vmatpush1.xpose.msra.mxu0 0.0
    %3354 = vmatprep.mubr.f32.mxu0 0.0
    %3355 = vmatmul.mubr.f32.gmra.mrb[0].mxu0 %v2890
    %v3356 = vpop.f32.mrb[0].mxu0
    %v3357 = vadd.f32 %v3210, %v3356
    %v3358 = vpop.f32.mrb[0].mxu0
    %3359 = vmatprep.mubr.f32.mxu0 0.0
    %3360 = vmatmul.mubr.f32.gmra.mrb[0].mxu0 %v2893
    %v3361 = vpop.f32.mrb[0].mxu0
    %v3362 = vadd.f32 %v3211, %v3361
    %v3363 = vpop.f32.mrb[0].mxu0
    %3364 = vmatprep.mubr.f32.mxu0 0.0
    %3365 = vmatmul.mubr.f32.gmra.mrb[0].mxu0 %v2896
    %v3366 = vpop.f32.mrb[0].mxu0
    %v3367 = vadd.f32 %v3212, %v3366
    %v3368 = vpop.f32.mrb[0].mxu0
    %3369 = vmatprep.mubr.f32.mxu0 0.0
    %3370 = vmatmul.mubr.f32.gmra.mrb[0].mxu0 %v2899
    %v3371 = vpop.f32.mrb[0].mxu0
    %v3372 = vadd.f32 %v3213, %v3371
    %v3373 = vpop.f32.mrb[0].mxu0
    %3374 = vmatprep.mubr.f32.mxu0 0.0
    %3375 = vmatmul.mubr.f32.gmra.mrb[0].mxu0 %v2902
    %v3376 = vpop.f32.mrb[0].mxu0
    %v3377 = vadd.f32 %v3214, %v3376
    %v3378 = vpop.f32.mrb[0].mxu0
    %3379 = vmatprep.mubr.f32.mxu0 0.0
    %3380 = vmatmul.mubr.f32.gmra.mrb[0].mxu0 %v2905
    %v3381 = vpop.f32.mrb[0].mxu0
    %v3382 = vadd.f32 %v3215, %v3381
    %v3383 = vpop.f32.mrb[0].mxu0
    %3384 = vmatprep.mubr.f32.mxu0 0.0
    %3385 = vmatmul.mubr.f32.gmra.mrb[0].mxu0 %v2908
    %v3386 = vpop.f32.mrb[0].mxu0
    %v3387 = vadd.f32 %v3216, %v3386
    %v3388 = vpop.f32.mrb[0].mxu0
    %3389 = vmatprep.mubr.f32.mxu0 0.0
    %3390 = vmatmul.mubr.f32.gmra.mrb[0].mxu0 %v2911
    %v3391 = vpop.f32.mrb[0].mxu0
    %v3392 = vadd.f32 %v3217, %v3391
    %v3393 = vpop.f32.mrb[0].mxu0
    %3394 = vmatprep.mubr.f32.mxu0 0.0
    %3395 = vmatmul.mubr.f32.gmra.mrb[0].mxu0 %v2914
    %v3396 = vpop.f32.mrb[0].mxu0
    %v3397 = vadd.f32 %v3218, %v3396
    %v3398 = vpop.f32.mrb[0].mxu0
    %3399 = vmatprep.mubr.f32.mxu0 0.0
    %3400 = vmatmul.mubr.f32.gmra.mrb[0].mxu0 %v2917
    %v3401 = vpop.f32.mrb[0].mxu0
    %v3402 = vadd.f32 %v3219, %v3401
    %v3403 = vpop.f32.mrb[0].mxu0
    %3404 = vmatprep.mubr.f32.mxu0 0.0
    %3405 = vmatmul.mubr.f32.gmra.mrb[0].mxu0 %v2920
    %v3406 = vpop.f32.mrb[0].mxu0
    %v3407 = vadd.f32 %v3220, %v3406
    %v3408 = vpop.f32.mrb[0].mxu0
    %3409 = vmatprep.mubr.f32.mxu0 0.0
    %3410 = vmatmul.mubr.f32.gmra.mrb[0].mxu0 %v2923
    %v3411 = vpop.f32.mrb[0].mxu0
    %v3412 = vadd.f32 %v3221, %v3411
    %v3413 = vpop.f32.mrb[0].mxu0
    %3414 = vmatprep.mubr.f32.mxu0 0.0
    %3415 = vmatmul.mubr.f32.gmra.mrb[0].mxu0 %v2926
    %v3416 = vpop.f32.mrb[0].mxu0
    %v3417 = vadd.f32 %v3222, %v3416
    %v3418 = vpop.f32.mrb[0].mxu0
    %3419 = vmatprep.mubr.f32.mxu0 0.0
    %3420 = vmatmul.mubr.f32.gmra.mrb[0].mxu0 %v2929
    %v3421 = vpop.f32.mrb[0].mxu0
    %v3422 = vadd.f32 %v3223, %v3421
    %v3423 = vpop.f32.mrb[0].mxu0
    %3424 = vmatprep.mubr.f32.mxu0 0.0
    %3425 = vmatmul.mubr.f32.gmra.mrb[0].mxu0 %v2932
    %v3426 = vpop.f32.mrb[0].mxu0
    %v3427 = vadd.f32 %v3224, %v3426
    %v3428 = vpop.f32.mrb[0].mxu0
    %3429 = vmatprep.mubr.f32.mxu0 0.0
    %3430 = vmatmul.mubr.f32.gmra.mrb[0].mxu0 %v2935
    %v3431 = vpop.f32.mrb[0].mxu0
    %v3432 = vadd.f32 %v3225, %v3431
    %v3433 = vpop.f32.mrb[0].mxu0
    %3434 = vdwg.mxu0
    %v3435 = vld [vmem:[%s1261] sm:$0xff]
    %v3436 = vld [vmem:[%s1261 + $0x8] sm:$0xff]
    %v3437 = vld [vmem:[%s1261 + $0x10] sm:$0xff]
    %v3438 = vld [vmem:[%s1261 + $0x18] sm:$0xff]
    %v3439 = vld [vmem:[%s1261 + $0x20] sm:$0xff]
    %v3440 = vld [vmem:[%s1261 + $0x28] sm:$0xff]
    %v3441 = vld [vmem:[%s1261 + $0x30] sm:$0xff]
    %v3442 = vld [vmem:[%s1261 + $0x38] sm:$0xff]
    %v3443 = vld [vmem:[%s1261 + $0x40] sm:$0xff]
    %v3444 = vld [vmem:[%s1261 + $0x48] sm:$0xff]
    %v3445 = vld [vmem:[%s1261 + $0x50] sm:$0xff]
    %v3446 = vld [vmem:[%s1261 + $0x58] sm:$0xff]
    %v3447 = vld [vmem:[%s1261 + $0x60] sm:$0xff]
    %v3448 = vld [vmem:[%s1261 + $0x68] sm:$0xff]
    %v3449 = vld [vmem:[%s1261 + $0x70] sm:$0xff]
    %v3450 = vld [vmem:[%s1261 + $0x78] sm:$0xff]
    %3451 = vset.pattern.permute.xlu0 1
    %3452 = vperm.xlu0 %3451, %v3114
    %v3453 = vpop.permute.xlu0 %3452
    %3455 = vset.pattern.permute.xlu0 1
    %3456 = vperm.xlu0 %3455, %v3115
    %v3457 = vpop.permute.xlu0 %3456
    %3459 = vset.pattern.permute.xlu0 1
    %3460 = vperm.xlu0 %3459, %v3116
    %v3461 = vpop.permute.xlu0 %3460
    %3463 = vset.pattern.permute.xlu0 1
    %3464 = vperm.xlu0 %3463, %v3117
    %v3465 = vpop.permute.xlu0 %3464
    %3467 = vset.pattern.permute.xlu0 1
    %3468 = vperm.xlu0 %3467, %v3118
    %v3469 = vpop.permute.xlu0 %3468
    %3471 = vset.pattern.permute.xlu0 1
    %3472 = vperm.xlu0 %3471, %v3119
    %v3473 = vpop.permute.xlu0 %3472
    %3475 = vset.pattern.permute.xlu0 1
    %3476 = vperm.xlu0 %3475, %v3120
    %v3477 = vpop.permute.xlu0 %3476
    %3479 = vset.pattern.permute.xlu0 1
    %3480 = vperm.xlu0 %3479, %v3121
    %v3481 = vpop.permute.xlu0 %3480
    %3483 = vset.pattern.permute.xlu0 1
    %3484 = vperm.xlu0 %3483, %v3122
    %v3485 = vpop.permute.xlu0 %3484
    %3487 = vset.pattern.permute.xlu0 1
    %3488 = vperm.xlu0 %3487, %v3123
    %v3489 = vpop.permute.xlu0 %3488
    %3491 = vset.pattern.permute.xlu0 1
    %3492 = vperm.xlu0 %3491, %v3124
    %v3493 = vpop.permute.xlu0 %3492
    %3495 = vset.pattern.permute.xlu0 1
    %3496 = vperm.xlu0 %3495, %v3125
    %v3497 = vpop.permute.xlu0 %3496
    %3499 = vset.pattern.permute.xlu0 1
    %3500 = vperm.xlu0 %3499, %v3126
    %v3501 = vpop.permute.xlu0 %3500
    %3503 = vset.pattern.permute.xlu0 1
    %3504 = vperm.xlu0 %3503, %v3127
    %v3505 = vpop.permute.xlu0 %3504
    %3507 = vset.pattern.permute.xlu0 1
    %3508 = vperm.xlu0 %3507, %v3128
    %v3509 = vpop.permute.xlu0 %3508
    %3511 = vset.pattern.permute.xlu0 1
    %3512 = vperm.xlu0 %3511, %v3129
    %v3513 = vpop.permute.xlu0 %3512
    %v3515 = vmul.f32 %v3435, %v3453
    %v3516 = vmul.f32 %v3436, %v3457
    %v3517 = vmul.f32 %v3437, %v3461
    %v3518 = vmul.f32 %v3438, %v3465
    %v3519 = vmul.f32 %v3439, %v3469
    %v3520 = vmul.f32 %v3440, %v3473
    %v3521 = vmul.f32 %v3441, %v3477
    %v3522 = vmul.f32 %v3442, %v3481
    %v3523 = vmul.f32 %v3443, %v3485
    %v3524 = vmul.f32 %v3444, %v3489
    %v3525 = vmul.f32 %v3445, %v3493
    %v3526 = vmul.f32 %v3446, %v3497
    %v3527 = vmul.f32 %v3447, %v3501
    %v3528 = vmul.f32 %v3448, %v3505
    %v3529 = vmul.f32 %v3449, %v3509
    %v3530 = vmul.f32 %v3450, %v3513
    %v3531 = vadd.f32 %v3357, %v3515
    %v3532 = vadd.f32 %v3362, %v3516
    %v3533 = vadd.f32 %v3367, %v3517
    %v3534 = vadd.f32 %v3372, %v3518
    %v3535 = vadd.f32 %v3377, %v3519
    %v3536 = vadd.f32 %v3382, %v3520
    %v3537 = vadd.f32 %v3387, %v3521
    %v3538 = vadd.f32 %v3392, %v3522
    %v3539 = vadd.f32 %v3397, %v3523
    %v3540 = vadd.f32 %v3402, %v3524
    %v3541 = vadd.f32 %v3407, %v3525
    %v3542 = vadd.f32 %v3412, %v3526
    %v3543 = vadd.f32 %v3417, %v3527
    %v3544 = vadd.f32 %v3422, %v3528
    %v3545 = vadd.f32 %v3427, %v3529
    %v3546 = vadd.f32 %v3432, %v3530
    %v3547 = vld [vmem:[%s1374] sm:$0xff]
    %v3548 = vld [vmem:[%s1374 + $0x8] sm:$0xff]
    %v3549 = vld [vmem:[%s1374 + $0x10] sm:$0xff]
    %v3550 = vld [vmem:[%s1374 + $0x18] sm:$0xff]
    %v3551 = vld [vmem:[%s1374 + $0x20] sm:$0xff]
    %v3552 = vld [vmem:[%s1374 + $0x28] sm:$0xff]
    %v3553 = vld [vmem:[%s1374 + $0x30] sm:$0xff]
    %v3554 = vld [vmem:[%s1374 + $0x38] sm:$0xff]
    %v3555 = vld [vmem:[%s1374 + $0x40] sm:$0xff]
    %v3556 = vld [vmem:[%s1374 + $0x48] sm:$0xff]
    %v3557 = vld [vmem:[%s1374 + $0x50] sm:$0xff]
    %v3558 = vld [vmem:[%s1374 + $0x58] sm:$0xff]
    %v3559 = vld [vmem:[%s1374 + $0x60] sm:$0xff]
    %v3560 = vld [vmem:[%s1374 + $0x68] sm:$0xff]
    %v3561 = vld [vmem:[%s1374 + $0x70] sm:$0xff]
    %v3562 = vld [vmem:[%s1374 + $0x78] sm:$0xff]
    %3563 = vset.pattern.permute.xlu0 2
    %3564 = vperm.xlu0 %3563, %v3114
    %v3565 = vpop.permute.xlu0 %3564
    %3567 = vset.pattern.permute.xlu0 2
    %3568 = vperm.xlu0 %3567, %v3115
    %v3569 = vpop.permute.xlu0 %3568
    %3571 = vset.pattern.permute.xlu0 2
    %3572 = vperm.xlu0 %3571, %v3116
    %v3573 = vpop.permute.xlu0 %3572
    %3575 = vset.pattern.permute.xlu0 2
    %3576 = vperm.xlu0 %3575, %v3117
    %v3577 = vpop.permute.xlu0 %3576
    %3579 = vset.pattern.permute.xlu0 2
    %3580 = vperm.xlu0 %3579, %v3118
    %v3581 = vpop.permute.xlu0 %3580
    %3583 = vset.pattern.permute.xlu0 2
    %3584 = vperm.xlu0 %3583, %v3119
    %v3585 = vpop.permute.xlu0 %3584
    %3587 = vset.pattern.permute.xlu0 2
    %3588 = vperm.xlu0 %3587, %v3120
    %v3589 = vpop.permute.xlu0 %3588
    %3591 = vset.pattern.permute.xlu0 2
    %3592 = vperm.xlu0 %3591, %v3121
    %v3593 = vpop.permute.xlu0 %3592
    %3595 = vset.pattern.permute.xlu0 2
    %3596 = vperm.xlu0 %3595, %v3122
    %v3597 = vpop.permute.xlu0 %3596
    %3599 = vset.pattern.permute.xlu0 2
    %3600 = vperm.xlu0 %3599, %v3123
    %v3601 = vpop.permute.xlu0 %3600
    %3603 = vset.pattern.permute.xlu0 2
    %3604 = vperm.xlu0 %3603, %v3124
    %v3605 = vpop.permute.xlu0 %3604
    %3607 = vset.pattern.permute.xlu0 2
    %3608 = vperm.xlu0 %3607, %v3125
    %v3609 = vpop.permute.xlu0 %3608
    %3611 = vset.pattern.permute.xlu0 2
    %3612 = vperm.xlu0 %3611, %v3126
    %v3613 = vpop.permute.xlu0 %3612
    %3615 = vset.pattern.permute.xlu0 2
    %3616 = vperm.xlu0 %3615, %v3127
    %v3617 = vpop.permute.xlu0 %3616
    %3619 = vset.pattern.permute.xlu0 2
    %3620 = vperm.xlu0 %3619, %v3128
    %v3621 = vpop.permute.xlu0 %3620
    %3623 = vset.pattern.permute.xlu0 2
    %3624 = vperm.xlu0 %3623, %v3129
    %v3625 = vpop.permute.xlu0 %3624
    %v3627 = vmul.f32 %v3547, %v3565
    %v3628 = vmul.f32 %v3548, %v3569
    %v3629 = vmul.f32 %v3549, %v3573
    %v3630 = vmul.f32 %v3550, %v3577
    %v3631 = vmul.f32 %v3551, %v3581
    %v3632 = vmul.f32 %v3552, %v3585
    %v3633 = vmul.f32 %v3553, %v3589
    %v3634 = vmul.f32 %v3554, %v3593
    %v3635 = vmul.f32 %v3555, %v3597
    %v3636 = vmul.f32 %v3556, %v3601
    %v3637 = vmul.f32 %v3557, %v3605
    %v3638 = vmul.f32 %v3558, %v3609
    %v3639 = vmul.f32 %v3559, %v3613
    %v3640 = vmul.f32 %v3560, %v3617
    %v3641 = vmul.f32 %v3561, %v3621
    %v3642 = vmul.f32 %v3562, %v3625
    %v3643 = vadd.f32 %v3531, %v3627
    %v3644 = vadd.f32 %v3532, %v3628
    %v3645 = vadd.f32 %v3533, %v3629
    %v3646 = vadd.f32 %v3534, %v3630
    %v3647 = vadd.f32 %v3535, %v3631
    %v3648 = vadd.f32 %v3536, %v3632
    %v3649 = vadd.f32 %v3537, %v3633
    %v3650 = vadd.f32 %v3538, %v3634
    %v3651 = vadd.f32 %v3539, %v3635
    %v3652 = vadd.f32 %v3540, %v3636
    %v3653 = vadd.f32 %v3541, %v3637
    %v3654 = vadd.f32 %v3542, %v3638
    %v3655 = vadd.f32 %v3543, %v3639
    %v3656 = vadd.f32 %v3544, %v3640
    %v3657 = vadd.f32 %v3545, %v3641
    %v3658 = vadd.f32 %v3546, %v3642
    %v3659 = vld [vmem:[%s1487] sm:$0xff]
    %v3660 = vld [vmem:[%s1487 + $0x8] sm:$0xff]
    %v3661 = vld [vmem:[%s1487 + $0x10] sm:$0xff]
    %v3662 = vld [vmem:[%s1487 + $0x18] sm:$0xff]
    %v3663 = vld [vmem:[%s1487 + $0x20] sm:$0xff]
    %v3664 = vld [vmem:[%s1487 + $0x28] sm:$0xff]
    %v3665 = vld [vmem:[%s1487 + $0x30] sm:$0xff]
    %v3666 = vld [vmem:[%s1487 + $0x38] sm:$0xff]
    %v3667 = vld [vmem:[%s1487 + $0x40] sm:$0xff]
    %v3668 = vld [vmem:[%s1487 + $0x48] sm:$0xff]
    %v3669 = vld [vmem:[%s1487 + $0x50] sm:$0xff]
    %v3670 = vld [vmem:[%s1487 + $0x58] sm:$0xff]
    %v3671 = vld [vmem:[%s1487 + $0x60] sm:$0xff]
    %v3672 = vld [vmem:[%s1487 + $0x68] sm:$0xff]
    %v3673 = vld [vmem:[%s1487 + $0x70] sm:$0xff]
    %v3674 = vld [vmem:[%s1487 + $0x78] sm:$0xff]
    %3675 = vset.pattern.permute.xlu0 3
    %3676 = vperm.xlu0 %3675, %v3114
    %v3677 = vpop.permute.xlu0 %3676
    %3679 = vset.pattern.permute.xlu0 3
    %3680 = vperm.xlu0 %3679, %v3115
    %v3681 = vpop.permute.xlu0 %3680
    %3683 = vset.pattern.permute.xlu0 3
    %3684 = vperm.xlu0 %3683, %v3116
    %v3685 = vpop.permute.xlu0 %3684
    %3687 = vset.pattern.permute.xlu0 3
    %3688 = vperm.xlu0 %3687, %v3117
    %v3689 = vpop.permute.xlu0 %3688
    %3691 = vset.pattern.permute.xlu0 3
    %3692 = vperm.xlu0 %3691, %v3118
    %v3693 = vpop.permute.xlu0 %3692
    %3695 = vset.pattern.permute.xlu0 3
    %3696 = vperm.xlu0 %3695, %v3119
    %v3697 = vpop.permute.xlu0 %3696
    %3699 = vset.pattern.permute.xlu0 3
    %3700 = vperm.xlu0 %3699, %v3120
    %v3701 = vpop.permute.xlu0 %3700
    %3703 = vset.pattern.permute.xlu0 3
    %3704 = vperm.xlu0 %3703, %v3121
    %v3705 = vpop.permute.xlu0 %3704
    %3707 = vset.pattern.permute.xlu0 3
    %3708 = vperm.xlu0 %3707, %v3122
    %v3709 = vpop.permute.xlu0 %3708
    %3711 = vset.pattern.permute.xlu0 3
    %3712 = vperm.xlu0 %3711, %v3123
    %v3713 = vpop.permute.xlu0 %3712
    %3715 = vset.pattern.permute.xlu0 3
    %3716 = vperm.xlu0 %3715, %v3124
    %v3717 = vpop.permute.xlu0 %3716
    %3719 = vset.pattern.permute.xlu0 3
    %3720 = vperm.xlu0 %3719, %v3125
    %v3721 = vpop.permute.xlu0 %3720
    %3723 = vset.pattern.permute.xlu0 3
    %3724 = vperm.xlu0 %3723, %v3126
    %v3725 = vpop.permute.xlu0 %3724
    %3727 = vset.pattern.permute.xlu0 3
    %3728 = vperm.xlu0 %3727, %v3127
    %v3729 = vpop.permute.xlu0 %3728
    %3731 = vset.pattern.permute.xlu0 3
    %3732 = vperm.xlu0 %3731, %v3128
    %v3733 = vpop.permute.xlu0 %3732
    %3735 = vset.pattern.permute.xlu0 3
    %3736 = vperm.xlu0 %3735, %v3129
    %v3737 = vpop.permute.xlu0 %3736
    %v3739 = vmul.f32 %v3659, %v3677
    %v3740 = vmul.f32 %v3660, %v3681
    %v3741 = vmul.f32 %v3661, %v3685
    %v3742 = vmul.f32 %v3662, %v3689
    %v3743 = vmul.f32 %v3663, %v3693
    %v3744 = vmul.f32 %v3664, %v3697
    %v3745 = vmul.f32 %v3665, %v3701
    %v3746 = vmul.f32 %v3666, %v3705
    %v3747 = vmul.f32 %v3667, %v3709
    %v3748 = vmul.f32 %v3668, %v3713
    %v3749 = vmul.f32 %v3669, %v3717
    %v3750 = vmul.f32 %v3670, %v3721
    %v3751 = vmul.f32 %v3671, %v3725
    %v3752 = vmul.f32 %v3672, %v3729
    %v3753 = vmul.f32 %v3673, %v3733
    %v3754 = vmul.f32 %v3674, %v3737
    %v3755 = vadd.f32 %v3643, %v3739
    %v3756 = vadd.f32 %v3644, %v3740
    %v3757 = vadd.f32 %v3645, %v3741
    %v3758 = vadd.f32 %v3646, %v3742
    %v3759 = vadd.f32 %v3647, %v3743
    %v3760 = vadd.f32 %v3648, %v3744
    %v3761 = vadd.f32 %v3649, %v3745
    %v3762 = vadd.f32 %v3650, %v3746
    %v3763 = vadd.f32 %v3651, %v3747
    %v3764 = vadd.f32 %v3652, %v3748
    %v3765 = vadd.f32 %v3653, %v3749
    %v3766 = vadd.f32 %v3654, %v3750
    %v3767 = vadd.f32 %v3655, %v3751
    %v3768 = vadd.f32 %v3656, %v3752
    %v3769 = vadd.f32 %v3657, %v3753
    %v3770 = vadd.f32 %v3658, %v3754
    %v3771 = vmul.f32 %v3755, 0.17677669
    %v3772 = vmul.f32 %v3756, 0.17677669
    %v3773 = vmul.f32 %v3757, 0.17677669
    %v3774 = vmul.f32 %v3758, 0.17677669
    %v3775 = vmul.f32 %v3759, 0.17677669
    %v3776 = vmul.f32 %v3760, 0.17677669
    %v3777 = vmul.f32 %v3761, 0.17677669
    %v3778 = vmul.f32 %v3762, 0.17677669
    %v3779 = vmul.f32 %v3763, 0.17677669
    %v3780 = vmul.f32 %v3764, 0.17677669
    %v3781 = vmul.f32 %v3765, 0.17677669
    %v3782 = vmul.f32 %v3766, 0.17677669
    %v3783 = vmul.f32 %v3767, 0.17677669
    %v3784 = vmul.f32 %v3768, 0.17677669
    %v3785 = vmul.f32 %v3769, 0.17677669
    %v3786 = vmul.f32 %v3770, 0.17677669
    %v3787 = vsel %vm1616, %v3771, -1e+30
    %v3788 = vsel %vm1617, %v3772, -1e+30
    %v3789 = vsel %vm1618, %v3773, -1e+30
    %v3790 = vsel %vm1619, %v3774, -1e+30
    %v3791 = vsel %vm1620, %v3775, -1e+30
    %v3792 = vsel %vm1621, %v3776, -1e+30
    %v3793 = vsel %vm1622, %v3777, -1e+30
    %v3794 = vsel %vm1623, %v3778, -1e+30
    %v3795 = vsel %vm1624, %v3779, -1e+30
    %v3796 = vsel %vm1625, %v3780, -1e+30
    %v3797 = vsel %vm1626, %v3781, -1e+30
    %v3798 = vsel %vm1627, %v3782, -1e+30
    %v3799 = vsel %vm1628, %v3783, -1e+30
    %v3800 = vsel %vm1629, %v3784, -1e+30
    %v3801 = vsel %vm1630, %v3785, -1e+30
    %v3802 = vsel %vm1631, %v3786, -1e+30
    %3803 = vmax.xlane.f32.xlu0 %v3787
    %v3804 = vpop.xlane.xlu0 %3803
    %3805 = vmax.xlane.f32.xlu0 %v3788
    %v3806 = vpop.xlane.xlu0 %3805
    %3807 = vmax.xlane.f32.xlu0 %v3789
    %v3808 = vpop.xlane.xlu0 %3807
    %3809 = vmax.xlane.f32.xlu0 %v3790
    %v3810 = vpop.xlane.xlu0 %3809
    %3811 = vmax.xlane.f32.xlu0 %v3791
    %v3812 = vpop.xlane.xlu0 %3811
    %3813 = vmax.xlane.f32.xlu0 %v3792
    %v3814 = vpop.xlane.xlu0 %3813
    %3815 = vmax.xlane.f32.xlu0 %v3793
    %v3816 = vpop.xlane.xlu0 %3815
    %3817 = vmax.xlane.f32.xlu0 %v3794
    %v3818 = vpop.xlane.xlu0 %3817
    %3819 = vmax.xlane.f32.xlu0 %v3795
    %v3820 = vpop.xlane.xlu0 %3819
    %3821 = vmax.xlane.f32.xlu0 %v3796
    %v3822 = vpop.xlane.xlu0 %3821
    %3823 = vmax.xlane.f32.xlu0 %v3797
    %v3824 = vpop.xlane.xlu0 %3823
    %3825 = vmax.xlane.f32.xlu0 %v3798
    %v3826 = vpop.xlane.xlu0 %3825
    %3827 = vmax.xlane.f32.xlu0 %v3799
    %v3828 = vpop.xlane.xlu0 %3827
    %3829 = vmax.xlane.f32.xlu0 %v3800
    %v3830 = vpop.xlane.xlu0 %3829
    %3831 = vmax.xlane.f32.xlu0 %v3801
    %v3832 = vpop.xlane.xlu0 %3831
    %3833 = vmax.xlane.f32.xlu0 %v3802
    %v3834 = vpop.xlane.xlu0 %3833
    %v3835 = vsub.f32 %v3787, %v3804
    %v3836 = vsub.f32 %v3788, %v3806
    %v3837 = vsub.f32 %v3789, %v3808
    %v3838 = vsub.f32 %v3790, %v3810
    %v3839 = vsub.f32 %v3791, %v3812
    %v3840 = vsub.f32 %v3792, %v3814
    %v3841 = vsub.f32 %v3793, %v3816
    %v3842 = vsub.f32 %v3794, %v3818
    %v3843 = vsub.f32 %v3795, %v3820
    %v3844 = vsub.f32 %v3796, %v3822
    %v3845 = vsub.f32 %v3797, %v3824
    %v3846 = vsub.f32 %v3798, %v3826
    %v3847 = vsub.f32 %v3799, %v3828
    %v3848 = vsub.f32 %v3800, %v3830
    %v3849 = vsub.f32 %v3801, %v3832
    %v3850 = vsub.f32 %v3802, %v3834
    %v3851 = vmul.f32 %v3835, 1.442695
    %v3852 = vpow.pop %v3851
    %v3853 = vmul.f32 %v3836, 1.442695
    %v3854 = vpow.pop %v3853
    %v3855 = vmul.f32 %v3837, 1.442695
    %v3856 = vpow.pop %v3855
    %v3857 = vmul.f32 %v3838, 1.442695
    %v3858 = vpow.pop %v3857
    %v3859 = vmul.f32 %v3839, 1.442695
    %v3860 = vpow.pop %v3859
    %v3861 = vmul.f32 %v3840, 1.442695
    %v3862 = vpow.pop %v3861
    %v3863 = vmul.f32 %v3841, 1.442695
    %v3864 = vpow.pop %v3863
    %v3865 = vmul.f32 %v3842, 1.442695
    %v3866 = vpow.pop %v3865
    %v3867 = vmul.f32 %v3843, 1.442695
    %v3868 = vpow.pop %v3867
    %v3869 = vmul.f32 %v3844, 1.442695
    %v3870 = vpow.pop %v3869
    %v3871 = vmul.f32 %v3845, 1.442695
    %v3872 = vpow.pop %v3871
    %v3873 = vmul.f32 %v3846, 1.442695
    %v3874 = vpow.pop %v3873
    %v3875 = vmul.f32 %v3847, 1.442695
    %v3876 = vpow.pop %v3875
    %v3877 = vmul.f32 %v3848, 1.442695
    %v3878 = vpow.pop %v3877
    %v3879 = vmul.f32 %v3849, 1.442695
    %v3880 = vpow.pop %v3879
    %v3881 = vmul.f32 %v3850, 1.442695
    %v3882 = vpow.pop %v3881
    %v3883 = vmul.f32 %v3852, %v125
    %v3884 = vmul.f32 %v3854, %v126
    %v3885 = vmul.f32 %v3856, %v127
    %v3886 = vmul.f32 %v3858, %v128
    %v3887 = vmul.f32 %v3860, %v129
    %v3888 = vmul.f32 %v3862, %v130
    %v3889 = vmul.f32 %v3864, %v131
    %v3890 = vmul.f32 %v3866, %v132
    %v3891 = vmul.f32 %v3868, %v133
    %v3892 = vmul.f32 %v3870, %v134
    %v3893 = vmul.f32 %v3872, %v135
    %v3894 = vmul.f32 %v3874, %v136
    %v3895 = vmul.f32 %v3876, %v137
    %v3896 = vmul.f32 %v3878, %v138
    %v3897 = vmul.f32 %v3880, %v139
    %v3898 = vmul.f32 %v3882, %v140
    %3899 = vadd.xlane.f32.xlu0 %v3883
    %v3900 = vpop.xlane.xlu0 %3899
    %3901 = vadd.xlane.f32.xlu0 %v3884
    %v3902 = vpop.xlane.xlu0 %3901
    %3903 = vadd.xlane.f32.xlu0 %v3885
    %v3904 = vpop.xlane.xlu0 %3903
    %3905 = vadd.xlane.f32.xlu0 %v3886
    %v3906 = vpop.xlane.xlu0 %3905
    %3907 = vadd.xlane.f32.xlu0 %v3887
    %v3908 = vpop.xlane.xlu0 %3907
    %3909 = vadd.xlane.f32.xlu0 %v3888
    %v3910 = vpop.xlane.xlu0 %3909
    %3911 = vadd.xlane.f32.xlu0 %v3889
    %v3912 = vpop.xlane.xlu0 %3911
    %3913 = vadd.xlane.f32.xlu0 %v3890
    %v3914 = vpop.xlane.xlu0 %3913
    %3915 = vadd.xlane.f32.xlu0 %v3891
    %v3916 = vpop.xlane.xlu0 %3915
    %3917 = vadd.xlane.f32.xlu0 %v3892
    %v3918 = vpop.xlane.xlu0 %3917
    %3919 = vadd.xlane.f32.xlu0 %v3893
    %v3920 = vpop.xlane.xlu0 %3919
    %3921 = vadd.xlane.f32.xlu0 %v3894
    %v3922 = vpop.xlane.xlu0 %3921
    %3923 = vadd.xlane.f32.xlu0 %v3895
    %v3924 = vpop.xlane.xlu0 %3923
    %3925 = vadd.xlane.f32.xlu0 %v3896
    %v3926 = vpop.xlane.xlu0 %3925
    %3927 = vadd.xlane.f32.xlu0 %v3897
    %v3928 = vpop.xlane.xlu0 %3927
    %3929 = vadd.xlane.f32.xlu0 %v3898
    %v3930 = vpop.xlane.xlu0 %3929
    %v3931 = vmax.f32 %v3900, 1e-30
    %v3932 = vmax.f32 %v3902, 1e-30
    %v3933 = vmax.f32 %v3904, 1e-30
    %v3934 = vmax.f32 %v3906, 1e-30
    %v3935 = vmax.f32 %v3908, 1e-30
    %v3936 = vmax.f32 %v3910, 1e-30
    %v3937 = vmax.f32 %v3912, 1e-30
    %v3938 = vmax.f32 %v3914, 1e-30
    %v3939 = vmax.f32 %v3916, 1e-30
    %v3940 = vmax.f32 %v3918, 1e-30
    %v3941 = vmax.f32 %v3920, 1e-30
    %v3942 = vmax.f32 %v3922, 1e-30
    %v3943 = vmax.f32 %v3924, 1e-30
    %v3944 = vmax.f32 %v3926, 1e-30
    %v3945 = vmax.f32 %v3928, 1e-30
    %v3946 = vmax.f32 %v3930, 1e-30
    %v3947 = vrcp.pop %v3931
    %v3948 = vrcp.pop %v3932
    %v3949 = vrcp.pop %v3933
    %v3950 = vrcp.pop %v3934
    %v3951 = vrcp.pop %v3935
    %v3952 = vrcp.pop %v3936
    %v3953 = vrcp.pop %v3937
    %v3954 = vrcp.pop %v3938
    %v3955 = vrcp.pop %v3939
    %v3956 = vrcp.pop %v3940
    %v3957 = vrcp.pop %v3941
    %v3958 = vrcp.pop %v3942
    %v3959 = vrcp.pop %v3943
    %v3960 = vrcp.pop %v3944
    %v3961 = vrcp.pop %v3945
    %v3962 = vrcp.pop %v3946
    %v3963 = vmul.f32 %v3883, %v3947
    %v3964 = vmul.f32 %v3884, %v3948
    %v3965 = vmul.f32 %v3885, %v3949
    %v3966 = vmul.f32 %v3886, %v3950
    %v3967 = vmul.f32 %v3887, %v3951
    %v3968 = vmul.f32 %v3888, %v3952
    %v3969 = vmul.f32 %v3889, %v3953
    %v3970 = vmul.f32 %v3890, %v3954
    %v3971 = vmul.f32 %v3891, %v3955
    %v3972 = vmul.f32 %v3892, %v3956
    %v3973 = vmul.f32 %v3893, %v3957
    %v3974 = vmul.f32 %v3894, %v3958
    %v3975 = vmul.f32 %v3895, %v3959
    %v3976 = vmul.f32 %v3896, %v3960
    %v3977 = vmul.f32 %v3897, %v3961
    %v3978 = vmul.f32 %v3898, %v3962
    %v3979 = vmul.f32 %v3963, %v3098
    %v3980 = vmul.f32 %v3964, %v3099
    %v3981 = vmul.f32 %v3965, %v3100
    %v3982 = vmul.f32 %v3966, %v3101
    %v3983 = vmul.f32 %v3967, %v3102
    %v3984 = vmul.f32 %v3968, %v3103
    %v3985 = vmul.f32 %v3969, %v3104
    %v3986 = vmul.f32 %v3970, %v3105
    %v3987 = vmul.f32 %v3971, %v3106
    %v3988 = vmul.f32 %v3972, %v3107
    %v3989 = vmul.f32 %v3973, %v3108
    %v3990 = vmul.f32 %v3974, %v3109
    %v3991 = vmul.f32 %v3975, %v3110
    %v3992 = vmul.f32 %v3976, %v3111
    %v3993 = vmul.f32 %v3977, %v3112
    %v3994 = vmul.f32 %v3978, %v3113
    %3995 = vadd.xlane.f32.xlu0 %v3979
    %v3996 = vpop.xlane.xlu0 %3995
    %3997 = vadd.xlane.f32.xlu0 %v3980
    %v3998 = vpop.xlane.xlu0 %3997
    %3999 = vadd.xlane.f32.xlu0 %v3981
    %v4000 = vpop.xlane.xlu0 %3999
    %4001 = vadd.xlane.f32.xlu0 %v3982
    %v4002 = vpop.xlane.xlu0 %4001
    %4003 = vadd.xlane.f32.xlu0 %v3983
    %v4004 = vpop.xlane.xlu0 %4003
    %4005 = vadd.xlane.f32.xlu0 %v3984
    %v4006 = vpop.xlane.xlu0 %4005
    %4007 = vadd.xlane.f32.xlu0 %v3985
    %v4008 = vpop.xlane.xlu0 %4007
    %4009 = vadd.xlane.f32.xlu0 %v3986
    %v4010 = vpop.xlane.xlu0 %4009
    %4011 = vadd.xlane.f32.xlu0 %v3987
    %v4012 = vpop.xlane.xlu0 %4011
    %4013 = vadd.xlane.f32.xlu0 %v3988
    %v4014 = vpop.xlane.xlu0 %4013
    %4015 = vadd.xlane.f32.xlu0 %v3989
    %v4016 = vpop.xlane.xlu0 %4015
    %4017 = vadd.xlane.f32.xlu0 %v3990
    %v4018 = vpop.xlane.xlu0 %4017
    %4019 = vadd.xlane.f32.xlu0 %v3991
    %v4020 = vpop.xlane.xlu0 %4019
    %4021 = vadd.xlane.f32.xlu0 %v3992
    %v4022 = vpop.xlane.xlu0 %4021
    %4023 = vadd.xlane.f32.xlu0 %v3993
    %v4024 = vpop.xlane.xlu0 %4023
    %4025 = vadd.xlane.f32.xlu0 %v3994
    %v4026 = vpop.xlane.xlu0 %4025
    %v4027 = vmul.f32 %v3963, %v3435
    %v4028 = vmul.f32 %v3964, %v3436
    %v4029 = vmul.f32 %v3965, %v3437
    %v4030 = vmul.f32 %v3966, %v3438
    %v4031 = vmul.f32 %v3967, %v3439
    %v4032 = vmul.f32 %v3968, %v3440
    %v4033 = vmul.f32 %v3969, %v3441
    %v4034 = vmul.f32 %v3970, %v3442
    %v4035 = vmul.f32 %v3971, %v3443
    %v4036 = vmul.f32 %v3972, %v3444
    %v4037 = vmul.f32 %v3973, %v3445
    %v4038 = vmul.f32 %v3974, %v3446
    %v4039 = vmul.f32 %v3975, %v3447
    %v4040 = vmul.f32 %v3976, %v3448
    %v4041 = vmul.f32 %v3977, %v3449
    %v4042 = vmul.f32 %v3978, %v3450
    %4043 = vadd.xlane.f32.xlu0 %v4027
    %v4044 = vpop.xlane.xlu0 %4043
    %4045 = vadd.xlane.f32.xlu0 %v4028
    %v4046 = vpop.xlane.xlu0 %4045
    %4047 = vadd.xlane.f32.xlu0 %v4029
    %v4048 = vpop.xlane.xlu0 %4047
    %4049 = vadd.xlane.f32.xlu0 %v4030
    %v4050 = vpop.xlane.xlu0 %4049
    %4051 = vadd.xlane.f32.xlu0 %v4031
    %v4052 = vpop.xlane.xlu0 %4051
    %4053 = vadd.xlane.f32.xlu0 %v4032
    %v4054 = vpop.xlane.xlu0 %4053
    %4055 = vadd.xlane.f32.xlu0 %v4033
    %v4056 = vpop.xlane.xlu0 %4055
    %4057 = vadd.xlane.f32.xlu0 %v4034
    %v4058 = vpop.xlane.xlu0 %4057
    %4059 = vadd.xlane.f32.xlu0 %v4035
    %v4060 = vpop.xlane.xlu0 %4059
    %4061 = vadd.xlane.f32.xlu0 %v4036
    %v4062 = vpop.xlane.xlu0 %4061
    %4063 = vadd.xlane.f32.xlu0 %v4037
    %v4064 = vpop.xlane.xlu0 %4063
    %4065 = vadd.xlane.f32.xlu0 %v4038
    %v4066 = vpop.xlane.xlu0 %4065
    %4067 = vadd.xlane.f32.xlu0 %v4039
    %v4068 = vpop.xlane.xlu0 %4067
    %4069 = vadd.xlane.f32.xlu0 %v4040
    %v4070 = vpop.xlane.xlu0 %4069
    %4071 = vadd.xlane.f32.xlu0 %v4041
    %v4072 = vpop.xlane.xlu0 %4071
    %4073 = vadd.xlane.f32.xlu0 %v4042
    %v4074 = vpop.xlane.xlu0 %4073
    %v4075 = vmul.f32 %v3963, %v3547
    %v4076 = vmul.f32 %v3964, %v3548
    %v4077 = vmul.f32 %v3965, %v3549
    %v4078 = vmul.f32 %v3966, %v3550
    %v4079 = vmul.f32 %v3967, %v3551
    %v4080 = vmul.f32 %v3968, %v3552
    %v4081 = vmul.f32 %v3969, %v3553
    %v4082 = vmul.f32 %v3970, %v3554
    %v4083 = vmul.f32 %v3971, %v3555
    %v4084 = vmul.f32 %v3972, %v3556
    %v4085 = vmul.f32 %v3973, %v3557
    %v4086 = vmul.f32 %v3974, %v3558
    %v4087 = vmul.f32 %v3975, %v3559
    %v4088 = vmul.f32 %v3976, %v3560
    %v4089 = vmul.f32 %v3977, %v3561
    %v4090 = vmul.f32 %v3978, %v3562
    %4091 = vadd.xlane.f32.xlu0 %v4075
    %v4092 = vpop.xlane.xlu0 %4091
    %4093 = vadd.xlane.f32.xlu0 %v4076
    %v4094 = vpop.xlane.xlu0 %4093
    %4095 = vadd.xlane.f32.xlu0 %v4077
    %v4096 = vpop.xlane.xlu0 %4095
    %4097 = vadd.xlane.f32.xlu0 %v4078
    %v4098 = vpop.xlane.xlu0 %4097
    %4099 = vadd.xlane.f32.xlu0 %v4079
    %v4100 = vpop.xlane.xlu0 %4099
    %4101 = vadd.xlane.f32.xlu0 %v4080
    %v4102 = vpop.xlane.xlu0 %4101
    %4103 = vadd.xlane.f32.xlu0 %v4081
    %v4104 = vpop.xlane.xlu0 %4103
    %4105 = vadd.xlane.f32.xlu0 %v4082
    %v4106 = vpop.xlane.xlu0 %4105
    %4107 = vadd.xlane.f32.xlu0 %v4083
    %v4108 = vpop.xlane.xlu0 %4107
    %4109 = vadd.xlane.f32.xlu0 %v4084
    %v4110 = vpop.xlane.xlu0 %4109
    %4111 = vadd.xlane.f32.xlu0 %v4085
    %v4112 = vpop.xlane.xlu0 %4111
    %4113 = vadd.xlane.f32.xlu0 %v4086
    %v4114 = vpop.xlane.xlu0 %4113
    %4115 = vadd.xlane.f32.xlu0 %v4087
    %v4116 = vpop.xlane.xlu0 %4115
    %4117 = vadd.xlane.f32.xlu0 %v4088
    %v4118 = vpop.xlane.xlu0 %4117
    %4119 = vadd.xlane.f32.xlu0 %v4089
    %v4120 = vpop.xlane.xlu0 %4119
    %4121 = vadd.xlane.f32.xlu0 %v4090
    %v4122 = vpop.xlane.xlu0 %4121
    %v4123 = vmul.f32 %v3963, %v3659
    %v4124 = vmul.f32 %v3964, %v3660
    %v4125 = vmul.f32 %v3965, %v3661
    %v4126 = vmul.f32 %v3966, %v3662
    %v4127 = vmul.f32 %v3967, %v3663
    %v4128 = vmul.f32 %v3968, %v3664
    %v4129 = vmul.f32 %v3969, %v3665
    %v4130 = vmul.f32 %v3970, %v3666
    %v4131 = vmul.f32 %v3971, %v3667
    %v4132 = vmul.f32 %v3972, %v3668
    %v4133 = vmul.f32 %v3973, %v3669
    %v4134 = vmul.f32 %v3974, %v3670
    %v4135 = vmul.f32 %v3975, %v3671
    %v4136 = vmul.f32 %v3976, %v3672
    %v4137 = vmul.f32 %v3977, %v3673
    %v4138 = vmul.f32 %v3978, %v3674
    %4139 = vadd.xlane.f32.xlu0 %v4123
    %v4140 = vpop.xlane.xlu0 %4139
    %4141 = vadd.xlane.f32.xlu0 %v4124
    %v4142 = vpop.xlane.xlu0 %4141
    %4143 = vadd.xlane.f32.xlu0 %v4125
    %v4144 = vpop.xlane.xlu0 %4143
    %4145 = vadd.xlane.f32.xlu0 %v4126
    %v4146 = vpop.xlane.xlu0 %4145
    %4147 = vadd.xlane.f32.xlu0 %v4127
    %v4148 = vpop.xlane.xlu0 %4147
    %4149 = vadd.xlane.f32.xlu0 %v4128
    %v4150 = vpop.xlane.xlu0 %4149
    %4151 = vadd.xlane.f32.xlu0 %v4129
    %v4152 = vpop.xlane.xlu0 %4151
    %4153 = vadd.xlane.f32.xlu0 %v4130
    %v4154 = vpop.xlane.xlu0 %4153
    %4155 = vadd.xlane.f32.xlu0 %v4131
    %v4156 = vpop.xlane.xlu0 %4155
    %4157 = vadd.xlane.f32.xlu0 %v4132
    %v4158 = vpop.xlane.xlu0 %4157
    %4159 = vadd.xlane.f32.xlu0 %v4133
    %v4160 = vpop.xlane.xlu0 %4159
    %4161 = vadd.xlane.f32.xlu0 %v4134
    %v4162 = vpop.xlane.xlu0 %4161
    %4163 = vadd.xlane.f32.xlu0 %v4135
    %v4164 = vpop.xlane.xlu0 %4163
    %4165 = vadd.xlane.f32.xlu0 %v4136
    %v4166 = vpop.xlane.xlu0 %4165
    %4167 = vadd.xlane.f32.xlu0 %v4137
    %v4168 = vpop.xlane.xlu0 %4167
    %4169 = vadd.xlane.f32.xlu0 %v4138
    %v4170 = vpop.xlane.xlu0 %4169
    %v4171 = vsel %vm2016, %v3996, %v4044
    %v4172 = vsel %vm2016, %v3998, %v4046
    %v4173 = vsel %vm2016, %v4000, %v4048
    %v4174 = vsel %vm2016, %v4002, %v4050
    %v4175 = vsel %vm2016, %v4004, %v4052
    %v4176 = vsel %vm2016, %v4006, %v4054
    %v4177 = vsel %vm2016, %v4008, %v4056
    %v4178 = vsel %vm2016, %v4010, %v4058
    %v4179 = vsel %vm2016, %v4012, %v4060
    %v4180 = vsel %vm2016, %v4014, %v4062
    %v4181 = vsel %vm2016, %v4016, %v4064
    %v4182 = vsel %vm2016, %v4018, %v4066
    %v4183 = vsel %vm2016, %v4020, %v4068
    %v4184 = vsel %vm2016, %v4022, %v4070
    %v4185 = vsel %vm2016, %v4024, %v4072
    %v4186 = vsel %vm2016, %v4026, %v4074
    %v4187 = vsel %vm2033, %v4171, %v4092
    %v4188 = vsel %vm2033, %v4172, %v4094
    %v4189 = vsel %vm2033, %v4173, %v4096
    %v4190 = vsel %vm2033, %v4174, %v4098
    %v4191 = vsel %vm2033, %v4175, %v4100
    %v4192 = vsel %vm2033, %v4176, %v4102
    %v4193 = vsel %vm2033, %v4177, %v4104
    %v4194 = vsel %vm2033, %v4178, %v4106
    %v4195 = vsel %vm2033, %v4179, %v4108
    %v4196 = vsel %vm2033, %v4180, %v4110
    %v4197 = vsel %vm2033, %v4181, %v4112
    %v4198 = vsel %vm2033, %v4182, %v4114
    %v4199 = vsel %vm2033, %v4183, %v4116
    %v4200 = vsel %vm2033, %v4184, %v4118
    %v4201 = vsel %vm2033, %v4185, %v4120
    %v4202 = vsel %vm2033, %v4186, %v4122
    %v4203 = vsel %vm2050, %v4187, %v4140
    %v4204 = vsel %vm2050, %v4188, %v4142
    %v4205 = vsel %vm2050, %v4189, %v4144
    %v4206 = vsel %vm2050, %v4190, %v4146
    %v4207 = vsel %vm2050, %v4191, %v4148
    %v4208 = vsel %vm2050, %v4192, %v4150
    %v4209 = vsel %vm2050, %v4193, %v4152
    %v4210 = vsel %vm2050, %v4194, %v4154
    %v4211 = vsel %vm2050, %v4195, %v4156
    %v4212 = vsel %vm2050, %v4196, %v4158
    %v4213 = vsel %vm2050, %v4197, %v4160
    %v4214 = vsel %vm2050, %v4198, %v4162
    %v4215 = vsel %vm2050, %v4199, %v4164
    %v4216 = vsel %vm2050, %v4200, %v4166
    %v4217 = vsel %vm2050, %v4201, %v4168
    %v4218 = vsel %vm2050, %v4202, %v4170
    %v4220 = vsel %vm907, %v4203, 0
    %v4223 = vsel %vm907, %v4204, 0
    %v4226 = vsel %vm907, %v4205, 0
    %v4229 = vsel %vm907, %v4206, 0
    %v4232 = vsel %vm907, %v4207, 0
    %v4235 = vsel %vm907, %v4208, 0
    %v4238 = vsel %vm907, %v4209, 0
    %v4241 = vsel %vm907, %v4210, 0
    %v4244 = vsel %vm907, %v4211, 0
    %v4247 = vsel %vm907, %v4212, 0
    %v4250 = vsel %vm907, %v4213, 0
    %v4253 = vsel %vm907, %v4214, 0
    %v4256 = vsel %vm907, %v4215, 0
    %v4259 = vsel %vm907, %v4216, 0
    %v4262 = vsel %vm907, %v4217, 0
    %v4265 = vsel %vm907, %v4218, 0
    %4267 = vmatprep.subr.mxu0 0.0
    %4268 = vmatpush1.msra.mxu0 %v2116
    %4269 = vmatprep.subr.mxu0 0.0
    %4270 = vmatpush1.msra.mxu0 0.0
    %4271 = vmatprep.subr.mxu0 0.0
    %4272 = vmatpush1.msra.mxu0 0.0
    %4273 = vmatprep.subr.mxu0 0.0
    %4274 = vmatpush1.msra.mxu0 0.0
    %4275 = vmatprep.subr.mxu0 0.0
    %4276 = vmatpush1.msra.mxu0 0.0
    %4277 = vmatprep.subr.mxu0 0.0
    %4278 = vmatpush1.msra.mxu0 0.0
    %4279 = vmatprep.subr.mxu0 0.0
    %4280 = vmatpush1.msra.mxu0 0.0
    %4281 = vmatprep.subr.mxu0 0.0
    %4282 = vmatpush1.msra.mxu0 0.0
    %4283 = vmatprep.subr.mxu0 0.0
    %4284 = vmatpush1.msra.mxu0 0.0
    %4285 = vmatprep.subr.mxu0 0.0
    %4286 = vmatpush1.msra.mxu0 0.0
    %4287 = vmatprep.subr.mxu0 0.0
    %4288 = vmatpush1.msra.mxu0 0.0
    %4289 = vmatprep.subr.mxu0 0.0
    %4290 = vmatpush1.msra.mxu0 0.0
    %4291 = vmatprep.subr.mxu0 0.0
    %4292 = vmatpush1.msra.mxu0 0.0
    %4293 = vmatprep.subr.mxu0 0.0
    %4294 = vmatpush1.msra.mxu0 0.0
    %4295 = vmatprep.subr.mxu0 0.0
    %4296 = vmatpush1.msra.mxu0 0.0
    %4297 = vmatprep.subr.mxu0 0.0
    %4298 = vmatpush1.msra.mxu0 0.0
    %4299 = vmatprep.subr.mxu0 0.0
    %4300 = vmatpush1.msra.mxu0 0.0
    %4301 = vmatprep.subr.mxu0 0.0
    %4302 = vmatpush1.msra.mxu0 0.0
    %4303 = vmatprep.subr.mxu0 0.0
    %4304 = vmatpush1.msra.mxu0 0.0
    %4305 = vmatprep.subr.mxu0 0.0
    %4306 = vmatpush1.msra.mxu0 0.0
    %4307 = vmatprep.subr.mxu0 0.0
    %4308 = vmatpush1.msra.mxu0 0.0
    %4309 = vmatprep.subr.mxu0 0.0
    %4310 = vmatpush1.msra.mxu0 0.0
    %4311 = vmatprep.subr.mxu0 0.0
    %4312 = vmatpush1.msra.mxu0 0.0
    %4313 = vmatprep.subr.mxu0 0.0
    %4314 = vmatpush1.msra.mxu0 0.0
    %4315 = vmatprep.subr.mxu0 0.0
    %4316 = vmatpush1.msra.mxu0 0.0
    %4317 = vmatprep.subr.mxu0 0.0
    %4318 = vmatpush1.msra.mxu0 0.0
    %4319 = vmatprep.subr.mxu0 0.0
    %4320 = vmatpush1.msra.mxu0 0.0
    %4321 = vmatprep.subr.mxu0 0.0
    %4322 = vmatpush1.msra.mxu0 0.0
    %4323 = vmatprep.subr.mxu0 0.0
    %4324 = vmatpush1.msra.mxu0 0.0
    %4325 = vmatprep.subr.mxu0 0.0
    %4326 = vmatpush1.msra.mxu0 0.0
    %4327 = vmatprep.subr.mxu0 0.0
    %4328 = vmatpush1.msra.mxu0 0.0
    %4329 = vmatprep.subr.mxu0 0.0
    %4330 = vmatpush1.msra.mxu0 0.0
    %4331 = vmatprep.mubr.f32.mxu0 0.0
    %4332 = vmatmul.mubr.f32.gmra.mrb[0].mxu0 %v4220
    %v4333 = vpop.f32.mrb[0].mxu0
    %v4334 = vadd.f32 0.0, %v4333
    %v4335 = vpop.f32.mrb[0].mxu0
    %4336 = vmatprep.mubr.f32.mxu0 0.0
    %4337 = vmatmul.mubr.f32.gmra.mrb[0].mxu0 %v4223
    %v4338 = vpop.f32.mrb[0].mxu0
    %v4339 = vadd.f32 0.0, %v4338
    %v4340 = vpop.f32.mrb[0].mxu0
    %4341 = vmatprep.mubr.f32.mxu0 0.0
    %4342 = vmatmul.mubr.f32.gmra.mrb[0].mxu0 %v4226
    %v4343 = vpop.f32.mrb[0].mxu0
    %v4344 = vadd.f32 0.0, %v4343
    %v4345 = vpop.f32.mrb[0].mxu0
    %4346 = vmatprep.mubr.f32.mxu0 0.0
    %4347 = vmatmul.mubr.f32.gmra.mrb[0].mxu0 %v4229
    %v4348 = vpop.f32.mrb[0].mxu0
    %v4349 = vadd.f32 0.0, %v4348
    %v4350 = vpop.f32.mrb[0].mxu0
    %4351 = vmatprep.mubr.f32.mxu0 0.0
    %4352 = vmatmul.mubr.f32.gmra.mrb[0].mxu0 %v4232
    %v4353 = vpop.f32.mrb[0].mxu0
    %v4354 = vadd.f32 0.0, %v4353
    %v4355 = vpop.f32.mrb[0].mxu0
    %4356 = vmatprep.mubr.f32.mxu0 0.0
    %4357 = vmatmul.mubr.f32.gmra.mrb[0].mxu0 %v4235
    %v4358 = vpop.f32.mrb[0].mxu0
    %v4359 = vadd.f32 0.0, %v4358
    %v4360 = vpop.f32.mrb[0].mxu0
    %4361 = vmatprep.mubr.f32.mxu0 0.0
    %4362 = vmatmul.mubr.f32.gmra.mrb[0].mxu0 %v4238
    %v4363 = vpop.f32.mrb[0].mxu0
    %v4364 = vadd.f32 0.0, %v4363
    %v4365 = vpop.f32.mrb[0].mxu0
    %4366 = vmatprep.mubr.f32.mxu0 0.0
    %4367 = vmatmul.mubr.f32.gmra.mrb[0].mxu0 %v4241
    %v4368 = vpop.f32.mrb[0].mxu0
    %v4369 = vadd.f32 0.0, %v4368
    %v4370 = vpop.f32.mrb[0].mxu0
    %4371 = vmatprep.mubr.f32.mxu0 0.0
    %4372 = vmatmul.mubr.f32.gmra.mrb[0].mxu0 %v4244
    %v4373 = vpop.f32.mrb[0].mxu0
    %v4374 = vadd.f32 0.0, %v4373
    %v4375 = vpop.f32.mrb[0].mxu0
    %4376 = vmatprep.mubr.f32.mxu0 0.0
    %4377 = vmatmul.mubr.f32.gmra.mrb[0].mxu0 %v4247
    %v4378 = vpop.f32.mrb[0].mxu0
    %v4379 = vadd.f32 0.0, %v4378
    %v4380 = vpop.f32.mrb[0].mxu0
    %4381 = vmatprep.mubr.f32.mxu0 0.0
    %4382 = vmatmul.mubr.f32.gmra.mrb[0].mxu0 %v4250
    %v4383 = vpop.f32.mrb[0].mxu0
    %v4384 = vadd.f32 0.0, %v4383
    %v4385 = vpop.f32.mrb[0].mxu0
    %4386 = vmatprep.mubr.f32.mxu0 0.0
    %4387 = vmatmul.mubr.f32.gmra.mrb[0].mxu0 %v4253
    %v4388 = vpop.f32.mrb[0].mxu0
    %v4389 = vadd.f32 0.0, %v4388
    %v4390 = vpop.f32.mrb[0].mxu0
    %4391 = vmatprep.mubr.f32.mxu0 0.0
    %4392 = vmatmul.mubr.f32.gmra.mrb[0].mxu0 %v4256
    %v4393 = vpop.f32.mrb[0].mxu0
    %v4394 = vadd.f32 0.0, %v4393
    %v4395 = vpop.f32.mrb[0].mxu0
    %4396 = vmatprep.mubr.f32.mxu0 0.0
    %4397 = vmatmul.mubr.f32.gmra.mrb[0].mxu0 %v4259
    %v4398 = vpop.f32.mrb[0].mxu0
    %v4399 = vadd.f32 0.0, %v4398
    %v4400 = vpop.f32.mrb[0].mxu0
    %4401 = vmatprep.mubr.f32.mxu0 0.0
    %4402 = vmatmul.mubr.f32.gmra.mrb[0].mxu0 %v4262
    %v4403 = vpop.f32.mrb[0].mxu0
    %v4404 = vadd.f32 0.0, %v4403
    %v4405 = vpop.f32.mrb[0].mxu0
    %4406 = vmatprep.mubr.f32.mxu0 0.0
    %4407 = vmatmul.mubr.f32.gmra.mrb[0].mxu0 %v4265
    %v4408 = vpop.f32.mrb[0].mxu0
    %v4409 = vadd.f32 0.0, %v4408
    %v4410 = vpop.f32.mrb[0].mxu0
    %4411 = vdwg.mxu0
    %4412 = vrot.lane.b32.xlu0 %v2873, 64
    %v4413 = vpop.permute.xlu0 %4412
    %4414 = vrot.lane.b32.xlu0 %v2874, 64
    %v4415 = vpop.permute.xlu0 %4414
    %4416 = vrot.lane.b32.xlu0 %v2875, 64
    %v4417 = vpop.permute.xlu0 %4416
    %4418 = vrot.lane.b32.xlu0 %v2876, 64
    %v4419 = vpop.permute.xlu0 %4418
    %4420 = vrot.lane.b32.xlu0 %v2877, 64
    %v4421 = vpop.permute.xlu0 %4420
    %4422 = vrot.lane.b32.xlu0 %v2878, 64
    %v4423 = vpop.permute.xlu0 %4422
    %4424 = vrot.lane.b32.xlu0 %v2879, 64
    %v4425 = vpop.permute.xlu0 %4424
    %4426 = vrot.lane.b32.xlu0 %v2880, 64
    %v4427 = vpop.permute.xlu0 %4426
    %4428 = vrot.lane.b32.xlu0 %v2881, 64
    %v4429 = vpop.permute.xlu0 %4428
    %4430 = vrot.lane.b32.xlu0 %v2882, 64
    %v4431 = vpop.permute.xlu0 %4430
    %4432 = vrot.lane.b32.xlu0 %v2883, 64
    %v4433 = vpop.permute.xlu0 %4432
    %4434 = vrot.lane.b32.xlu0 %v2884, 64
    %v4435 = vpop.permute.xlu0 %4434
    %4436 = vrot.lane.b32.xlu0 %v2885, 64
    %v4437 = vpop.permute.xlu0 %4436
    %4438 = vrot.lane.b32.xlu0 %v2886, 64
    %v4439 = vpop.permute.xlu0 %4438
    %4440 = vrot.lane.b32.xlu0 %v2887, 64
    %v4441 = vpop.permute.xlu0 %4440
    %4442 = vrot.lane.b32.xlu0 %v2888, 64
    %v4443 = vpop.permute.xlu0 %4442
    %4460 = vmatprep.subr.mxu0 0.0
    %4461 = vmatpush1.msra.mxu0 %v4413
    %4462 = vmatprep.subr.mxu0 0.0
    %4463 = vmatpush1.msra.mxu0 %v4415
    %4464 = vmatprep.subr.mxu0 0.0
    %4465 = vmatpush1.msra.mxu0 %v4417
    %4466 = vmatprep.subr.mxu0 0.0
    %4467 = vmatpush1.msra.mxu0 %v4419
    %4468 = vmatprep.subr.mxu0 0.0
    %4469 = vmatpush1.msra.mxu0 %v4421
    %4470 = vmatprep.subr.mxu0 0.0
    %4471 = vmatpush1.msra.mxu0 %v4423
    %4472 = vmatprep.subr.mxu0 0.0
    %4473 = vmatpush1.msra.mxu0 %v4425
    %4474 = vmatprep.subr.mxu0 0.0
    %4475 = vmatpush1.msra.mxu0 %v4427
    %4476 = vmatprep.subr.mxu0 0.0
    %4477 = vmatpush1.msra.mxu0 %v4429
    %4478 = vmatprep.subr.mxu0 0.0
    %4479 = vmatpush1.msra.mxu0 %v4431
    %4480 = vmatprep.subr.mxu0 0.0
    %4481 = vmatpush1.msra.mxu0 %v4433
    %4482 = vmatprep.subr.mxu0 0.0
    %4483 = vmatpush1.msra.mxu0 %v4435
    %4484 = vmatprep.subr.mxu0 0.0
    %4485 = vmatpush1.msra.mxu0 %v4437
    %4486 = vmatprep.subr.mxu0 0.0
    %4487 = vmatpush1.msra.mxu0 %v4439
    %4488 = vmatprep.subr.mxu0 0.0
    %4489 = vmatpush1.msra.mxu0 %v4441
    %4490 = vmatprep.subr.mxu0 0.0
    %4491 = vmatpush1.msra.mxu0 %v4443
    %4492 = vmatprep.subr.mxu0 0.0
    %4493 = vmatpush1.msra.mxu0 0.0
    %4494 = vmatprep.subr.mxu0 0.0
    %4495 = vmatpush1.msra.mxu0 0.0
    %4496 = vmatprep.subr.mxu0 0.0
    %4497 = vmatpush1.msra.mxu0 0.0
    %4498 = vmatprep.subr.mxu0 0.0
    %4499 = vmatpush1.msra.mxu0 0.0
    %4500 = vmatprep.subr.mxu0 0.0
    %4501 = vmatpush1.msra.mxu0 0.0
    %4502 = vmatprep.subr.mxu0 0.0
    %4503 = vmatpush1.msra.mxu0 0.0
    %4504 = vmatprep.subr.mxu0 0.0
    %4505 = vmatpush1.msra.mxu0 0.0
    %4506 = vmatprep.subr.mxu0 0.0
    %4507 = vmatpush1.msra.mxu0 0.0
    %4508 = vmatprep.subr.mxu0 0.0
    %4509 = vmatpush1.msra.mxu0 0.0
    %4510 = vmatprep.subr.mxu0 0.0
    %4511 = vmatpush1.msra.mxu0 0.0
    %4512 = vmatprep.subr.mxu0 0.0
    %4513 = vmatpush1.msra.mxu0 0.0
    %4514 = vmatprep.subr.mxu0 0.0
    %4515 = vmatpush1.msra.mxu0 0.0
    %4516 = vmatprep.subr.mxu0 0.0
    %4517 = vmatpush1.msra.mxu0 0.0
    %4518 = vmatprep.subr.mxu0 0.0
    %4519 = vmatpush1.msra.mxu0 0.0
    %4520 = vmatprep.subr.mxu0 0.0
    %4521 = vmatpush1.msra.mxu0 0.0
    %4522 = vmatprep.subr.mxu0 0.0
    %4523 = vmatpush1.msra.mxu0 0.0
    %4524 = vmatprep.mubr.f32.mxu0 0.0
    %4525 = vmatmul.mubr.f32.gmra.mrb[0].mxu0 %v3963
    %v4526 = vpop.f32.mrb[0].mxu0
    %v4527 = vadd.f32 %v4334, %v4526
    %v4528 = vpop.f32.mrb[0].mxu0
    %4529 = vmatprep.mubr.f32.mxu0 0.0
    %4530 = vmatmul.mubr.f32.gmra.mrb[0].mxu0 %v3964
    %v4531 = vpop.f32.mrb[0].mxu0
    %v4532 = vadd.f32 %v4339, %v4531
    %v4533 = vpop.f32.mrb[0].mxu0
    %4534 = vmatprep.mubr.f32.mxu0 0.0
    %4535 = vmatmul.mubr.f32.gmra.mrb[0].mxu0 %v3965
    %v4536 = vpop.f32.mrb[0].mxu0
    %v4537 = vadd.f32 %v4344, %v4536
    %v4538 = vpop.f32.mrb[0].mxu0
    %4539 = vmatprep.mubr.f32.mxu0 0.0
    %4540 = vmatmul.mubr.f32.gmra.mrb[0].mxu0 %v3966
    %v4541 = vpop.f32.mrb[0].mxu0
    %v4542 = vadd.f32 %v4349, %v4541
    %v4543 = vpop.f32.mrb[0].mxu0
    %4544 = vmatprep.mubr.f32.mxu0 0.0
    %4545 = vmatmul.mubr.f32.gmra.mrb[0].mxu0 %v3967
    %v4546 = vpop.f32.mrb[0].mxu0
    %v4547 = vadd.f32 %v4354, %v4546
    %v4548 = vpop.f32.mrb[0].mxu0
    %4549 = vmatprep.mubr.f32.mxu0 0.0
    %4550 = vmatmul.mubr.f32.gmra.mrb[0].mxu0 %v3968
    %v4551 = vpop.f32.mrb[0].mxu0
    %v4552 = vadd.f32 %v4359, %v4551
    %v4553 = vpop.f32.mrb[0].mxu0
    %4554 = vmatprep.mubr.f32.mxu0 0.0
    %4555 = vmatmul.mubr.f32.gmra.mrb[0].mxu0 %v3969
    %v4556 = vpop.f32.mrb[0].mxu0
    %v4557 = vadd.f32 %v4364, %v4556
    %v4558 = vpop.f32.mrb[0].mxu0
    %4559 = vmatprep.mubr.f32.mxu0 0.0
    %4560 = vmatmul.mubr.f32.gmra.mrb[0].mxu0 %v3970
    %v4561 = vpop.f32.mrb[0].mxu0
    %v4562 = vadd.f32 %v4369, %v4561
    %v4563 = vpop.f32.mrb[0].mxu0
    %4564 = vmatprep.mubr.f32.mxu0 0.0
    %4565 = vmatmul.mubr.f32.gmra.mrb[0].mxu0 %v3971
    %v4566 = vpop.f32.mrb[0].mxu0
    %v4567 = vadd.f32 %v4374, %v4566
    %v4568 = vpop.f32.mrb[0].mxu0
    %4569 = vmatprep.mubr.f32.mxu0 0.0
    %4570 = vmatmul.mubr.f32.gmra.mrb[0].mxu0 %v3972
    %v4571 = vpop.f32.mrb[0].mxu0
    %v4572 = vadd.f32 %v4379, %v4571
    %v4573 = vpop.f32.mrb[0].mxu0
    %4574 = vmatprep.mubr.f32.mxu0 0.0
    %4575 = vmatmul.mubr.f32.gmra.mrb[0].mxu0 %v3973
    %v4576 = vpop.f32.mrb[0].mxu0
    %v4577 = vadd.f32 %v4384, %v4576
    %v4578 = vpop.f32.mrb[0].mxu0
    %4579 = vmatprep.mubr.f32.mxu0 0.0
    %4580 = vmatmul.mubr.f32.gmra.mrb[0].mxu0 %v3974
    %v4581 = vpop.f32.mrb[0].mxu0
    %v4582 = vadd.f32 %v4389, %v4581
    %v4583 = vpop.f32.mrb[0].mxu0
    %4584 = vmatprep.mubr.f32.mxu0 0.0
    %4585 = vmatmul.mubr.f32.gmra.mrb[0].mxu0 %v3975
    %v4586 = vpop.f32.mrb[0].mxu0
    %v4587 = vadd.f32 %v4394, %v4586
    %v4588 = vpop.f32.mrb[0].mxu0
    %4589 = vmatprep.mubr.f32.mxu0 0.0
    %4590 = vmatmul.mubr.f32.gmra.mrb[0].mxu0 %v3976
    %v4591 = vpop.f32.mrb[0].mxu0
    %v4592 = vadd.f32 %v4399, %v4591
    %v4593 = vpop.f32.mrb[0].mxu0
    %4594 = vmatprep.mubr.f32.mxu0 0.0
    %4595 = vmatmul.mubr.f32.gmra.mrb[0].mxu0 %v3977
    %v4596 = vpop.f32.mrb[0].mxu0
    %v4597 = vadd.f32 %v4404, %v4596
    %v4598 = vpop.f32.mrb[0].mxu0
    %4599 = vmatprep.mubr.f32.mxu0 0.0
    %4600 = vmatmul.mubr.f32.gmra.mrb[0].mxu0 %v3978
    %v4601 = vpop.f32.mrb[0].mxu0
    %v4602 = vadd.f32 %v4409, %v4601
    %v4603 = vpop.f32.mrb[0].mxu0
    %4604 = vdwg.mxu0
    %v4605 = vld [vmem:[#allocation2] sm:$0xff]
    %v4606 = vld [vmem:[#allocation2 + $0x8] sm:$0xff]
    %v4607 = vld [vmem:[#allocation2 + $0x10] sm:$0xff]
    %v4608 = vld [vmem:[#allocation2 + $0x18] sm:$0xff]
    %v4609 = vld [vmem:[#allocation2 + $0x20] sm:$0xff]
    %v4610 = vld [vmem:[#allocation2 + $0x28] sm:$0xff]
    %v4611 = vld [vmem:[#allocation2 + $0x30] sm:$0xff]
    %v4612 = vld [vmem:[#allocation2 + $0x38] sm:$0xff]
    %v4613 = vld [vmem:[#allocation2 + $0x40] sm:$0xff]
    %v4614 = vld [vmem:[#allocation2 + $0x48] sm:$0xff]
    %v4615 = vld [vmem:[#allocation2 + $0x50] sm:$0xff]
    %v4616 = vld [vmem:[#allocation2 + $0x58] sm:$0xff]
    %v4617 = vld [vmem:[#allocation2 + $0x60] sm:$0xff]
    %v4618 = vld [vmem:[#allocation2 + $0x68] sm:$0xff]
    %v4619 = vld [vmem:[#allocation2 + $0x70] sm:$0xff]
    %v4620 = vld [vmem:[#allocation2 + $0x78] sm:$0xff]
    %4637 = vrot.lane.b32.xlu0 %v4605, 32
    %v4638 = vpop.permute.xlu0 %4637
    %4639 = vrot.lane.b32.xlu0 %v4606, 32
    %v4640 = vpop.permute.xlu0 %4639
    %4641 = vrot.lane.b32.xlu0 %v4607, 32
    %v4642 = vpop.permute.xlu0 %4641
    %4643 = vrot.lane.b32.xlu0 %v4608, 32
    %v4644 = vpop.permute.xlu0 %4643
    %4645 = vrot.lane.b32.xlu0 %v4609, 32
    %v4646 = vpop.permute.xlu0 %4645
    %4647 = vrot.lane.b32.xlu0 %v4610, 32
    %v4648 = vpop.permute.xlu0 %4647
    %4649 = vrot.lane.b32.xlu0 %v4611, 32
    %v4650 = vpop.permute.xlu0 %4649
    %4651 = vrot.lane.b32.xlu0 %v4612, 32
    %v4652 = vpop.permute.xlu0 %4651
    %4653 = vrot.lane.b32.xlu0 %v4613, 32
    %v4654 = vpop.permute.xlu0 %4653
    %4655 = vrot.lane.b32.xlu0 %v4614, 32
    %v4656 = vpop.permute.xlu0 %4655
    %4657 = vrot.lane.b32.xlu0 %v4615, 32
    %v4658 = vpop.permute.xlu0 %4657
    %4659 = vrot.lane.b32.xlu0 %v4616, 32
    %v4660 = vpop.permute.xlu0 %4659
    %4661 = vrot.lane.b32.xlu0 %v4617, 32
    %v4662 = vpop.permute.xlu0 %4661
    %4663 = vrot.lane.b32.xlu0 %v4618, 32
    %v4664 = vpop.permute.xlu0 %4663
    %4665 = vrot.lane.b32.xlu0 %v4619, 32
    %v4666 = vpop.permute.xlu0 %4665
    %4667 = vrot.lane.b32.xlu0 %v4620, 32
    %v4668 = vpop.permute.xlu0 %4667
    %v4685 = vadd.f32 %v4527, %v4638
    %v4686 = vadd.f32 %v4532, %v4640
    %v4687 = vadd.f32 %v4537, %v4642
    %v4688 = vadd.f32 %v4542, %v4644
    %v4689 = vadd.f32 %v4547, %v4646
    %v4690 = vadd.f32 %v4552, %v4648
    %v4691 = vadd.f32 %v4557, %v4650
    %v4692 = vadd.f32 %v4562, %v4652
    %v4693 = vadd.f32 %v4567, %v4654
    %v4694 = vadd.f32 %v4572, %v4656
    %v4695 = vadd.f32 %v4577, %v4658
    %v4696 = vadd.f32 %v4582, %v4660
    %v4697 = vadd.f32 %v4587, %v4662
    %v4698 = vadd.f32 %v4592, %v4664
    %v4699 = vadd.f32 %v4597, %v4666
    %v4700 = vadd.f32 %v4602, %v4668
    %v4701 = vxor.u32 %v4685, 2147483648
    %v4702 = vxor.u32 %v4686, 2147483648
    %v4703 = vxor.u32 %v4687, 2147483648
    %v4704 = vxor.u32 %v4688, 2147483648
    %v4705 = vxor.u32 %v4689, 2147483648
    %v4706 = vxor.u32 %v4690, 2147483648
    %v4707 = vxor.u32 %v4691, 2147483648
    %v4708 = vxor.u32 %v4692, 2147483648
    %v4709 = vxor.u32 %v4693, 2147483648
    %v4710 = vxor.u32 %v4694, 2147483648
    %v4711 = vxor.u32 %v4695, 2147483648
    %v4712 = vxor.u32 %v4696, 2147483648
    %v4713 = vxor.u32 %v4697, 2147483648
    %v4714 = vxor.u32 %v4698, 2147483648
    %v4715 = vxor.u32 %v4699, 2147483648
    %v4716 = vxor.u32 %v4700, 2147483648
    %v4717 = vmul.f32 %v4701, 1.442695
    %v4718 = vpow.pop %v4717
    %v4719 = vmul.f32 %v4702, 1.442695
    %v4720 = vpow.pop %v4719
    %v4721 = vmul.f32 %v4703, 1.442695
    %v4722 = vpow.pop %v4721
    %v4723 = vmul.f32 %v4704, 1.442695
    %v4724 = vpow.pop %v4723
    %v4725 = vmul.f32 %v4705, 1.442695
    %v4726 = vpow.pop %v4725
    %v4727 = vmul.f32 %v4706, 1.442695
    %v4728 = vpow.pop %v4727
    %v4729 = vmul.f32 %v4707, 1.442695
    %v4730 = vpow.pop %v4729
    %v4731 = vmul.f32 %v4708, 1.442695
    %v4732 = vpow.pop %v4731
    %v4733 = vmul.f32 %v4709, 1.442695
    %v4734 = vpow.pop %v4733
    %v4735 = vmul.f32 %v4710, 1.442695
    %v4736 = vpow.pop %v4735
    %v4737 = vmul.f32 %v4711, 1.442695
    %v4738 = vpow.pop %v4737
    %v4739 = vmul.f32 %v4712, 1.442695
    %v4740 = vpow.pop %v4739
    %v4741 = vmul.f32 %v4713, 1.442695
    %v4742 = vpow.pop %v4741
    %v4743 = vmul.f32 %v4714, 1.442695
    %v4744 = vpow.pop %v4743
    %v4745 = vmul.f32 %v4715, 1.442695
    %v4746 = vpow.pop %v4745
    %v4747 = vmul.f32 %v4716, 1.442695
    %v4748 = vpow.pop %v4747
    %v4749 = vadd.f32 %v4718, 1.0
    %v4750 = vadd.f32 %v4720, 1.0
    %v4751 = vadd.f32 %v4722, 1.0
    %v4752 = vadd.f32 %v4724, 1.0
    %v4753 = vadd.f32 %v4726, 1.0
    %v4754 = vadd.f32 %v4728, 1.0
    %v4755 = vadd.f32 %v4730, 1.0
    %v4756 = vadd.f32 %v4732, 1.0
    %v4757 = vadd.f32 %v4734, 1.0
    %v4758 = vadd.f32 %v4736, 1.0
    %v4759 = vadd.f32 %v4738, 1.0
    %v4760 = vadd.f32 %v4740, 1.0
    %v4761 = vadd.f32 %v4742, 1.0
    %v4762 = vadd.f32 %v4744, 1.0
    %v4763 = vadd.f32 %v4746, 1.0
    %v4764 = vadd.f32 %v4748, 1.0
    %v4765 = vrcp.pop %v4749
    %v4766 = vmul.f32 1.0, %v4765
    %v4767 = vrcp.pop %v4750
    %v4768 = vmul.f32 1.0, %v4767
    %v4769 = vrcp.pop %v4751
    %v4770 = vmul.f32 1.0, %v4769
    %v4771 = vrcp.pop %v4752
    %v4772 = vmul.f32 1.0, %v4771
    %v4773 = vrcp.pop %v4753
    %v4774 = vmul.f32 1.0, %v4773
    %v4775 = vrcp.pop %v4754
    %v4776 = vmul.f32 1.0, %v4775
    %v4777 = vrcp.pop %v4755
    %v4778 = vmul.f32 1.0, %v4777
    %v4779 = vrcp.pop %v4756
    %v4780 = vmul.f32 1.0, %v4779
    %v4781 = vrcp.pop %v4757
    %v4782 = vmul.f32 1.0, %v4781
    %v4783 = vrcp.pop %v4758
    %v4784 = vmul.f32 1.0, %v4783
    %v4785 = vrcp.pop %v4759
    %v4786 = vmul.f32 1.0, %v4785
    %v4787 = vrcp.pop %v4760
    %v4788 = vmul.f32 1.0, %v4787
    %v4789 = vrcp.pop %v4761
    %v4790 = vmul.f32 1.0, %v4789
    %v4791 = vrcp.pop %v4762
    %v4792 = vmul.f32 1.0, %v4791
    %v4793 = vrcp.pop %v4763
    %v4794 = vmul.f32 1.0, %v4793
    %v4795 = vrcp.pop %v4764
    %v4796 = vmul.f32 1.0, %v4795
    %v4797 = vmul.f32 %v4685, %v4766
    %v4798 = vmul.f32 %v4686, %v4768
    %v4799 = vmul.f32 %v4687, %v4770
    %v4800 = vmul.f32 %v4688, %v4772
    %v4801 = vmul.f32 %v4689, %v4774
    %v4802 = vmul.f32 %v4690, %v4776
    %v4803 = vmul.f32 %v4691, %v4778
    %v4804 = vmul.f32 %v4692, %v4780
    %v4805 = vmul.f32 %v4693, %v4782
    %v4806 = vmul.f32 %v4694, %v4784
    %v4807 = vmul.f32 %v4695, %v4786
    %v4808 = vmul.f32 %v4696, %v4788
    %v4809 = vmul.f32 %v4697, %v4790
    %v4810 = vmul.f32 %v4698, %v4792
    %v4811 = vmul.f32 %v4699, %v4794
    %v4812 = vmul.f32 %v4700, %v4796
    %v4814 = vsel %vm485, %v4797, 0
    %v4817 = vsel %vm485, %v4798, 0
    %v4820 = vsel %vm485, %v4799, 0
    %v4823 = vsel %vm485, %v4800, 0
    %v4826 = vsel %vm485, %v4801, 0
    %v4829 = vsel %vm485, %v4802, 0
    %v4832 = vsel %vm485, %v4803, 0
    %v4835 = vsel %vm485, %v4804, 0
    %v4838 = vsel %vm485, %v4805, 0
    %v4841 = vsel %vm485, %v4806, 0
    %v4844 = vsel %vm485, %v4807, 0
    %v4847 = vsel %vm485, %v4808, 0
    %v4850 = vsel %vm485, %v4809, 0
    %v4853 = vsel %vm485, %v4810, 0
    %v4856 = vsel %vm485, %v4811, 0
    %v4859 = vsel %vm485, %v4812, 0
    %4861 = vmatprep.subr.mxu0 0.0
    %4862 = vmatpush1.msra.mxu0 %v142
    %4863 = vmatprep.subr.mxu0 0.0
    %4864 = vmatpush1.msra.mxu0 %v143
    %4865 = vmatprep.subr.mxu0 0.0
    %4866 = vmatpush1.msra.mxu0 %v144
    %4867 = vmatprep.subr.mxu0 0.0
    %4868 = vmatpush1.msra.mxu0 %v145
    %4869 = vmatprep.subr.mxu0 0.0
    %4870 = vmatpush1.msra.mxu0 0.0
    %4871 = vmatprep.subr.mxu0 0.0
    %4872 = vmatpush1.msra.mxu0 0.0
    %4873 = vmatprep.subr.mxu0 0.0
    %4874 = vmatpush1.msra.mxu0 0.0
    %4875 = vmatprep.subr.mxu0 0.0
    %4876 = vmatpush1.msra.mxu0 0.0
    %4877 = vmatprep.subr.mxu0 0.0
    %4878 = vmatpush1.msra.mxu0 0.0
    %4879 = vmatprep.subr.mxu0 0.0
    %4880 = vmatpush1.msra.mxu0 0.0
    %4881 = vmatprep.subr.mxu0 0.0
    %4882 = vmatpush1.msra.mxu0 0.0
    %4883 = vmatprep.subr.mxu0 0.0
    %4884 = vmatpush1.msra.mxu0 0.0
    %4885 = vmatprep.subr.mxu0 0.0
    %4886 = vmatpush1.msra.mxu0 0.0
    %4887 = vmatprep.subr.mxu0 0.0
    %4888 = vmatpush1.msra.mxu0 0.0
    %4889 = vmatprep.subr.mxu0 0.0
    %4890 = vmatpush1.msra.mxu0 0.0
    %4891 = vmatprep.subr.mxu0 0.0
    %4892 = vmatpush1.msra.mxu0 0.0
    %4893 = vmatprep.subr.mxu0 0.0
    %4894 = vmatpush1.msra.mxu0 0.0
    %4895 = vmatprep.subr.mxu0 0.0
    %4896 = vmatpush1.msra.mxu0 0.0
    %4897 = vmatprep.subr.mxu0 0.0
    %4898 = vmatpush1.msra.mxu0 0.0
    %4899 = vmatprep.subr.mxu0 0.0
    %4900 = vmatpush1.msra.mxu0 0.0
    %4901 = vmatprep.subr.mxu0 0.0
    %4902 = vmatpush1.msra.mxu0 0.0
    %4903 = vmatprep.subr.mxu0 0.0
    %4904 = vmatpush1.msra.mxu0 0.0
    %4905 = vmatprep.subr.mxu0 0.0
    %4906 = vmatpush1.msra.mxu0 0.0
    %4907 = vmatprep.subr.mxu0 0.0
    %4908 = vmatpush1.msra.mxu0 0.0
    %4909 = vmatprep.subr.mxu0 0.0
    %4910 = vmatpush1.msra.mxu0 0.0
    %4911 = vmatprep.subr.mxu0 0.0
    %4912 = vmatpush1.msra.mxu0 0.0
    %4913 = vmatprep.subr.mxu0 0.0
    %4914 = vmatpush1.msra.mxu0 0.0
    %4915 = vmatprep.subr.mxu0 0.0
    %4916 = vmatpush1.msra.mxu0 0.0
    %4917 = vmatprep.subr.mxu0 0.0
    %4918 = vmatpush1.msra.mxu0 0.0
    %4919 = vmatprep.subr.mxu0 0.0
    %4920 = vmatpush1.msra.mxu0 0.0
    %4921 = vmatprep.subr.mxu0 0.0
    %4922 = vmatpush1.msra.mxu0 0.0
    %4923 = vmatprep.subr.mxu0 0.0
    %4924 = vmatpush1.msra.mxu0 0.0
    %4925 = vmatprep.mubr.f32.mxu0 0.0
    %4926 = vmatmul.mubr.f32.gmra.mrb[0].mxu0 %v4814
    %v4927 = vpop.f32.mrb[0].mxu0
    %v4928 = vadd.f32 %v483, %v4927
    %v4929 = vpop.f32.mrb[0].mxu0
    %4930 = vmatprep.mubr.f32.mxu0 0.0
    %4931 = vmatmul.mubr.f32.gmra.mrb[0].mxu0 %v4817
    %v4932 = vpop.f32.mrb[0].mxu0
    %v4933 = vadd.f32 %v483, %v4932
    %v4934 = vpop.f32.mrb[0].mxu0
    %4935 = vmatprep.mubr.f32.mxu0 0.0
    %4936 = vmatmul.mubr.f32.gmra.mrb[0].mxu0 %v4820
    %v4937 = vpop.f32.mrb[0].mxu0
    %v4938 = vadd.f32 %v483, %v4937
    %v4939 = vpop.f32.mrb[0].mxu0
    %4940 = vmatprep.mubr.f32.mxu0 0.0
    %4941 = vmatmul.mubr.f32.gmra.mrb[0].mxu0 %v4823
    %v4942 = vpop.f32.mrb[0].mxu0
    %v4943 = vadd.f32 %v483, %v4942
    %v4944 = vpop.f32.mrb[0].mxu0
    %4945 = vmatprep.mubr.f32.mxu0 0.0
    %4946 = vmatmul.mubr.f32.gmra.mrb[0].mxu0 %v4826
    %v4947 = vpop.f32.mrb[0].mxu0
    %v4948 = vadd.f32 %v483, %v4947
    %v4949 = vpop.f32.mrb[0].mxu0
    %4950 = vmatprep.mubr.f32.mxu0 0.0
    %4951 = vmatmul.mubr.f32.gmra.mrb[0].mxu0 %v4829
    %v4952 = vpop.f32.mrb[0].mxu0
    %v4953 = vadd.f32 %v483, %v4952
    %v4954 = vpop.f32.mrb[0].mxu0
    %4955 = vmatprep.mubr.f32.mxu0 0.0
    %4956 = vmatmul.mubr.f32.gmra.mrb[0].mxu0 %v4832
    %v4957 = vpop.f32.mrb[0].mxu0
    %v4958 = vadd.f32 %v483, %v4957
    %v4959 = vpop.f32.mrb[0].mxu0
    %4960 = vmatprep.mubr.f32.mxu0 0.0
    %4961 = vmatmul.mubr.f32.gmra.mrb[0].mxu0 %v4835
    %v4962 = vpop.f32.mrb[0].mxu0
    %v4963 = vadd.f32 %v483, %v4962
    %v4964 = vpop.f32.mrb[0].mxu0
    %4965 = vmatprep.mubr.f32.mxu0 0.0
    %4966 = vmatmul.mubr.f32.gmra.mrb[0].mxu0 %v4838
    %v4967 = vpop.f32.mrb[0].mxu0
    %v4968 = vadd.f32 %v483, %v4967
    %v4969 = vpop.f32.mrb[0].mxu0
    %4970 = vmatprep.mubr.f32.mxu0 0.0
    %4971 = vmatmul.mubr.f32.gmra.mrb[0].mxu0 %v4841
    %v4972 = vpop.f32.mrb[0].mxu0
    %v4973 = vadd.f32 %v483, %v4972
    %v4974 = vpop.f32.mrb[0].mxu0
    %4975 = vmatprep.mubr.f32.mxu0 0.0
    %4976 = vmatmul.mubr.f32.gmra.mrb[0].mxu0 %v4844
    %v4977 = vpop.f32.mrb[0].mxu0
    %v4978 = vadd.f32 %v483, %v4977
    %v4979 = vpop.f32.mrb[0].mxu0
    %4980 = vmatprep.mubr.f32.mxu0 0.0
    %4981 = vmatmul.mubr.f32.gmra.mrb[0].mxu0 %v4847
    %v4982 = vpop.f32.mrb[0].mxu0
    %v4983 = vadd.f32 %v483, %v4982
    %v4984 = vpop.f32.mrb[0].mxu0
    %4985 = vmatprep.mubr.f32.mxu0 0.0
    %4986 = vmatmul.mubr.f32.gmra.mrb[0].mxu0 %v4850
    %v4987 = vpop.f32.mrb[0].mxu0
    %v4988 = vadd.f32 %v483, %v4987
    %v4989 = vpop.f32.mrb[0].mxu0
    %4990 = vmatprep.mubr.f32.mxu0 0.0
    %4991 = vmatmul.mubr.f32.gmra.mrb[0].mxu0 %v4853
    %v4992 = vpop.f32.mrb[0].mxu0
    %v4993 = vadd.f32 %v483, %v4992
    %v4994 = vpop.f32.mrb[0].mxu0
    %4995 = vmatprep.mubr.f32.mxu0 0.0
    %4996 = vmatmul.mubr.f32.gmra.mrb[0].mxu0 %v4856
    %v4997 = vpop.f32.mrb[0].mxu0
    %v4998 = vadd.f32 %v483, %v4997
    %v4999 = vpop.f32.mrb[0].mxu0
    %5000 = vmatprep.mubr.f32.mxu0 0.0
    %5001 = vmatmul.mubr.f32.gmra.mrb[0].mxu0 %v4859
    %v5002 = vpop.f32.mrb[0].mxu0
    %v5003 = vadd.f32 %v483, %v5002
    %v5004 = vpop.f32.mrb[0].mxu0
    %5005 = vdwg.mxu0
    %5006 = vst [vmem:[#allocation2] sm:$0xff] %v4928
    %5007 = vst [vmem:[#allocation2 + $0x8] sm:$0xff] %v4933
    %5008 = vst [vmem:[#allocation2 + $0x10] sm:$0xff] %v4938
    %5009 = vst [vmem:[#allocation2 + $0x18] sm:$0xff] %v4943
    %5010 = vst [vmem:[#allocation2 + $0x20] sm:$0xff] %v4948
    %5011 = vst [vmem:[#allocation2 + $0x28] sm:$0xff] %v4953
    %5012 = vst [vmem:[#allocation2 + $0x30] sm:$0xff] %v4958
    %5013 = vst [vmem:[#allocation2 + $0x38] sm:$0xff] %v4963
    %5014 = vst [vmem:[#allocation2 + $0x40] sm:$0xff] %v4968
    %5015 = vst [vmem:[#allocation2 + $0x48] sm:$0xff] %v4973
    %5016 = vst [vmem:[#allocation2 + $0x50] sm:$0xff] %v4978
    %5017 = vst [vmem:[#allocation2 + $0x58] sm:$0xff] %v4983
    %5018 = vst [vmem:[#allocation2 + $0x60] sm:$0xff] %v4988
    %5019 = vst [vmem:[#allocation2 + $0x68] sm:$0xff] %v4993
    %5020 = vst [vmem:[#allocation2 + $0x70] sm:$0xff] %v4998
    %5021 = vst [vmem:[#allocation2 + $0x78] sm:$0xff] %v5003
    %v5022 = vld [vmem:[#allocation2] sm:$0xff]
    %v5023 = vld [vmem:[#allocation2 + $0x8] sm:$0xff]
    %v5024 = vld [vmem:[#allocation2 + $0x10] sm:$0xff]
    %v5025 = vld [vmem:[#allocation2 + $0x18] sm:$0xff]
    %v5026 = vld [vmem:[#allocation2 + $0x20] sm:$0xff]
    %v5027 = vld [vmem:[#allocation2 + $0x28] sm:$0xff]
    %v5028 = vld [vmem:[#allocation2 + $0x30] sm:$0xff]
    %v5029 = vld [vmem:[#allocation2 + $0x38] sm:$0xff]
    %v5030 = vld [vmem:[#allocation2 + $0x40] sm:$0xff]
    %v5031 = vld [vmem:[#allocation2 + $0x48] sm:$0xff]
    %v5032 = vld [vmem:[#allocation2 + $0x50] sm:$0xff]
    %v5033 = vld [vmem:[#allocation2 + $0x58] sm:$0xff]
    %v5034 = vld [vmem:[#allocation2 + $0x60] sm:$0xff]
    %v5035 = vld [vmem:[#allocation2 + $0x68] sm:$0xff]
    %v5036 = vld [vmem:[#allocation2 + $0x70] sm:$0xff]
    %v5037 = vld [vmem:[#allocation2 + $0x78] sm:$0xff]
    %v5039 = vsel %vm485, %v5022, 0
    %v5042 = vsel %vm485, %v5023, 0
    %v5045 = vsel %vm485, %v5024, 0
    %v5048 = vsel %vm485, %v5025, 0
    %v5051 = vsel %vm485, %v5026, 0
    %v5054 = vsel %vm485, %v5027, 0
    %v5057 = vsel %vm485, %v5028, 0
    %v5060 = vsel %vm485, %v5029, 0
    %v5063 = vsel %vm485, %v5030, 0
    %v5066 = vsel %vm485, %v5031, 0
    %v5069 = vsel %vm485, %v5032, 0
    %v5072 = vsel %vm485, %v5033, 0
    %v5075 = vsel %vm485, %v5034, 0
    %v5078 = vsel %vm485, %v5035, 0
    %v5081 = vsel %vm485, %v5036, 0
    %v5084 = vsel %vm485, %v5037, 0
    %5086 = vmatprep.subr.mxu0 0.0
    %5087 = vmatpush1.xpose.msra.mxu0 %v760
    %5088 = vmatprep.subr.mxu0 0.0
    %5089 = vmatpush1.xpose.msra.mxu0 0.0
    %5090 = vmatprep.subr.mxu0 0.0
    %5091 = vmatpush1.xpose.msra.mxu0 0.0
    %5092 = vmatprep.subr.mxu0 0.0
    %5093 = vmatpush1.xpose.msra.mxu0 0.0
    %5094 = vmatprep.subr.mxu0 0.0
    %5095 = vmatpush1.xpose.msra.mxu0 0.0
    %5096 = vmatprep.subr.mxu0 0.0
    %5097 = vmatpush1.xpose.msra.mxu0 0.0
    %5098 = vmatprep.subr.mxu0 0.0
    %5099 = vmatpush1.xpose.msra.mxu0 0.0
    %5100 = vmatprep.subr.mxu0 0.0
    %5101 = vmatpush1.xpose.msra.mxu0 0.0
    %5102 = vmatprep.subr.mxu0 0.0
    %5103 = vmatpush1.xpose.msra.mxu0 0.0
    %5104 = vmatprep.subr.mxu0 0.0
    %5105 = vmatpush1.xpose.msra.mxu0 0.0
    %5106 = vmatprep.subr.mxu0 0.0
    %5107 = vmatpush1.xpose.msra.mxu0 0.0
    %5108 = vmatprep.subr.mxu0 0.0
    %5109 = vmatpush1.xpose.msra.mxu0 0.0
    %5110 = vmatprep.subr.mxu0 0.0
    %5111 = vmatpush1.xpose.msra.mxu0 0.0
    %5112 = vmatprep.subr.mxu0 0.0
    %5113 = vmatpush1.xpose.msra.mxu0 0.0
    %5114 = vmatprep.subr.mxu0 0.0
    %5115 = vmatpush1.xpose.msra.mxu0 0.0
    %5116 = vmatprep.subr.mxu0 0.0
    %5117 = vmatpush1.xpose.msra.mxu0 0.0
    %5118 = vmatprep.subr.mxu0 0.0
    %5119 = vmatpush1.xpose.msra.mxu0 0.0
    %5120 = vmatprep.subr.mxu0 0.0
    %5121 = vmatpush1.xpose.msra.mxu0 0.0
    %5122 = vmatprep.subr.mxu0 0.0
    %5123 = vmatpush1.xpose.msra.mxu0 0.0
    %5124 = vmatprep.subr.mxu0 0.0
    %5125 = vmatpush1.xpose.msra.mxu0 0.0
    %5126 = vmatprep.subr.mxu0 0.0
    %5127 = vmatpush1.xpose.msra.mxu0 0.0
    %5128 = vmatprep.subr.mxu0 0.0
    %5129 = vmatpush1.xpose.msra.mxu0 0.0
    %5130 = vmatprep.subr.mxu0 0.0
    %5131 = vmatpush1.xpose.msra.mxu0 0.0
    %5132 = vmatprep.subr.mxu0 0.0
    %5133 = vmatpush1.xpose.msra.mxu0 0.0
    %5134 = vmatprep.subr.mxu0 0.0
    %5135 = vmatpush1.xpose.msra.mxu0 0.0
    %5136 = vmatprep.subr.mxu0 0.0
    %5137 = vmatpush1.xpose.msra.mxu0 0.0
    %5138 = vmatprep.subr.mxu0 0.0
    %5139 = vmatpush1.xpose.msra.mxu0 0.0
    %5140 = vmatprep.subr.mxu0 0.0
    %5141 = vmatpush1.xpose.msra.mxu0 0.0
    %5142 = vmatprep.subr.mxu0 0.0
    %5143 = vmatpush1.xpose.msra.mxu0 0.0
    %5144 = vmatprep.subr.mxu0 0.0
    %5145 = vmatpush1.xpose.msra.mxu0 0.0
    %5146 = vmatprep.subr.mxu0 0.0
    %5147 = vmatpush1.xpose.msra.mxu0 0.0
    %5148 = vmatprep.subr.mxu0 0.0
    %5149 = vmatpush1.xpose.msra.mxu0 0.0
    %5150 = vmatprep.mubr.f32.mxu0 0.0
    %5151 = vmatmul.mubr.f32.gmra.mrb[0].mxu0 %v5039
    %v5152 = vpop.f32.mrb[0].mxu0
    %v5153 = vadd.f32 0.0, %v5152
    %v5154 = vpop.f32.mrb[0].mxu0
    %5155 = vmatprep.mubr.f32.mxu0 0.0
    %5156 = vmatmul.mubr.f32.gmra.mrb[0].mxu0 %v5042
    %v5157 = vpop.f32.mrb[0].mxu0
    %v5158 = vadd.f32 0.0, %v5157
    %v5159 = vpop.f32.mrb[0].mxu0
    %5160 = vmatprep.mubr.f32.mxu0 0.0
    %5161 = vmatmul.mubr.f32.gmra.mrb[0].mxu0 %v5045
    %v5162 = vpop.f32.mrb[0].mxu0
    %v5163 = vadd.f32 0.0, %v5162
    %v5164 = vpop.f32.mrb[0].mxu0
    %5165 = vmatprep.mubr.f32.mxu0 0.0
    %5166 = vmatmul.mubr.f32.gmra.mrb[0].mxu0 %v5048
    %v5167 = vpop.f32.mrb[0].mxu0
    %v5168 = vadd.f32 0.0, %v5167
    %v5169 = vpop.f32.mrb[0].mxu0
    %5170 = vmatprep.mubr.f32.mxu0 0.0
    %5171 = vmatmul.mubr.f32.gmra.mrb[0].mxu0 %v5051
    %v5172 = vpop.f32.mrb[0].mxu0
    %v5173 = vadd.f32 0.0, %v5172
    %v5174 = vpop.f32.mrb[0].mxu0
    %5175 = vmatprep.mubr.f32.mxu0 0.0
    %5176 = vmatmul.mubr.f32.gmra.mrb[0].mxu0 %v5054
    %v5177 = vpop.f32.mrb[0].mxu0
    %v5178 = vadd.f32 0.0, %v5177
    %v5179 = vpop.f32.mrb[0].mxu0
    %5180 = vmatprep.mubr.f32.mxu0 0.0
    %5181 = vmatmul.mubr.f32.gmra.mrb[0].mxu0 %v5057
    %v5182 = vpop.f32.mrb[0].mxu0
    %v5183 = vadd.f32 0.0, %v5182
    %v5184 = vpop.f32.mrb[0].mxu0
    %5185 = vmatprep.mubr.f32.mxu0 0.0
    %5186 = vmatmul.mubr.f32.gmra.mrb[0].mxu0 %v5060
    %v5187 = vpop.f32.mrb[0].mxu0
    %v5188 = vadd.f32 0.0, %v5187
    %v5189 = vpop.f32.mrb[0].mxu0
    %5190 = vmatprep.mubr.f32.mxu0 0.0
    %5191 = vmatmul.mubr.f32.gmra.mrb[0].mxu0 %v5063
    %v5192 = vpop.f32.mrb[0].mxu0
    %v5193 = vadd.f32 0.0, %v5192
    %v5194 = vpop.f32.mrb[0].mxu0
    %5195 = vmatprep.mubr.f32.mxu0 0.0
    %5196 = vmatmul.mubr.f32.gmra.mrb[0].mxu0 %v5066
    %v5197 = vpop.f32.mrb[0].mxu0
    %v5198 = vadd.f32 0.0, %v5197
    %v5199 = vpop.f32.mrb[0].mxu0
    %5200 = vmatprep.mubr.f32.mxu0 0.0
    %5201 = vmatmul.mubr.f32.gmra.mrb[0].mxu0 %v5069
    %v5202 = vpop.f32.mrb[0].mxu0
    %v5203 = vadd.f32 0.0, %v5202
    %v5204 = vpop.f32.mrb[0].mxu0
    %5205 = vmatprep.mubr.f32.mxu0 0.0
    %5206 = vmatmul.mubr.f32.gmra.mrb[0].mxu0 %v5072
    %v5207 = vpop.f32.mrb[0].mxu0
    %v5208 = vadd.f32 0.0, %v5207
    %v5209 = vpop.f32.mrb[0].mxu0
    %5210 = vmatprep.mubr.f32.mxu0 0.0
    %5211 = vmatmul.mubr.f32.gmra.mrb[0].mxu0 %v5075
    %v5212 = vpop.f32.mrb[0].mxu0
    %v5213 = vadd.f32 0.0, %v5212
    %v5214 = vpop.f32.mrb[0].mxu0
    %5215 = vmatprep.mubr.f32.mxu0 0.0
    %5216 = vmatmul.mubr.f32.gmra.mrb[0].mxu0 %v5078
    %v5217 = vpop.f32.mrb[0].mxu0
    %v5218 = vadd.f32 0.0, %v5217
    %v5219 = vpop.f32.mrb[0].mxu0
    %5220 = vmatprep.mubr.f32.mxu0 0.0
    %5221 = vmatmul.mubr.f32.gmra.mrb[0].mxu0 %v5081
    %v5222 = vpop.f32.mrb[0].mxu0
    %v5223 = vadd.f32 0.0, %v5222
    %v5224 = vpop.f32.mrb[0].mxu0
    %5225 = vmatprep.mubr.f32.mxu0 0.0
    %5226 = vmatmul.mubr.f32.gmra.mrb[0].mxu0 %v5084
    %v5227 = vpop.f32.mrb[0].mxu0
    %v5228 = vadd.f32 0.0, %v5227
    %v5229 = vpop.f32.mrb[0].mxu0
    %5230 = vdwg.mxu0
    %5231 = vst.msk [vmem:[#allocation3] sm:$0xff] %vm907, %v5153
    %5232 = vst.msk [vmem:[#allocation3 + $0x8] sm:$0xff] %vm907, %v5158
    %5233 = vst.msk [vmem:[#allocation3 + $0x10] sm:$0xff] %vm907, %v5163
    %5234 = vst.msk [vmem:[#allocation3 + $0x18] sm:$0xff] %vm907, %v5168
    %5235 = vst.msk [vmem:[#allocation3 + $0x20] sm:$0xff] %vm907, %v5173
    %5236 = vst.msk [vmem:[#allocation3 + $0x28] sm:$0xff] %vm907, %v5178
    %5237 = vst.msk [vmem:[#allocation3 + $0x30] sm:$0xff] %vm907, %v5183
    %5238 = vst.msk [vmem:[#allocation3 + $0x38] sm:$0xff] %vm907, %v5188
    %5239 = vst.msk [vmem:[#allocation3 + $0x40] sm:$0xff] %vm907, %v5193
    %5240 = vst.msk [vmem:[#allocation3 + $0x48] sm:$0xff] %vm907, %v5198
    %5241 = vst.msk [vmem:[#allocation3 + $0x50] sm:$0xff] %vm907, %v5203
    %5242 = vst.msk [vmem:[#allocation3 + $0x58] sm:$0xff] %vm907, %v5208
    %5243 = vst.msk [vmem:[#allocation3 + $0x60] sm:$0xff] %vm907, %v5213
    %5244 = vst.msk [vmem:[#allocation3 + $0x68] sm:$0xff] %vm907, %v5218
    %5245 = vst.msk [vmem:[#allocation3 + $0x70] sm:$0xff] %vm907, %v5223
    %5246 = vst.msk [vmem:[#allocation3 + $0x78] sm:$0xff] %vm907, %v5228
    %v5247 = vld [vmem:[#allocation4] sm:$0xff]
    %v5248 = vld [vmem:[#allocation4 + $0x8] sm:$0xff]
    %v5249 = vld [vmem:[#allocation4 + $0x10] sm:$0xff]
    %v5250 = vld [vmem:[#allocation4 + $0x18] sm:$0xff]
    %v5251 = vld [vmem:[#allocation4 + $0x20] sm:$0xff]
    %v5252 = vld [vmem:[#allocation4 + $0x28] sm:$0xff]
    %v5253 = vld [vmem:[#allocation4 + $0x30] sm:$0xff]
    %v5254 = vld [vmem:[#allocation4 + $0x38] sm:$0xff]
    %v5255 = vld [vmem:[#allocation4 + $0x40] sm:$0xff]
    %v5256 = vld [vmem:[#allocation4 + $0x48] sm:$0xff]
    %v5257 = vld [vmem:[#allocation4 + $0x50] sm:$0xff]
    %v5258 = vld [vmem:[#allocation4 + $0x58] sm:$0xff]
    %v5259 = vld [vmem:[#allocation4 + $0x60] sm:$0xff]
    %v5260 = vld [vmem:[#allocation4 + $0x68] sm:$0xff]
    %v5261 = vld [vmem:[#allocation4 + $0x70] sm:$0xff]
    %v5262 = vld [vmem:[#allocation4 + $0x78] sm:$0xff]
    %v5263 = vld [vmem:[#allocation3] sm:$0xff]
    %v5264 = vld [vmem:[#allocation3 + $0x8] sm:$0xff]
    %v5265 = vld [vmem:[#allocation3 + $0x10] sm:$0xff]
    %v5266 = vld [vmem:[#allocation3 + $0x18] sm:$0xff]
    %v5267 = vld [vmem:[#allocation3 + $0x20] sm:$0xff]
    %v5268 = vld [vmem:[#allocation3 + $0x28] sm:$0xff]
    %v5269 = vld [vmem:[#allocation3 + $0x30] sm:$0xff]
    %v5270 = vld [vmem:[#allocation3 + $0x38] sm:$0xff]
    %v5271 = vld [vmem:[#allocation3 + $0x40] sm:$0xff]
    %v5272 = vld [vmem:[#allocation3 + $0x48] sm:$0xff]
    %v5273 = vld [vmem:[#allocation3 + $0x50] sm:$0xff]
    %v5274 = vld [vmem:[#allocation3 + $0x58] sm:$0xff]
    %v5275 = vld [vmem:[#allocation3 + $0x60] sm:$0xff]
    %v5276 = vld [vmem:[#allocation3 + $0x68] sm:$0xff]
    %v5277 = vld [vmem:[#allocation3 + $0x70] sm:$0xff]
    %v5278 = vld [vmem:[#allocation3 + $0x78] sm:$0xff]
    %5280 = vset.pattern.permute.xlu0 0
    %5281 = vperm.xlu0 %5280, %v5263
    %v5282 = vpop.permute.xlu0 %5281
    %5285 = vset.pattern.permute.xlu0 0
    %5286 = vperm.xlu0 %5285, %v5264
    %v5287 = vpop.permute.xlu0 %5286
    %5290 = vset.pattern.permute.xlu0 0
    %5291 = vperm.xlu0 %5290, %v5265
    %v5292 = vpop.permute.xlu0 %5291
    %5295 = vset.pattern.permute.xlu0 0
    %5296 = vperm.xlu0 %5295, %v5266
    %v5297 = vpop.permute.xlu0 %5296
    %5300 = vset.pattern.permute.xlu0 0
    %5301 = vperm.xlu0 %5300, %v5267
    %v5302 = vpop.permute.xlu0 %5301
    %5305 = vset.pattern.permute.xlu0 0
    %5306 = vperm.xlu0 %5305, %v5268
    %v5307 = vpop.permute.xlu0 %5306
    %5310 = vset.pattern.permute.xlu0 0
    %5311 = vperm.xlu0 %5310, %v5269
    %v5312 = vpop.permute.xlu0 %5311
    %5315 = vset.pattern.permute.xlu0 0
    %5316 = vperm.xlu0 %5315, %v5270
    %v5317 = vpop.permute.xlu0 %5316
    %5320 = vset.pattern.permute.xlu0 0
    %5321 = vperm.xlu0 %5320, %v5271
    %v5322 = vpop.permute.xlu0 %5321
    %5325 = vset.pattern.permute.xlu0 0
    %5326 = vperm.xlu0 %5325, %v5272
    %v5327 = vpop.permute.xlu0 %5326
    %5330 = vset.pattern.permute.xlu0 0
    %5331 = vperm.xlu0 %5330, %v5273
    %v5332 = vpop.permute.xlu0 %5331
    %5335 = vset.pattern.permute.xlu0 0
    %5336 = vperm.xlu0 %5335, %v5274
    %v5337 = vpop.permute.xlu0 %5336
    %5340 = vset.pattern.permute.xlu0 0
    %5341 = vperm.xlu0 %5340, %v5275
    %v5342 = vpop.permute.xlu0 %5341
    %5345 = vset.pattern.permute.xlu0 0
    %5346 = vperm.xlu0 %5345, %v5276
    %v5347 = vpop.permute.xlu0 %5346
    %5350 = vset.pattern.permute.xlu0 0
    %5351 = vperm.xlu0 %5350, %v5277
    %v5352 = vpop.permute.xlu0 %5351
    %5355 = vset.pattern.permute.xlu0 0
    %5356 = vperm.xlu0 %5355, %v5278
    %v5357 = vpop.permute.xlu0 %5356
    %v5359 = vmul.f32 %v5247, %v5282
    %v5360 = vmul.f32 %v5248, %v5287
    %v5361 = vmul.f32 %v5249, %v5292
    %v5362 = vmul.f32 %v5250, %v5297
    %v5363 = vmul.f32 %v5251, %v5302
    %v5364 = vmul.f32 %v5252, %v5307
    %v5365 = vmul.f32 %v5253, %v5312
    %v5366 = vmul.f32 %v5254, %v5317
    %v5367 = vmul.f32 %v5255, %v5322
    %v5368 = vmul.f32 %v5256, %v5327
    %v5369 = vmul.f32 %v5257, %v5332
    %v5370 = vmul.f32 %v5258, %v5337
    %v5371 = vmul.f32 %v5259, %v5342
    %v5372 = vmul.f32 %v5260, %v5347
    %v5373 = vmul.f32 %v5261, %v5352
    %v5374 = vmul.f32 %v5262, %v5357
    %5375 = vrot.lane.b32.xlu0 %v5022, 96
    %v5376 = vpop.permute.xlu0 %5375
    %5377 = vrot.lane.b32.xlu0 %v5023, 96
    %v5378 = vpop.permute.xlu0 %5377
    %5379 = vrot.lane.b32.xlu0 %v5024, 96
    %v5380 = vpop.permute.xlu0 %5379
    %5381 = vrot.lane.b32.xlu0 %v5025, 96
    %v5382 = vpop.permute.xlu0 %5381
    %5383 = vrot.lane.b32.xlu0 %v5026, 96
    %v5384 = vpop.permute.xlu0 %5383
    %5385 = vrot.lane.b32.xlu0 %v5027, 96
    %v5386 = vpop.permute.xlu0 %5385
    %5387 = vrot.lane.b32.xlu0 %v5028, 96
    %v5388 = vpop.permute.xlu0 %5387
    %5389 = vrot.lane.b32.xlu0 %v5029, 96
    %v5390 = vpop.permute.xlu0 %5389
    %5391 = vrot.lane.b32.xlu0 %v5030, 96
    %v5392 = vpop.permute.xlu0 %5391
    %5393 = vrot.lane.b32.xlu0 %v5031, 96
    %v5394 = vpop.permute.xlu0 %5393
    %5395 = vrot.lane.b32.xlu0 %v5032, 96
    %v5396 = vpop.permute.xlu0 %5395
    %5397 = vrot.lane.b32.xlu0 %v5033, 96
    %v5398 = vpop.permute.xlu0 %5397
    %5399 = vrot.lane.b32.xlu0 %v5034, 96
    %v5400 = vpop.permute.xlu0 %5399
    %5401 = vrot.lane.b32.xlu0 %v5035, 96
    %v5402 = vpop.permute.xlu0 %5401
    %5403 = vrot.lane.b32.xlu0 %v5036, 96
    %v5404 = vpop.permute.xlu0 %5403
    %5405 = vrot.lane.b32.xlu0 %v5037, 96
    %v5406 = vpop.permute.xlu0 %5405
    %v5407 = vsel %vm485, %v5376, 0
    %v5409 = vsel %vm485, %v5378, 0
    %v5411 = vsel %vm485, %v5380, 0
    %v5413 = vsel %vm485, %v5382, 0
    %v5415 = vsel %vm485, %v5384, 0
    %v5417 = vsel %vm485, %v5386, 0
    %v5419 = vsel %vm485, %v5388, 0
    %v5421 = vsel %vm485, %v5390, 0
    %v5423 = vsel %vm485, %v5392, 0
    %v5425 = vsel %vm485, %v5394, 0
    %v5427 = vsel %vm485, %v5396, 0
    %v5429 = vsel %vm485, %v5398, 0
    %v5431 = vsel %vm485, %v5400, 0
    %v5433 = vsel %vm485, %v5402, 0
    %v5435 = vsel %vm485, %v5404, 0
    %v5437 = vsel %vm485, %v5406, 0
    %5439 = vmatprep.subr.mxu0 0.0
    %5440 = vmatpush1.xpose.msra.mxu0 %v5407
    %5441 = vmatprep.subr.mxu0 0.0
    %5442 = vmatpush1.xpose.msra.mxu0 %v5409
    %5443 = vmatprep.subr.mxu0 0.0
    %5444 = vmatpush1.xpose.msra.mxu0 %v5411
    %5445 = vmatprep.subr.mxu0 0.0
    %5446 = vmatpush1.xpose.msra.mxu0 %v5413
    %5447 = vmatprep.subr.mxu0 0.0
    %5448 = vmatpush1.xpose.msra.mxu0 %v5415
    %5449 = vmatprep.subr.mxu0 0.0
    %5450 = vmatpush1.xpose.msra.mxu0 %v5417
    %5451 = vmatprep.subr.mxu0 0.0
    %5452 = vmatpush1.xpose.msra.mxu0 %v5419
    %5453 = vmatprep.subr.mxu0 0.0
    %5454 = vmatpush1.xpose.msra.mxu0 %v5421
    %5455 = vmatprep.subr.mxu0 0.0
    %5456 = vmatpush1.xpose.msra.mxu0 %v5423
    %5457 = vmatprep.subr.mxu0 0.0
    %5458 = vmatpush1.xpose.msra.mxu0 %v5425
    %5459 = vmatprep.subr.mxu0 0.0
    %5460 = vmatpush1.xpose.msra.mxu0 %v5427
    %5461 = vmatprep.subr.mxu0 0.0
    %5462 = vmatpush1.xpose.msra.mxu0 %v5429
    %5463 = vmatprep.subr.mxu0 0.0
    %5464 = vmatpush1.xpose.msra.mxu0 %v5431
    %5465 = vmatprep.subr.mxu0 0.0
    %5466 = vmatpush1.xpose.msra.mxu0 %v5433
    %5467 = vmatprep.subr.mxu0 0.0
    %5468 = vmatpush1.xpose.msra.mxu0 %v5435
    %5469 = vmatprep.subr.mxu0 0.0
    %5470 = vmatpush1.xpose.msra.mxu0 %v5437
    %5471 = vmatprep.subr.mxu0 0.0
    %5472 = vmatpush1.xpose.msra.mxu0 0.0
    %5473 = vmatprep.subr.mxu0 0.0
    %5474 = vmatpush1.xpose.msra.mxu0 0.0
    %5475 = vmatprep.subr.mxu0 0.0
    %5476 = vmatpush1.xpose.msra.mxu0 0.0
    %5477 = vmatprep.subr.mxu0 0.0
    %5478 = vmatpush1.xpose.msra.mxu0 0.0
    %5479 = vmatprep.subr.mxu0 0.0
    %5480 = vmatpush1.xpose.msra.mxu0 0.0
    %5481 = vmatprep.subr.mxu0 0.0
    %5482 = vmatpush1.xpose.msra.mxu0 0.0
    %5483 = vmatprep.subr.mxu0 0.0
    %5484 = vmatpush1.xpose.msra.mxu0 0.0
    %5485 = vmatprep.subr.mxu0 0.0
    %5486 = vmatpush1.xpose.msra.mxu0 0.0
    %5487 = vmatprep.subr.mxu0 0.0
    %5488 = vmatpush1.xpose.msra.mxu0 0.0
    %5489 = vmatprep.subr.mxu0 0.0
    %5490 = vmatpush1.xpose.msra.mxu0 0.0
    %5491 = vmatprep.subr.mxu0 0.0
    %5492 = vmatpush1.xpose.msra.mxu0 0.0
    %5493 = vmatprep.subr.mxu0 0.0
    %5494 = vmatpush1.xpose.msra.mxu0 0.0
    %5495 = vmatprep.subr.mxu0 0.0
    %5496 = vmatpush1.xpose.msra.mxu0 0.0
    %5497 = vmatprep.subr.mxu0 0.0
    %5498 = vmatpush1.xpose.msra.mxu0 0.0
    %5499 = vmatprep.subr.mxu0 0.0
    %5500 = vmatpush1.xpose.msra.mxu0 0.0
    %5501 = vmatprep.subr.mxu0 0.0
    %5502 = vmatpush1.xpose.msra.mxu0 0.0
    %5503 = vmatprep.mubr.f32.mxu0 0.0
    %5504 = vmatmul.mubr.f32.gmra.mrb[0].mxu0 %v5039
    %v5505 = vpop.f32.mrb[0].mxu0
    %v5506 = vadd.f32 %v5359, %v5505
    %v5507 = vpop.f32.mrb[0].mxu0
    %5508 = vmatprep.mubr.f32.mxu0 0.0
    %5509 = vmatmul.mubr.f32.gmra.mrb[0].mxu0 %v5042
    %v5510 = vpop.f32.mrb[0].mxu0
    %v5511 = vadd.f32 %v5360, %v5510
    %v5512 = vpop.f32.mrb[0].mxu0
    %5513 = vmatprep.mubr.f32.mxu0 0.0
    %5514 = vmatmul.mubr.f32.gmra.mrb[0].mxu0 %v5045
    %v5515 = vpop.f32.mrb[0].mxu0
    %v5516 = vadd.f32 %v5361, %v5515
    %v5517 = vpop.f32.mrb[0].mxu0
    %5518 = vmatprep.mubr.f32.mxu0 0.0
    %5519 = vmatmul.mubr.f32.gmra.mrb[0].mxu0 %v5048
    %v5520 = vpop.f32.mrb[0].mxu0
    %v5521 = vadd.f32 %v5362, %v5520
    %v5522 = vpop.f32.mrb[0].mxu0
    %5523 = vmatprep.mubr.f32.mxu0 0.0
    %5524 = vmatmul.mubr.f32.gmra.mrb[0].mxu0 %v5051
    %v5525 = vpop.f32.mrb[0].mxu0
    %v5526 = vadd.f32 %v5363, %v5525
    %v5527 = vpop.f32.mrb[0].mxu0
    %5528 = vmatprep.mubr.f32.mxu0 0.0
    %5529 = vmatmul.mubr.f32.gmra.mrb[0].mxu0 %v5054
    %v5530 = vpop.f32.mrb[0].mxu0
    %v5531 = vadd.f32 %v5364, %v5530
    %v5532 = vpop.f32.mrb[0].mxu0
    %5533 = vmatprep.mubr.f32.mxu0 0.0
    %5534 = vmatmul.mubr.f32.gmra.mrb[0].mxu0 %v5057
    %v5535 = vpop.f32.mrb[0].mxu0
    %v5536 = vadd.f32 %v5365, %v5535
    %v5537 = vpop.f32.mrb[0].mxu0
    %5538 = vmatprep.mubr.f32.mxu0 0.0
    %5539 = vmatmul.mubr.f32.gmra.mrb[0].mxu0 %v5060
    %v5540 = vpop.f32.mrb[0].mxu0
    %v5541 = vadd.f32 %v5366, %v5540
    %v5542 = vpop.f32.mrb[0].mxu0
    %5543 = vmatprep.mubr.f32.mxu0 0.0
    %5544 = vmatmul.mubr.f32.gmra.mrb[0].mxu0 %v5063
    %v5545 = vpop.f32.mrb[0].mxu0
    %v5546 = vadd.f32 %v5367, %v5545
    %v5547 = vpop.f32.mrb[0].mxu0
    %5548 = vmatprep.mubr.f32.mxu0 0.0
    %5549 = vmatmul.mubr.f32.gmra.mrb[0].mxu0 %v5066
    %v5550 = vpop.f32.mrb[0].mxu0
    %v5551 = vadd.f32 %v5368, %v5550
    %v5552 = vpop.f32.mrb[0].mxu0
    %5553 = vmatprep.mubr.f32.mxu0 0.0
    %5554 = vmatmul.mubr.f32.gmra.mrb[0].mxu0 %v5069
    %v5555 = vpop.f32.mrb[0].mxu0
    %v5556 = vadd.f32 %v5369, %v5555
    %v5557 = vpop.f32.mrb[0].mxu0
    %5558 = vmatprep.mubr.f32.mxu0 0.0
    %5559 = vmatmul.mubr.f32.gmra.mrb[0].mxu0 %v5072
    %v5560 = vpop.f32.mrb[0].mxu0
    %v5561 = vadd.f32 %v5370, %v5560
    %v5562 = vpop.f32.mrb[0].mxu0
    %5563 = vmatprep.mubr.f32.mxu0 0.0
    %5564 = vmatmul.mubr.f32.gmra.mrb[0].mxu0 %v5075
    %v5565 = vpop.f32.mrb[0].mxu0
    %v5566 = vadd.f32 %v5371, %v5565
    %v5567 = vpop.f32.mrb[0].mxu0
    %5568 = vmatprep.mubr.f32.mxu0 0.0
    %5569 = vmatmul.mubr.f32.gmra.mrb[0].mxu0 %v5078
    %v5570 = vpop.f32.mrb[0].mxu0
    %v5571 = vadd.f32 %v5372, %v5570
    %v5572 = vpop.f32.mrb[0].mxu0
    %5573 = vmatprep.mubr.f32.mxu0 0.0
    %5574 = vmatmul.mubr.f32.gmra.mrb[0].mxu0 %v5081
    %v5575 = vpop.f32.mrb[0].mxu0
    %v5576 = vadd.f32 %v5373, %v5575
    %v5577 = vpop.f32.mrb[0].mxu0
    %5578 = vmatprep.mubr.f32.mxu0 0.0
    %5579 = vmatmul.mubr.f32.gmra.mrb[0].mxu0 %v5084
    %v5580 = vpop.f32.mrb[0].mxu0
    %v5581 = vadd.f32 %v5374, %v5580
    %v5582 = vpop.f32.mrb[0].mxu0
    %5583 = vdwg.mxu0
    %v5584 = vld [vmem:[%s1261] sm:$0xff]
    %v5585 = vld [vmem:[%s1261 + $0x8] sm:$0xff]
    %v5586 = vld [vmem:[%s1261 + $0x10] sm:$0xff]
    %v5587 = vld [vmem:[%s1261 + $0x18] sm:$0xff]
    %v5588 = vld [vmem:[%s1261 + $0x20] sm:$0xff]
    %v5589 = vld [vmem:[%s1261 + $0x28] sm:$0xff]
    %v5590 = vld [vmem:[%s1261 + $0x30] sm:$0xff]
    %v5591 = vld [vmem:[%s1261 + $0x38] sm:$0xff]
    %v5592 = vld [vmem:[%s1261 + $0x40] sm:$0xff]
    %v5593 = vld [vmem:[%s1261 + $0x48] sm:$0xff]
    %v5594 = vld [vmem:[%s1261 + $0x50] sm:$0xff]
    %v5595 = vld [vmem:[%s1261 + $0x58] sm:$0xff]
    %v5596 = vld [vmem:[%s1261 + $0x60] sm:$0xff]
    %v5597 = vld [vmem:[%s1261 + $0x68] sm:$0xff]
    %v5598 = vld [vmem:[%s1261 + $0x70] sm:$0xff]
    %v5599 = vld [vmem:[%s1261 + $0x78] sm:$0xff]
    %5600 = vset.pattern.permute.xlu0 1
    %5601 = vperm.xlu0 %5600, %v5263
    %v5602 = vpop.permute.xlu0 %5601
    %5604 = vset.pattern.permute.xlu0 1
    %5605 = vperm.xlu0 %5604, %v5264
    %v5606 = vpop.permute.xlu0 %5605
    %5608 = vset.pattern.permute.xlu0 1
    %5609 = vperm.xlu0 %5608, %v5265
    %v5610 = vpop.permute.xlu0 %5609
    %5612 = vset.pattern.permute.xlu0 1
    %5613 = vperm.xlu0 %5612, %v5266
    %v5614 = vpop.permute.xlu0 %5613
    %5616 = vset.pattern.permute.xlu0 1
    %5617 = vperm.xlu0 %5616, %v5267
    %v5618 = vpop.permute.xlu0 %5617
    %5620 = vset.pattern.permute.xlu0 1
    %5621 = vperm.xlu0 %5620, %v5268
    %v5622 = vpop.permute.xlu0 %5621
    %5624 = vset.pattern.permute.xlu0 1
    %5625 = vperm.xlu0 %5624, %v5269
    %v5626 = vpop.permute.xlu0 %5625
    %5628 = vset.pattern.permute.xlu0 1
    %5629 = vperm.xlu0 %5628, %v5270
    %v5630 = vpop.permute.xlu0 %5629
    %5632 = vset.pattern.permute.xlu0 1
    %5633 = vperm.xlu0 %5632, %v5271
    %v5634 = vpop.permute.xlu0 %5633
    %5636 = vset.pattern.permute.xlu0 1
    %5637 = vperm.xlu0 %5636, %v5272
    %v5638 = vpop.permute.xlu0 %5637
    %5640 = vset.pattern.permute.xlu0 1
    %5641 = vperm.xlu0 %5640, %v5273
    %v5642 = vpop.permute.xlu0 %5641
    %5644 = vset.pattern.permute.xlu0 1
    %5645 = vperm.xlu0 %5644, %v5274
    %v5646 = vpop.permute.xlu0 %5645
    %5648 = vset.pattern.permute.xlu0 1
    %5649 = vperm.xlu0 %5648, %v5275
    %v5650 = vpop.permute.xlu0 %5649
    %5652 = vset.pattern.permute.xlu0 1
    %5653 = vperm.xlu0 %5652, %v5276
    %v5654 = vpop.permute.xlu0 %5653
    %5656 = vset.pattern.permute.xlu0 1
    %5657 = vperm.xlu0 %5656, %v5277
    %v5658 = vpop.permute.xlu0 %5657
    %5660 = vset.pattern.permute.xlu0 1
    %5661 = vperm.xlu0 %5660, %v5278
    %v5662 = vpop.permute.xlu0 %5661
    %v5664 = vmul.f32 %v5584, %v5602
    %v5665 = vmul.f32 %v5585, %v5606
    %v5666 = vmul.f32 %v5586, %v5610
    %v5667 = vmul.f32 %v5587, %v5614
    %v5668 = vmul.f32 %v5588, %v5618
    %v5669 = vmul.f32 %v5589, %v5622
    %v5670 = vmul.f32 %v5590, %v5626
    %v5671 = vmul.f32 %v5591, %v5630
    %v5672 = vmul.f32 %v5592, %v5634
    %v5673 = vmul.f32 %v5593, %v5638
    %v5674 = vmul.f32 %v5594, %v5642
    %v5675 = vmul.f32 %v5595, %v5646
    %v5676 = vmul.f32 %v5596, %v5650
    %v5677 = vmul.f32 %v5597, %v5654
    %v5678 = vmul.f32 %v5598, %v5658
    %v5679 = vmul.f32 %v5599, %v5662
    %v5680 = vadd.f32 %v5506, %v5664
    %v5681 = vadd.f32 %v5511, %v5665
    %v5682 = vadd.f32 %v5516, %v5666
    %v5683 = vadd.f32 %v5521, %v5667
    %v5684 = vadd.f32 %v5526, %v5668
    %v5685 = vadd.f32 %v5531, %v5669
    %v5686 = vadd.f32 %v5536, %v5670
    %v5687 = vadd.f32 %v5541, %v5671
    %v5688 = vadd.f32 %v5546, %v5672
    %v5689 = vadd.f32 %v5551, %v5673
    %v5690 = vadd.f32 %v5556, %v5674
    %v5691 = vadd.f32 %v5561, %v5675
    %v5692 = vadd.f32 %v5566, %v5676
    %v5693 = vadd.f32 %v5571, %v5677
    %v5694 = vadd.f32 %v5576, %v5678
    %v5695 = vadd.f32 %v5581, %v5679
    %v5696 = vld [vmem:[%s1374] sm:$0xff]
    %v5697 = vld [vmem:[%s1374 + $0x8] sm:$0xff]
    %v5698 = vld [vmem:[%s1374 + $0x10] sm:$0xff]
    %v5699 = vld [vmem:[%s1374 + $0x18] sm:$0xff]
    %v5700 = vld [vmem:[%s1374 + $0x20] sm:$0xff]
    %v5701 = vld [vmem:[%s1374 + $0x28] sm:$0xff]
    %v5702 = vld [vmem:[%s1374 + $0x30] sm:$0xff]
    %v5703 = vld [vmem:[%s1374 + $0x38] sm:$0xff]
    %v5704 = vld [vmem:[%s1374 + $0x40] sm:$0xff]
    %v5705 = vld [vmem:[%s1374 + $0x48] sm:$0xff]
    %v5706 = vld [vmem:[%s1374 + $0x50] sm:$0xff]
    %v5707 = vld [vmem:[%s1374 + $0x58] sm:$0xff]
    %v5708 = vld [vmem:[%s1374 + $0x60] sm:$0xff]
    %v5709 = vld [vmem:[%s1374 + $0x68] sm:$0xff]
    %v5710 = vld [vmem:[%s1374 + $0x70] sm:$0xff]
    %v5711 = vld [vmem:[%s1374 + $0x78] sm:$0xff]
    %5712 = vset.pattern.permute.xlu0 2
    %5713 = vperm.xlu0 %5712, %v5263
    %v5714 = vpop.permute.xlu0 %5713
    %5716 = vset.pattern.permute.xlu0 2
    %5717 = vperm.xlu0 %5716, %v5264
    %v5718 = vpop.permute.xlu0 %5717
    %5720 = vset.pattern.permute.xlu0 2
    %5721 = vperm.xlu0 %5720, %v5265
    %v5722 = vpop.permute.xlu0 %5721
    %5724 = vset.pattern.permute.xlu0 2
    %5725 = vperm.xlu0 %5724, %v5266
    %v5726 = vpop.permute.xlu0 %5725
    %5728 = vset.pattern.permute.xlu0 2
    %5729 = vperm.xlu0 %5728, %v5267
    %v5730 = vpop.permute.xlu0 %5729
    %5732 = vset.pattern.permute.xlu0 2
    %5733 = vperm.xlu0 %5732, %v5268
    %v5734 = vpop.permute.xlu0 %5733
    %5736 = vset.pattern.permute.xlu0 2
    %5737 = vperm.xlu0 %5736, %v5269
    %v5738 = vpop.permute.xlu0 %5737
    %5740 = vset.pattern.permute.xlu0 2
    %5741 = vperm.xlu0 %5740, %v5270
    %v5742 = vpop.permute.xlu0 %5741
    %5744 = vset.pattern.permute.xlu0 2
    %5745 = vperm.xlu0 %5744, %v5271
    %v5746 = vpop.permute.xlu0 %5745
    %5748 = vset.pattern.permute.xlu0 2
    %5749 = vperm.xlu0 %5748, %v5272
    %v5750 = vpop.permute.xlu0 %5749
    %5752 = vset.pattern.permute.xlu0 2
    %5753 = vperm.xlu0 %5752, %v5273
    %v5754 = vpop.permute.xlu0 %5753
    %5756 = vset.pattern.permute.xlu0 2
    %5757 = vperm.xlu0 %5756, %v5274
    %v5758 = vpop.permute.xlu0 %5757
    %5760 = vset.pattern.permute.xlu0 2
    %5761 = vperm.xlu0 %5760, %v5275
    %v5762 = vpop.permute.xlu0 %5761
    %5764 = vset.pattern.permute.xlu0 2
    %5765 = vperm.xlu0 %5764, %v5276
    %v5766 = vpop.permute.xlu0 %5765
    %5768 = vset.pattern.permute.xlu0 2
    %5769 = vperm.xlu0 %5768, %v5277
    %v5770 = vpop.permute.xlu0 %5769
    %5772 = vset.pattern.permute.xlu0 2
    %5773 = vperm.xlu0 %5772, %v5278
    %v5774 = vpop.permute.xlu0 %5773
    %v5776 = vmul.f32 %v5696, %v5714
    %v5777 = vmul.f32 %v5697, %v5718
    %v5778 = vmul.f32 %v5698, %v5722
    %v5779 = vmul.f32 %v5699, %v5726
    %v5780 = vmul.f32 %v5700, %v5730
    %v5781 = vmul.f32 %v5701, %v5734
    %v5782 = vmul.f32 %v5702, %v5738
    %v5783 = vmul.f32 %v5703, %v5742
    %v5784 = vmul.f32 %v5704, %v5746
    %v5785 = vmul.f32 %v5705, %v5750
    %v5786 = vmul.f32 %v5706, %v5754
    %v5787 = vmul.f32 %v5707, %v5758
    %v5788 = vmul.f32 %v5708, %v5762
    %v5789 = vmul.f32 %v5709, %v5766
    %v5790 = vmul.f32 %v5710, %v5770
    %v5791 = vmul.f32 %v5711, %v5774
    %v5792 = vadd.f32 %v5680, %v5776
    %v5793 = vadd.f32 %v5681, %v5777
    %v5794 = vadd.f32 %v5682, %v5778
    %v5795 = vadd.f32 %v5683, %v5779
    %v5796 = vadd.f32 %v5684, %v5780
    %v5797 = vadd.f32 %v5685, %v5781
    %v5798 = vadd.f32 %v5686, %v5782
    %v5799 = vadd.f32 %v5687, %v5783
    %v5800 = vadd.f32 %v5688, %v5784
    %v5801 = vadd.f32 %v5689, %v5785
    %v5802 = vadd.f32 %v5690, %v5786
    %v5803 = vadd.f32 %v5691, %v5787
    %v5804 = vadd.f32 %v5692, %v5788
    %v5805 = vadd.f32 %v5693, %v5789
    %v5806 = vadd.f32 %v5694, %v5790
    %v5807 = vadd.f32 %v5695, %v5791
    %v5808 = vld [vmem:[%s1487] sm:$0xff]
    %v5809 = vld [vmem:[%s1487 + $0x8] sm:$0xff]
    %v5810 = vld [vmem:[%s1487 + $0x10] sm:$0xff]
    %v5811 = vld [vmem:[%s1487 + $0x18] sm:$0xff]
    %v5812 = vld [vmem:[%s1487 + $0x20] sm:$0xff]
    %v5813 = vld [vmem:[%s1487 + $0x28] sm:$0xff]
    %v5814 = vld [vmem:[%s1487 + $0x30] sm:$0xff]
    %v5815 = vld [vmem:[%s1487 + $0x38] sm:$0xff]
    %v5816 = vld [vmem:[%s1487 + $0x40] sm:$0xff]
    %v5817 = vld [vmem:[%s1487 + $0x48] sm:$0xff]
    %v5818 = vld [vmem:[%s1487 + $0x50] sm:$0xff]
    %v5819 = vld [vmem:[%s1487 + $0x58] sm:$0xff]
    %v5820 = vld [vmem:[%s1487 + $0x60] sm:$0xff]
    %v5821 = vld [vmem:[%s1487 + $0x68] sm:$0xff]
    %v5822 = vld [vmem:[%s1487 + $0x70] sm:$0xff]
    %v5823 = vld [vmem:[%s1487 + $0x78] sm:$0xff]
    %5824 = vset.pattern.permute.xlu0 3
    %5825 = vperm.xlu0 %5824, %v5263
    %v5826 = vpop.permute.xlu0 %5825
    %5828 = vset.pattern.permute.xlu0 3
    %5829 = vperm.xlu0 %5828, %v5264
    %v5830 = vpop.permute.xlu0 %5829
    %5832 = vset.pattern.permute.xlu0 3
    %5833 = vperm.xlu0 %5832, %v5265
    %v5834 = vpop.permute.xlu0 %5833
    %5836 = vset.pattern.permute.xlu0 3
    %5837 = vperm.xlu0 %5836, %v5266
    %v5838 = vpop.permute.xlu0 %5837
    %5840 = vset.pattern.permute.xlu0 3
    %5841 = vperm.xlu0 %5840, %v5267
    %v5842 = vpop.permute.xlu0 %5841
    %5844 = vset.pattern.permute.xlu0 3
    %5845 = vperm.xlu0 %5844, %v5268
    %v5846 = vpop.permute.xlu0 %5845
    %5848 = vset.pattern.permute.xlu0 3
    %5849 = vperm.xlu0 %5848, %v5269
    %v5850 = vpop.permute.xlu0 %5849
    %5852 = vset.pattern.permute.xlu0 3
    %5853 = vperm.xlu0 %5852, %v5270
    %v5854 = vpop.permute.xlu0 %5853
    %5856 = vset.pattern.permute.xlu0 3
    %5857 = vperm.xlu0 %5856, %v5271
    %v5858 = vpop.permute.xlu0 %5857
    %5860 = vset.pattern.permute.xlu0 3
    %5861 = vperm.xlu0 %5860, %v5272
    %v5862 = vpop.permute.xlu0 %5861
    %5864 = vset.pattern.permute.xlu0 3
    %5865 = vperm.xlu0 %5864, %v5273
    %v5866 = vpop.permute.xlu0 %5865
    %5868 = vset.pattern.permute.xlu0 3
    %5869 = vperm.xlu0 %5868, %v5274
    %v5870 = vpop.permute.xlu0 %5869
    %5872 = vset.pattern.permute.xlu0 3
    %5873 = vperm.xlu0 %5872, %v5275
    %v5874 = vpop.permute.xlu0 %5873
    %5876 = vset.pattern.permute.xlu0 3
    %5877 = vperm.xlu0 %5876, %v5276
    %v5878 = vpop.permute.xlu0 %5877
    %5880 = vset.pattern.permute.xlu0 3
    %5881 = vperm.xlu0 %5880, %v5277
    %v5882 = vpop.permute.xlu0 %5881
    %5884 = vset.pattern.permute.xlu0 3
    %5885 = vperm.xlu0 %5884, %v5278
    %v5886 = vpop.permute.xlu0 %5885
    %v5888 = vmul.f32 %v5808, %v5826
    %v5889 = vmul.f32 %v5809, %v5830
    %v5890 = vmul.f32 %v5810, %v5834
    %v5891 = vmul.f32 %v5811, %v5838
    %v5892 = vmul.f32 %v5812, %v5842
    %v5893 = vmul.f32 %v5813, %v5846
    %v5894 = vmul.f32 %v5814, %v5850
    %v5895 = vmul.f32 %v5815, %v5854
    %v5896 = vmul.f32 %v5816, %v5858
    %v5897 = vmul.f32 %v5817, %v5862
    %v5898 = vmul.f32 %v5818, %v5866
    %v5899 = vmul.f32 %v5819, %v5870
    %v5900 = vmul.f32 %v5820, %v5874
    %v5901 = vmul.f32 %v5821, %v5878
    %v5902 = vmul.f32 %v5822, %v5882
    %v5903 = vmul.f32 %v5823, %v5886
    %v5904 = vadd.f32 %v5792, %v5888
    %v5905 = vadd.f32 %v5793, %v5889
    %v5906 = vadd.f32 %v5794, %v5890
    %v5907 = vadd.f32 %v5795, %v5891
    %v5908 = vadd.f32 %v5796, %v5892
    %v5909 = vadd.f32 %v5797, %v5893
    %v5910 = vadd.f32 %v5798, %v5894
    %v5911 = vadd.f32 %v5799, %v5895
    %v5912 = vadd.f32 %v5800, %v5896
    %v5913 = vadd.f32 %v5801, %v5897
    %v5914 = vadd.f32 %v5802, %v5898
    %v5915 = vadd.f32 %v5803, %v5899
    %v5916 = vadd.f32 %v5804, %v5900
    %v5917 = vadd.f32 %v5805, %v5901
    %v5918 = vadd.f32 %v5806, %v5902
    %v5919 = vadd.f32 %v5807, %v5903
    %v5920 = vmul.f32 %v5904, 0.17677669
    %v5921 = vmul.f32 %v5905, 0.17677669
    %v5922 = vmul.f32 %v5906, 0.17677669
    %v5923 = vmul.f32 %v5907, 0.17677669
    %v5924 = vmul.f32 %v5908, 0.17677669
    %v5925 = vmul.f32 %v5909, 0.17677669
    %v5926 = vmul.f32 %v5910, 0.17677669
    %v5927 = vmul.f32 %v5911, 0.17677669
    %v5928 = vmul.f32 %v5912, 0.17677669
    %v5929 = vmul.f32 %v5913, 0.17677669
    %v5930 = vmul.f32 %v5914, 0.17677669
    %v5931 = vmul.f32 %v5915, 0.17677669
    %v5932 = vmul.f32 %v5916, 0.17677669
    %v5933 = vmul.f32 %v5917, 0.17677669
    %v5934 = vmul.f32 %v5918, 0.17677669
    %v5935 = vmul.f32 %v5919, 0.17677669
    %v5936 = vsel %vm1616, %v5920, -1e+30
    %v5937 = vsel %vm1617, %v5921, -1e+30
    %v5938 = vsel %vm1618, %v5922, -1e+30
    %v5939 = vsel %vm1619, %v5923, -1e+30
    %v5940 = vsel %vm1620, %v5924, -1e+30
    %v5941 = vsel %vm1621, %v5925, -1e+30
    %v5942 = vsel %vm1622, %v5926, -1e+30
    %v5943 = vsel %vm1623, %v5927, -1e+30
    %v5944 = vsel %vm1624, %v5928, -1e+30
    %v5945 = vsel %vm1625, %v5929, -1e+30
    %v5946 = vsel %vm1626, %v5930, -1e+30
    %v5947 = vsel %vm1627, %v5931, -1e+30
    %v5948 = vsel %vm1628, %v5932, -1e+30
    %v5949 = vsel %vm1629, %v5933, -1e+30
    %v5950 = vsel %vm1630, %v5934, -1e+30
    %v5951 = vsel %vm1631, %v5935, -1e+30
    %5952 = vmax.xlane.f32.xlu0 %v5936
    %v5953 = vpop.xlane.xlu0 %5952
    %5954 = vmax.xlane.f32.xlu0 %v5937
    %v5955 = vpop.xlane.xlu0 %5954
    %5956 = vmax.xlane.f32.xlu0 %v5938
    %v5957 = vpop.xlane.xlu0 %5956
    %5958 = vmax.xlane.f32.xlu0 %v5939
    %v5959 = vpop.xlane.xlu0 %5958
    %5960 = vmax.xlane.f32.xlu0 %v5940
    %v5961 = vpop.xlane.xlu0 %5960
    %5962 = vmax.xlane.f32.xlu0 %v5941
    %v5963 = vpop.xlane.xlu0 %5962
    %5964 = vmax.xlane.f32.xlu0 %v5942
    %v5965 = vpop.xlane.xlu0 %5964
    %5966 = vmax.xlane.f32.xlu0 %v5943
    %v5967 = vpop.xlane.xlu0 %5966
    %5968 = vmax.xlane.f32.xlu0 %v5944
    %v5969 = vpop.xlane.xlu0 %5968
    %5970 = vmax.xlane.f32.xlu0 %v5945
    %v5971 = vpop.xlane.xlu0 %5970
    %5972 = vmax.xlane.f32.xlu0 %v5946
    %v5973 = vpop.xlane.xlu0 %5972
    %5974 = vmax.xlane.f32.xlu0 %v5947
    %v5975 = vpop.xlane.xlu0 %5974
    %5976 = vmax.xlane.f32.xlu0 %v5948
    %v5977 = vpop.xlane.xlu0 %5976
    %5978 = vmax.xlane.f32.xlu0 %v5949
    %v5979 = vpop.xlane.xlu0 %5978
    %5980 = vmax.xlane.f32.xlu0 %v5950
    %v5981 = vpop.xlane.xlu0 %5980
    %5982 = vmax.xlane.f32.xlu0 %v5951
    %v5983 = vpop.xlane.xlu0 %5982
    %v5984 = vsub.f32 %v5936, %v5953
    %v5985 = vsub.f32 %v5937, %v5955
    %v5986 = vsub.f32 %v5938, %v5957
    %v5987 = vsub.f32 %v5939, %v5959
    %v5988 = vsub.f32 %v5940, %v5961
    %v5989 = vsub.f32 %v5941, %v5963
    %v5990 = vsub.f32 %v5942, %v5965
    %v5991 = vsub.f32 %v5943, %v5967
    %v5992 = vsub.f32 %v5944, %v5969
    %v5993 = vsub.f32 %v5945, %v5971
    %v5994 = vsub.f32 %v5946, %v5973
    %v5995 = vsub.f32 %v5947, %v5975
    %v5996 = vsub.f32 %v5948, %v5977
    %v5997 = vsub.f32 %v5949, %v5979
    %v5998 = vsub.f32 %v5950, %v5981
    %v5999 = vsub.f32 %v5951, %v5983
    %v6000 = vmul.f32 %v5984, 1.442695
    %v6001 = vpow.pop %v6000
    %v6002 = vmul.f32 %v5985, 1.442695
    %v6003 = vpow.pop %v6002
    %v6004 = vmul.f32 %v5986, 1.442695
    %v6005 = vpow.pop %v6004
    %v6006 = vmul.f32 %v5987, 1.442695
    %v6007 = vpow.pop %v6006
    %v6008 = vmul.f32 %v5988, 1.442695
    %v6009 = vpow.pop %v6008
    %v6010 = vmul.f32 %v5989, 1.442695
    %v6011 = vpow.pop %v6010
    %v6012 = vmul.f32 %v5990, 1.442695
    %v6013 = vpow.pop %v6012
    %v6014 = vmul.f32 %v5991, 1.442695
    %v6015 = vpow.pop %v6014
    %v6016 = vmul.f32 %v5992, 1.442695
    %v6017 = vpow.pop %v6016
    %v6018 = vmul.f32 %v5993, 1.442695
    %v6019 = vpow.pop %v6018
    %v6020 = vmul.f32 %v5994, 1.442695
    %v6021 = vpow.pop %v6020
    %v6022 = vmul.f32 %v5995, 1.442695
    %v6023 = vpow.pop %v6022
    %v6024 = vmul.f32 %v5996, 1.442695
    %v6025 = vpow.pop %v6024
    %v6026 = vmul.f32 %v5997, 1.442695
    %v6027 = vpow.pop %v6026
    %v6028 = vmul.f32 %v5998, 1.442695
    %v6029 = vpow.pop %v6028
    %v6030 = vmul.f32 %v5999, 1.442695
    %v6031 = vpow.pop %v6030
    %v6032 = vmul.f32 %v6001, %v125
    %v6033 = vmul.f32 %v6003, %v126
    %v6034 = vmul.f32 %v6005, %v127
    %v6035 = vmul.f32 %v6007, %v128
    %v6036 = vmul.f32 %v6009, %v129
    %v6037 = vmul.f32 %v6011, %v130
    %v6038 = vmul.f32 %v6013, %v131
    %v6039 = vmul.f32 %v6015, %v132
    %v6040 = vmul.f32 %v6017, %v133
    %v6041 = vmul.f32 %v6019, %v134
    %v6042 = vmul.f32 %v6021, %v135
    %v6043 = vmul.f32 %v6023, %v136
    %v6044 = vmul.f32 %v6025, %v137
    %v6045 = vmul.f32 %v6027, %v138
    %v6046 = vmul.f32 %v6029, %v139
    %v6047 = vmul.f32 %v6031, %v140
    %6048 = vadd.xlane.f32.xlu0 %v6032
    %v6049 = vpop.xlane.xlu0 %6048
    %6050 = vadd.xlane.f32.xlu0 %v6033
    %v6051 = vpop.xlane.xlu0 %6050
    %6052 = vadd.xlane.f32.xlu0 %v6034
    %v6053 = vpop.xlane.xlu0 %6052
    %6054 = vadd.xlane.f32.xlu0 %v6035
    %v6055 = vpop.xlane.xlu0 %6054
    %6056 = vadd.xlane.f32.xlu0 %v6036
    %v6057 = vpop.xlane.xlu0 %6056
    %6058 = vadd.xlane.f32.xlu0 %v6037
    %v6059 = vpop.xlane.xlu0 %6058
    %6060 = vadd.xlane.f32.xlu0 %v6038
    %v6061 = vpop.xlane.xlu0 %6060
    %6062 = vadd.xlane.f32.xlu0 %v6039
    %v6063 = vpop.xlane.xlu0 %6062
    %6064 = vadd.xlane.f32.xlu0 %v6040
    %v6065 = vpop.xlane.xlu0 %6064
    %6066 = vadd.xlane.f32.xlu0 %v6041
    %v6067 = vpop.xlane.xlu0 %6066
    %6068 = vadd.xlane.f32.xlu0 %v6042
    %v6069 = vpop.xlane.xlu0 %6068
    %6070 = vadd.xlane.f32.xlu0 %v6043
    %v6071 = vpop.xlane.xlu0 %6070
    %6072 = vadd.xlane.f32.xlu0 %v6044
    %v6073 = vpop.xlane.xlu0 %6072
    %6074 = vadd.xlane.f32.xlu0 %v6045
    %v6075 = vpop.xlane.xlu0 %6074
    %6076 = vadd.xlane.f32.xlu0 %v6046
    %v6077 = vpop.xlane.xlu0 %6076
    %6078 = vadd.xlane.f32.xlu0 %v6047
    %v6079 = vpop.xlane.xlu0 %6078
    %v6080 = vmax.f32 %v6049, 1e-30
    %v6081 = vmax.f32 %v6051, 1e-30
    %v6082 = vmax.f32 %v6053, 1e-30
    %v6083 = vmax.f32 %v6055, 1e-30
    %v6084 = vmax.f32 %v6057, 1e-30
    %v6085 = vmax.f32 %v6059, 1e-30
    %v6086 = vmax.f32 %v6061, 1e-30
    %v6087 = vmax.f32 %v6063, 1e-30
    %v6088 = vmax.f32 %v6065, 1e-30
    %v6089 = vmax.f32 %v6067, 1e-30
    %v6090 = vmax.f32 %v6069, 1e-30
    %v6091 = vmax.f32 %v6071, 1e-30
    %v6092 = vmax.f32 %v6073, 1e-30
    %v6093 = vmax.f32 %v6075, 1e-30
    %v6094 = vmax.f32 %v6077, 1e-30
    %v6095 = vmax.f32 %v6079, 1e-30
    %v6096 = vrcp.pop %v6080
    %v6097 = vrcp.pop %v6081
    %v6098 = vrcp.pop %v6082
    %v6099 = vrcp.pop %v6083
    %v6100 = vrcp.pop %v6084
    %v6101 = vrcp.pop %v6085
    %v6102 = vrcp.pop %v6086
    %v6103 = vrcp.pop %v6087
    %v6104 = vrcp.pop %v6088
    %v6105 = vrcp.pop %v6089
    %v6106 = vrcp.pop %v6090
    %v6107 = vrcp.pop %v6091
    %v6108 = vrcp.pop %v6092
    %v6109 = vrcp.pop %v6093
    %v6110 = vrcp.pop %v6094
    %v6111 = vrcp.pop %v6095
    %v6112 = vmul.f32 %v6032, %v6096
    %v6113 = vmul.f32 %v6033, %v6097
    %v6114 = vmul.f32 %v6034, %v6098
    %v6115 = vmul.f32 %v6035, %v6099
    %v6116 = vmul.f32 %v6036, %v6100
    %v6117 = vmul.f32 %v6037, %v6101
    %v6118 = vmul.f32 %v6038, %v6102
    %v6119 = vmul.f32 %v6039, %v6103
    %v6120 = vmul.f32 %v6040, %v6104
    %v6121 = vmul.f32 %v6041, %v6105
    %v6122 = vmul.f32 %v6042, %v6106
    %v6123 = vmul.f32 %v6043, %v6107
    %v6124 = vmul.f32 %v6044, %v6108
    %v6125 = vmul.f32 %v6045, %v6109
    %v6126 = vmul.f32 %v6046, %v6110
    %v6127 = vmul.f32 %v6047, %v6111
    %v6128 = vmul.f32 %v6112, %v5247
    %v6129 = vmul.f32 %v6113, %v5248
    %v6130 = vmul.f32 %v6114, %v5249
    %v6131 = vmul.f32 %v6115, %v5250
    %v6132 = vmul.f32 %v6116, %v5251
    %v6133 = vmul.f32 %v6117, %v5252
    %v6134 = vmul.f32 %v6118, %v5253
    %v6135 = vmul.f32 %v6119, %v5254
    %v6136 = vmul.f32 %v6120, %v5255
    %v6137 = vmul.f32 %v6121, %v5256
    %v6138 = vmul.f32 %v6122, %v5257
    %v6139 = vmul.f32 %v6123, %v5258
    %v6140 = vmul.f32 %v6124, %v5259
    %v6141 = vmul.f32 %v6125, %v5260
    %v6142 = vmul.f32 %v6126, %v5261
    %v6143 = vmul.f32 %v6127, %v5262
    %6144 = vadd.xlane.f32.xlu0 %v6128
    %v6145 = vpop.xlane.xlu0 %6144
    %6146 = vadd.xlane.f32.xlu0 %v6129
    %v6147 = vpop.xlane.xlu0 %6146
    %6148 = vadd.xlane.f32.xlu0 %v6130
    %v6149 = vpop.xlane.xlu0 %6148
    %6150 = vadd.xlane.f32.xlu0 %v6131
    %v6151 = vpop.xlane.xlu0 %6150
    %6152 = vadd.xlane.f32.xlu0 %v6132
    %v6153 = vpop.xlane.xlu0 %6152
    %6154 = vadd.xlane.f32.xlu0 %v6133
    %v6155 = vpop.xlane.xlu0 %6154
    %6156 = vadd.xlane.f32.xlu0 %v6134
    %v6157 = vpop.xlane.xlu0 %6156
    %6158 = vadd.xlane.f32.xlu0 %v6135
    %v6159 = vpop.xlane.xlu0 %6158
    %6160 = vadd.xlane.f32.xlu0 %v6136
    %v6161 = vpop.xlane.xlu0 %6160
    %6162 = vadd.xlane.f32.xlu0 %v6137
    %v6163 = vpop.xlane.xlu0 %6162
    %6164 = vadd.xlane.f32.xlu0 %v6138
    %v6165 = vpop.xlane.xlu0 %6164
    %6166 = vadd.xlane.f32.xlu0 %v6139
    %v6167 = vpop.xlane.xlu0 %6166
    %6168 = vadd.xlane.f32.xlu0 %v6140
    %v6169 = vpop.xlane.xlu0 %6168
    %6170 = vadd.xlane.f32.xlu0 %v6141
    %v6171 = vpop.xlane.xlu0 %6170
    %6172 = vadd.xlane.f32.xlu0 %v6142
    %v6173 = vpop.xlane.xlu0 %6172
    %6174 = vadd.xlane.f32.xlu0 %v6143
    %v6175 = vpop.xlane.xlu0 %6174
    %v6176 = vmul.f32 %v6112, %v5584
    %v6177 = vmul.f32 %v6113, %v5585
    %v6178 = vmul.f32 %v6114, %v5586
    %v6179 = vmul.f32 %v6115, %v5587
    %v6180 = vmul.f32 %v6116, %v5588
    %v6181 = vmul.f32 %v6117, %v5589
    %v6182 = vmul.f32 %v6118, %v5590
    %v6183 = vmul.f32 %v6119, %v5591
    %v6184 = vmul.f32 %v6120, %v5592
    %v6185 = vmul.f32 %v6121, %v5593
    %v6186 = vmul.f32 %v6122, %v5594
    %v6187 = vmul.f32 %v6123, %v5595
    %v6188 = vmul.f32 %v6124, %v5596
    %v6189 = vmul.f32 %v6125, %v5597
    %v6190 = vmul.f32 %v6126, %v5598
    %v6191 = vmul.f32 %v6127, %v5599
    %6192 = vadd.xlane.f32.xlu0 %v6176
    %v6193 = vpop.xlane.xlu0 %6192
    %6194 = vadd.xlane.f32.xlu0 %v6177
    %v6195 = vpop.xlane.xlu0 %6194
    %6196 = vadd.xlane.f32.xlu0 %v6178
    %v6197 = vpop.xlane.xlu0 %6196
    %6198 = vadd.xlane.f32.xlu0 %v6179
    %v6199 = vpop.xlane.xlu0 %6198
    %6200 = vadd.xlane.f32.xlu0 %v6180
    %v6201 = vpop.xlane.xlu0 %6200
    %6202 = vadd.xlane.f32.xlu0 %v6181
    %v6203 = vpop.xlane.xlu0 %6202
    %6204 = vadd.xlane.f32.xlu0 %v6182
    %v6205 = vpop.xlane.xlu0 %6204
    %6206 = vadd.xlane.f32.xlu0 %v6183
    %v6207 = vpop.xlane.xlu0 %6206
    %6208 = vadd.xlane.f32.xlu0 %v6184
    %v6209 = vpop.xlane.xlu0 %6208
    %6210 = vadd.xlane.f32.xlu0 %v6185
    %v6211 = vpop.xlane.xlu0 %6210
    %6212 = vadd.xlane.f32.xlu0 %v6186
    %v6213 = vpop.xlane.xlu0 %6212
    %6214 = vadd.xlane.f32.xlu0 %v6187
    %v6215 = vpop.xlane.xlu0 %6214
    %6216 = vadd.xlane.f32.xlu0 %v6188
    %v6217 = vpop.xlane.xlu0 %6216
    %6218 = vadd.xlane.f32.xlu0 %v6189
    %v6219 = vpop.xlane.xlu0 %6218
    %6220 = vadd.xlane.f32.xlu0 %v6190
    %v6221 = vpop.xlane.xlu0 %6220
    %6222 = vadd.xlane.f32.xlu0 %v6191
    %v6223 = vpop.xlane.xlu0 %6222
    %v6224 = vmul.f32 %v6112, %v5696
    %v6225 = vmul.f32 %v6113, %v5697
    %v6226 = vmul.f32 %v6114, %v5698
    %v6227 = vmul.f32 %v6115, %v5699
    %v6228 = vmul.f32 %v6116, %v5700
    %v6229 = vmul.f32 %v6117, %v5701
    %v6230 = vmul.f32 %v6118, %v5702
    %v6231 = vmul.f32 %v6119, %v5703
    %v6232 = vmul.f32 %v6120, %v5704
    %v6233 = vmul.f32 %v6121, %v5705
    %v6234 = vmul.f32 %v6122, %v5706
    %v6235 = vmul.f32 %v6123, %v5707
    %v6236 = vmul.f32 %v6124, %v5708
    %v6237 = vmul.f32 %v6125, %v5709
    %v6238 = vmul.f32 %v6126, %v5710
    %v6239 = vmul.f32 %v6127, %v5711
    %6240 = vadd.xlane.f32.xlu0 %v6224
    %v6241 = vpop.xlane.xlu0 %6240
    %6242 = vadd.xlane.f32.xlu0 %v6225
    %v6243 = vpop.xlane.xlu0 %6242
    %6244 = vadd.xlane.f32.xlu0 %v6226
    %v6245 = vpop.xlane.xlu0 %6244
    %6246 = vadd.xlane.f32.xlu0 %v6227
    %v6247 = vpop.xlane.xlu0 %6246
    %6248 = vadd.xlane.f32.xlu0 %v6228
    %v6249 = vpop.xlane.xlu0 %6248
    %6250 = vadd.xlane.f32.xlu0 %v6229
    %v6251 = vpop.xlane.xlu0 %6250
    %6252 = vadd.xlane.f32.xlu0 %v6230
    %v6253 = vpop.xlane.xlu0 %6252
    %6254 = vadd.xlane.f32.xlu0 %v6231
    %v6255 = vpop.xlane.xlu0 %6254
    %6256 = vadd.xlane.f32.xlu0 %v6232
    %v6257 = vpop.xlane.xlu0 %6256
    %6258 = vadd.xlane.f32.xlu0 %v6233
    %v6259 = vpop.xlane.xlu0 %6258
    %6260 = vadd.xlane.f32.xlu0 %v6234
    %v6261 = vpop.xlane.xlu0 %6260
    %6262 = vadd.xlane.f32.xlu0 %v6235
    %v6263 = vpop.xlane.xlu0 %6262
    %6264 = vadd.xlane.f32.xlu0 %v6236
    %v6265 = vpop.xlane.xlu0 %6264
    %6266 = vadd.xlane.f32.xlu0 %v6237
    %v6267 = vpop.xlane.xlu0 %6266
    %6268 = vadd.xlane.f32.xlu0 %v6238
    %v6269 = vpop.xlane.xlu0 %6268
    %6270 = vadd.xlane.f32.xlu0 %v6239
    %v6271 = vpop.xlane.xlu0 %6270
    %v6272 = vmul.f32 %v6112, %v5808
    %v6273 = vmul.f32 %v6113, %v5809
    %v6274 = vmul.f32 %v6114, %v5810
    %v6275 = vmul.f32 %v6115, %v5811
    %v6276 = vmul.f32 %v6116, %v5812
    %v6277 = vmul.f32 %v6117, %v5813
    %v6278 = vmul.f32 %v6118, %v5814
    %v6279 = vmul.f32 %v6119, %v5815
    %v6280 = vmul.f32 %v6120, %v5816
    %v6281 = vmul.f32 %v6121, %v5817
    %v6282 = vmul.f32 %v6122, %v5818
    %v6283 = vmul.f32 %v6123, %v5819
    %v6284 = vmul.f32 %v6124, %v5820
    %v6285 = vmul.f32 %v6125, %v5821
    %v6286 = vmul.f32 %v6126, %v5822
    %v6287 = vmul.f32 %v6127, %v5823
    %6288 = vadd.xlane.f32.xlu0 %v6272
    %v6289 = vpop.xlane.xlu0 %6288
    %6290 = vadd.xlane.f32.xlu0 %v6273
    %v6291 = vpop.xlane.xlu0 %6290
    %6292 = vadd.xlane.f32.xlu0 %v6274
    %v6293 = vpop.xlane.xlu0 %6292
    %6294 = vadd.xlane.f32.xlu0 %v6275
    %v6295 = vpop.xlane.xlu0 %6294
    %6296 = vadd.xlane.f32.xlu0 %v6276
    %v6297 = vpop.xlane.xlu0 %6296
    %6298 = vadd.xlane.f32.xlu0 %v6277
    %v6299 = vpop.xlane.xlu0 %6298
    %6300 = vadd.xlane.f32.xlu0 %v6278
    %v6301 = vpop.xlane.xlu0 %6300
    %6302 = vadd.xlane.f32.xlu0 %v6279
    %v6303 = vpop.xlane.xlu0 %6302
    %6304 = vadd.xlane.f32.xlu0 %v6280
    %v6305 = vpop.xlane.xlu0 %6304
    %6306 = vadd.xlane.f32.xlu0 %v6281
    %v6307 = vpop.xlane.xlu0 %6306
    %6308 = vadd.xlane.f32.xlu0 %v6282
    %v6309 = vpop.xlane.xlu0 %6308
    %6310 = vadd.xlane.f32.xlu0 %v6283
    %v6311 = vpop.xlane.xlu0 %6310
    %6312 = vadd.xlane.f32.xlu0 %v6284
    %v6313 = vpop.xlane.xlu0 %6312
    %6314 = vadd.xlane.f32.xlu0 %v6285
    %v6315 = vpop.xlane.xlu0 %6314
    %6316 = vadd.xlane.f32.xlu0 %v6286
    %v6317 = vpop.xlane.xlu0 %6316
    %6318 = vadd.xlane.f32.xlu0 %v6287
    %v6319 = vpop.xlane.xlu0 %6318
    %v6320 = vsel %vm2016, %v6145, %v6193
    %v6321 = vsel %vm2016, %v6147, %v6195
    %v6322 = vsel %vm2016, %v6149, %v6197
    %v6323 = vsel %vm2016, %v6151, %v6199
    %v6324 = vsel %vm2016, %v6153, %v6201
    %v6325 = vsel %vm2016, %v6155, %v6203
    %v6326 = vsel %vm2016, %v6157, %v6205
    %v6327 = vsel %vm2016, %v6159, %v6207
    %v6328 = vsel %vm2016, %v6161, %v6209
    %v6329 = vsel %vm2016, %v6163, %v6211
    %v6330 = vsel %vm2016, %v6165, %v6213
    %v6331 = vsel %vm2016, %v6167, %v6215
    %v6332 = vsel %vm2016, %v6169, %v6217
    %v6333 = vsel %vm2016, %v6171, %v6219
    %v6334 = vsel %vm2016, %v6173, %v6221
    %v6335 = vsel %vm2016, %v6175, %v6223
    %v6336 = vsel %vm2033, %v6320, %v6241
    %v6337 = vsel %vm2033, %v6321, %v6243
    %v6338 = vsel %vm2033, %v6322, %v6245
    %v6339 = vsel %vm2033, %v6323, %v6247
    %v6340 = vsel %vm2033, %v6324, %v6249
    %v6341 = vsel %vm2033, %v6325, %v6251
    %v6342 = vsel %vm2033, %v6326, %v6253
    %v6343 = vsel %vm2033, %v6327, %v6255
    %v6344 = vsel %vm2033, %v6328, %v6257
    %v6345 = vsel %vm2033, %v6329, %v6259
    %v6346 = vsel %vm2033, %v6330, %v6261
    %v6347 = vsel %vm2033, %v6331, %v6263
    %v6348 = vsel %vm2033, %v6332, %v6265
    %v6349 = vsel %vm2033, %v6333, %v6267
    %v6350 = vsel %vm2033, %v6334, %v6269
    %v6351 = vsel %vm2033, %v6335, %v6271
    %v6352 = vsel %vm2050, %v6336, %v6289
    %v6353 = vsel %vm2050, %v6337, %v6291
    %v6354 = vsel %vm2050, %v6338, %v6293
    %v6355 = vsel %vm2050, %v6339, %v6295
    %v6356 = vsel %vm2050, %v6340, %v6297
    %v6357 = vsel %vm2050, %v6341, %v6299
    %v6358 = vsel %vm2050, %v6342, %v6301
    %v6359 = vsel %vm2050, %v6343, %v6303
    %v6360 = vsel %vm2050, %v6344, %v6305
    %v6361 = vsel %vm2050, %v6345, %v6307
    %v6362 = vsel %vm2050, %v6346, %v6309
    %v6363 = vsel %vm2050, %v6347, %v6311
    %v6364 = vsel %vm2050, %v6348, %v6313
    %v6365 = vsel %vm2050, %v6349, %v6315
    %v6366 = vsel %vm2050, %v6350, %v6317
    %v6367 = vsel %vm2050, %v6351, %v6319
    %v6369 = vsel %vm907, %v6352, 0
    %v6372 = vsel %vm907, %v6353, 0
    %v6375 = vsel %vm907, %v6354, 0
    %v6378 = vsel %vm907, %v6355, 0
    %v6381 = vsel %vm907, %v6356, 0
    %v6384 = vsel %vm907, %v6357, 0
    %v6387 = vsel %vm907, %v6358, 0
    %v6390 = vsel %vm907, %v6359, 0
    %v6393 = vsel %vm907, %v6360, 0
    %v6396 = vsel %vm907, %v6361, 0
    %v6399 = vsel %vm907, %v6362, 0
    %v6402 = vsel %vm907, %v6363, 0
    %v6405 = vsel %vm907, %v6364, 0
    %v6408 = vsel %vm907, %v6365, 0
    %v6411 = vsel %vm907, %v6366, 0
    %v6414 = vsel %vm907, %v6367, 0
    %6416 = vmatprep.subr.mxu0 0.0
    %6417 = vmatpush1.msra.mxu0 %v2116
    %6418 = vmatprep.subr.mxu0 0.0
    %6419 = vmatpush1.msra.mxu0 0.0
    %6420 = vmatprep.subr.mxu0 0.0
    %6421 = vmatpush1.msra.mxu0 0.0
    %6422 = vmatprep.subr.mxu0 0.0
    %6423 = vmatpush1.msra.mxu0 0.0
    %6424 = vmatprep.subr.mxu0 0.0
    %6425 = vmatpush1.msra.mxu0 0.0
    %6426 = vmatprep.subr.mxu0 0.0
    %6427 = vmatpush1.msra.mxu0 0.0
    %6428 = vmatprep.subr.mxu0 0.0
    %6429 = vmatpush1.msra.mxu0 0.0
    %6430 = vmatprep.subr.mxu0 0.0
    %6431 = vmatpush1.msra.mxu0 0.0
    %6432 = vmatprep.subr.mxu0 0.0
    %6433 = vmatpush1.msra.mxu0 0.0
    %6434 = vmatprep.subr.mxu0 0.0
    %6435 = vmatpush1.msra.mxu0 0.0
    %6436 = vmatprep.subr.mxu0 0.0
    %6437 = vmatpush1.msra.mxu0 0.0
    %6438 = vmatprep.subr.mxu0 0.0
    %6439 = vmatpush1.msra.mxu0 0.0
    %6440 = vmatprep.subr.mxu0 0.0
    %6441 = vmatpush1.msra.mxu0 0.0
    %6442 = vmatprep.subr.mxu0 0.0
    %6443 = vmatpush1.msra.mxu0 0.0
    %6444 = vmatprep.subr.mxu0 0.0
    %6445 = vmatpush1.msra.mxu0 0.0
    %6446 = vmatprep.subr.mxu0 0.0
    %6447 = vmatpush1.msra.mxu0 0.0
    %6448 = vmatprep.subr.mxu0 0.0
    %6449 = vmatpush1.msra.mxu0 0.0
    %6450 = vmatprep.subr.mxu0 0.0
    %6451 = vmatpush1.msra.mxu0 0.0
    %6452 = vmatprep.subr.mxu0 0.0
    %6453 = vmatpush1.msra.mxu0 0.0
    %6454 = vmatprep.subr.mxu0 0.0
    %6455 = vmatpush1.msra.mxu0 0.0
    %6456 = vmatprep.subr.mxu0 0.0
    %6457 = vmatpush1.msra.mxu0 0.0
    %6458 = vmatprep.subr.mxu0 0.0
    %6459 = vmatpush1.msra.mxu0 0.0
    %6460 = vmatprep.subr.mxu0 0.0
    %6461 = vmatpush1.msra.mxu0 0.0
    %6462 = vmatprep.subr.mxu0 0.0
    %6463 = vmatpush1.msra.mxu0 0.0
    %6464 = vmatprep.subr.mxu0 0.0
    %6465 = vmatpush1.msra.mxu0 0.0
    %6466 = vmatprep.subr.mxu0 0.0
    %6467 = vmatpush1.msra.mxu0 0.0
    %6468 = vmatprep.subr.mxu0 0.0
    %6469 = vmatpush1.msra.mxu0 0.0
    %6470 = vmatprep.subr.mxu0 0.0
    %6471 = vmatpush1.msra.mxu0 0.0
    %6472 = vmatprep.subr.mxu0 0.0
    %6473 = vmatpush1.msra.mxu0 0.0
    %6474 = vmatprep.subr.mxu0 0.0
    %6475 = vmatpush1.msra.mxu0 0.0
    %6476 = vmatprep.subr.mxu0 0.0
    %6477 = vmatpush1.msra.mxu0 0.0
    %6478 = vmatprep.subr.mxu0 0.0
    %6479 = vmatpush1.msra.mxu0 0.0
    %6480 = vmatprep.mubr.f32.mxu0 0.0
    %6481 = vmatmul.mubr.f32.gmra.mrb[0].mxu0 %v6369
    %v6482 = vpop.f32.mrb[0].mxu0
    %v6483 = vadd.f32 0.0, %v6482
    %v6484 = vpop.f32.mrb[0].mxu0
    %6485 = vmatprep.mubr.f32.mxu0 0.0
    %6486 = vmatmul.mubr.f32.gmra.mrb[0].mxu0 %v6372
    %v6487 = vpop.f32.mrb[0].mxu0
    %v6488 = vadd.f32 0.0, %v6487
    %v6489 = vpop.f32.mrb[0].mxu0
    %6490 = vmatprep.mubr.f32.mxu0 0.0
    %6491 = vmatmul.mubr.f32.gmra.mrb[0].mxu0 %v6375
    %v6492 = vpop.f32.mrb[0].mxu0
    %v6493 = vadd.f32 0.0, %v6492
    %v6494 = vpop.f32.mrb[0].mxu0
    %6495 = vmatprep.mubr.f32.mxu0 0.0
    %6496 = vmatmul.mubr.f32.gmra.mrb[0].mxu0 %v6378
    %v6497 = vpop.f32.mrb[0].mxu0
    %v6498 = vadd.f32 0.0, %v6497
    %v6499 = vpop.f32.mrb[0].mxu0
    %6500 = vmatprep.mubr.f32.mxu0 0.0
    %6501 = vmatmul.mubr.f32.gmra.mrb[0].mxu0 %v6381
    %v6502 = vpop.f32.mrb[0].mxu0
    %v6503 = vadd.f32 0.0, %v6502
    %v6504 = vpop.f32.mrb[0].mxu0
    %6505 = vmatprep.mubr.f32.mxu0 0.0
    %6506 = vmatmul.mubr.f32.gmra.mrb[0].mxu0 %v6384
    %v6507 = vpop.f32.mrb[0].mxu0
    %v6508 = vadd.f32 0.0, %v6507
    %v6509 = vpop.f32.mrb[0].mxu0
    %6510 = vmatprep.mubr.f32.mxu0 0.0
    %6511 = vmatmul.mubr.f32.gmra.mrb[0].mxu0 %v6387
    %v6512 = vpop.f32.mrb[0].mxu0
    %v6513 = vadd.f32 0.0, %v6512
    %v6514 = vpop.f32.mrb[0].mxu0
    %6515 = vmatprep.mubr.f32.mxu0 0.0
    %6516 = vmatmul.mubr.f32.gmra.mrb[0].mxu0 %v6390
    %v6517 = vpop.f32.mrb[0].mxu0
    %v6518 = vadd.f32 0.0, %v6517
    %v6519 = vpop.f32.mrb[0].mxu0
    %6520 = vmatprep.mubr.f32.mxu0 0.0
    %6521 = vmatmul.mubr.f32.gmra.mrb[0].mxu0 %v6393
    %v6522 = vpop.f32.mrb[0].mxu0
    %v6523 = vadd.f32 0.0, %v6522
    %v6524 = vpop.f32.mrb[0].mxu0
    %6525 = vmatprep.mubr.f32.mxu0 0.0
    %6526 = vmatmul.mubr.f32.gmra.mrb[0].mxu0 %v6396
    %v6527 = vpop.f32.mrb[0].mxu0
    %v6528 = vadd.f32 0.0, %v6527
    %v6529 = vpop.f32.mrb[0].mxu0
    %6530 = vmatprep.mubr.f32.mxu0 0.0
    %6531 = vmatmul.mubr.f32.gmra.mrb[0].mxu0 %v6399
    %v6532 = vpop.f32.mrb[0].mxu0
    %v6533 = vadd.f32 0.0, %v6532
    %v6534 = vpop.f32.mrb[0].mxu0
    %6535 = vmatprep.mubr.f32.mxu0 0.0
    %6536 = vmatmul.mubr.f32.gmra.mrb[0].mxu0 %v6402
    %v6537 = vpop.f32.mrb[0].mxu0
    %v6538 = vadd.f32 0.0, %v6537
    %v6539 = vpop.f32.mrb[0].mxu0
    %6540 = vmatprep.mubr.f32.mxu0 0.0
    %6541 = vmatmul.mubr.f32.gmra.mrb[0].mxu0 %v6405
    %v6542 = vpop.f32.mrb[0].mxu0
    %v6543 = vadd.f32 0.0, %v6542
    %v6544 = vpop.f32.mrb[0].mxu0
    %6545 = vmatprep.mubr.f32.mxu0 0.0
    %6546 = vmatmul.mubr.f32.gmra.mrb[0].mxu0 %v6408
    %v6547 = vpop.f32.mrb[0].mxu0
    %v6548 = vadd.f32 0.0, %v6547
    %v6549 = vpop.f32.mrb[0].mxu0
    %6550 = vmatprep.mubr.f32.mxu0 0.0
    %6551 = vmatmul.mubr.f32.gmra.mrb[0].mxu0 %v6411
    %v6552 = vpop.f32.mrb[0].mxu0
    %v6553 = vadd.f32 0.0, %v6552
    %v6554 = vpop.f32.mrb[0].mxu0
    %6555 = vmatprep.mubr.f32.mxu0 0.0
    %6556 = vmatmul.mubr.f32.gmra.mrb[0].mxu0 %v6414
    %v6557 = vpop.f32.mrb[0].mxu0
    %v6558 = vadd.f32 0.0, %v6557
    %v6559 = vpop.f32.mrb[0].mxu0
    %6560 = vdwg.mxu0
    %6561 = vrot.lane.b32.xlu0 %v5022, 64
    %v6562 = vpop.permute.xlu0 %6561
    %6563 = vrot.lane.b32.xlu0 %v5023, 64
    %v6564 = vpop.permute.xlu0 %6563
    %6565 = vrot.lane.b32.xlu0 %v5024, 64
    %v6566 = vpop.permute.xlu0 %6565
    %6567 = vrot.lane.b32.xlu0 %v5025, 64
    %v6568 = vpop.permute.xlu0 %6567
    %6569 = vrot.lane.b32.xlu0 %v5026, 64
    %v6570 = vpop.permute.xlu0 %6569
    %6571 = vrot.lane.b32.xlu0 %v5027, 64
    %v6572 = vpop.permute.xlu0 %6571
    %6573 = vrot.lane.b32.xlu0 %v5028, 64
    %v6574 = vpop.permute.xlu0 %6573
    %6575 = vrot.lane.b32.xlu0 %v5029, 64
    %v6576 = vpop.permute.xlu0 %6575
    %6577 = vrot.lane.b32.xlu0 %v5030, 64
    %v6578 = vpop.permute.xlu0 %6577
    %6579 = vrot.lane.b32.xlu0 %v5031, 64
    %v6580 = vpop.permute.xlu0 %6579
    %6581 = vrot.lane.b32.xlu0 %v5032, 64
    %v6582 = vpop.permute.xlu0 %6581
    %6583 = vrot.lane.b32.xlu0 %v5033, 64
    %v6584 = vpop.permute.xlu0 %6583
    %6585 = vrot.lane.b32.xlu0 %v5034, 64
    %v6586 = vpop.permute.xlu0 %6585
    %6587 = vrot.lane.b32.xlu0 %v5035, 64
    %v6588 = vpop.permute.xlu0 %6587
    %6589 = vrot.lane.b32.xlu0 %v5036, 64
    %v6590 = vpop.permute.xlu0 %6589
    %6591 = vrot.lane.b32.xlu0 %v5037, 64
    %v6592 = vpop.permute.xlu0 %6591
    %6609 = vmatprep.subr.mxu0 0.0
    %6610 = vmatpush1.msra.mxu0 %v6562
    %6611 = vmatprep.subr.mxu0 0.0
    %6612 = vmatpush1.msra.mxu0 %v6564
    %6613 = vmatprep.subr.mxu0 0.0
    %6614 = vmatpush1.msra.mxu0 %v6566
    %6615 = vmatprep.subr.mxu0 0.0
    %6616 = vmatpush1.msra.mxu0 %v6568
    %6617 = vmatprep.subr.mxu0 0.0
    %6618 = vmatpush1.msra.mxu0 %v6570
    %6619 = vmatprep.subr.mxu0 0.0
    %6620 = vmatpush1.msra.mxu0 %v6572
    %6621 = vmatprep.subr.mxu0 0.0
    %6622 = vmatpush1.msra.mxu0 %v6574
    %6623 = vmatprep.subr.mxu0 0.0
    %6624 = vmatpush1.msra.mxu0 %v6576
    %6625 = vmatprep.subr.mxu0 0.0
    %6626 = vmatpush1.msra.mxu0 %v6578
    %6627 = vmatprep.subr.mxu0 0.0
    %6628 = vmatpush1.msra.mxu0 %v6580
    %6629 = vmatprep.subr.mxu0 0.0
    %6630 = vmatpush1.msra.mxu0 %v6582
    %6631 = vmatprep.subr.mxu0 0.0
    %6632 = vmatpush1.msra.mxu0 %v6584
    %6633 = vmatprep.subr.mxu0 0.0
    %6634 = vmatpush1.msra.mxu0 %v6586
    %6635 = vmatprep.subr.mxu0 0.0
    %6636 = vmatpush1.msra.mxu0 %v6588
    %6637 = vmatprep.subr.mxu0 0.0
    %6638 = vmatpush1.msra.mxu0 %v6590
    %6639 = vmatprep.subr.mxu0 0.0
    %6640 = vmatpush1.msra.mxu0 %v6592
    %6641 = vmatprep.subr.mxu0 0.0
    %6642 = vmatpush1.msra.mxu0 0.0
    %6643 = vmatprep.subr.mxu0 0.0
    %6644 = vmatpush1.msra.mxu0 0.0
    %6645 = vmatprep.subr.mxu0 0.0
    %6646 = vmatpush1.msra.mxu0 0.0
    %6647 = vmatprep.subr.mxu0 0.0
    %6648 = vmatpush1.msra.mxu0 0.0
    %6649 = vmatprep.subr.mxu0 0.0
    %6650 = vmatpush1.msra.mxu0 0.0
    %6651 = vmatprep.subr.mxu0 0.0
    %6652 = vmatpush1.msra.mxu0 0.0
    %6653 = vmatprep.subr.mxu0 0.0
    %6654 = vmatpush1.msra.mxu0 0.0
    %6655 = vmatprep.subr.mxu0 0.0
    %6656 = vmatpush1.msra.mxu0 0.0
    %6657 = vmatprep.subr.mxu0 0.0
    %6658 = vmatpush1.msra.mxu0 0.0
    %6659 = vmatprep.subr.mxu0 0.0
    %6660 = vmatpush1.msra.mxu0 0.0
    %6661 = vmatprep.subr.mxu0 0.0
    %6662 = vmatpush1.msra.mxu0 0.0
    %6663 = vmatprep.subr.mxu0 0.0
    %6664 = vmatpush1.msra.mxu0 0.0
    %6665 = vmatprep.subr.mxu0 0.0
    %6666 = vmatpush1.msra.mxu0 0.0
    %6667 = vmatprep.subr.mxu0 0.0
    %6668 = vmatpush1.msra.mxu0 0.0
    %6669 = vmatprep.subr.mxu0 0.0
    %6670 = vmatpush1.msra.mxu0 0.0
    %6671 = vmatprep.subr.mxu0 0.0
    %6672 = vmatpush1.msra.mxu0 0.0
    %6673 = vmatprep.mubr.f32.mxu0 0.0
    %6674 = vmatmul.mubr.f32.gmra.mrb[0].mxu0 %v6112
    %v6675 = vpop.f32.mrb[0].mxu0
    %v6676 = vadd.f32 %v6483, %v6675
    %v6677 = vpop.f32.mrb[0].mxu0
    %6678 = vmatprep.mubr.f32.mxu0 0.0
    %6679 = vmatmul.mubr.f32.gmra.mrb[0].mxu0 %v6113
    %v6680 = vpop.f32.mrb[0].mxu0
    %v6681 = vadd.f32 %v6488, %v6680
    %v6682 = vpop.f32.mrb[0].mxu0
    %6683 = vmatprep.mubr.f32.mxu0 0.0
    %6684 = vmatmul.mubr.f32.gmra.mrb[0].mxu0 %v6114
    %v6685 = vpop.f32.mrb[0].mxu0
    %v6686 = vadd.f32 %v6493, %v6685
    %v6687 = vpop.f32.mrb[0].mxu0
    %6688 = vmatprep.mubr.f32.mxu0 0.0
    %6689 = vmatmul.mubr.f32.gmra.mrb[0].mxu0 %v6115
    %v6690 = vpop.f32.mrb[0].mxu0
    %v6691 = vadd.f32 %v6498, %v6690
    %v6692 = vpop.f32.mrb[0].mxu0
    %6693 = vmatprep.mubr.f32.mxu0 0.0
    %6694 = vmatmul.mubr.f32.gmra.mrb[0].mxu0 %v6116
    %v6695 = vpop.f32.mrb[0].mxu0
    %v6696 = vadd.f32 %v6503, %v6695
    %v6697 = vpop.f32.mrb[0].mxu0
    %6698 = vmatprep.mubr.f32.mxu0 0.0
    %6699 = vmatmul.mubr.f32.gmra.mrb[0].mxu0 %v6117
    %v6700 = vpop.f32.mrb[0].mxu0
    %v6701 = vadd.f32 %v6508, %v6700
    %v6702 = vpop.f32.mrb[0].mxu0
    %6703 = vmatprep.mubr.f32.mxu0 0.0
    %6704 = vmatmul.mubr.f32.gmra.mrb[0].mxu0 %v6118
    %v6705 = vpop.f32.mrb[0].mxu0
    %v6706 = vadd.f32 %v6513, %v6705
    %v6707 = vpop.f32.mrb[0].mxu0
    %6708 = vmatprep.mubr.f32.mxu0 0.0
    %6709 = vmatmul.mubr.f32.gmra.mrb[0].mxu0 %v6119
    %v6710 = vpop.f32.mrb[0].mxu0
    %v6711 = vadd.f32 %v6518, %v6710
    %v6712 = vpop.f32.mrb[0].mxu0
    %6713 = vmatprep.mubr.f32.mxu0 0.0
    %6714 = vmatmul.mubr.f32.gmra.mrb[0].mxu0 %v6120
    %v6715 = vpop.f32.mrb[0].mxu0
    %v6716 = vadd.f32 %v6523, %v6715
    %v6717 = vpop.f32.mrb[0].mxu0
    %6718 = vmatprep.mubr.f32.mxu0 0.0
    %6719 = vmatmul.mubr.f32.gmra.mrb[0].mxu0 %v6121
    %v6720 = vpop.f32.mrb[0].mxu0
    %v6721 = vadd.f32 %v6528, %v6720
    %v6722 = vpop.f32.mrb[0].mxu0
    %6723 = vmatprep.mubr.f32.mxu0 0.0
    %6724 = vmatmul.mubr.f32.gmra.mrb[0].mxu0 %v6122
    %v6725 = vpop.f32.mrb[0].mxu0
    %v6726 = vadd.f32 %v6533, %v6725
    %v6727 = vpop.f32.mrb[0].mxu0
    %6728 = vmatprep.mubr.f32.mxu0 0.0
    %6729 = vmatmul.mubr.f32.gmra.mrb[0].mxu0 %v6123
    %v6730 = vpop.f32.mrb[0].mxu0
    %v6731 = vadd.f32 %v6538, %v6730
    %v6732 = vpop.f32.mrb[0].mxu0
    %6733 = vmatprep.mubr.f32.mxu0 0.0
    %6734 = vmatmul.mubr.f32.gmra.mrb[0].mxu0 %v6124
    %v6735 = vpop.f32.mrb[0].mxu0
    %v6736 = vadd.f32 %v6543, %v6735
    %v6737 = vpop.f32.mrb[0].mxu0
    %6738 = vmatprep.mubr.f32.mxu0 0.0
    %6739 = vmatmul.mubr.f32.gmra.mrb[0].mxu0 %v6125
    %v6740 = vpop.f32.mrb[0].mxu0
    %v6741 = vadd.f32 %v6548, %v6740
    %v6742 = vpop.f32.mrb[0].mxu0
    %6743 = vmatprep.mubr.f32.mxu0 0.0
    %6744 = vmatmul.mubr.f32.gmra.mrb[0].mxu0 %v6126
    %v6745 = vpop.f32.mrb[0].mxu0
    %v6746 = vadd.f32 %v6553, %v6745
    %v6747 = vpop.f32.mrb[0].mxu0
    %6748 = vmatprep.mubr.f32.mxu0 0.0
    %6749 = vmatmul.mubr.f32.gmra.mrb[0].mxu0 %v6127
    %v6750 = vpop.f32.mrb[0].mxu0
    %v6751 = vadd.f32 %v6558, %v6750
    %v6752 = vpop.f32.mrb[0].mxu0
    %6753 = vdwg.mxu0
    %v6754 = vld [vmem:[#allocation2] sm:$0xff]
    %v6755 = vld [vmem:[#allocation2 + $0x8] sm:$0xff]
    %v6756 = vld [vmem:[#allocation2 + $0x10] sm:$0xff]
    %v6757 = vld [vmem:[#allocation2 + $0x18] sm:$0xff]
    %v6758 = vld [vmem:[#allocation2 + $0x20] sm:$0xff]
    %v6759 = vld [vmem:[#allocation2 + $0x28] sm:$0xff]
    %v6760 = vld [vmem:[#allocation2 + $0x30] sm:$0xff]
    %v6761 = vld [vmem:[#allocation2 + $0x38] sm:$0xff]
    %v6762 = vld [vmem:[#allocation2 + $0x40] sm:$0xff]
    %v6763 = vld [vmem:[#allocation2 + $0x48] sm:$0xff]
    %v6764 = vld [vmem:[#allocation2 + $0x50] sm:$0xff]
    %v6765 = vld [vmem:[#allocation2 + $0x58] sm:$0xff]
    %v6766 = vld [vmem:[#allocation2 + $0x60] sm:$0xff]
    %v6767 = vld [vmem:[#allocation2 + $0x68] sm:$0xff]
    %v6768 = vld [vmem:[#allocation2 + $0x70] sm:$0xff]
    %v6769 = vld [vmem:[#allocation2 + $0x78] sm:$0xff]
    %6786 = vrot.lane.b32.xlu0 %v6754, 32
    %v6787 = vpop.permute.xlu0 %6786
    %6788 = vrot.lane.b32.xlu0 %v6755, 32
    %v6789 = vpop.permute.xlu0 %6788
    %6790 = vrot.lane.b32.xlu0 %v6756, 32
    %v6791 = vpop.permute.xlu0 %6790
    %6792 = vrot.lane.b32.xlu0 %v6757, 32
    %v6793 = vpop.permute.xlu0 %6792
    %6794 = vrot.lane.b32.xlu0 %v6758, 32
    %v6795 = vpop.permute.xlu0 %6794
    %6796 = vrot.lane.b32.xlu0 %v6759, 32
    %v6797 = vpop.permute.xlu0 %6796
    %6798 = vrot.lane.b32.xlu0 %v6760, 32
    %v6799 = vpop.permute.xlu0 %6798
    %6800 = vrot.lane.b32.xlu0 %v6761, 32
    %v6801 = vpop.permute.xlu0 %6800
    %6802 = vrot.lane.b32.xlu0 %v6762, 32
    %v6803 = vpop.permute.xlu0 %6802
    %6804 = vrot.lane.b32.xlu0 %v6763, 32
    %v6805 = vpop.permute.xlu0 %6804
    %6806 = vrot.lane.b32.xlu0 %v6764, 32
    %v6807 = vpop.permute.xlu0 %6806
    %6808 = vrot.lane.b32.xlu0 %v6765, 32
    %v6809 = vpop.permute.xlu0 %6808
    %6810 = vrot.lane.b32.xlu0 %v6766, 32
    %v6811 = vpop.permute.xlu0 %6810
    %6812 = vrot.lane.b32.xlu0 %v6767, 32
    %v6813 = vpop.permute.xlu0 %6812
    %6814 = vrot.lane.b32.xlu0 %v6768, 32
    %v6815 = vpop.permute.xlu0 %6814
    %6816 = vrot.lane.b32.xlu0 %v6769, 32
    %v6817 = vpop.permute.xlu0 %6816
    %v6834 = vadd.f32 %v6676, %v6787
    %v6835 = vadd.f32 %v6681, %v6789
    %v6836 = vadd.f32 %v6686, %v6791
    %v6837 = vadd.f32 %v6691, %v6793
    %v6838 = vadd.f32 %v6696, %v6795
    %v6839 = vadd.f32 %v6701, %v6797
    %v6840 = vadd.f32 %v6706, %v6799
    %v6841 = vadd.f32 %v6711, %v6801
    %v6842 = vadd.f32 %v6716, %v6803
    %v6843 = vadd.f32 %v6721, %v6805
    %v6844 = vadd.f32 %v6726, %v6807
    %v6845 = vadd.f32 %v6731, %v6809
    %v6846 = vadd.f32 %v6736, %v6811
    %v6847 = vadd.f32 %v6741, %v6813
    %v6848 = vadd.f32 %v6746, %v6815
    %v6849 = vadd.f32 %v6751, %v6817
    %v6850 = vxor.u32 %v6834, 2147483648
    %v6851 = vxor.u32 %v6835, 2147483648
    %v6852 = vxor.u32 %v6836, 2147483648
    %v6853 = vxor.u32 %v6837, 2147483648
    %v6854 = vxor.u32 %v6838, 2147483648
    %v6855 = vxor.u32 %v6839, 2147483648
    %v6856 = vxor.u32 %v6840, 2147483648
    %v6857 = vxor.u32 %v6841, 2147483648
    %v6858 = vxor.u32 %v6842, 2147483648
    %v6859 = vxor.u32 %v6843, 2147483648
    %v6860 = vxor.u32 %v6844, 2147483648
    %v6861 = vxor.u32 %v6845, 2147483648
    %v6862 = vxor.u32 %v6846, 2147483648
    %v6863 = vxor.u32 %v6847, 2147483648
    %v6864 = vxor.u32 %v6848, 2147483648
    %v6865 = vxor.u32 %v6849, 2147483648
    %v6866 = vmul.f32 %v6850, 1.442695
    %v6867 = vpow.pop %v6866
    %v6868 = vmul.f32 %v6851, 1.442695
    %v6869 = vpow.pop %v6868
    %v6870 = vmul.f32 %v6852, 1.442695
    %v6871 = vpow.pop %v6870
    %v6872 = vmul.f32 %v6853, 1.442695
    %v6873 = vpow.pop %v6872
    %v6874 = vmul.f32 %v6854, 1.442695
    %v6875 = vpow.pop %v6874
    %v6876 = vmul.f32 %v6855, 1.442695
    %v6877 = vpow.pop %v6876
    %v6878 = vmul.f32 %v6856, 1.442695
    %v6879 = vpow.pop %v6878
    %v6880 = vmul.f32 %v6857, 1.442695
    %v6881 = vpow.pop %v6880
    %v6882 = vmul.f32 %v6858, 1.442695
    %v6883 = vpow.pop %v6882
    %v6884 = vmul.f32 %v6859, 1.442695
    %v6885 = vpow.pop %v6884
    %v6886 = vmul.f32 %v6860, 1.442695
    %v6887 = vpow.pop %v6886
    %v6888 = vmul.f32 %v6861, 1.442695
    %v6889 = vpow.pop %v6888
    %v6890 = vmul.f32 %v6862, 1.442695
    %v6891 = vpow.pop %v6890
    %v6892 = vmul.f32 %v6863, 1.442695
    %v6893 = vpow.pop %v6892
    %v6894 = vmul.f32 %v6864, 1.442695
    %v6895 = vpow.pop %v6894
    %v6896 = vmul.f32 %v6865, 1.442695
    %v6897 = vpow.pop %v6896
    %v6898 = vadd.f32 %v6867, 1.0
    %v6899 = vadd.f32 %v6869, 1.0
    %v6900 = vadd.f32 %v6871, 1.0
    %v6901 = vadd.f32 %v6873, 1.0
    %v6902 = vadd.f32 %v6875, 1.0
    %v6903 = vadd.f32 %v6877, 1.0
    %v6904 = vadd.f32 %v6879, 1.0
    %v6905 = vadd.f32 %v6881, 1.0
    %v6906 = vadd.f32 %v6883, 1.0
    %v6907 = vadd.f32 %v6885, 1.0
    %v6908 = vadd.f32 %v6887, 1.0
    %v6909 = vadd.f32 %v6889, 1.0
    %v6910 = vadd.f32 %v6891, 1.0
    %v6911 = vadd.f32 %v6893, 1.0
    %v6912 = vadd.f32 %v6895, 1.0
    %v6913 = vadd.f32 %v6897, 1.0
    %v6914 = vrcp.pop %v6898
    %v6915 = vmul.f32 1.0, %v6914
    %v6916 = vrcp.pop %v6899
    %v6917 = vmul.f32 1.0, %v6916
    %v6918 = vrcp.pop %v6900
    %v6919 = vmul.f32 1.0, %v6918
    %v6920 = vrcp.pop %v6901
    %v6921 = vmul.f32 1.0, %v6920
    %v6922 = vrcp.pop %v6902
    %v6923 = vmul.f32 1.0, %v6922
    %v6924 = vrcp.pop %v6903
    %v6925 = vmul.f32 1.0, %v6924
    %v6926 = vrcp.pop %v6904
    %v6927 = vmul.f32 1.0, %v6926
    %v6928 = vrcp.pop %v6905
    %v6929 = vmul.f32 1.0, %v6928
    %v6930 = vrcp.pop %v6906
    %v6931 = vmul.f32 1.0, %v6930
    %v6932 = vrcp.pop %v6907
    %v6933 = vmul.f32 1.0, %v6932
    %v6934 = vrcp.pop %v6908
    %v6935 = vmul.f32 1.0, %v6934
    %v6936 = vrcp.pop %v6909
    %v6937 = vmul.f32 1.0, %v6936
    %v6938 = vrcp.pop %v6910
    %v6939 = vmul.f32 1.0, %v6938
    %v6940 = vrcp.pop %v6911
    %v6941 = vmul.f32 1.0, %v6940
    %v6942 = vrcp.pop %v6912
    %v6943 = vmul.f32 1.0, %v6942
    %v6944 = vrcp.pop %v6913
    %v6945 = vmul.f32 1.0, %v6944
    %v6946 = vmul.f32 %v6834, %v6915
    %v6947 = vmul.f32 %v6835, %v6917
    %v6948 = vmul.f32 %v6836, %v6919
    %v6949 = vmul.f32 %v6837, %v6921
    %v6950 = vmul.f32 %v6838, %v6923
    %v6951 = vmul.f32 %v6839, %v6925
    %v6952 = vmul.f32 %v6840, %v6927
    %v6953 = vmul.f32 %v6841, %v6929
    %v6954 = vmul.f32 %v6842, %v6931
    %v6955 = vmul.f32 %v6843, %v6933
    %v6956 = vmul.f32 %v6844, %v6935
    %v6957 = vmul.f32 %v6845, %v6937
    %v6958 = vmul.f32 %v6846, %v6939
    %v6959 = vmul.f32 %v6847, %v6941
    %v6960 = vmul.f32 %v6848, %v6943
    %v6961 = vmul.f32 %v6849, %v6945
    %v6963 = vsel %vm485, %v6946, 0
    %v6966 = vsel %vm485, %v6947, 0
    %v6969 = vsel %vm485, %v6948, 0
    %v6972 = vsel %vm485, %v6949, 0
    %v6975 = vsel %vm485, %v6950, 0
    %v6978 = vsel %vm485, %v6951, 0
    %v6981 = vsel %vm485, %v6952, 0
    %v6984 = vsel %vm485, %v6953, 0
    %v6987 = vsel %vm485, %v6954, 0
    %v6990 = vsel %vm485, %v6955, 0
    %v6993 = vsel %vm485, %v6956, 0
    %v6996 = vsel %vm485, %v6957, 0
    %v6999 = vsel %vm485, %v6958, 0
    %v7002 = vsel %vm485, %v6959, 0
    %v7005 = vsel %vm485, %v6960, 0
    %v7008 = vsel %vm485, %v6961, 0
    %7010 = vmatprep.subr.mxu0 0.0
    %7011 = vmatpush1.msra.mxu0 %v142
    %7012 = vmatprep.subr.mxu0 0.0
    %7013 = vmatpush1.msra.mxu0 %v143
    %7014 = vmatprep.subr.mxu0 0.0
    %7015 = vmatpush1.msra.mxu0 %v144
    %7016 = vmatprep.subr.mxu0 0.0
    %7017 = vmatpush1.msra.mxu0 %v145
    %7018 = vmatprep.subr.mxu0 0.0
    %7019 = vmatpush1.msra.mxu0 0.0
    %7020 = vmatprep.subr.mxu0 0.0
    %7021 = vmatpush1.msra.mxu0 0.0
    %7022 = vmatprep.subr.mxu0 0.0
    %7023 = vmatpush1.msra.mxu0 0.0
    %7024 = vmatprep.subr.mxu0 0.0
    %7025 = vmatpush1.msra.mxu0 0.0
    %7026 = vmatprep.subr.mxu0 0.0
    %7027 = vmatpush1.msra.mxu0 0.0
    %7028 = vmatprep.subr.mxu0 0.0
    %7029 = vmatpush1.msra.mxu0 0.0
    %7030 = vmatprep.subr.mxu0 0.0
    %7031 = vmatpush1.msra.mxu0 0.0
    %7032 = vmatprep.subr.mxu0 0.0
    %7033 = vmatpush1.msra.mxu0 0.0
    %7034 = vmatprep.subr.mxu0 0.0
    %7035 = vmatpush1.msra.mxu0 0.0
    %7036 = vmatprep.subr.mxu0 0.0
    %7037 = vmatpush1.msra.mxu0 0.0
    %7038 = vmatprep.subr.mxu0 0.0
    %7039 = vmatpush1.msra.mxu0 0.0
    %7040 = vmatprep.subr.mxu0 0.0
    %7041 = vmatpush1.msra.mxu0 0.0
    %7042 = vmatprep.subr.mxu0 0.0
    %7043 = vmatpush1.msra.mxu0 0.0
    %7044 = vmatprep.subr.mxu0 0.0
    %7045 = vmatpush1.msra.mxu0 0.0
    %7046 = vmatprep.subr.mxu0 0.0
    %7047 = vmatpush1.msra.mxu0 0.0
    %7048 = vmatprep.subr.mxu0 0.0
    %7049 = vmatpush1.msra.mxu0 0.0
    %7050 = vmatprep.subr.mxu0 0.0
    %7051 = vmatpush1.msra.mxu0 0.0
    %7052 = vmatprep.subr.mxu0 0.0
    %7053 = vmatpush1.msra.mxu0 0.0
    %7054 = vmatprep.subr.mxu0 0.0
    %7055 = vmatpush1.msra.mxu0 0.0
    %7056 = vmatprep.subr.mxu0 0.0
    %7057 = vmatpush1.msra.mxu0 0.0
    %7058 = vmatprep.subr.mxu0 0.0
    %7059 = vmatpush1.msra.mxu0 0.0
    %7060 = vmatprep.subr.mxu0 0.0
    %7061 = vmatpush1.msra.mxu0 0.0
    %7062 = vmatprep.subr.mxu0 0.0
    %7063 = vmatpush1.msra.mxu0 0.0
    %7064 = vmatprep.subr.mxu0 0.0
    %7065 = vmatpush1.msra.mxu0 0.0
    %7066 = vmatprep.subr.mxu0 0.0
    %7067 = vmatpush1.msra.mxu0 0.0
    %7068 = vmatprep.subr.mxu0 0.0
    %7069 = vmatpush1.msra.mxu0 0.0
    %7070 = vmatprep.subr.mxu0 0.0
    %7071 = vmatpush1.msra.mxu0 0.0
    %7072 = vmatprep.subr.mxu0 0.0
    %7073 = vmatpush1.msra.mxu0 0.0
    %7074 = vmatprep.mubr.f32.mxu0 0.0
    %7075 = vmatmul.mubr.f32.gmra.mrb[0].mxu0 %v6963
    %v7076 = vpop.f32.mrb[0].mxu0
    %v7077 = vadd.f32 %v483, %v7076
    %v7078 = vpop.f32.mrb[0].mxu0
    %7079 = vmatprep.mubr.f32.mxu0 0.0
    %7080 = vmatmul.mubr.f32.gmra.mrb[0].mxu0 %v6966
    %v7081 = vpop.f32.mrb[0].mxu0
    %v7082 = vadd.f32 %v483, %v7081
    %v7083 = vpop.f32.mrb[0].mxu0
    %7084 = vmatprep.mubr.f32.mxu0 0.0
    %7085 = vmatmul.mubr.f32.gmra.mrb[0].mxu0 %v6969
    %v7086 = vpop.f32.mrb[0].mxu0
    %v7087 = vadd.f32 %v483, %v7086
    %v7088 = vpop.f32.mrb[0].mxu0
    %7089 = vmatprep.mubr.f32.mxu0 0.0
    %7090 = vmatmul.mubr.f32.gmra.mrb[0].mxu0 %v6972
    %v7091 = vpop.f32.mrb[0].mxu0
    %v7092 = vadd.f32 %v483, %v7091
    %v7093 = vpop.f32.mrb[0].mxu0
    %7094 = vmatprep.mubr.f32.mxu0 0.0
    %7095 = vmatmul.mubr.f32.gmra.mrb[0].mxu0 %v6975
    %v7096 = vpop.f32.mrb[0].mxu0
    %v7097 = vadd.f32 %v483, %v7096
    %v7098 = vpop.f32.mrb[0].mxu0
    %7099 = vmatprep.mubr.f32.mxu0 0.0
    %7100 = vmatmul.mubr.f32.gmra.mrb[0].mxu0 %v6978
    %v7101 = vpop.f32.mrb[0].mxu0
    %v7102 = vadd.f32 %v483, %v7101
    %v7103 = vpop.f32.mrb[0].mxu0
    %7104 = vmatprep.mubr.f32.mxu0 0.0
    %7105 = vmatmul.mubr.f32.gmra.mrb[0].mxu0 %v6981
    %v7106 = vpop.f32.mrb[0].mxu0
    %v7107 = vadd.f32 %v483, %v7106
    %v7108 = vpop.f32.mrb[0].mxu0
    %7109 = vmatprep.mubr.f32.mxu0 0.0
    %7110 = vmatmul.mubr.f32.gmra.mrb[0].mxu0 %v6984
    %v7111 = vpop.f32.mrb[0].mxu0
    %v7112 = vadd.f32 %v483, %v7111
    %v7113 = vpop.f32.mrb[0].mxu0
    %7114 = vmatprep.mubr.f32.mxu0 0.0
    %7115 = vmatmul.mubr.f32.gmra.mrb[0].mxu0 %v6987
    %v7116 = vpop.f32.mrb[0].mxu0
    %v7117 = vadd.f32 %v483, %v7116
    %v7118 = vpop.f32.mrb[0].mxu0
    %7119 = vmatprep.mubr.f32.mxu0 0.0
    %7120 = vmatmul.mubr.f32.gmra.mrb[0].mxu0 %v6990
    %v7121 = vpop.f32.mrb[0].mxu0
    %v7122 = vadd.f32 %v483, %v7121
    %v7123 = vpop.f32.mrb[0].mxu0
    %7124 = vmatprep.mubr.f32.mxu0 0.0
    %7125 = vmatmul.mubr.f32.gmra.mrb[0].mxu0 %v6993
    %v7126 = vpop.f32.mrb[0].mxu0
    %v7127 = vadd.f32 %v483, %v7126
    %v7128 = vpop.f32.mrb[0].mxu0
    %7129 = vmatprep.mubr.f32.mxu0 0.0
    %7130 = vmatmul.mubr.f32.gmra.mrb[0].mxu0 %v6996
    %v7131 = vpop.f32.mrb[0].mxu0
    %v7132 = vadd.f32 %v483, %v7131
    %v7133 = vpop.f32.mrb[0].mxu0
    %7134 = vmatprep.mubr.f32.mxu0 0.0
    %7135 = vmatmul.mubr.f32.gmra.mrb[0].mxu0 %v6999
    %v7136 = vpop.f32.mrb[0].mxu0
    %v7137 = vadd.f32 %v483, %v7136
    %v7138 = vpop.f32.mrb[0].mxu0
    %7139 = vmatprep.mubr.f32.mxu0 0.0
    %7140 = vmatmul.mubr.f32.gmra.mrb[0].mxu0 %v7002
    %v7141 = vpop.f32.mrb[0].mxu0
    %v7142 = vadd.f32 %v483, %v7141
    %v7143 = vpop.f32.mrb[0].mxu0
    %7144 = vmatprep.mubr.f32.mxu0 0.0
    %7145 = vmatmul.mubr.f32.gmra.mrb[0].mxu0 %v7005
    %v7146 = vpop.f32.mrb[0].mxu0
    %v7147 = vadd.f32 %v483, %v7146
    %v7148 = vpop.f32.mrb[0].mxu0
    %7149 = vmatprep.mubr.f32.mxu0 0.0
    %7150 = vmatmul.mubr.f32.gmra.mrb[0].mxu0 %v7008
    %v7151 = vpop.f32.mrb[0].mxu0
    %v7152 = vadd.f32 %v483, %v7151
    %v7153 = vpop.f32.mrb[0].mxu0
    %7154 = vdwg.mxu0
    %7155 = vst [vmem:[#allocation2] sm:$0xff] %v7077
    %7156 = vst [vmem:[#allocation2 + $0x8] sm:$0xff] %v7082
    %7157 = vst [vmem:[#allocation2 + $0x10] sm:$0xff] %v7087
    %7158 = vst [vmem:[#allocation2 + $0x18] sm:$0xff] %v7092
    %7159 = vst [vmem:[#allocation2 + $0x20] sm:$0xff] %v7097
    %7160 = vst [vmem:[#allocation2 + $0x28] sm:$0xff] %v7102
    %7161 = vst [vmem:[#allocation2 + $0x30] sm:$0xff] %v7107
    %7162 = vst [vmem:[#allocation2 + $0x38] sm:$0xff] %v7112
    %7163 = vst [vmem:[#allocation2 + $0x40] sm:$0xff] %v7117
    %7164 = vst [vmem:[#allocation2 + $0x48] sm:$0xff] %v7122
    %7165 = vst [vmem:[#allocation2 + $0x50] sm:$0xff] %v7127
    %7166 = vst [vmem:[#allocation2 + $0x58] sm:$0xff] %v7132
    %7167 = vst [vmem:[#allocation2 + $0x60] sm:$0xff] %v7137
    %7168 = vst [vmem:[#allocation2 + $0x68] sm:$0xff] %v7142
    %7169 = vst [vmem:[#allocation2 + $0x70] sm:$0xff] %v7147
    %7170 = vst [vmem:[#allocation2 + $0x78] sm:$0xff] %v7152
    %v7171 = vld [vmem:[#allocation2] sm:$0xff]
    %v7172 = vld [vmem:[#allocation2 + $0x8] sm:$0xff]
    %v7173 = vld [vmem:[#allocation2 + $0x10] sm:$0xff]
    %v7174 = vld [vmem:[#allocation2 + $0x18] sm:$0xff]
    %v7175 = vld [vmem:[#allocation2 + $0x20] sm:$0xff]
    %v7176 = vld [vmem:[#allocation2 + $0x28] sm:$0xff]
    %v7177 = vld [vmem:[#allocation2 + $0x30] sm:$0xff]
    %v7178 = vld [vmem:[#allocation2 + $0x38] sm:$0xff]
    %v7179 = vld [vmem:[#allocation2 + $0x40] sm:$0xff]
    %v7180 = vld [vmem:[#allocation2 + $0x48] sm:$0xff]
    %v7181 = vld [vmem:[#allocation2 + $0x50] sm:$0xff]
    %v7182 = vld [vmem:[#allocation2 + $0x58] sm:$0xff]
    %v7183 = vld [vmem:[#allocation2 + $0x60] sm:$0xff]
    %v7184 = vld [vmem:[#allocation2 + $0x68] sm:$0xff]
    %v7185 = vld [vmem:[#allocation2 + $0x70] sm:$0xff]
    %v7186 = vld [vmem:[#allocation2 + $0x78] sm:$0xff]
    %v7188 = vsel %vm485, %v7171, 0
    %v7191 = vsel %vm485, %v7172, 0
    %v7194 = vsel %vm485, %v7173, 0
    %v7197 = vsel %vm485, %v7174, 0
    %v7200 = vsel %vm485, %v7175, 0
    %v7203 = vsel %vm485, %v7176, 0
    %v7206 = vsel %vm485, %v7177, 0
    %v7209 = vsel %vm485, %v7178, 0
    %v7212 = vsel %vm485, %v7179, 0
    %v7215 = vsel %vm485, %v7180, 0
    %v7218 = vsel %vm485, %v7181, 0
    %v7221 = vsel %vm485, %v7182, 0
    %v7224 = vsel %vm485, %v7183, 0
    %v7227 = vsel %vm485, %v7184, 0
    %v7230 = vsel %vm485, %v7185, 0
    %v7233 = vsel %vm485, %v7186, 0
    %7235 = vmatprep.subr.mxu0 0.0
    %7236 = vmatpush1.xpose.msra.mxu0 %v760
    %7237 = vmatprep.subr.mxu0 0.0
    %7238 = vmatpush1.xpose.msra.mxu0 0.0
    %7239 = vmatprep.subr.mxu0 0.0
    %7240 = vmatpush1.xpose.msra.mxu0 0.0
    %7241 = vmatprep.subr.mxu0 0.0
    %7242 = vmatpush1.xpose.msra.mxu0 0.0
    %7243 = vmatprep.subr.mxu0 0.0
    %7244 = vmatpush1.xpose.msra.mxu0 0.0
    %7245 = vmatprep.subr.mxu0 0.0
    %7246 = vmatpush1.xpose.msra.mxu0 0.0
    %7247 = vmatprep.subr.mxu0 0.0
    %7248 = vmatpush1.xpose.msra.mxu0 0.0
    %7249 = vmatprep.subr.mxu0 0.0
    %7250 = vmatpush1.xpose.msra.mxu0 0.0
    %7251 = vmatprep.subr.mxu0 0.0
    %7252 = vmatpush1.xpose.msra.mxu0 0.0
    %7253 = vmatprep.subr.mxu0 0.0
    %7254 = vmatpush1.xpose.msra.mxu0 0.0
    %7255 = vmatprep.subr.mxu0 0.0
    %7256 = vmatpush1.xpose.msra.mxu0 0.0
    %7257 = vmatprep.subr.mxu0 0.0
    %7258 = vmatpush1.xpose.msra.mxu0 0.0
    %7259 = vmatprep.subr.mxu0 0.0
    %7260 = vmatpush1.xpose.msra.mxu0 0.0
    %7261 = vmatprep.subr.mxu0 0.0
    %7262 = vmatpush1.xpose.msra.mxu0 0.0
    %7263 = vmatprep.subr.mxu0 0.0
    %7264 = vmatpush1.xpose.msra.mxu0 0.0
    %7265 = vmatprep.subr.mxu0 0.0
    %7266 = vmatpush1.xpose.msra.mxu0 0.0
    %7267 = vmatprep.subr.mxu0 0.0
    %7268 = vmatpush1.xpose.msra.mxu0 0.0
    %7269 = vmatprep.subr.mxu0 0.0
    %7270 = vmatpush1.xpose.msra.mxu0 0.0
    %7271 = vmatprep.subr.mxu0 0.0
    %7272 = vmatpush1.xpose.msra.mxu0 0.0
    %7273 = vmatprep.subr.mxu0 0.0
    %7274 = vmatpush1.xpose.msra.mxu0 0.0
    %7275 = vmatprep.subr.mxu0 0.0
    %7276 = vmatpush1.xpose.msra.mxu0 0.0
    %7277 = vmatprep.subr.mxu0 0.0
    %7278 = vmatpush1.xpose.msra.mxu0 0.0
    %7279 = vmatprep.subr.mxu0 0.0
    %7280 = vmatpush1.xpose.msra.mxu0 0.0
    %7281 = vmatprep.subr.mxu0 0.0
    %7282 = vmatpush1.xpose.msra.mxu0 0.0
    %7283 = vmatprep.subr.mxu0 0.0
    %7284 = vmatpush1.xpose.msra.mxu0 0.0
    %7285 = vmatprep.subr.mxu0 0.0
    %7286 = vmatpush1.xpose.msra.mxu0 0.0
    %7287 = vmatprep.subr.mxu0 0.0
    %7288 = vmatpush1.xpose.msra.mxu0 0.0
    %7289 = vmatprep.subr.mxu0 0.0
    %7290 = vmatpush1.xpose.msra.mxu0 0.0
    %7291 = vmatprep.subr.mxu0 0.0
    %7292 = vmatpush1.xpose.msra.mxu0 0.0
    %7293 = vmatprep.subr.mxu0 0.0
    %7294 = vmatpush1.xpose.msra.mxu0 0.0
    %7295 = vmatprep.subr.mxu0 0.0
    %7296 = vmatpush1.xpose.msra.mxu0 0.0
    %7297 = vmatprep.subr.mxu0 0.0
    %7298 = vmatpush1.xpose.msra.mxu0 0.0
    %7299 = vmatprep.mubr.f32.mxu0 0.0
    %7300 = vmatmul.mubr.f32.gmra.mrb[0].mxu0 %v7188
    %v7301 = vpop.f32.mrb[0].mxu0
    %v7302 = vadd.f32 0.0, %v7301
    %v7303 = vpop.f32.mrb[0].mxu0
    %7304 = vmatprep.mubr.f32.mxu0 0.0
    %7305 = vmatmul.mubr.f32.gmra.mrb[0].mxu0 %v7191
    %v7306 = vpop.f32.mrb[0].mxu0
    %v7307 = vadd.f32 0.0, %v7306
    %v7308 = vpop.f32.mrb[0].mxu0
    %7309 = vmatprep.mubr.f32.mxu0 0.0
    %7310 = vmatmul.mubr.f32.gmra.mrb[0].mxu0 %v7194
    %v7311 = vpop.f32.mrb[0].mxu0
    %v7312 = vadd.f32 0.0, %v7311
    %v7313 = vpop.f32.mrb[0].mxu0
    %7314 = vmatprep.mubr.f32.mxu0 0.0
    %7315 = vmatmul.mubr.f32.gmra.mrb[0].mxu0 %v7197
    %v7316 = vpop.f32.mrb[0].mxu0
    %v7317 = vadd.f32 0.0, %v7316
    %v7318 = vpop.f32.mrb[0].mxu0
    %7319 = vmatprep.mubr.f32.mxu0 0.0
    %7320 = vmatmul.mubr.f32.gmra.mrb[0].mxu0 %v7200
    %v7321 = vpop.f32.mrb[0].mxu0
    %v7322 = vadd.f32 0.0, %v7321
    %v7323 = vpop.f32.mrb[0].mxu0
    %7324 = vmatprep.mubr.f32.mxu0 0.0
    %7325 = vmatmul.mubr.f32.gmra.mrb[0].mxu0 %v7203
    %v7326 = vpop.f32.mrb[0].mxu0
    %v7327 = vadd.f32 0.0, %v7326
    %v7328 = vpop.f32.mrb[0].mxu0
    %7329 = vmatprep.mubr.f32.mxu0 0.0
    %7330 = vmatmul.mubr.f32.gmra.mrb[0].mxu0 %v7206
    %v7331 = vpop.f32.mrb[0].mxu0
    %v7332 = vadd.f32 0.0, %v7331
    %v7333 = vpop.f32.mrb[0].mxu0
    %7334 = vmatprep.mubr.f32.mxu0 0.0
    %7335 = vmatmul.mubr.f32.gmra.mrb[0].mxu0 %v7209
    %v7336 = vpop.f32.mrb[0].mxu0
    %v7337 = vadd.f32 0.0, %v7336
    %v7338 = vpop.f32.mrb[0].mxu0
    %7339 = vmatprep.mubr.f32.mxu0 0.0
    %7340 = vmatmul.mubr.f32.gmra.mrb[0].mxu0 %v7212
    %v7341 = vpop.f32.mrb[0].mxu0
    %v7342 = vadd.f32 0.0, %v7341
    %v7343 = vpop.f32.mrb[0].mxu0
    %7344 = vmatprep.mubr.f32.mxu0 0.0
    %7345 = vmatmul.mubr.f32.gmra.mrb[0].mxu0 %v7215
    %v7346 = vpop.f32.mrb[0].mxu0
    %v7347 = vadd.f32 0.0, %v7346
    %v7348 = vpop.f32.mrb[0].mxu0
    %7349 = vmatprep.mubr.f32.mxu0 0.0
    %7350 = vmatmul.mubr.f32.gmra.mrb[0].mxu0 %v7218
    %v7351 = vpop.f32.mrb[0].mxu0
    %v7352 = vadd.f32 0.0, %v7351
    %v7353 = vpop.f32.mrb[0].mxu0
    %7354 = vmatprep.mubr.f32.mxu0 0.0
    %7355 = vmatmul.mubr.f32.gmra.mrb[0].mxu0 %v7221
    %v7356 = vpop.f32.mrb[0].mxu0
    %v7357 = vadd.f32 0.0, %v7356
    %v7358 = vpop.f32.mrb[0].mxu0
    %7359 = vmatprep.mubr.f32.mxu0 0.0
    %7360 = vmatmul.mubr.f32.gmra.mrb[0].mxu0 %v7224
    %v7361 = vpop.f32.mrb[0].mxu0
    %v7362 = vadd.f32 0.0, %v7361
    %v7363 = vpop.f32.mrb[0].mxu0
    %7364 = vmatprep.mubr.f32.mxu0 0.0
    %7365 = vmatmul.mubr.f32.gmra.mrb[0].mxu0 %v7227
    %v7366 = vpop.f32.mrb[0].mxu0
    %v7367 = vadd.f32 0.0, %v7366
    %v7368 = vpop.f32.mrb[0].mxu0
    %7369 = vmatprep.mubr.f32.mxu0 0.0
    %7370 = vmatmul.mubr.f32.gmra.mrb[0].mxu0 %v7230
    %v7371 = vpop.f32.mrb[0].mxu0
    %v7372 = vadd.f32 0.0, %v7371
    %v7373 = vpop.f32.mrb[0].mxu0
    %7374 = vmatprep.mubr.f32.mxu0 0.0
    %7375 = vmatmul.mubr.f32.gmra.mrb[0].mxu0 %v7233
    %v7376 = vpop.f32.mrb[0].mxu0
    %v7377 = vadd.f32 0.0, %v7376
    %v7378 = vpop.f32.mrb[0].mxu0
    %7379 = vdwg.mxu0
    %7380 = vst.msk [vmem:[#allocation3] sm:$0xff] %vm907, %v7302
    %7381 = vst.msk [vmem:[#allocation3 + $0x8] sm:$0xff] %vm907, %v7307
    %7382 = vst.msk [vmem:[#allocation3 + $0x10] sm:$0xff] %vm907, %v7312
    %7383 = vst.msk [vmem:[#allocation3 + $0x18] sm:$0xff] %vm907, %v7317
    %7384 = vst.msk [vmem:[#allocation3 + $0x20] sm:$0xff] %vm907, %v7322
    %7385 = vst.msk [vmem:[#allocation3 + $0x28] sm:$0xff] %vm907, %v7327
    %7386 = vst.msk [vmem:[#allocation3 + $0x30] sm:$0xff] %vm907, %v7332
    %7387 = vst.msk [vmem:[#allocation3 + $0x38] sm:$0xff] %vm907, %v7337
    %7388 = vst.msk [vmem:[#allocation3 + $0x40] sm:$0xff] %vm907, %v7342
    %7389 = vst.msk [vmem:[#allocation3 + $0x48] sm:$0xff] %vm907, %v7347
    %7390 = vst.msk [vmem:[#allocation3 + $0x50] sm:$0xff] %vm907, %v7352
    %7391 = vst.msk [vmem:[#allocation3 + $0x58] sm:$0xff] %vm907, %v7357
    %7392 = vst.msk [vmem:[#allocation3 + $0x60] sm:$0xff] %vm907, %v7362
    %7393 = vst.msk [vmem:[#allocation3 + $0x68] sm:$0xff] %vm907, %v7367
    %7394 = vst.msk [vmem:[#allocation3 + $0x70] sm:$0xff] %vm907, %v7372
    %7395 = vst.msk [vmem:[#allocation3 + $0x78] sm:$0xff] %vm907, %v7377
    %v7396 = vld [vmem:[#allocation4] sm:$0xff]
    %v7397 = vld [vmem:[#allocation4 + $0x8] sm:$0xff]
    %v7398 = vld [vmem:[#allocation4 + $0x10] sm:$0xff]
    %v7399 = vld [vmem:[#allocation4 + $0x18] sm:$0xff]
    %v7400 = vld [vmem:[#allocation4 + $0x20] sm:$0xff]
    %v7401 = vld [vmem:[#allocation4 + $0x28] sm:$0xff]
    %v7402 = vld [vmem:[#allocation4 + $0x30] sm:$0xff]
    %v7403 = vld [vmem:[#allocation4 + $0x38] sm:$0xff]
    %v7404 = vld [vmem:[#allocation4 + $0x40] sm:$0xff]
    %v7405 = vld [vmem:[#allocation4 + $0x48] sm:$0xff]
    %v7406 = vld [vmem:[#allocation4 + $0x50] sm:$0xff]
    %v7407 = vld [vmem:[#allocation4 + $0x58] sm:$0xff]
    %v7408 = vld [vmem:[#allocation4 + $0x60] sm:$0xff]
    %v7409 = vld [vmem:[#allocation4 + $0x68] sm:$0xff]
    %v7410 = vld [vmem:[#allocation4 + $0x70] sm:$0xff]
    %v7411 = vld [vmem:[#allocation4 + $0x78] sm:$0xff]
    %v7412 = vld [vmem:[#allocation3] sm:$0xff]
    %v7413 = vld [vmem:[#allocation3 + $0x8] sm:$0xff]
    %v7414 = vld [vmem:[#allocation3 + $0x10] sm:$0xff]
    %v7415 = vld [vmem:[#allocation3 + $0x18] sm:$0xff]
    %v7416 = vld [vmem:[#allocation3 + $0x20] sm:$0xff]
    %v7417 = vld [vmem:[#allocation3 + $0x28] sm:$0xff]
    %v7418 = vld [vmem:[#allocation3 + $0x30] sm:$0xff]
    %v7419 = vld [vmem:[#allocation3 + $0x38] sm:$0xff]
    %v7420 = vld [vmem:[#allocation3 + $0x40] sm:$0xff]
    %v7421 = vld [vmem:[#allocation3 + $0x48] sm:$0xff]
    %v7422 = vld [vmem:[#allocation3 + $0x50] sm:$0xff]
    %v7423 = vld [vmem:[#allocation3 + $0x58] sm:$0xff]
    %v7424 = vld [vmem:[#allocation3 + $0x60] sm:$0xff]
    %v7425 = vld [vmem:[#allocation3 + $0x68] sm:$0xff]
    %v7426 = vld [vmem:[#allocation3 + $0x70] sm:$0xff]
    %v7427 = vld [vmem:[#allocation3 + $0x78] sm:$0xff]
    %7429 = vset.pattern.permute.xlu0 0
    %7430 = vperm.xlu0 %7429, %v7412
    %v7431 = vpop.permute.xlu0 %7430
    %7434 = vset.pattern.permute.xlu0 0
    %7435 = vperm.xlu0 %7434, %v7413
    %v7436 = vpop.permute.xlu0 %7435
    %7439 = vset.pattern.permute.xlu0 0
    %7440 = vperm.xlu0 %7439, %v7414
    %v7441 = vpop.permute.xlu0 %7440
    %7444 = vset.pattern.permute.xlu0 0
    %7445 = vperm.xlu0 %7444, %v7415
    %v7446 = vpop.permute.xlu0 %7445
    %7449 = vset.pattern.permute.xlu0 0
    %7450 = vperm.xlu0 %7449, %v7416
    %v7451 = vpop.permute.xlu0 %7450
    %7454 = vset.pattern.permute.xlu0 0
    %7455 = vperm.xlu0 %7454, %v7417
    %v7456 = vpop.permute.xlu0 %7455
    %7459 = vset.pattern.permute.xlu0 0
    %7460 = vperm.xlu0 %7459, %v7418
    %v7461 = vpop.permute.xlu0 %7460
    %7464 = vset.pattern.permute.xlu0 0
    %7465 = vperm.xlu0 %7464, %v7419
    %v7466 = vpop.permute.xlu0 %7465
    %7469 = vset.pattern.permute.xlu0 0
    %7470 = vperm.xlu0 %7469, %v7420
    %v7471 = vpop.permute.xlu0 %7470
    %7474 = vset.pattern.permute.xlu0 0
    %7475 = vperm.xlu0 %7474, %v7421
    %v7476 = vpop.permute.xlu0 %7475
    %7479 = vset.pattern.permute.xlu0 0
    %7480 = vperm.xlu0 %7479, %v7422
    %v7481 = vpop.permute.xlu0 %7480
    %7484 = vset.pattern.permute.xlu0 0
    %7485 = vperm.xlu0 %7484, %v7423
    %v7486 = vpop.permute.xlu0 %7485
    %7489 = vset.pattern.permute.xlu0 0
    %7490 = vperm.xlu0 %7489, %v7424
    %v7491 = vpop.permute.xlu0 %7490
    %7494 = vset.pattern.permute.xlu0 0
    %7495 = vperm.xlu0 %7494, %v7425
    %v7496 = vpop.permute.xlu0 %7495
    %7499 = vset.pattern.permute.xlu0 0
    %7500 = vperm.xlu0 %7499, %v7426
    %v7501 = vpop.permute.xlu0 %7500
    %7504 = vset.pattern.permute.xlu0 0
    %7505 = vperm.xlu0 %7504, %v7427
    %v7506 = vpop.permute.xlu0 %7505
    %v7508 = vmul.f32 %v7396, %v7431
    %v7509 = vmul.f32 %v7397, %v7436
    %v7510 = vmul.f32 %v7398, %v7441
    %v7511 = vmul.f32 %v7399, %v7446
    %v7512 = vmul.f32 %v7400, %v7451
    %v7513 = vmul.f32 %v7401, %v7456
    %v7514 = vmul.f32 %v7402, %v7461
    %v7515 = vmul.f32 %v7403, %v7466
    %v7516 = vmul.f32 %v7404, %v7471
    %v7517 = vmul.f32 %v7405, %v7476
    %v7518 = vmul.f32 %v7406, %v7481
    %v7519 = vmul.f32 %v7407, %v7486
    %v7520 = vmul.f32 %v7408, %v7491
    %v7521 = vmul.f32 %v7409, %v7496
    %v7522 = vmul.f32 %v7410, %v7501
    %v7523 = vmul.f32 %v7411, %v7506
    %7524 = vrot.lane.b32.xlu0 %v7171, 96
    %v7525 = vpop.permute.xlu0 %7524
    %7526 = vrot.lane.b32.xlu0 %v7172, 96
    %v7527 = vpop.permute.xlu0 %7526
    %7528 = vrot.lane.b32.xlu0 %v7173, 96
    %v7529 = vpop.permute.xlu0 %7528
    %7530 = vrot.lane.b32.xlu0 %v7174, 96
    %v7531 = vpop.permute.xlu0 %7530
    %7532 = vrot.lane.b32.xlu0 %v7175, 96
    %v7533 = vpop.permute.xlu0 %7532
    %7534 = vrot.lane.b32.xlu0 %v7176, 96
    %v7535 = vpop.permute.xlu0 %7534
    %7536 = vrot.lane.b32.xlu0 %v7177, 96
    %v7537 = vpop.permute.xlu0 %7536
    %7538 = vrot.lane.b32.xlu0 %v7178, 96
    %v7539 = vpop.permute.xlu0 %7538
    %7540 = vrot.lane.b32.xlu0 %v7179, 96
    %v7541 = vpop.permute.xlu0 %7540
    %7542 = vrot.lane.b32.xlu0 %v7180, 96
    %v7543 = vpop.permute.xlu0 %7542
    %7544 = vrot.lane.b32.xlu0 %v7181, 96
    %v7545 = vpop.permute.xlu0 %7544
    %7546 = vrot.lane.b32.xlu0 %v7182, 96
    %v7547 = vpop.permute.xlu0 %7546
    %7548 = vrot.lane.b32.xlu0 %v7183, 96
    %v7549 = vpop.permute.xlu0 %7548
    %7550 = vrot.lane.b32.xlu0 %v7184, 96
    %v7551 = vpop.permute.xlu0 %7550
    %7552 = vrot.lane.b32.xlu0 %v7185, 96
    %v7553 = vpop.permute.xlu0 %7552
    %7554 = vrot.lane.b32.xlu0 %v7186, 96
    %v7555 = vpop.permute.xlu0 %7554
    %v7556 = vsel %vm485, %v7525, 0
    %v7558 = vsel %vm485, %v7527, 0
    %v7560 = vsel %vm485, %v7529, 0
    %v7562 = vsel %vm485, %v7531, 0
    %v7564 = vsel %vm485, %v7533, 0
    %v7566 = vsel %vm485, %v7535, 0
    %v7568 = vsel %vm485, %v7537, 0
    %v7570 = vsel %vm485, %v7539, 0
    %v7572 = vsel %vm485, %v7541, 0
    %v7574 = vsel %vm485, %v7543, 0
    %v7576 = vsel %vm485, %v7545, 0
    %v7578 = vsel %vm485, %v7547, 0
    %v7580 = vsel %vm485, %v7549, 0
    %v7582 = vsel %vm485, %v7551, 0
    %v7584 = vsel %vm485, %v7553, 0
    %v7586 = vsel %vm485, %v7555, 0
    %7588 = vmatprep.subr.mxu0 0.0
    %7589 = vmatpush1.xpose.msra.mxu0 %v7556
    %7590 = vmatprep.subr.mxu0 0.0
    %7591 = vmatpush1.xpose.msra.mxu0 %v7558
    %7592 = vmatprep.subr.mxu0 0.0
    %7593 = vmatpush1.xpose.msra.mxu0 %v7560
    %7594 = vmatprep.subr.mxu0 0.0
    %7595 = vmatpush1.xpose.msra.mxu0 %v7562
    %7596 = vmatprep.subr.mxu0 0.0
    %7597 = vmatpush1.xpose.msra.mxu0 %v7564
    %7598 = vmatprep.subr.mxu0 0.0
    %7599 = vmatpush1.xpose.msra.mxu0 %v7566
    %7600 = vmatprep.subr.mxu0 0.0
    %7601 = vmatpush1.xpose.msra.mxu0 %v7568
    %7602 = vmatprep.subr.mxu0 0.0
    %7603 = vmatpush1.xpose.msra.mxu0 %v7570
    %7604 = vmatprep.subr.mxu0 0.0
    %7605 = vmatpush1.xpose.msra.mxu0 %v7572
    %7606 = vmatprep.subr.mxu0 0.0
    %7607 = vmatpush1.xpose.msra.mxu0 %v7574
    %7608 = vmatprep.subr.mxu0 0.0
    %7609 = vmatpush1.xpose.msra.mxu0 %v7576
    %7610 = vmatprep.subr.mxu0 0.0
    %7611 = vmatpush1.xpose.msra.mxu0 %v7578
    %7612 = vmatprep.subr.mxu0 0.0
    %7613 = vmatpush1.xpose.msra.mxu0 %v7580
    %7614 = vmatprep.subr.mxu0 0.0
    %7615 = vmatpush1.xpose.msra.mxu0 %v7582
    %7616 = vmatprep.subr.mxu0 0.0
    %7617 = vmatpush1.xpose.msra.mxu0 %v7584
    %7618 = vmatprep.subr.mxu0 0.0
    %7619 = vmatpush1.xpose.msra.mxu0 %v7586
    %7620 = vmatprep.subr.mxu0 0.0
    %7621 = vmatpush1.xpose.msra.mxu0 0.0
    %7622 = vmatprep.subr.mxu0 0.0
    %7623 = vmatpush1.xpose.msra.mxu0 0.0
    %7624 = vmatprep.subr.mxu0 0.0
    %7625 = vmatpush1.xpose.msra.mxu0 0.0
    %7626 = vmatprep.subr.mxu0 0.0
    %7627 = vmatpush1.xpose.msra.mxu0 0.0
    %7628 = vmatprep.subr.mxu0 0.0
    %7629 = vmatpush1.xpose.msra.mxu0 0.0
    %7630 = vmatprep.subr.mxu0 0.0
    %7631 = vmatpush1.xpose.msra.mxu0 0.0
    %7632 = vmatprep.subr.mxu0 0.0
    %7633 = vmatpush1.xpose.msra.mxu0 0.0
    %7634 = vmatprep.subr.mxu0 0.0
    %7635 = vmatpush1.xpose.msra.mxu0 0.0
    %7636 = vmatprep.subr.mxu0 0.0
    %7637 = vmatpush1.xpose.msra.mxu0 0.0
    %7638 = vmatprep.subr.mxu0 0.0
    %7639 = vmatpush1.xpose.msra.mxu0 0.0
    %7640 = vmatprep.subr.mxu0 0.0
    %7641 = vmatpush1.xpose.msra.mxu0 0.0
    %7642 = vmatprep.subr.mxu0 0.0
    %7643 = vmatpush1.xpose.msra.mxu0 0.0
    %7644 = vmatprep.subr.mxu0 0.0
    %7645 = vmatpush1.xpose.msra.mxu0 0.0
    %7646 = vmatprep.subr.mxu0 0.0
    %7647 = vmatpush1.xpose.msra.mxu0 0.0
    %7648 = vmatprep.subr.mxu0 0.0
    %7649 = vmatpush1.xpose.msra.mxu0 0.0
    %7650 = vmatprep.subr.mxu0 0.0
    %7651 = vmatpush1.xpose.msra.mxu0 0.0
    %7652 = vmatprep.mubr.f32.mxu0 0.0
    %7653 = vmatmul.mubr.f32.gmra.mrb[0].mxu0 %v7188
    %v7654 = vpop.f32.mrb[0].mxu0
    %v7655 = vadd.f32 %v7508, %v7654
    %v7656 = vpop.f32.mrb[0].mxu0
    %7657 = vmatprep.mubr.f32.mxu0 0.0
    %7658 = vmatmul.mubr.f32.gmra.mrb[0].mxu0 %v7191
    %v7659 = vpop.f32.mrb[0].mxu0
    %v7660 = vadd.f32 %v7509, %v7659
    %v7661 = vpop.f32.mrb[0].mxu0
    %7662 = vmatprep.mubr.f32.mxu0 0.0
    %7663 = vmatmul.mubr.f32.gmra.mrb[0].mxu0 %v7194
    %v7664 = vpop.f32.mrb[0].mxu0
    %v7665 = vadd.f32 %v7510, %v7664
    %v7666 = vpop.f32.mrb[0].mxu0
    %7667 = vmatprep.mubr.f32.mxu0 0.0
    %7668 = vmatmul.mubr.f32.gmra.mrb[0].mxu0 %v7197
    %v7669 = vpop.f32.mrb[0].mxu0
    %v7670 = vadd.f32 %v7511, %v7669
    %v7671 = vpop.f32.mrb[0].mxu0
    %7672 = vmatprep.mubr.f32.mxu0 0.0
    %7673 = vmatmul.mubr.f32.gmra.mrb[0].mxu0 %v7200
    %v7674 = vpop.f32.mrb[0].mxu0
    %v7675 = vadd.f32 %v7512, %v7674
    %v7676 = vpop.f32.mrb[0].mxu0
    %7677 = vmatprep.mubr.f32.mxu0 0.0
    %7678 = vmatmul.mubr.f32.gmra.mrb[0].mxu0 %v7203
    %v7679 = vpop.f32.mrb[0].mxu0
    %v7680 = vadd.f32 %v7513, %v7679
    %v7681 = vpop.f32.mrb[0].mxu0
    %7682 = vmatprep.mubr.f32.mxu0 0.0
    %7683 = vmatmul.mubr.f32.gmra.mrb[0].mxu0 %v7206
    %v7684 = vpop.f32.mrb[0].mxu0
    %v7685 = vadd.f32 %v7514, %v7684
    %v7686 = vpop.f32.mrb[0].mxu0
    %7687 = vmatprep.mubr.f32.mxu0 0.0
    %7688 = vmatmul.mubr.f32.gmra.mrb[0].mxu0 %v7209
    %v7689 = vpop.f32.mrb[0].mxu0
    %v7690 = vadd.f32 %v7515, %v7689
    %v7691 = vpop.f32.mrb[0].mxu0
    %7692 = vmatprep.mubr.f32.mxu0 0.0
    %7693 = vmatmul.mubr.f32.gmra.mrb[0].mxu0 %v7212
    %v7694 = vpop.f32.mrb[0].mxu0
    %v7695 = vadd.f32 %v7516, %v7694
    %v7696 = vpop.f32.mrb[0].mxu0
    %7697 = vmatprep.mubr.f32.mxu0 0.0
    %7698 = vmatmul.mubr.f32.gmra.mrb[0].mxu0 %v7215
    %v7699 = vpop.f32.mrb[0].mxu0
    %v7700 = vadd.f32 %v7517, %v7699
    %v7701 = vpop.f32.mrb[0].mxu0
    %7702 = vmatprep.mubr.f32.mxu0 0.0
    %7703 = vmatmul.mubr.f32.gmra.mrb[0].mxu0 %v7218
    %v7704 = vpop.f32.mrb[0].mxu0
    %v7705 = vadd.f32 %v7518, %v7704
    %v7706 = vpop.f32.mrb[0].mxu0
    %7707 = vmatprep.mubr.f32.mxu0 0.0
    %7708 = vmatmul.mubr.f32.gmra.mrb[0].mxu0 %v7221
    %v7709 = vpop.f32.mrb[0].mxu0
    %v7710 = vadd.f32 %v7519, %v7709
    %v7711 = vpop.f32.mrb[0].mxu0
    %7712 = vmatprep.mubr.f32.mxu0 0.0
    %7713 = vmatmul.mubr.f32.gmra.mrb[0].mxu0 %v7224
    %v7714 = vpop.f32.mrb[0].mxu0
    %v7715 = vadd.f32 %v7520, %v7714
    %v7716 = vpop.f32.mrb[0].mxu0
    %7717 = vmatprep.mubr.f32.mxu0 0.0
    %7718 = vmatmul.mubr.f32.gmra.mrb[0].mxu0 %v7227
    %v7719 = vpop.f32.mrb[0].mxu0
    %v7720 = vadd.f32 %v7521, %v7719
    %v7721 = vpop.f32.mrb[0].mxu0
    %7722 = vmatprep.mubr.f32.mxu0 0.0
    %7723 = vmatmul.mubr.f32.gmra.mrb[0].mxu0 %v7230
    %v7724 = vpop.f32.mrb[0].mxu0
    %v7725 = vadd.f32 %v7522, %v7724
    %v7726 = vpop.f32.mrb[0].mxu0
    %7727 = vmatprep.mubr.f32.mxu0 0.0
    %7728 = vmatmul.mubr.f32.gmra.mrb[0].mxu0 %v7233
    %v7729 = vpop.f32.mrb[0].mxu0
    %v7730 = vadd.f32 %v7523, %v7729
    %v7731 = vpop.f32.mrb[0].mxu0
    %7732 = vdwg.mxu0
    %v7733 = vld [vmem:[%s1261] sm:$0xff]
    %v7734 = vld [vmem:[%s1261 + $0x8] sm:$0xff]
    %v7735 = vld [vmem:[%s1261 + $0x10] sm:$0xff]
    %v7736 = vld [vmem:[%s1261 + $0x18] sm:$0xff]
    %v7737 = vld [vmem:[%s1261 + $0x20] sm:$0xff]
    %v7738 = vld [vmem:[%s1261 + $0x28] sm:$0xff]
    %v7739 = vld [vmem:[%s1261 + $0x30] sm:$0xff]
    %v7740 = vld [vmem:[%s1261 + $0x38] sm:$0xff]
    %v7741 = vld [vmem:[%s1261 + $0x40] sm:$0xff]
    %v7742 = vld [vmem:[%s1261 + $0x48] sm:$0xff]
    %v7743 = vld [vmem:[%s1261 + $0x50] sm:$0xff]
    %v7744 = vld [vmem:[%s1261 + $0x58] sm:$0xff]
    %v7745 = vld [vmem:[%s1261 + $0x60] sm:$0xff]
    %v7746 = vld [vmem:[%s1261 + $0x68] sm:$0xff]
    %v7747 = vld [vmem:[%s1261 + $0x70] sm:$0xff]
    %v7748 = vld [vmem:[%s1261 + $0x78] sm:$0xff]
    %7749 = vset.pattern.permute.xlu0 1
    %7750 = vperm.xlu0 %7749, %v7412
    %v7751 = vpop.permute.xlu0 %7750
    %7753 = vset.pattern.permute.xlu0 1
    %7754 = vperm.xlu0 %7753, %v7413
    %v7755 = vpop.permute.xlu0 %7754
    %7757 = vset.pattern.permute.xlu0 1
    %7758 = vperm.xlu0 %7757, %v7414
    %v7759 = vpop.permute.xlu0 %7758
    %7761 = vset.pattern.permute.xlu0 1
    %7762 = vperm.xlu0 %7761, %v7415
    %v7763 = vpop.permute.xlu0 %7762
    %7765 = vset.pattern.permute.xlu0 1
    %7766 = vperm.xlu0 %7765, %v7416
    %v7767 = vpop.permute.xlu0 %7766
    %7769 = vset.pattern.permute.xlu0 1
    %7770 = vperm.xlu0 %7769, %v7417
    %v7771 = vpop.permute.xlu0 %7770
    %7773 = vset.pattern.permute.xlu0 1
    %7774 = vperm.xlu0 %7773, %v7418
    %v7775 = vpop.permute.xlu0 %7774
    %7777 = vset.pattern.permute.xlu0 1
    %7778 = vperm.xlu0 %7777, %v7419
    %v7779 = vpop.permute.xlu0 %7778
    %7781 = vset.pattern.permute.xlu0 1
    %7782 = vperm.xlu0 %7781, %v7420
    %v7783 = vpop.permute.xlu0 %7782
    %7785 = vset.pattern.permute.xlu0 1
    %7786 = vperm.xlu0 %7785, %v7421
    %v7787 = vpop.permute.xlu0 %7786
    %7789 = vset.pattern.permute.xlu0 1
    %7790 = vperm.xlu0 %7789, %v7422
    %v7791 = vpop.permute.xlu0 %7790
    %7793 = vset.pattern.permute.xlu0 1
    %7794 = vperm.xlu0 %7793, %v7423
    %v7795 = vpop.permute.xlu0 %7794
    %7797 = vset.pattern.permute.xlu0 1
    %7798 = vperm.xlu0 %7797, %v7424
    %v7799 = vpop.permute.xlu0 %7798
    %7801 = vset.pattern.permute.xlu0 1
    %7802 = vperm.xlu0 %7801, %v7425
    %v7803 = vpop.permute.xlu0 %7802
    %7805 = vset.pattern.permute.xlu0 1
    %7806 = vperm.xlu0 %7805, %v7426
    %v7807 = vpop.permute.xlu0 %7806
    %7809 = vset.pattern.permute.xlu0 1
    %7810 = vperm.xlu0 %7809, %v7427
    %v7811 = vpop.permute.xlu0 %7810
    %v7813 = vmul.f32 %v7733, %v7751
    %v7814 = vmul.f32 %v7734, %v7755
    %v7815 = vmul.f32 %v7735, %v7759
    %v7816 = vmul.f32 %v7736, %v7763
    %v7817 = vmul.f32 %v7737, %v7767
    %v7818 = vmul.f32 %v7738, %v7771
    %v7819 = vmul.f32 %v7739, %v7775
    %v7820 = vmul.f32 %v7740, %v7779
    %v7821 = vmul.f32 %v7741, %v7783
    %v7822 = vmul.f32 %v7742, %v7787
    %v7823 = vmul.f32 %v7743, %v7791
    %v7824 = vmul.f32 %v7744, %v7795
    %v7825 = vmul.f32 %v7745, %v7799
    %v7826 = vmul.f32 %v7746, %v7803
    %v7827 = vmul.f32 %v7747, %v7807
    %v7828 = vmul.f32 %v7748, %v7811
    %v7829 = vadd.f32 %v7655, %v7813
    %v7830 = vadd.f32 %v7660, %v7814
    %v7831 = vadd.f32 %v7665, %v7815
    %v7832 = vadd.f32 %v7670, %v7816
    %v7833 = vadd.f32 %v7675, %v7817
    %v7834 = vadd.f32 %v7680, %v7818
    %v7835 = vadd.f32 %v7685, %v7819
    %v7836 = vadd.f32 %v7690, %v7820
    %v7837 = vadd.f32 %v7695, %v7821
    %v7838 = vadd.f32 %v7700, %v7822
    %v7839 = vadd.f32 %v7705, %v7823
    %v7840 = vadd.f32 %v7710, %v7824
    %v7841 = vadd.f32 %v7715, %v7825
    %v7842 = vadd.f32 %v7720, %v7826
    %v7843 = vadd.f32 %v7725, %v7827
    %v7844 = vadd.f32 %v7730, %v7828
    %v7845 = vld [vmem:[%s1374] sm:$0xff]
    %v7846 = vld [vmem:[%s1374 + $0x8] sm:$0xff]
    %v7847 = vld [vmem:[%s1374 + $0x10] sm:$0xff]
    %v7848 = vld [vmem:[%s1374 + $0x18] sm:$0xff]
    %v7849 = vld [vmem:[%s1374 + $0x20] sm:$0xff]
    %v7850 = vld [vmem:[%s1374 + $0x28] sm:$0xff]
    %v7851 = vld [vmem:[%s1374 + $0x30] sm:$0xff]
    %v7852 = vld [vmem:[%s1374 + $0x38] sm:$0xff]
    %v7853 = vld [vmem:[%s1374 + $0x40] sm:$0xff]
    %v7854 = vld [vmem:[%s1374 + $0x48] sm:$0xff]
    %v7855 = vld [vmem:[%s1374 + $0x50] sm:$0xff]
    %v7856 = vld [vmem:[%s1374 + $0x58] sm:$0xff]
    %v7857 = vld [vmem:[%s1374 + $0x60] sm:$0xff]
    %v7858 = vld [vmem:[%s1374 + $0x68] sm:$0xff]
    %v7859 = vld [vmem:[%s1374 + $0x70] sm:$0xff]
    %v7860 = vld [vmem:[%s1374 + $0x78] sm:$0xff]
    %7861 = vset.pattern.permute.xlu0 2
    %7862 = vperm.xlu0 %7861, %v7412
    %v7863 = vpop.permute.xlu0 %7862
    %7865 = vset.pattern.permute.xlu0 2
    %7866 = vperm.xlu0 %7865, %v7413
    %v7867 = vpop.permute.xlu0 %7866
    %7869 = vset.pattern.permute.xlu0 2
    %7870 = vperm.xlu0 %7869, %v7414
    %v7871 = vpop.permute.xlu0 %7870
    %7873 = vset.pattern.permute.xlu0 2
    %7874 = vperm.xlu0 %7873, %v7415
    %v7875 = vpop.permute.xlu0 %7874
    %7877 = vset.pattern.permute.xlu0 2
    %7878 = vperm.xlu0 %7877, %v7416
    %v7879 = vpop.permute.xlu0 %7878
    %7881 = vset.pattern.permute.xlu0 2
    %7882 = vperm.xlu0 %7881, %v7417
    %v7883 = vpop.permute.xlu0 %7882
    %7885 = vset.pattern.permute.xlu0 2
    %7886 = vperm.xlu0 %7885, %v7418
    %v7887 = vpop.permute.xlu0 %7886
    %7889 = vset.pattern.permute.xlu0 2
    %7890 = vperm.xlu0 %7889, %v7419
    %v7891 = vpop.permute.xlu0 %7890
    %7893 = vset.pattern.permute.xlu0 2
    %7894 = vperm.xlu0 %7893, %v7420
    %v7895 = vpop.permute.xlu0 %7894
    %7897 = vset.pattern.permute.xlu0 2
    %7898 = vperm.xlu0 %7897, %v7421
    %v7899 = vpop.permute.xlu0 %7898
    %7901 = vset.pattern.permute.xlu0 2
    %7902 = vperm.xlu0 %7901, %v7422
    %v7903 = vpop.permute.xlu0 %7902
    %7905 = vset.pattern.permute.xlu0 2
    %7906 = vperm.xlu0 %7905, %v7423
    %v7907 = vpop.permute.xlu0 %7906
    %7909 = vset.pattern.permute.xlu0 2
    %7910 = vperm.xlu0 %7909, %v7424
    %v7911 = vpop.permute.xlu0 %7910
    %7913 = vset.pattern.permute.xlu0 2
    %7914 = vperm.xlu0 %7913, %v7425
    %v7915 = vpop.permute.xlu0 %7914
    %7917 = vset.pattern.permute.xlu0 2
    %7918 = vperm.xlu0 %7917, %v7426
    %v7919 = vpop.permute.xlu0 %7918
    %7921 = vset.pattern.permute.xlu0 2
    %7922 = vperm.xlu0 %7921, %v7427
    %v7923 = vpop.permute.xlu0 %7922
    %v7925 = vmul.f32 %v7845, %v7863
    %v7926 = vmul.f32 %v7846, %v7867
    %v7927 = vmul.f32 %v7847, %v7871
    %v7928 = vmul.f32 %v7848, %v7875
    %v7929 = vmul.f32 %v7849, %v7879
    %v7930 = vmul.f32 %v7850, %v7883
    %v7931 = vmul.f32 %v7851, %v7887
    %v7932 = vmul.f32 %v7852, %v7891
    %v7933 = vmul.f32 %v7853, %v7895
    %v7934 = vmul.f32 %v7854, %v7899
    %v7935 = vmul.f32 %v7855, %v7903
    %v7936 = vmul.f32 %v7856, %v7907
    %v7937 = vmul.f32 %v7857, %v7911
    %v7938 = vmul.f32 %v7858, %v7915
    %v7939 = vmul.f32 %v7859, %v7919
    %v7940 = vmul.f32 %v7860, %v7923
    %v7941 = vadd.f32 %v7829, %v7925
    %v7942 = vadd.f32 %v7830, %v7926
    %v7943 = vadd.f32 %v7831, %v7927
    %v7944 = vadd.f32 %v7832, %v7928
    %v7945 = vadd.f32 %v7833, %v7929
    %v7946 = vadd.f32 %v7834, %v7930
    %v7947 = vadd.f32 %v7835, %v7931
    %v7948 = vadd.f32 %v7836, %v7932
    %v7949 = vadd.f32 %v7837, %v7933
    %v7950 = vadd.f32 %v7838, %v7934
    %v7951 = vadd.f32 %v7839, %v7935
    %v7952 = vadd.f32 %v7840, %v7936
    %v7953 = vadd.f32 %v7841, %v7937
    %v7954 = vadd.f32 %v7842, %v7938
    %v7955 = vadd.f32 %v7843, %v7939
    %v7956 = vadd.f32 %v7844, %v7940
    %v7957 = vld [vmem:[%s1487] sm:$0xff]
    %v7958 = vld [vmem:[%s1487 + $0x8] sm:$0xff]
    %v7959 = vld [vmem:[%s1487 + $0x10] sm:$0xff]
    %v7960 = vld [vmem:[%s1487 + $0x18] sm:$0xff]
    %v7961 = vld [vmem:[%s1487 + $0x20] sm:$0xff]
    %v7962 = vld [vmem:[%s1487 + $0x28] sm:$0xff]
    %v7963 = vld [vmem:[%s1487 + $0x30] sm:$0xff]
    %v7964 = vld [vmem:[%s1487 + $0x38] sm:$0xff]
    %v7965 = vld [vmem:[%s1487 + $0x40] sm:$0xff]
    %v7966 = vld [vmem:[%s1487 + $0x48] sm:$0xff]
    %v7967 = vld [vmem:[%s1487 + $0x50] sm:$0xff]
    %v7968 = vld [vmem:[%s1487 + $0x58] sm:$0xff]
    %v7969 = vld [vmem:[%s1487 + $0x60] sm:$0xff]
    %v7970 = vld [vmem:[%s1487 + $0x68] sm:$0xff]
    %v7971 = vld [vmem:[%s1487 + $0x70] sm:$0xff]
    %v7972 = vld [vmem:[%s1487 + $0x78] sm:$0xff]
    %7973 = vset.pattern.permute.xlu0 3
    %7974 = vperm.xlu0 %7973, %v7412
    %v7975 = vpop.permute.xlu0 %7974
    %7977 = vset.pattern.permute.xlu0 3
    %7978 = vperm.xlu0 %7977, %v7413
    %v7979 = vpop.permute.xlu0 %7978
    %7981 = vset.pattern.permute.xlu0 3
    %7982 = vperm.xlu0 %7981, %v7414
    %v7983 = vpop.permute.xlu0 %7982
    %7985 = vset.pattern.permute.xlu0 3
    %7986 = vperm.xlu0 %7985, %v7415
    %v7987 = vpop.permute.xlu0 %7986
    %7989 = vset.pattern.permute.xlu0 3
    %7990 = vperm.xlu0 %7989, %v7416
    %v7991 = vpop.permute.xlu0 %7990
    %7993 = vset.pattern.permute.xlu0 3
    %7994 = vperm.xlu0 %7993, %v7417
    %v7995 = vpop.permute.xlu0 %7994
    %7997 = vset.pattern.permute.xlu0 3
    %7998 = vperm.xlu0 %7997, %v7418
    %v7999 = vpop.permute.xlu0 %7998
    %8001 = vset.pattern.permute.xlu0 3
    %8002 = vperm.xlu0 %8001, %v7419
    %v8003 = vpop.permute.xlu0 %8002
    %8005 = vset.pattern.permute.xlu0 3
    %8006 = vperm.xlu0 %8005, %v7420
    %v8007 = vpop.permute.xlu0 %8006
    %8009 = vset.pattern.permute.xlu0 3
    %8010 = vperm.xlu0 %8009, %v7421
    %v8011 = vpop.permute.xlu0 %8010
    %8013 = vset.pattern.permute.xlu0 3
    %8014 = vperm.xlu0 %8013, %v7422
    %v8015 = vpop.permute.xlu0 %8014
    %8017 = vset.pattern.permute.xlu0 3
    %8018 = vperm.xlu0 %8017, %v7423
    %v8019 = vpop.permute.xlu0 %8018
    %8021 = vset.pattern.permute.xlu0 3
    %8022 = vperm.xlu0 %8021, %v7424
    %v8023 = vpop.permute.xlu0 %8022
    %8025 = vset.pattern.permute.xlu0 3
    %8026 = vperm.xlu0 %8025, %v7425
    %v8027 = vpop.permute.xlu0 %8026
    %8029 = vset.pattern.permute.xlu0 3
    %8030 = vperm.xlu0 %8029, %v7426
    %v8031 = vpop.permute.xlu0 %8030
    %8033 = vset.pattern.permute.xlu0 3
    %8034 = vperm.xlu0 %8033, %v7427
    %v8035 = vpop.permute.xlu0 %8034
    %v8037 = vmul.f32 %v7957, %v7975
    %v8038 = vmul.f32 %v7958, %v7979
    %v8039 = vmul.f32 %v7959, %v7983
    %v8040 = vmul.f32 %v7960, %v7987
    %v8041 = vmul.f32 %v7961, %v7991
    %v8042 = vmul.f32 %v7962, %v7995
    %v8043 = vmul.f32 %v7963, %v7999
    %v8044 = vmul.f32 %v7964, %v8003
    %v8045 = vmul.f32 %v7965, %v8007
    %v8046 = vmul.f32 %v7966, %v8011
    %v8047 = vmul.f32 %v7967, %v8015
    %v8048 = vmul.f32 %v7968, %v8019
    %v8049 = vmul.f32 %v7969, %v8023
    %v8050 = vmul.f32 %v7970, %v8027
    %v8051 = vmul.f32 %v7971, %v8031
    %v8052 = vmul.f32 %v7972, %v8035
    %v8053 = vadd.f32 %v7941, %v8037
    %v8054 = vadd.f32 %v7942, %v8038
    %v8055 = vadd.f32 %v7943, %v8039
    %v8056 = vadd.f32 %v7944, %v8040
    %v8057 = vadd.f32 %v7945, %v8041
    %v8058 = vadd.f32 %v7946, %v8042
    %v8059 = vadd.f32 %v7947, %v8043
    %v8060 = vadd.f32 %v7948, %v8044
    %v8061 = vadd.f32 %v7949, %v8045
    %v8062 = vadd.f32 %v7950, %v8046
    %v8063 = vadd.f32 %v7951, %v8047
    %v8064 = vadd.f32 %v7952, %v8048
    %v8065 = vadd.f32 %v7953, %v8049
    %v8066 = vadd.f32 %v7954, %v8050
    %v8067 = vadd.f32 %v7955, %v8051
    %v8068 = vadd.f32 %v7956, %v8052
    %v8069 = vmul.f32 %v8053, 0.17677669
    %v8070 = vmul.f32 %v8054, 0.17677669
    %v8071 = vmul.f32 %v8055, 0.17677669
    %v8072 = vmul.f32 %v8056, 0.17677669
    %v8073 = vmul.f32 %v8057, 0.17677669
    %v8074 = vmul.f32 %v8058, 0.17677669
    %v8075 = vmul.f32 %v8059, 0.17677669
    %v8076 = vmul.f32 %v8060, 0.17677669
    %v8077 = vmul.f32 %v8061, 0.17677669
    %v8078 = vmul.f32 %v8062, 0.17677669
    %v8079 = vmul.f32 %v8063, 0.17677669
    %v8080 = vmul.f32 %v8064, 0.17677669
    %v8081 = vmul.f32 %v8065, 0.17677669
    %v8082 = vmul.f32 %v8066, 0.17677669
    %v8083 = vmul.f32 %v8067, 0.17677669
    %v8084 = vmul.f32 %v8068, 0.17677669
    %v8085 = vsel %vm1616, %v8069, -1e+30
    %v8086 = vsel %vm1617, %v8070, -1e+30
    %v8087 = vsel %vm1618, %v8071, -1e+30
    %v8088 = vsel %vm1619, %v8072, -1e+30
    %v8089 = vsel %vm1620, %v8073, -1e+30
    %v8090 = vsel %vm1621, %v8074, -1e+30
    %v8091 = vsel %vm1622, %v8075, -1e+30
    %v8092 = vsel %vm1623, %v8076, -1e+30
    %v8093 = vsel %vm1624, %v8077, -1e+30
    %v8094 = vsel %vm1625, %v8078, -1e+30
    %v8095 = vsel %vm1626, %v8079, -1e+30
    %v8096 = vsel %vm1627, %v8080, -1e+30
    %v8097 = vsel %vm1628, %v8081, -1e+30
    %v8098 = vsel %vm1629, %v8082, -1e+30
    %v8099 = vsel %vm1630, %v8083, -1e+30
    %v8100 = vsel %vm1631, %v8084, -1e+30
    %8101 = vmax.xlane.f32.xlu0 %v8085
    %v8102 = vpop.xlane.xlu0 %8101
    %8103 = vmax.xlane.f32.xlu0 %v8086
    %v8104 = vpop.xlane.xlu0 %8103
    %8105 = vmax.xlane.f32.xlu0 %v8087
    %v8106 = vpop.xlane.xlu0 %8105
    %8107 = vmax.xlane.f32.xlu0 %v8088
    %v8108 = vpop.xlane.xlu0 %8107
    %8109 = vmax.xlane.f32.xlu0 %v8089
    %v8110 = vpop.xlane.xlu0 %8109
    %8111 = vmax.xlane.f32.xlu0 %v8090
    %v8112 = vpop.xlane.xlu0 %8111
    %8113 = vmax.xlane.f32.xlu0 %v8091
    %v8114 = vpop.xlane.xlu0 %8113
    %8115 = vmax.xlane.f32.xlu0 %v8092
    %v8116 = vpop.xlane.xlu0 %8115
    %8117 = vmax.xlane.f32.xlu0 %v8093
    %v8118 = vpop.xlane.xlu0 %8117
    %8119 = vmax.xlane.f32.xlu0 %v8094
    %v8120 = vpop.xlane.xlu0 %8119
    %8121 = vmax.xlane.f32.xlu0 %v8095
    %v8122 = vpop.xlane.xlu0 %8121
    %8123 = vmax.xlane.f32.xlu0 %v8096
    %v8124 = vpop.xlane.xlu0 %8123
    %8125 = vmax.xlane.f32.xlu0 %v8097
    %v8126 = vpop.xlane.xlu0 %8125
    %8127 = vmax.xlane.f32.xlu0 %v8098
    %v8128 = vpop.xlane.xlu0 %8127
    %8129 = vmax.xlane.f32.xlu0 %v8099
    %v8130 = vpop.xlane.xlu0 %8129
    %8131 = vmax.xlane.f32.xlu0 %v8100
    %v8132 = vpop.xlane.xlu0 %8131
    %v8133 = vsub.f32 %v8085, %v8102
    %v8134 = vsub.f32 %v8086, %v8104
    %v8135 = vsub.f32 %v8087, %v8106
    %v8136 = vsub.f32 %v8088, %v8108
    %v8137 = vsub.f32 %v8089, %v8110
    %v8138 = vsub.f32 %v8090, %v8112
    %v8139 = vsub.f32 %v8091, %v8114
    %v8140 = vsub.f32 %v8092, %v8116
    %v8141 = vsub.f32 %v8093, %v8118
    %v8142 = vsub.f32 %v8094, %v8120
    %v8143 = vsub.f32 %v8095, %v8122
    %v8144 = vsub.f32 %v8096, %v8124
    %v8145 = vsub.f32 %v8097, %v8126
    %v8146 = vsub.f32 %v8098, %v8128
    %v8147 = vsub.f32 %v8099, %v8130
    %v8148 = vsub.f32 %v8100, %v8132
    %v8149 = vmul.f32 %v8133, 1.442695
    %v8150 = vpow.pop %v8149
    %v8151 = vmul.f32 %v8134, 1.442695
    %v8152 = vpow.pop %v8151
    %v8153 = vmul.f32 %v8135, 1.442695
    %v8154 = vpow.pop %v8153
    %v8155 = vmul.f32 %v8136, 1.442695
    %v8156 = vpow.pop %v8155
    %v8157 = vmul.f32 %v8137, 1.442695
    %v8158 = vpow.pop %v8157
    %v8159 = vmul.f32 %v8138, 1.442695
    %v8160 = vpow.pop %v8159
    %v8161 = vmul.f32 %v8139, 1.442695
    %v8162 = vpow.pop %v8161
    %v8163 = vmul.f32 %v8140, 1.442695
    %v8164 = vpow.pop %v8163
    %v8165 = vmul.f32 %v8141, 1.442695
    %v8166 = vpow.pop %v8165
    %v8167 = vmul.f32 %v8142, 1.442695
    %v8168 = vpow.pop %v8167
    %v8169 = vmul.f32 %v8143, 1.442695
    %v8170 = vpow.pop %v8169
    %v8171 = vmul.f32 %v8144, 1.442695
    %v8172 = vpow.pop %v8171
    %v8173 = vmul.f32 %v8145, 1.442695
    %v8174 = vpow.pop %v8173
    %v8175 = vmul.f32 %v8146, 1.442695
    %v8176 = vpow.pop %v8175
    %v8177 = vmul.f32 %v8147, 1.442695
    %v8178 = vpow.pop %v8177
    %v8179 = vmul.f32 %v8148, 1.442695
    %v8180 = vpow.pop %v8179
    %v8181 = vmul.f32 %v8150, %v125
    %v8182 = vmul.f32 %v8152, %v126
    %v8183 = vmul.f32 %v8154, %v127
    %v8184 = vmul.f32 %v8156, %v128
    %v8185 = vmul.f32 %v8158, %v129
    %v8186 = vmul.f32 %v8160, %v130
    %v8187 = vmul.f32 %v8162, %v131
    %v8188 = vmul.f32 %v8164, %v132
    %v8189 = vmul.f32 %v8166, %v133
    %v8190 = vmul.f32 %v8168, %v134
    %v8191 = vmul.f32 %v8170, %v135
    %v8192 = vmul.f32 %v8172, %v136
    %v8193 = vmul.f32 %v8174, %v137
    %v8194 = vmul.f32 %v8176, %v138
    %v8195 = vmul.f32 %v8178, %v139
    %v8196 = vmul.f32 %v8180, %v140
    %8197 = vadd.xlane.f32.xlu0 %v8181
    %v8198 = vpop.xlane.xlu0 %8197
    %8199 = vadd.xlane.f32.xlu0 %v8182
    %v8200 = vpop.xlane.xlu0 %8199
    %8201 = vadd.xlane.f32.xlu0 %v8183
    %v8202 = vpop.xlane.xlu0 %8201
    %8203 = vadd.xlane.f32.xlu0 %v8184
    %v8204 = vpop.xlane.xlu0 %8203
    %8205 = vadd.xlane.f32.xlu0 %v8185
    %v8206 = vpop.xlane.xlu0 %8205
    %8207 = vadd.xlane.f32.xlu0 %v8186
    %v8208 = vpop.xlane.xlu0 %8207
    %8209 = vadd.xlane.f32.xlu0 %v8187
    %v8210 = vpop.xlane.xlu0 %8209
    %8211 = vadd.xlane.f32.xlu0 %v8188
    %v8212 = vpop.xlane.xlu0 %8211
    %8213 = vadd.xlane.f32.xlu0 %v8189
    %v8214 = vpop.xlane.xlu0 %8213
    %8215 = vadd.xlane.f32.xlu0 %v8190
    %v8216 = vpop.xlane.xlu0 %8215
    %8217 = vadd.xlane.f32.xlu0 %v8191
    %v8218 = vpop.xlane.xlu0 %8217
    %8219 = vadd.xlane.f32.xlu0 %v8192
    %v8220 = vpop.xlane.xlu0 %8219
    %8221 = vadd.xlane.f32.xlu0 %v8193
    %v8222 = vpop.xlane.xlu0 %8221
    %8223 = vadd.xlane.f32.xlu0 %v8194
    %v8224 = vpop.xlane.xlu0 %8223
    %8225 = vadd.xlane.f32.xlu0 %v8195
    %v8226 = vpop.xlane.xlu0 %8225
    %8227 = vadd.xlane.f32.xlu0 %v8196
    %v8228 = vpop.xlane.xlu0 %8227
    %v8229 = vmax.f32 %v8198, 1e-30
    %v8230 = vmax.f32 %v8200, 1e-30
    %v8231 = vmax.f32 %v8202, 1e-30
    %v8232 = vmax.f32 %v8204, 1e-30
    %v8233 = vmax.f32 %v8206, 1e-30
    %v8234 = vmax.f32 %v8208, 1e-30
    %v8235 = vmax.f32 %v8210, 1e-30
    %v8236 = vmax.f32 %v8212, 1e-30
    %v8237 = vmax.f32 %v8214, 1e-30
    %v8238 = vmax.f32 %v8216, 1e-30
    %v8239 = vmax.f32 %v8218, 1e-30
    %v8240 = vmax.f32 %v8220, 1e-30
    %v8241 = vmax.f32 %v8222, 1e-30
    %v8242 = vmax.f32 %v8224, 1e-30
    %v8243 = vmax.f32 %v8226, 1e-30
    %v8244 = vmax.f32 %v8228, 1e-30
    %v8245 = vrcp.pop %v8229
    %v8246 = vrcp.pop %v8230
    %v8247 = vrcp.pop %v8231
    %v8248 = vrcp.pop %v8232
    %v8249 = vrcp.pop %v8233
    %v8250 = vrcp.pop %v8234
    %v8251 = vrcp.pop %v8235
    %v8252 = vrcp.pop %v8236
    %v8253 = vrcp.pop %v8237
    %v8254 = vrcp.pop %v8238
    %v8255 = vrcp.pop %v8239
    %v8256 = vrcp.pop %v8240
    %v8257 = vrcp.pop %v8241
    %v8258 = vrcp.pop %v8242
    %v8259 = vrcp.pop %v8243
    %v8260 = vrcp.pop %v8244
    %v8261 = vmul.f32 %v8181, %v8245
    %v8262 = vmul.f32 %v8182, %v8246
    %v8263 = vmul.f32 %v8183, %v8247
    %v8264 = vmul.f32 %v8184, %v8248
    %v8265 = vmul.f32 %v8185, %v8249
    %v8266 = vmul.f32 %v8186, %v8250
    %v8267 = vmul.f32 %v8187, %v8251
    %v8268 = vmul.f32 %v8188, %v8252
    %v8269 = vmul.f32 %v8189, %v8253
    %v8270 = vmul.f32 %v8190, %v8254
    %v8271 = vmul.f32 %v8191, %v8255
    %v8272 = vmul.f32 %v8192, %v8256
    %v8273 = vmul.f32 %v8193, %v8257
    %v8274 = vmul.f32 %v8194, %v8258
    %v8275 = vmul.f32 %v8195, %v8259
    %v8276 = vmul.f32 %v8196, %v8260
    %v8277 = vmul.f32 %v8261, %v7396
    %v8278 = vmul.f32 %v8262, %v7397
    %v8279 = vmul.f32 %v8263, %v7398
    %v8280 = vmul.f32 %v8264, %v7399
    %v8281 = vmul.f32 %v8265, %v7400
    %v8282 = vmul.f32 %v8266, %v7401
    %v8283 = vmul.f32 %v8267, %v7402
    %v8284 = vmul.f32 %v8268, %v7403
    %v8285 = vmul.f32 %v8269, %v7404
    %v8286 = vmul.f32 %v8270, %v7405
    %v8287 = vmul.f32 %v8271, %v7406
    %v8288 = vmul.f32 %v8272, %v7407
    %v8289 = vmul.f32 %v8273, %v7408
    %v8290 = vmul.f32 %v8274, %v7409
    %v8291 = vmul.f32 %v8275, %v7410
    %v8292 = vmul.f32 %v8276, %v7411
    %8293 = vadd.xlane.f32.xlu0 %v8277
    %v8294 = vpop.xlane.xlu0 %8293
    %8295 = vadd.xlane.f32.xlu0 %v8278
    %v8296 = vpop.xlane.xlu0 %8295
    %8297 = vadd.xlane.f32.xlu0 %v8279
    %v8298 = vpop.xlane.xlu0 %8297
    %8299 = vadd.xlane.f32.xlu0 %v8280
    %v8300 = vpop.xlane.xlu0 %8299
    %8301 = vadd.xlane.f32.xlu0 %v8281
    %v8302 = vpop.xlane.xlu0 %8301
    %8303 = vadd.xlane.f32.xlu0 %v8282
    %v8304 = vpop.xlane.xlu0 %8303
    %8305 = vadd.xlane.f32.xlu0 %v8283
    %v8306 = vpop.xlane.xlu0 %8305
    %8307 = vadd.xlane.f32.xlu0 %v8284
    %v8308 = vpop.xlane.xlu0 %8307
    %8309 = vadd.xlane.f32.xlu0 %v8285
    %v8310 = vpop.xlane.xlu0 %8309
    %8311 = vadd.xlane.f32.xlu0 %v8286
    %v8312 = vpop.xlane.xlu0 %8311
    %8313 = vadd.xlane.f32.xlu0 %v8287
    %v8314 = vpop.xlane.xlu0 %8313
    %8315 = vadd.xlane.f32.xlu0 %v8288
    %v8316 = vpop.xlane.xlu0 %8315
    %8317 = vadd.xlane.f32.xlu0 %v8289
    %v8318 = vpop.xlane.xlu0 %8317
    %8319 = vadd.xlane.f32.xlu0 %v8290
    %v8320 = vpop.xlane.xlu0 %8319
    %8321 = vadd.xlane.f32.xlu0 %v8291
    %v8322 = vpop.xlane.xlu0 %8321
    %8323 = vadd.xlane.f32.xlu0 %v8292
    %v8324 = vpop.xlane.xlu0 %8323
    %v8325 = vmul.f32 %v8261, %v7733
    %v8326 = vmul.f32 %v8262, %v7734
    %v8327 = vmul.f32 %v8263, %v7735
    %v8328 = vmul.f32 %v8264, %v7736
    %v8329 = vmul.f32 %v8265, %v7737
    %v8330 = vmul.f32 %v8266, %v7738
    %v8331 = vmul.f32 %v8267, %v7739
    %v8332 = vmul.f32 %v8268, %v7740
    %v8333 = vmul.f32 %v8269, %v7741
    %v8334 = vmul.f32 %v8270, %v7742
    %v8335 = vmul.f32 %v8271, %v7743
    %v8336 = vmul.f32 %v8272, %v7744
    %v8337 = vmul.f32 %v8273, %v7745
    %v8338 = vmul.f32 %v8274, %v7746
    %v8339 = vmul.f32 %v8275, %v7747
    %v8340 = vmul.f32 %v8276, %v7748
    %8341 = vadd.xlane.f32.xlu0 %v8325
    %v8342 = vpop.xlane.xlu0 %8341
    %8343 = vadd.xlane.f32.xlu0 %v8326
    %v8344 = vpop.xlane.xlu0 %8343
    %8345 = vadd.xlane.f32.xlu0 %v8327
    %v8346 = vpop.xlane.xlu0 %8345
    %8347 = vadd.xlane.f32.xlu0 %v8328
    %v8348 = vpop.xlane.xlu0 %8347
    %8349 = vadd.xlane.f32.xlu0 %v8329
    %v8350 = vpop.xlane.xlu0 %8349
    %8351 = vadd.xlane.f32.xlu0 %v8330
    %v8352 = vpop.xlane.xlu0 %8351
    %8353 = vadd.xlane.f32.xlu0 %v8331
    %v8354 = vpop.xlane.xlu0 %8353
    %8355 = vadd.xlane.f32.xlu0 %v8332
    %v8356 = vpop.xlane.xlu0 %8355
    %8357 = vadd.xlane.f32.xlu0 %v8333
    %v8358 = vpop.xlane.xlu0 %8357
    %8359 = vadd.xlane.f32.xlu0 %v8334
    %v8360 = vpop.xlane.xlu0 %8359
    %8361 = vadd.xlane.f32.xlu0 %v8335
    %v8362 = vpop.xlane.xlu0 %8361
    %8363 = vadd.xlane.f32.xlu0 %v8336
    %v8364 = vpop.xlane.xlu0 %8363
    %8365 = vadd.xlane.f32.xlu0 %v8337
    %v8366 = vpop.xlane.xlu0 %8365
    %8367 = vadd.xlane.f32.xlu0 %v8338
    %v8368 = vpop.xlane.xlu0 %8367
    %8369 = vadd.xlane.f32.xlu0 %v8339
    %v8370 = vpop.xlane.xlu0 %8369
    %8371 = vadd.xlane.f32.xlu0 %v8340
    %v8372 = vpop.xlane.xlu0 %8371
    %v8373 = vmul.f32 %v8261, %v7845
    %v8374 = vmul.f32 %v8262, %v7846
    %v8375 = vmul.f32 %v8263, %v7847
    %v8376 = vmul.f32 %v8264, %v7848
    %v8377 = vmul.f32 %v8265, %v7849
    %v8378 = vmul.f32 %v8266, %v7850
    %v8379 = vmul.f32 %v8267, %v7851
    %v8380 = vmul.f32 %v8268, %v7852
    %v8381 = vmul.f32 %v8269, %v7853
    %v8382 = vmul.f32 %v8270, %v7854
    %v8383 = vmul.f32 %v8271, %v7855
    %v8384 = vmul.f32 %v8272, %v7856
    %v8385 = vmul.f32 %v8273, %v7857
    %v8386 = vmul.f32 %v8274, %v7858
    %v8387 = vmul.f32 %v8275, %v7859
    %v8388 = vmul.f32 %v8276, %v7860
    %8389 = vadd.xlane.f32.xlu0 %v8373
    %v8390 = vpop.xlane.xlu0 %8389
    %8391 = vadd.xlane.f32.xlu0 %v8374
    %v8392 = vpop.xlane.xlu0 %8391
    %8393 = vadd.xlane.f32.xlu0 %v8375
    %v8394 = vpop.xlane.xlu0 %8393
    %8395 = vadd.xlane.f32.xlu0 %v8376
    %v8396 = vpop.xlane.xlu0 %8395
    %8397 = vadd.xlane.f32.xlu0 %v8377
    %v8398 = vpop.xlane.xlu0 %8397
    %8399 = vadd.xlane.f32.xlu0 %v8378
    %v8400 = vpop.xlane.xlu0 %8399
    %8401 = vadd.xlane.f32.xlu0 %v8379
    %v8402 = vpop.xlane.xlu0 %8401
    %8403 = vadd.xlane.f32.xlu0 %v8380
    %v8404 = vpop.xlane.xlu0 %8403
    %8405 = vadd.xlane.f32.xlu0 %v8381
    %v8406 = vpop.xlane.xlu0 %8405
    %8407 = vadd.xlane.f32.xlu0 %v8382
    %v8408 = vpop.xlane.xlu0 %8407
    %8409 = vadd.xlane.f32.xlu0 %v8383
    %v8410 = vpop.xlane.xlu0 %8409
    %8411 = vadd.xlane.f32.xlu0 %v8384
    %v8412 = vpop.xlane.xlu0 %8411
    %8413 = vadd.xlane.f32.xlu0 %v8385
    %v8414 = vpop.xlane.xlu0 %8413
    %8415 = vadd.xlane.f32.xlu0 %v8386
    %v8416 = vpop.xlane.xlu0 %8415
    %8417 = vadd.xlane.f32.xlu0 %v8387
    %v8418 = vpop.xlane.xlu0 %8417
    %8419 = vadd.xlane.f32.xlu0 %v8388
    %v8420 = vpop.xlane.xlu0 %8419
    %v8421 = vmul.f32 %v8261, %v7957
    %v8422 = vmul.f32 %v8262, %v7958
    %v8423 = vmul.f32 %v8263, %v7959
    %v8424 = vmul.f32 %v8264, %v7960
    %v8425 = vmul.f32 %v8265, %v7961
    %v8426 = vmul.f32 %v8266, %v7962
    %v8427 = vmul.f32 %v8267, %v7963
    %v8428 = vmul.f32 %v8268, %v7964
    %v8429 = vmul.f32 %v8269, %v7965
    %v8430 = vmul.f32 %v8270, %v7966
    %v8431 = vmul.f32 %v8271, %v7967
    %v8432 = vmul.f32 %v8272, %v7968
    %v8433 = vmul.f32 %v8273, %v7969
    %v8434 = vmul.f32 %v8274, %v7970
    %v8435 = vmul.f32 %v8275, %v7971
    %v8436 = vmul.f32 %v8276, %v7972
    %8437 = vadd.xlane.f32.xlu0 %v8421
    %v8438 = vpop.xlane.xlu0 %8437
    %8439 = vadd.xlane.f32.xlu0 %v8422
    %v8440 = vpop.xlane.xlu0 %8439
    %8441 = vadd.xlane.f32.xlu0 %v8423
    %v8442 = vpop.xlane.xlu0 %8441
    %8443 = vadd.xlane.f32.xlu0 %v8424
    %v8444 = vpop.xlane.xlu0 %8443
    %8445 = vadd.xlane.f32.xlu0 %v8425
    %v8446 = vpop.xlane.xlu0 %8445
    %8447 = vadd.xlane.f32.xlu0 %v8426
    %v8448 = vpop.xlane.xlu0 %8447
    %8449 = vadd.xlane.f32.xlu0 %v8427
    %v8450 = vpop.xlane.xlu0 %8449
    %8451 = vadd.xlane.f32.xlu0 %v8428
    %v8452 = vpop.xlane.xlu0 %8451
    %8453 = vadd.xlane.f32.xlu0 %v8429
    %v8454 = vpop.xlane.xlu0 %8453
    %8455 = vadd.xlane.f32.xlu0 %v8430
    %v8456 = vpop.xlane.xlu0 %8455
    %8457 = vadd.xlane.f32.xlu0 %v8431
    %v8458 = vpop.xlane.xlu0 %8457
    %8459 = vadd.xlane.f32.xlu0 %v8432
    %v8460 = vpop.xlane.xlu0 %8459
    %8461 = vadd.xlane.f32.xlu0 %v8433
    %v8462 = vpop.xlane.xlu0 %8461
    %8463 = vadd.xlane.f32.xlu0 %v8434
    %v8464 = vpop.xlane.xlu0 %8463
    %8465 = vadd.xlane.f32.xlu0 %v8435
    %v8466 = vpop.xlane.xlu0 %8465
    %8467 = vadd.xlane.f32.xlu0 %v8436
    %v8468 = vpop.xlane.xlu0 %8467
    %v8469 = vsel %vm2016, %v8294, %v8342
    %v8470 = vsel %vm2016, %v8296, %v8344
    %v8471 = vsel %vm2016, %v8298, %v8346
    %v8472 = vsel %vm2016, %v8300, %v8348
    %v8473 = vsel %vm2016, %v8302, %v8350
    %v8474 = vsel %vm2016, %v8304, %v8352
    %v8475 = vsel %vm2016, %v8306, %v8354
    %v8476 = vsel %vm2016, %v8308, %v8356
    %v8477 = vsel %vm2016, %v8310, %v8358
    %v8478 = vsel %vm2016, %v8312, %v8360
    %v8479 = vsel %vm2016, %v8314, %v8362
    %v8480 = vsel %vm2016, %v8316, %v8364
    %v8481 = vsel %vm2016, %v8318, %v8366
    %v8482 = vsel %vm2016, %v8320, %v8368
    %v8483 = vsel %vm2016, %v8322, %v8370
    %v8484 = vsel %vm2016, %v8324, %v8372
    %v8485 = vsel %vm2033, %v8469, %v8390
    %v8486 = vsel %vm2033, %v8470, %v8392
    %v8487 = vsel %vm2033, %v8471, %v8394
    %v8488 = vsel %vm2033, %v8472, %v8396
    %v8489 = vsel %vm2033, %v8473, %v8398
    %v8490 = vsel %vm2033, %v8474, %v8400
    %v8491 = vsel %vm2033, %v8475, %v8402
    %v8492 = vsel %vm2033, %v8476, %v8404
    %v8493 = vsel %vm2033, %v8477, %v8406
    %v8494 = vsel %vm2033, %v8478, %v8408
    %v8495 = vsel %vm2033, %v8479, %v8410
    %v8496 = vsel %vm2033, %v8480, %v8412
    %v8497 = vsel %vm2033, %v8481, %v8414
    %v8498 = vsel %vm2033, %v8482, %v8416
    %v8499 = vsel %vm2033, %v8483, %v8418
    %v8500 = vsel %vm2033, %v8484, %v8420
    %v8501 = vsel %vm2050, %v8485, %v8438
    %v8502 = vsel %vm2050, %v8486, %v8440
    %v8503 = vsel %vm2050, %v8487, %v8442
    %v8504 = vsel %vm2050, %v8488, %v8444
    %v8505 = vsel %vm2050, %v8489, %v8446
    %v8506 = vsel %vm2050, %v8490, %v8448
    %v8507 = vsel %vm2050, %v8491, %v8450
    %v8508 = vsel %vm2050, %v8492, %v8452
    %v8509 = vsel %vm2050, %v8493, %v8454
    %v8510 = vsel %vm2050, %v8494, %v8456
    %v8511 = vsel %vm2050, %v8495, %v8458
    %v8512 = vsel %vm2050, %v8496, %v8460
    %v8513 = vsel %vm2050, %v8497, %v8462
    %v8514 = vsel %vm2050, %v8498, %v8464
    %v8515 = vsel %vm2050, %v8499, %v8466
    %v8516 = vsel %vm2050, %v8500, %v8468
    %v8518 = vsel %vm907, %v8501, 0
    %v8521 = vsel %vm907, %v8502, 0
    %v8524 = vsel %vm907, %v8503, 0
    %v8527 = vsel %vm907, %v8504, 0
    %v8530 = vsel %vm907, %v8505, 0
    %v8533 = vsel %vm907, %v8506, 0
    %v8536 = vsel %vm907, %v8507, 0
    %v8539 = vsel %vm907, %v8508, 0
    %v8542 = vsel %vm907, %v8509, 0
    %v8545 = vsel %vm907, %v8510, 0
    %v8548 = vsel %vm907, %v8511, 0
    %v8551 = vsel %vm907, %v8512, 0
    %v8554 = vsel %vm907, %v8513, 0
    %v8557 = vsel %vm907, %v8514, 0
    %v8560 = vsel %vm907, %v8515, 0
    %v8563 = vsel %vm907, %v8516, 0
    %8565 = vmatprep.subr.mxu0 0.0
    %8566 = vmatpush1.msra.mxu0 %v2116
    %8567 = vmatprep.subr.mxu0 0.0
    %8568 = vmatpush1.msra.mxu0 0.0
    %8569 = vmatprep.subr.mxu0 0.0
    %8570 = vmatpush1.msra.mxu0 0.0
    %8571 = vmatprep.subr.mxu0 0.0
    %8572 = vmatpush1.msra.mxu0 0.0
    %8573 = vmatprep.subr.mxu0 0.0
    %8574 = vmatpush1.msra.mxu0 0.0
    %8575 = vmatprep.subr.mxu0 0.0
    %8576 = vmatpush1.msra.mxu0 0.0
    %8577 = vmatprep.subr.mxu0 0.0
    %8578 = vmatpush1.msra.mxu0 0.0
    %8579 = vmatprep.subr.mxu0 0.0
    %8580 = vmatpush1.msra.mxu0 0.0
    %8581 = vmatprep.subr.mxu0 0.0
    %8582 = vmatpush1.msra.mxu0 0.0
    %8583 = vmatprep.subr.mxu0 0.0
    %8584 = vmatpush1.msra.mxu0 0.0
    %8585 = vmatprep.subr.mxu0 0.0
    %8586 = vmatpush1.msra.mxu0 0.0
    %8587 = vmatprep.subr.mxu0 0.0
    %8588 = vmatpush1.msra.mxu0 0.0
    %8589 = vmatprep.subr.mxu0 0.0
    %8590 = vmatpush1.msra.mxu0 0.0
    %8591 = vmatprep.subr.mxu0 0.0
    %8592 = vmatpush1.msra.mxu0 0.0
    %8593 = vmatprep.subr.mxu0 0.0
    %8594 = vmatpush1.msra.mxu0 0.0
    %8595 = vmatprep.subr.mxu0 0.0
    %8596 = vmatpush1.msra.mxu0 0.0
    %8597 = vmatprep.subr.mxu0 0.0
    %8598 = vmatpush1.msra.mxu0 0.0
    %8599 = vmatprep.subr.mxu0 0.0
    %8600 = vmatpush1.msra.mxu0 0.0
    %8601 = vmatprep.subr.mxu0 0.0
    %8602 = vmatpush1.msra.mxu0 0.0
    %8603 = vmatprep.subr.mxu0 0.0
    %8604 = vmatpush1.msra.mxu0 0.0
    %8605 = vmatprep.subr.mxu0 0.0
    %8606 = vmatpush1.msra.mxu0 0.0
    %8607 = vmatprep.subr.mxu0 0.0
    %8608 = vmatpush1.msra.mxu0 0.0
    %8609 = vmatprep.subr.mxu0 0.0
    %8610 = vmatpush1.msra.mxu0 0.0
    %8611 = vmatprep.subr.mxu0 0.0
    %8612 = vmatpush1.msra.mxu0 0.0
    %8613 = vmatprep.subr.mxu0 0.0
    %8614 = vmatpush1.msra.mxu0 0.0
    %8615 = vmatprep.subr.mxu0 0.0
    %8616 = vmatpush1.msra.mxu0 0.0
    %8617 = vmatprep.subr.mxu0 0.0
    %8618 = vmatpush1.msra.mxu0 0.0
    %8619 = vmatprep.subr.mxu0 0.0
    %8620 = vmatpush1.msra.mxu0 0.0
    %8621 = vmatprep.subr.mxu0 0.0
    %8622 = vmatpush1.msra.mxu0 0.0
    %8623 = vmatprep.subr.mxu0 0.0
    %8624 = vmatpush1.msra.mxu0 0.0
    %8625 = vmatprep.subr.mxu0 0.0
    %8626 = vmatpush1.msra.mxu0 0.0
    %8627 = vmatprep.subr.mxu0 0.0
    %8628 = vmatpush1.msra.mxu0 0.0
    %8629 = vmatprep.mubr.f32.mxu0 0.0
    %8630 = vmatmul.mubr.f32.gmra.mrb[0].mxu0 %v8518
    %v8631 = vpop.f32.mrb[0].mxu0
    %v8632 = vadd.f32 0.0, %v8631
    %v8633 = vpop.f32.mrb[0].mxu0
    %8634 = vmatprep.mubr.f32.mxu0 0.0
    %8635 = vmatmul.mubr.f32.gmra.mrb[0].mxu0 %v8521
    %v8636 = vpop.f32.mrb[0].mxu0
    %v8637 = vadd.f32 0.0, %v8636
    %v8638 = vpop.f32.mrb[0].mxu0
    %8639 = vmatprep.mubr.f32.mxu0 0.0
    %8640 = vmatmul.mubr.f32.gmra.mrb[0].mxu0 %v8524
    %v8641 = vpop.f32.mrb[0].mxu0
    %v8642 = vadd.f32 0.0, %v8641
    %v8643 = vpop.f32.mrb[0].mxu0
    %8644 = vmatprep.mubr.f32.mxu0 0.0
    %8645 = vmatmul.mubr.f32.gmra.mrb[0].mxu0 %v8527
    %v8646 = vpop.f32.mrb[0].mxu0
    %v8647 = vadd.f32 0.0, %v8646
    %v8648 = vpop.f32.mrb[0].mxu0
    %8649 = vmatprep.mubr.f32.mxu0 0.0
    %8650 = vmatmul.mubr.f32.gmra.mrb[0].mxu0 %v8530
    %v8651 = vpop.f32.mrb[0].mxu0
    %v8652 = vadd.f32 0.0, %v8651
    %v8653 = vpop.f32.mrb[0].mxu0
    %8654 = vmatprep.mubr.f32.mxu0 0.0
    %8655 = vmatmul.mubr.f32.gmra.mrb[0].mxu0 %v8533
    %v8656 = vpop.f32.mrb[0].mxu0
    %v8657 = vadd.f32 0.0, %v8656
    %v8658 = vpop.f32.mrb[0].mxu0
    %8659 = vmatprep.mubr.f32.mxu0 0.0
    %8660 = vmatmul.mubr.f32.gmra.mrb[0].mxu0 %v8536
    %v8661 = vpop.f32.mrb[0].mxu0
    %v8662 = vadd.f32 0.0, %v8661
    %v8663 = vpop.f32.mrb[0].mxu0
    %8664 = vmatprep.mubr.f32.mxu0 0.0
    %8665 = vmatmul.mubr.f32.gmra.mrb[0].mxu0 %v8539
    %v8666 = vpop.f32.mrb[0].mxu0
    %v8667 = vadd.f32 0.0, %v8666
    %v8668 = vpop.f32.mrb[0].mxu0
    %8669 = vmatprep.mubr.f32.mxu0 0.0
    %8670 = vmatmul.mubr.f32.gmra.mrb[0].mxu0 %v8542
    %v8671 = vpop.f32.mrb[0].mxu0
    %v8672 = vadd.f32 0.0, %v8671
    %v8673 = vpop.f32.mrb[0].mxu0
    %8674 = vmatprep.mubr.f32.mxu0 0.0
    %8675 = vmatmul.mubr.f32.gmra.mrb[0].mxu0 %v8545
    %v8676 = vpop.f32.mrb[0].mxu0
    %v8677 = vadd.f32 0.0, %v8676
    %v8678 = vpop.f32.mrb[0].mxu0
    %8679 = vmatprep.mubr.f32.mxu0 0.0
    %8680 = vmatmul.mubr.f32.gmra.mrb[0].mxu0 %v8548
    %v8681 = vpop.f32.mrb[0].mxu0
    %v8682 = vadd.f32 0.0, %v8681
    %v8683 = vpop.f32.mrb[0].mxu0
    %8684 = vmatprep.mubr.f32.mxu0 0.0
    %8685 = vmatmul.mubr.f32.gmra.mrb[0].mxu0 %v8551
    %v8686 = vpop.f32.mrb[0].mxu0
    %v8687 = vadd.f32 0.0, %v8686
    %v8688 = vpop.f32.mrb[0].mxu0
    %8689 = vmatprep.mubr.f32.mxu0 0.0
    %8690 = vmatmul.mubr.f32.gmra.mrb[0].mxu0 %v8554
    %v8691 = vpop.f32.mrb[0].mxu0
    %v8692 = vadd.f32 0.0, %v8691
    %v8693 = vpop.f32.mrb[0].mxu0
    %8694 = vmatprep.mubr.f32.mxu0 0.0
    %8695 = vmatmul.mubr.f32.gmra.mrb[0].mxu0 %v8557
    %v8696 = vpop.f32.mrb[0].mxu0
    %v8697 = vadd.f32 0.0, %v8696
    %v8698 = vpop.f32.mrb[0].mxu0
    %8699 = vmatprep.mubr.f32.mxu0 0.0
    %8700 = vmatmul.mubr.f32.gmra.mrb[0].mxu0 %v8560
    %v8701 = vpop.f32.mrb[0].mxu0
    %v8702 = vadd.f32 0.0, %v8701
    %v8703 = vpop.f32.mrb[0].mxu0
    %8704 = vmatprep.mubr.f32.mxu0 0.0
    %8705 = vmatmul.mubr.f32.gmra.mrb[0].mxu0 %v8563
    %v8706 = vpop.f32.mrb[0].mxu0
    %v8707 = vadd.f32 0.0, %v8706
    %v8708 = vpop.f32.mrb[0].mxu0
    %8709 = vdwg.mxu0
    %8710 = vrot.lane.b32.xlu0 %v7171, 64
    %v8711 = vpop.permute.xlu0 %8710
    %8712 = vrot.lane.b32.xlu0 %v7172, 64
    %v8713 = vpop.permute.xlu0 %8712
    %8714 = vrot.lane.b32.xlu0 %v7173, 64
    %v8715 = vpop.permute.xlu0 %8714
    %8716 = vrot.lane.b32.xlu0 %v7174, 64
    %v8717 = vpop.permute.xlu0 %8716
    %8718 = vrot.lane.b32.xlu0 %v7175, 64
    %v8719 = vpop.permute.xlu0 %8718
    %8720 = vrot.lane.b32.xlu0 %v7176, 64
    %v8721 = vpop.permute.xlu0 %8720
    %8722 = vrot.lane.b32.xlu0 %v7177, 64
    %v8723 = vpop.permute.xlu0 %8722
    %8724 = vrot.lane.b32.xlu0 %v7178, 64
    %v8725 = vpop.permute.xlu0 %8724
    %8726 = vrot.lane.b32.xlu0 %v7179, 64
    %v8727 = vpop.permute.xlu0 %8726
    %8728 = vrot.lane.b32.xlu0 %v7180, 64
    %v8729 = vpop.permute.xlu0 %8728
    %8730 = vrot.lane.b32.xlu0 %v7181, 64
    %v8731 = vpop.permute.xlu0 %8730
    %8732 = vrot.lane.b32.xlu0 %v7182, 64
    %v8733 = vpop.permute.xlu0 %8732
    %8734 = vrot.lane.b32.xlu0 %v7183, 64
    %v8735 = vpop.permute.xlu0 %8734
    %8736 = vrot.lane.b32.xlu0 %v7184, 64
    %v8737 = vpop.permute.xlu0 %8736
    %8738 = vrot.lane.b32.xlu0 %v7185, 64
    %v8739 = vpop.permute.xlu0 %8738
    %8740 = vrot.lane.b32.xlu0 %v7186, 64
    %v8741 = vpop.permute.xlu0 %8740
    %8758 = vmatprep.subr.mxu0 0.0
    %8759 = vmatpush1.msra.mxu0 %v8711
    %8760 = vmatprep.subr.mxu0 0.0
    %8761 = vmatpush1.msra.mxu0 %v8713
    %8762 = vmatprep.subr.mxu0 0.0
    %8763 = vmatpush1.msra.mxu0 %v8715
    %8764 = vmatprep.subr.mxu0 0.0
    %8765 = vmatpush1.msra.mxu0 %v8717
    %8766 = vmatprep.subr.mxu0 0.0
    %8767 = vmatpush1.msra.mxu0 %v8719
    %8768 = vmatprep.subr.mxu0 0.0
    %8769 = vmatpush1.msra.mxu0 %v8721
    %8770 = vmatprep.subr.mxu0 0.0
    %8771 = vmatpush1.msra.mxu0 %v8723
    %8772 = vmatprep.subr.mxu0 0.0
    %8773 = vmatpush1.msra.mxu0 %v8725
    %8774 = vmatprep.subr.mxu0 0.0
    %8775 = vmatpush1.msra.mxu0 %v8727
    %8776 = vmatprep.subr.mxu0 0.0
    %8777 = vmatpush1.msra.mxu0 %v8729
    %8778 = vmatprep.subr.mxu0 0.0
    %8779 = vmatpush1.msra.mxu0 %v8731
    %8780 = vmatprep.subr.mxu0 0.0
    %8781 = vmatpush1.msra.mxu0 %v8733
    %8782 = vmatprep.subr.mxu0 0.0
    %8783 = vmatpush1.msra.mxu0 %v8735
    %8784 = vmatprep.subr.mxu0 0.0
    %8785 = vmatpush1.msra.mxu0 %v8737
    %8786 = vmatprep.subr.mxu0 0.0
    %8787 = vmatpush1.msra.mxu0 %v8739
    %8788 = vmatprep.subr.mxu0 0.0
    %8789 = vmatpush1.msra.mxu0 %v8741
    %8790 = vmatprep.subr.mxu0 0.0
    %8791 = vmatpush1.msra.mxu0 0.0
    %8792 = vmatprep.subr.mxu0 0.0
    %8793 = vmatpush1.msra.mxu0 0.0
    %8794 = vmatprep.subr.mxu0 0.0
    %8795 = vmatpush1.msra.mxu0 0.0
    %8796 = vmatprep.subr.mxu0 0.0
    %8797 = vmatpush1.msra.mxu0 0.0
    %8798 = vmatprep.subr.mxu0 0.0
    %8799 = vmatpush1.msra.mxu0 0.0
    %8800 = vmatprep.subr.mxu0 0.0
    %8801 = vmatpush1.msra.mxu0 0.0
    %8802 = vmatprep.subr.mxu0 0.0
    %8803 = vmatpush1.msra.mxu0 0.0
    %8804 = vmatprep.subr.mxu0 0.0
    %8805 = vmatpush1.msra.mxu0 0.0
    %8806 = vmatprep.subr.mxu0 0.0
    %8807 = vmatpush1.msra.mxu0 0.0
    %8808 = vmatprep.subr.mxu0 0.0
    %8809 = vmatpush1.msra.mxu0 0.0
    %8810 = vmatprep.subr.mxu0 0.0
    %8811 = vmatpush1.msra.mxu0 0.0
    %8812 = vmatprep.subr.mxu0 0.0
    %8813 = vmatpush1.msra.mxu0 0.0
    %8814 = vmatprep.subr.mxu0 0.0
    %8815 = vmatpush1.msra.mxu0 0.0
    %8816 = vmatprep.subr.mxu0 0.0
    %8817 = vmatpush1.msra.mxu0 0.0
    %8818 = vmatprep.subr.mxu0 0.0
    %8819 = vmatpush1.msra.mxu0 0.0
    %8820 = vmatprep.subr.mxu0 0.0
    %8821 = vmatpush1.msra.mxu0 0.0
    %8822 = vmatprep.mubr.f32.mxu0 0.0
    %8823 = vmatmul.mubr.f32.gmra.mrb[0].mxu0 %v8261
    %v8824 = vpop.f32.mrb[0].mxu0
    %v8825 = vadd.f32 %v8632, %v8824
    %v8826 = vpop.f32.mrb[0].mxu0
    %8827 = vmatprep.mubr.f32.mxu0 0.0
    %8828 = vmatmul.mubr.f32.gmra.mrb[0].mxu0 %v8262
    %v8829 = vpop.f32.mrb[0].mxu0
    %v8830 = vadd.f32 %v8637, %v8829
    %v8831 = vpop.f32.mrb[0].mxu0
    %8832 = vmatprep.mubr.f32.mxu0 0.0
    %8833 = vmatmul.mubr.f32.gmra.mrb[0].mxu0 %v8263
    %v8834 = vpop.f32.mrb[0].mxu0
    %v8835 = vadd.f32 %v8642, %v8834
    %v8836 = vpop.f32.mrb[0].mxu0
    %8837 = vmatprep.mubr.f32.mxu0 0.0
    %8838 = vmatmul.mubr.f32.gmra.mrb[0].mxu0 %v8264
    %v8839 = vpop.f32.mrb[0].mxu0
    %v8840 = vadd.f32 %v8647, %v8839
    %v8841 = vpop.f32.mrb[0].mxu0
    %8842 = vmatprep.mubr.f32.mxu0 0.0
    %8843 = vmatmul.mubr.f32.gmra.mrb[0].mxu0 %v8265
    %v8844 = vpop.f32.mrb[0].mxu0
    %v8845 = vadd.f32 %v8652, %v8844
    %v8846 = vpop.f32.mrb[0].mxu0
    %8847 = vmatprep.mubr.f32.mxu0 0.0
    %8848 = vmatmul.mubr.f32.gmra.mrb[0].mxu0 %v8266
    %v8849 = vpop.f32.mrb[0].mxu0
    %v8850 = vadd.f32 %v8657, %v8849
    %v8851 = vpop.f32.mrb[0].mxu0
    %8852 = vmatprep.mubr.f32.mxu0 0.0
    %8853 = vmatmul.mubr.f32.gmra.mrb[0].mxu0 %v8267
    %v8854 = vpop.f32.mrb[0].mxu0
    %v8855 = vadd.f32 %v8662, %v8854
    %v8856 = vpop.f32.mrb[0].mxu0
    %8857 = vmatprep.mubr.f32.mxu0 0.0
    %8858 = vmatmul.mubr.f32.gmra.mrb[0].mxu0 %v8268
    %v8859 = vpop.f32.mrb[0].mxu0
    %v8860 = vadd.f32 %v8667, %v8859
    %v8861 = vpop.f32.mrb[0].mxu0
    %8862 = vmatprep.mubr.f32.mxu0 0.0
    %8863 = vmatmul.mubr.f32.gmra.mrb[0].mxu0 %v8269
    %v8864 = vpop.f32.mrb[0].mxu0
    %v8865 = vadd.f32 %v8672, %v8864
    %v8866 = vpop.f32.mrb[0].mxu0
    %8867 = vmatprep.mubr.f32.mxu0 0.0
    %8868 = vmatmul.mubr.f32.gmra.mrb[0].mxu0 %v8270
    %v8869 = vpop.f32.mrb[0].mxu0
    %v8870 = vadd.f32 %v8677, %v8869
    %v8871 = vpop.f32.mrb[0].mxu0
    %8872 = vmatprep.mubr.f32.mxu0 0.0
    %8873 = vmatmul.mubr.f32.gmra.mrb[0].mxu0 %v8271
    %v8874 = vpop.f32.mrb[0].mxu0
    %v8875 = vadd.f32 %v8682, %v8874
    %v8876 = vpop.f32.mrb[0].mxu0
    %8877 = vmatprep.mubr.f32.mxu0 0.0
    %8878 = vmatmul.mubr.f32.gmra.mrb[0].mxu0 %v8272
    %v8879 = vpop.f32.mrb[0].mxu0
    %v8880 = vadd.f32 %v8687, %v8879
    %v8881 = vpop.f32.mrb[0].mxu0
    %8882 = vmatprep.mubr.f32.mxu0 0.0
    %8883 = vmatmul.mubr.f32.gmra.mrb[0].mxu0 %v8273
    %v8884 = vpop.f32.mrb[0].mxu0
    %v8885 = vadd.f32 %v8692, %v8884
    %v8886 = vpop.f32.mrb[0].mxu0
    %8887 = vmatprep.mubr.f32.mxu0 0.0
    %8888 = vmatmul.mubr.f32.gmra.mrb[0].mxu0 %v8274
    %v8889 = vpop.f32.mrb[0].mxu0
    %v8890 = vadd.f32 %v8697, %v8889
    %v8891 = vpop.f32.mrb[0].mxu0
    %8892 = vmatprep.mubr.f32.mxu0 0.0
    %8893 = vmatmul.mubr.f32.gmra.mrb[0].mxu0 %v8275
    %v8894 = vpop.f32.mrb[0].mxu0
    %v8895 = vadd.f32 %v8702, %v8894
    %v8896 = vpop.f32.mrb[0].mxu0
    %8897 = vmatprep.mubr.f32.mxu0 0.0
    %8898 = vmatmul.mubr.f32.gmra.mrb[0].mxu0 %v8276
    %v8899 = vpop.f32.mrb[0].mxu0
    %v8900 = vadd.f32 %v8707, %v8899
    %v8901 = vpop.f32.mrb[0].mxu0
    %8902 = vdwg.mxu0
    %v8903 = vld [vmem:[#allocation2] sm:$0xff]
    %v8904 = vld [vmem:[#allocation2 + $0x8] sm:$0xff]
    %v8905 = vld [vmem:[#allocation2 + $0x10] sm:$0xff]
    %v8906 = vld [vmem:[#allocation2 + $0x18] sm:$0xff]
    %v8907 = vld [vmem:[#allocation2 + $0x20] sm:$0xff]
    %v8908 = vld [vmem:[#allocation2 + $0x28] sm:$0xff]
    %v8909 = vld [vmem:[#allocation2 + $0x30] sm:$0xff]
    %v8910 = vld [vmem:[#allocation2 + $0x38] sm:$0xff]
    %v8911 = vld [vmem:[#allocation2 + $0x40] sm:$0xff]
    %v8912 = vld [vmem:[#allocation2 + $0x48] sm:$0xff]
    %v8913 = vld [vmem:[#allocation2 + $0x50] sm:$0xff]
    %v8914 = vld [vmem:[#allocation2 + $0x58] sm:$0xff]
    %v8915 = vld [vmem:[#allocation2 + $0x60] sm:$0xff]
    %v8916 = vld [vmem:[#allocation2 + $0x68] sm:$0xff]
    %v8917 = vld [vmem:[#allocation2 + $0x70] sm:$0xff]
    %v8918 = vld [vmem:[#allocation2 + $0x78] sm:$0xff]
    %8935 = vrot.lane.b32.xlu0 %v8903, 32
    %v8936 = vpop.permute.xlu0 %8935
    %8937 = vrot.lane.b32.xlu0 %v8904, 32
    %v8938 = vpop.permute.xlu0 %8937
    %8939 = vrot.lane.b32.xlu0 %v8905, 32
    %v8940 = vpop.permute.xlu0 %8939
    %8941 = vrot.lane.b32.xlu0 %v8906, 32
    %v8942 = vpop.permute.xlu0 %8941
    %8943 = vrot.lane.b32.xlu0 %v8907, 32
    %v8944 = vpop.permute.xlu0 %8943
    %8945 = vrot.lane.b32.xlu0 %v8908, 32
    %v8946 = vpop.permute.xlu0 %8945
    %8947 = vrot.lane.b32.xlu0 %v8909, 32
    %v8948 = vpop.permute.xlu0 %8947
    %8949 = vrot.lane.b32.xlu0 %v8910, 32
    %v8950 = vpop.permute.xlu0 %8949
    %8951 = vrot.lane.b32.xlu0 %v8911, 32
    %v8952 = vpop.permute.xlu0 %8951
    %8953 = vrot.lane.b32.xlu0 %v8912, 32
    %v8954 = vpop.permute.xlu0 %8953
    %8955 = vrot.lane.b32.xlu0 %v8913, 32
    %v8956 = vpop.permute.xlu0 %8955
    %8957 = vrot.lane.b32.xlu0 %v8914, 32
    %v8958 = vpop.permute.xlu0 %8957
    %8959 = vrot.lane.b32.xlu0 %v8915, 32
    %v8960 = vpop.permute.xlu0 %8959
    %8961 = vrot.lane.b32.xlu0 %v8916, 32
    %v8962 = vpop.permute.xlu0 %8961
    %8963 = vrot.lane.b32.xlu0 %v8917, 32
    %v8964 = vpop.permute.xlu0 %8963
    %8965 = vrot.lane.b32.xlu0 %v8918, 32
    %v8966 = vpop.permute.xlu0 %8965
    %v8983 = vadd.f32 %v8825, %v8936
    %v8984 = vadd.f32 %v8830, %v8938
    %v8985 = vadd.f32 %v8835, %v8940
    %v8986 = vadd.f32 %v8840, %v8942
    %v8987 = vadd.f32 %v8845, %v8944
    %v8988 = vadd.f32 %v8850, %v8946
    %v8989 = vadd.f32 %v8855, %v8948
    %v8990 = vadd.f32 %v8860, %v8950
    %v8991 = vadd.f32 %v8865, %v8952
    %v8992 = vadd.f32 %v8870, %v8954
    %v8993 = vadd.f32 %v8875, %v8956
    %v8994 = vadd.f32 %v8880, %v8958
    %v8995 = vadd.f32 %v8885, %v8960
    %v8996 = vadd.f32 %v8890, %v8962
    %v8997 = vadd.f32 %v8895, %v8964
    %v8998 = vadd.f32 %v8900, %v8966
    %v8999 = vxor.u32 %v8983, 2147483648
    %v9000 = vxor.u32 %v8984, 2147483648
    %v9001 = vxor.u32 %v8985, 2147483648
    %v9002 = vxor.u32 %v8986, 2147483648
    %v9003 = vxor.u32 %v8987, 2147483648
    %v9004 = vxor.u32 %v8988, 2147483648
    %v9005 = vxor.u32 %v8989, 2147483648
    %v9006 = vxor.u32 %v8990, 2147483648
    %v9007 = vxor.u32 %v8991, 2147483648
    %v9008 = vxor.u32 %v8992, 2147483648
    %v9009 = vxor.u32 %v8993, 2147483648
    %v9010 = vxor.u32 %v8994, 2147483648
    %v9011 = vxor.u32 %v8995, 2147483648
    %v9012 = vxor.u32 %v8996, 2147483648
    %v9013 = vxor.u32 %v8997, 2147483648
    %v9014 = vxor.u32 %v8998, 2147483648
    %v9015 = vmul.f32 %v8999, 1.442695
    %v9016 = vpow.pop %v9015
    %v9017 = vmul.f32 %v9000, 1.442695
    %v9018 = vpow.pop %v9017
    %v9019 = vmul.f32 %v9001, 1.442695
    %v9020 = vpow.pop %v9019
    %v9021 = vmul.f32 %v9002, 1.442695
    %v9022 = vpow.pop %v9021
    %v9023 = vmul.f32 %v9003, 1.442695
    %v9024 = vpow.pop %v9023
    %v9025 = vmul.f32 %v9004, 1.442695
    %v9026 = vpow.pop %v9025
    %v9027 = vmul.f32 %v9005, 1.442695
    %v9028 = vpow.pop %v9027
    %v9029 = vmul.f32 %v9006, 1.442695
    %v9030 = vpow.pop %v9029
    %v9031 = vmul.f32 %v9007, 1.442695
    %v9032 = vpow.pop %v9031
    %v9033 = vmul.f32 %v9008, 1.442695
    %v9034 = vpow.pop %v9033
    %v9035 = vmul.f32 %v9009, 1.442695
    %v9036 = vpow.pop %v9035
    %v9037 = vmul.f32 %v9010, 1.442695
    %v9038 = vpow.pop %v9037
    %v9039 = vmul.f32 %v9011, 1.442695
    %v9040 = vpow.pop %v9039
    %v9041 = vmul.f32 %v9012, 1.442695
    %v9042 = vpow.pop %v9041
    %v9043 = vmul.f32 %v9013, 1.442695
    %v9044 = vpow.pop %v9043
    %v9045 = vmul.f32 %v9014, 1.442695
    %v9046 = vpow.pop %v9045
    %v9047 = vadd.f32 %v9016, 1.0
    %v9048 = vadd.f32 %v9018, 1.0
    %v9049 = vadd.f32 %v9020, 1.0
    %v9050 = vadd.f32 %v9022, 1.0
    %v9051 = vadd.f32 %v9024, 1.0
    %v9052 = vadd.f32 %v9026, 1.0
    %v9053 = vadd.f32 %v9028, 1.0
    %v9054 = vadd.f32 %v9030, 1.0
    %v9055 = vadd.f32 %v9032, 1.0
    %v9056 = vadd.f32 %v9034, 1.0
    %v9057 = vadd.f32 %v9036, 1.0
    %v9058 = vadd.f32 %v9038, 1.0
    %v9059 = vadd.f32 %v9040, 1.0
    %v9060 = vadd.f32 %v9042, 1.0
    %v9061 = vadd.f32 %v9044, 1.0
    %v9062 = vadd.f32 %v9046, 1.0
    %v9063 = vrcp.pop %v9047
    %v9064 = vmul.f32 1.0, %v9063
    %v9065 = vrcp.pop %v9048
    %v9066 = vmul.f32 1.0, %v9065
    %v9067 = vrcp.pop %v9049
    %v9068 = vmul.f32 1.0, %v9067
    %v9069 = vrcp.pop %v9050
    %v9070 = vmul.f32 1.0, %v9069
    %v9071 = vrcp.pop %v9051
    %v9072 = vmul.f32 1.0, %v9071
    %v9073 = vrcp.pop %v9052
    %v9074 = vmul.f32 1.0, %v9073
    %v9075 = vrcp.pop %v9053
    %v9076 = vmul.f32 1.0, %v9075
    %v9077 = vrcp.pop %v9054
    %v9078 = vmul.f32 1.0, %v9077
    %v9079 = vrcp.pop %v9055
    %v9080 = vmul.f32 1.0, %v9079
    %v9081 = vrcp.pop %v9056
    %v9082 = vmul.f32 1.0, %v9081
    %v9083 = vrcp.pop %v9057
    %v9084 = vmul.f32 1.0, %v9083
    %v9085 = vrcp.pop %v9058
    %v9086 = vmul.f32 1.0, %v9085
    %v9087 = vrcp.pop %v9059
    %v9088 = vmul.f32 1.0, %v9087
    %v9089 = vrcp.pop %v9060
    %v9090 = vmul.f32 1.0, %v9089
    %v9091 = vrcp.pop %v9061
    %v9092 = vmul.f32 1.0, %v9091
    %v9093 = vrcp.pop %v9062
    %v9094 = vmul.f32 1.0, %v9093
    %v9095 = vmul.f32 %v8983, %v9064
    %v9096 = vmul.f32 %v8984, %v9066
    %v9097 = vmul.f32 %v8985, %v9068
    %v9098 = vmul.f32 %v8986, %v9070
    %v9099 = vmul.f32 %v8987, %v9072
    %v9100 = vmul.f32 %v8988, %v9074
    %v9101 = vmul.f32 %v8989, %v9076
    %v9102 = vmul.f32 %v8990, %v9078
    %v9103 = vmul.f32 %v8991, %v9080
    %v9104 = vmul.f32 %v8992, %v9082
    %v9105 = vmul.f32 %v8993, %v9084
    %v9106 = vmul.f32 %v8994, %v9086
    %v9107 = vmul.f32 %v8995, %v9088
    %v9108 = vmul.f32 %v8996, %v9090
    %v9109 = vmul.f32 %v8997, %v9092
    %v9110 = vmul.f32 %v8998, %v9094
    %v9111 = vld [vmem:[#allocation7] sm:$0xff]
    %9112 = vmatprep.subr.mxu0 0.0
    %9113 = vmatpush1.msra.mxu0 %v9095
    %9114 = vmatprep.subr.mxu0 0.0
    %9115 = vmatpush1.msra.mxu0 %v9096
    %9116 = vmatprep.subr.mxu0 0.0
    %9117 = vmatpush1.msra.mxu0 %v9097
    %9118 = vmatprep.subr.mxu0 0.0
    %9119 = vmatpush1.msra.mxu0 %v9098
    %9120 = vmatprep.subr.mxu0 0.0
    %9121 = vmatpush1.msra.mxu0 %v9099
    %9122 = vmatprep.subr.mxu0 0.0
    %9123 = vmatpush1.msra.mxu0 %v9100
    %9124 = vmatprep.subr.mxu0 0.0
    %9125 = vmatpush1.msra.mxu0 %v9101
    %9126 = vmatprep.subr.mxu0 0.0
    %9127 = vmatpush1.msra.mxu0 %v9102
    %9128 = vmatprep.subr.mxu0 0.0
    %9129 = vmatpush1.msra.mxu0 %v9103
    %9130 = vmatprep.subr.mxu0 0.0
    %9131 = vmatpush1.msra.mxu0 %v9104
    %9132 = vmatprep.subr.mxu0 0.0
    %9133 = vmatpush1.msra.mxu0 %v9105
    %9134 = vmatprep.subr.mxu0 0.0
    %9135 = vmatpush1.msra.mxu0 %v9106
    %9136 = vmatprep.subr.mxu0 0.0
    %9137 = vmatpush1.msra.mxu0 %v9107
    %9138 = vmatprep.subr.mxu0 0.0
    %9139 = vmatpush1.msra.mxu0 %v9108
    %9140 = vmatprep.subr.mxu0 0.0
    %9141 = vmatpush1.msra.mxu0 %v9109
    %9142 = vmatprep.subr.mxu0 0.0
    %9143 = vmatpush1.msra.mxu0 %v9110
    %9144 = vmatprep.subr.mxu0 0.0
    %9145 = vmatpush1.msra.mxu0 0.0
    %9146 = vmatprep.subr.mxu0 0.0
    %9147 = vmatpush1.msra.mxu0 0.0
    %9148 = vmatprep.subr.mxu0 0.0
    %9149 = vmatpush1.msra.mxu0 0.0
    %9150 = vmatprep.subr.mxu0 0.0
    %9151 = vmatpush1.msra.mxu0 0.0
    %9152 = vmatprep.subr.mxu0 0.0
    %9153 = vmatpush1.msra.mxu0 0.0
    %9154 = vmatprep.subr.mxu0 0.0
    %9155 = vmatpush1.msra.mxu0 0.0
    %9156 = vmatprep.subr.mxu0 0.0
    %9157 = vmatpush1.msra.mxu0 0.0
    %9158 = vmatprep.subr.mxu0 0.0
    %9159 = vmatpush1.msra.mxu0 0.0
    %9160 = vmatprep.subr.mxu0 0.0
    %9161 = vmatpush1.msra.mxu0 0.0
    %9162 = vmatprep.subr.mxu0 0.0
    %9163 = vmatpush1.msra.mxu0 0.0
    %9164 = vmatprep.subr.mxu0 0.0
    %9165 = vmatpush1.msra.mxu0 0.0
    %9166 = vmatprep.subr.mxu0 0.0
    %9167 = vmatpush1.msra.mxu0 0.0
    %9168 = vmatprep.subr.mxu0 0.0
    %9169 = vmatpush1.msra.mxu0 0.0
    %9170 = vmatprep.subr.mxu0 0.0
    %9171 = vmatpush1.msra.mxu0 0.0
    %9172 = vmatprep.subr.mxu0 0.0
    %9173 = vmatpush1.msra.mxu0 0.0
    %9174 = vmatprep.subr.mxu0 0.0
    %9175 = vmatpush1.msra.mxu0 0.0
    %9176 = vmatprep.mubr.f32.mxu0 0.0
    %9177 = vmatmul.mubr.f32.gmra.mrb[0].mxu0 %v9111
    %v9178 = vpop.f32.mrb[0].mxu0
    %v9179 = vadd.f32 0.0, %v9178
    %v9180 = vpop.f32.mrb[0].mxu0
    %9181 = vdwg.mxu0
    %v9182 = vld [vmem:[%s9] sm:$0xff]
    %v9183 = vld [vmem:[%s9 + $0x8] sm:$0xff]
    %v9184 = vld [vmem:[%s9 + $0x10] sm:$0xff]
    %v9185 = vld [vmem:[%s9 + $0x18] sm:$0xff]
    %v9186 = vld [vmem:[#allocation13] sm:$0x1]
    %v9188 = vlaneseq
    %v9189 = vshrl.u32 %v9188, 7
    %v9190 = vsub.s32 0, %v9189
    %v9191 = vrot.slane %v9186, %v9190
    %v9194 = vsel %vm485, %v9179, 0
    %9196 = vmatprep.subr.mxu0 0.0
    %9197 = vmatpush1.msra.mxu0 %v9182
    %9198 = vmatprep.subr.mxu0 0.0
    %9199 = vmatpush1.msra.mxu0 %v9183
    %9200 = vmatprep.subr.mxu0 0.0
    %9201 = vmatpush1.msra.mxu0 %v9184
    %9202 = vmatprep.subr.mxu0 0.0
    %9203 = vmatpush1.msra.mxu0 %v9185
    %9204 = vmatprep.subr.mxu0 0.0
    %9205 = vmatpush1.msra.mxu0 0.0
    %9206 = vmatprep.subr.mxu0 0.0
    %9207 = vmatpush1.msra.mxu0 0.0
    %9208 = vmatprep.subr.mxu0 0.0
    %9209 = vmatpush1.msra.mxu0 0.0
    %9210 = vmatprep.subr.mxu0 0.0
    %9211 = vmatpush1.msra.mxu0 0.0
    %9212 = vmatprep.subr.mxu0 0.0
    %9213 = vmatpush1.msra.mxu0 0.0
    %9214 = vmatprep.subr.mxu0 0.0
    %9215 = vmatpush1.msra.mxu0 0.0
    %9216 = vmatprep.subr.mxu0 0.0
    %9217 = vmatpush1.msra.mxu0 0.0
    %9218 = vmatprep.subr.mxu0 0.0
    %9219 = vmatpush1.msra.mxu0 0.0
    %9220 = vmatprep.subr.mxu0 0.0
    %9221 = vmatpush1.msra.mxu0 0.0
    %9222 = vmatprep.subr.mxu0 0.0
    %9223 = vmatpush1.msra.mxu0 0.0
    %9224 = vmatprep.subr.mxu0 0.0
    %9225 = vmatpush1.msra.mxu0 0.0
    %9226 = vmatprep.subr.mxu0 0.0
    %9227 = vmatpush1.msra.mxu0 0.0
    %9228 = vmatprep.subr.mxu0 0.0
    %9229 = vmatpush1.msra.mxu0 0.0
    %9230 = vmatprep.subr.mxu0 0.0
    %9231 = vmatpush1.msra.mxu0 0.0
    %9232 = vmatprep.subr.mxu0 0.0
    %9233 = vmatpush1.msra.mxu0 0.0
    %9234 = vmatprep.subr.mxu0 0.0
    %9235 = vmatpush1.msra.mxu0 0.0
    %9236 = vmatprep.subr.mxu0 0.0
    %9237 = vmatpush1.msra.mxu0 0.0
    %9238 = vmatprep.subr.mxu0 0.0
    %9239 = vmatpush1.msra.mxu0 0.0
    %9240 = vmatprep.subr.mxu0 0.0
    %9241 = vmatpush1.msra.mxu0 0.0
    %9242 = vmatprep.subr.mxu0 0.0
    %9243 = vmatpush1.msra.mxu0 0.0
    %9244 = vmatprep.subr.mxu0 0.0
    %9245 = vmatpush1.msra.mxu0 0.0
    %9246 = vmatprep.subr.mxu0 0.0
    %9247 = vmatpush1.msra.mxu0 0.0
    %9248 = vmatprep.subr.mxu0 0.0
    %9249 = vmatpush1.msra.mxu0 0.0
    %9250 = vmatprep.subr.mxu0 0.0
    %9251 = vmatpush1.msra.mxu0 0.0
    %9252 = vmatprep.subr.mxu0 0.0
    %9253 = vmatpush1.msra.mxu0 0.0
    %9254 = vmatprep.subr.mxu0 0.0
    %9255 = vmatpush1.msra.mxu0 0.0
    %9256 = vmatprep.subr.mxu0 0.0
    %9257 = vmatpush1.msra.mxu0 0.0
    %9258 = vmatprep.subr.mxu0 0.0
    %9259 = vmatpush1.msra.mxu0 0.0
    %9260 = vmatprep.mubr.f32.mxu0 0.0
    %9261 = vmatmul.mubr.f32.gmra.mrb[0].mxu0 %v9194
    %v9262 = vpop.f32.mrb[0].mxu0
    %v9263 = vadd.f32 %v9191, %v9262
    %v9264 = vpop.f32.mrb[0].mxu0
    %9265 = vdwg.mxu0
    %v9266 = vxor.u32 %v9263, 2147483648
    %v9267 = vmul.f32 %v9266, 1.442695
    %v9268 = vpow.pop %v9267
    %v9269 = vadd.f32 %v9268, 1.0
    %v9270 = vrcp.pop %v9269
    %v9271 = vmul.f32 1.0, %v9270
    %v9272 = vmul.f32 %v9263, %v9271
    %v9273 = vld [vmem:[%s11] sm:$0xff]
    %v9274 = vld [vmem:[%s11 + $0x8] sm:$0xff]
    %v9275 = vld [vmem:[%s11 + $0x10] sm:$0xff]
    %v9276 = vld [vmem:[%s11 + $0x18] sm:$0xff]
    %v9277 = vld [vmem:[%s12] sm:$0x1]
    %v9279 = vlaneseq
    %v9280 = vshrl.u32 %v9279, 7
    %v9281 = vsub.s32 0, %v9280
    %v9282 = vrot.slane %v9277, %v9281
    %v9285 = vsel %vm485, %v9272, 0
    %9287 = vmatprep.subr.mxu0 0.0
    %9288 = vmatpush1.msra.mxu0 %v9273
    %9289 = vmatprep.subr.mxu0 0.0
    %9290 = vmatpush1.msra.mxu0 %v9274
    %9291 = vmatprep.subr.mxu0 0.0
    %9292 = vmatpush1.msra.mxu0 %v9275
    %9293 = vmatprep.subr.mxu0 0.0
    %9294 = vmatpush1.msra.mxu0 %v9276
    %9295 = vmatprep.subr.mxu0 0.0
    %9296 = vmatpush1.msra.mxu0 0.0
    %9297 = vmatprep.subr.mxu0 0.0
    %9298 = vmatpush1.msra.mxu0 0.0
    %9299 = vmatprep.subr.mxu0 0.0
    %9300 = vmatpush1.msra.mxu0 0.0
    %9301 = vmatprep.subr.mxu0 0.0
    %9302 = vmatpush1.msra.mxu0 0.0
    %9303 = vmatprep.subr.mxu0 0.0
    %9304 = vmatpush1.msra.mxu0 0.0
    %9305 = vmatprep.subr.mxu0 0.0
    %9306 = vmatpush1.msra.mxu0 0.0
    %9307 = vmatprep.subr.mxu0 0.0
    %9308 = vmatpush1.msra.mxu0 0.0
    %9309 = vmatprep.subr.mxu0 0.0
    %9310 = vmatpush1.msra.mxu0 0.0
    %9311 = vmatprep.subr.mxu0 0.0
    %9312 = vmatpush1.msra.mxu0 0.0
    %9313 = vmatprep.subr.mxu0 0.0
    %9314 = vmatpush1.msra.mxu0 0.0
    %9315 = vmatprep.subr.mxu0 0.0
    %9316 = vmatpush1.msra.mxu0 0.0
    %9317 = vmatprep.subr.mxu0 0.0
    %9318 = vmatpush1.msra.mxu0 0.0
    %9319 = vmatprep.subr.mxu0 0.0
    %9320 = vmatpush1.msra.mxu0 0.0
    %9321 = vmatprep.subr.mxu0 0.0
    %9322 = vmatpush1.msra.mxu0 0.0
    %9323 = vmatprep.subr.mxu0 0.0
    %9324 = vmatpush1.msra.mxu0 0.0
    %9325 = vmatprep.subr.mxu0 0.0
    %9326 = vmatpush1.msra.mxu0 0.0
    %9327 = vmatprep.subr.mxu0 0.0
    %9328 = vmatpush1.msra.mxu0 0.0
    %9329 = vmatprep.subr.mxu0 0.0
    %9330 = vmatpush1.msra.mxu0 0.0
    %9331 = vmatprep.subr.mxu0 0.0
    %9332 = vmatpush1.msra.mxu0 0.0
    %9333 = vmatprep.subr.mxu0 0.0
    %9334 = vmatpush1.msra.mxu0 0.0
    %9335 = vmatprep.subr.mxu0 0.0
    %9336 = vmatpush1.msra.mxu0 0.0
    %9337 = vmatprep.subr.mxu0 0.0
    %9338 = vmatpush1.msra.mxu0 0.0
    %9339 = vmatprep.subr.mxu0 0.0
    %9340 = vmatpush1.msra.mxu0 0.0
    %9341 = vmatprep.subr.mxu0 0.0
    %9342 = vmatpush1.msra.mxu0 0.0
    %9343 = vmatprep.subr.mxu0 0.0
    %9344 = vmatpush1.msra.mxu0 0.0
    %9345 = vmatprep.subr.mxu0 0.0
    %9346 = vmatpush1.msra.mxu0 0.0
    %9347 = vmatprep.subr.mxu0 0.0
    %9348 = vmatpush1.msra.mxu0 0.0
    %9349 = vmatprep.subr.mxu0 0.0
    %9350 = vmatpush1.msra.mxu0 0.0
    %9351 = vmatprep.mubr.f32.mxu0 0.0
    %9352 = vmatmul.mubr.f32.gmra.mrb[0].mxu0 %v9285
    %v9353 = vpop.f32.mrb[0].mxu0
    %v9354 = vadd.f32 %v9282, %v9353
    %v9355 = vpop.f32.mrb[0].mxu0
    %9356 = vdwg.mxu0
    %v9357 = vxor.u32 %v9354, 2147483648
    %v9358 = vmul.f32 %v9357, 1.442695
    %v9359 = vpow.pop %v9358
    %v9360 = vadd.f32 %v9359, 1.0
    %v9361 = vrcp.pop %v9360
    %v9362 = vmul.f32 1.0, %v9361
    %v9363 = vmul.f32 %v9354, %v9362
    %v9364 = vld [vmem:[%s13] sm:$0xff]
    %v9365 = vld [vmem:[%s13 + $0x8] sm:$0xff]
    %v9366 = vld [vmem:[%s13 + $0x10] sm:$0xff]
    %v9367 = vld [vmem:[%s13 + $0x18] sm:$0xff]
    %v9368 = vld [vmem:[%s14] sm:$0x1]
    %v9370 = vlaneseq
    %v9371 = vshrl.u32 %v9370, 7
    %v9372 = vsub.s32 0, %v9371
    %v9373 = vrot.slane %v9368, %v9372
    %v9376 = vsel %vm485, %v9363, 0
    %9378 = vmatprep.subr.mxu0 0.0
    %9379 = vmatpush1.msra.mxu0 %v9364
    %9380 = vmatprep.subr.mxu0 0.0
    %9381 = vmatpush1.msra.mxu0 %v9365
    %9382 = vmatprep.subr.mxu0 0.0
    %9383 = vmatpush1.msra.mxu0 %v9366
    %9384 = vmatprep.subr.mxu0 0.0
    %9385 = vmatpush1.msra.mxu0 %v9367
    %9386 = vmatprep.subr.mxu0 0.0
    %9387 = vmatpush1.msra.mxu0 0.0
    %9388 = vmatprep.subr.mxu0 0.0
    %9389 = vmatpush1.msra.mxu0 0.0
    %9390 = vmatprep.subr.mxu0 0.0
    %9391 = vmatpush1.msra.mxu0 0.0
    %9392 = vmatprep.subr.mxu0 0.0
    %9393 = vmatpush1.msra.mxu0 0.0
    %9394 = vmatprep.subr.mxu0 0.0
    %9395 = vmatpush1.msra.mxu0 0.0
    %9396 = vmatprep.subr.mxu0 0.0
    %9397 = vmatpush1.msra.mxu0 0.0
    %9398 = vmatprep.subr.mxu0 0.0
    %9399 = vmatpush1.msra.mxu0 0.0
    %9400 = vmatprep.subr.mxu0 0.0
    %9401 = vmatpush1.msra.mxu0 0.0
    %9402 = vmatprep.subr.mxu0 0.0
    %9403 = vmatpush1.msra.mxu0 0.0
    %9404 = vmatprep.subr.mxu0 0.0
    %9405 = vmatpush1.msra.mxu0 0.0
    %9406 = vmatprep.subr.mxu0 0.0
    %9407 = vmatpush1.msra.mxu0 0.0
    %9408 = vmatprep.subr.mxu0 0.0
    %9409 = vmatpush1.msra.mxu0 0.0
    %9410 = vmatprep.subr.mxu0 0.0
    %9411 = vmatpush1.msra.mxu0 0.0
    %9412 = vmatprep.subr.mxu0 0.0
    %9413 = vmatpush1.msra.mxu0 0.0
    %9414 = vmatprep.subr.mxu0 0.0
    %9415 = vmatpush1.msra.mxu0 0.0
    %9416 = vmatprep.subr.mxu0 0.0
    %9417 = vmatpush1.msra.mxu0 0.0
    %9418 = vmatprep.subr.mxu0 0.0
    %9419 = vmatpush1.msra.mxu0 0.0
    %9420 = vmatprep.subr.mxu0 0.0
    %9421 = vmatpush1.msra.mxu0 0.0
    %9422 = vmatprep.subr.mxu0 0.0
    %9423 = vmatpush1.msra.mxu0 0.0
    %9424 = vmatprep.subr.mxu0 0.0
    %9425 = vmatpush1.msra.mxu0 0.0
    %9426 = vmatprep.subr.mxu0 0.0
    %9427 = vmatpush1.msra.mxu0 0.0
    %9428 = vmatprep.subr.mxu0 0.0
    %9429 = vmatpush1.msra.mxu0 0.0
    %9430 = vmatprep.subr.mxu0 0.0
    %9431 = vmatpush1.msra.mxu0 0.0
    %9432 = vmatprep.subr.mxu0 0.0
    %9433 = vmatpush1.msra.mxu0 0.0
    %9434 = vmatprep.subr.mxu0 0.0
    %9435 = vmatpush1.msra.mxu0 0.0
    %9436 = vmatprep.subr.mxu0 0.0
    %9437 = vmatpush1.msra.mxu0 0.0
    %9438 = vmatprep.subr.mxu0 0.0
    %9439 = vmatpush1.msra.mxu0 0.0
    %9440 = vmatprep.subr.mxu0 0.0
    %9441 = vmatpush1.msra.mxu0 0.0
    %9442 = vmatprep.mubr.f32.mxu0 0.0
    %9443 = vmatmul.mubr.f32.gmra.mrb[0].mxu0 %v9376
    %v9444 = vpop.f32.mrb[0].mxu0
    %v9445 = vadd.f32 %v9373, %v9444
    %v9446 = vpop.f32.mrb[0].mxu0
    %9447 = vdwg.mxu0
    %v9448 = vlaneseq
    %v9449 = vand.u32 %v9448, 127
    %vm9450 = vcmp.gt.f32.partialorder %v9445, 20.0
    %v9451 = vmin.f32 %v9445, 20.0
    %v9452 = vmul.f32 %v9451, 1.442695
    %v9453 = vpow.pop %v9452
    %v9454 = vadd.f32 %v9453, 1.0
    %v9455 = vlog2.pop %v9454
    %v9456 = vmul.f32 %v9455, 0.6931472
    %v9457 = vmul.f32 -0.5, %v9453
    %v9458 = vadd.f32 %v9457, 1.0
    %v9459 = vmul.f32 %v9458, %v9453
    %v9460 = vand.u32 2147483647, %v9453
    %vm9461 = vcmp.lt.f32.partialorder %v9460, 0.0004427343
    %v9462 = vsel %vm9461, %v9459, %v9456
    %v9463 = vsel %vm9450, %v9445, %v9462
    %v9464 = vadd.f32 %v9463, 1e-06
    %vm9465 = vcmp.lt.s32.totalorder %v9449, 2
    %v9466 = vsel %vm9465, %v9445, %v9464
    %vm9467 = vcmp.ge.s32.totalorder %v9449, 4
    %vm9468 = vcmp.lt.s32.totalorder %v9449, 6
    %vm9469 = vmand %vm9467, %vm9468
    %v9470 = vadd.f32 %v9466, 1.0
    %v9471 = vsel %vm9469, %v9470, %v9466
    %vm9472 = vcmask 64512
    %9473 = vst.msk [vmem:[#allocation15] sm:$0xff] %vm9472, %v9471
    // Predicated region
    $region86: #{tpu_custom_call.1} parent=1 // pred_check
      _
    $region87: #{tpu_custom_call.1} parent=1 // pred_check_branch
      %9475 = sbr.rel (0) target = $region89
    $region88: #{tpu_custom_call.1} parent=1 // pred_region
      %s9477 = ssub.s32 128, 128
      %9478 = vsyncadd [#allocation6], %s9477
      %s9480 = sshll.u32 [#allocation15], 4
      %s9481 = int_to_ptr.vmem [resolvable:$true] %s9480
      %9483 = dma.vmem_to_hbm [thread:$0]  %s9481, 128, %s15, [#allocation6]
    $region89: #{tpu_custom_call.1} parent=1 // pred_fallthru
      _
    // Predicated region
    $region90: #{tpu_custom_call.1} parent=1 // pred_check
      _
    $region91: #{tpu_custom_call.1} parent=1 // pred_check_branch
      %9485 = sbr.rel (0) target = $region93
    $region92: #{tpu_custom_call.1} parent=1 // pred_region
      %9486 = dma.done [#allocation6], 128
    $region93: #{tpu_custom_call.1} parent=1 // pred_fallthru
      _
    %9487 = vsyncpa [#allocation5], 1
    %9488 = vsyncpa [#allocation8], 1
    %9489 = vsyncpa [#allocation11], 1
    %9490 = vsyncpa [#allocation14], 1
    %9491 = vsyncpa [#allocation6], 1

</llo_original>
